<compile_context>
chip_gen: v7x
topology: tpu7x:2x2x1
jax: 0.10.0
libtpu: 0.0.40
codegen_flags: <defaults>
</compile_context>

<pallas_src>
import jax
import jax.numpy as jnp
import numpy as np
from jax import lax
from jax.experimental import pallas as pl
from jax.experimental.pallas import tpu as pltpu


# --------------------------- fused whole-block kernel ------------------------ #

def _make_block_kernel(num_layers, c0, growth, k, h, w):
    """Builds the kernel for fixed (L, C0, G, K, H, W) (layer loop is unrolled)."""
    g = growth
    nine_g = 9 * g

    def kernel(x_ref, *refs):
        # refs = [5 params per layer ...] + [o_ref] + [slab_ref, ypad_ref]
        param_refs = refs[:5 * num_layers]
        o_ref = refs[5 * num_layers]
        slab_ref = refs[5 * num_layers + 1]   # (H, W, Ctot)      f32  resident slab
        ypad_ref = refs[5 * num_layers + 2]   # (H+2, W+2, 9G)    f32  padded conv2 out

        # Zero ONLY the 1-pixel halo of the padded scratch (interior is fully
        # overwritten every layer).  Done every grid step: with "parallel"
        # batch semantics each core owns a private scratch and only one core
        # ever sees program_id == 0.
        zrow = jnp.zeros((1, w + 2, nine_g), jnp.float32)
        zcol = jnp.zeros((h + 2, 1, nine_g), jnp.float32)
        ypad_ref[0:1, :, :] = zrow
        ypad_ref[h + 1:h + 2, :, :] = zrow
        ypad_ref[:, 0:1, :] = zcol
        ypad_ref[:, w + 1:w + 2, :] = zcol

        # Original input channels pass through unchanged (torch.cat semantics).
        slab_ref[:, :, 0:c0] = x_ref[0]

        for i in range(num_layers):
            s1_ref, b1_ref, w1_ref, b2_ref, w2_ref = param_refs[5 * i:5 * i + 5]
            cin = c0 + i * g

            # BN1 (folded scale/shift) + ReLU on exactly this layer's Cin channels.
            xin = slab_ref[:, :, 0:cin]                               # (H, W, cin) f32
            a1 = jnp.maximum(xin * s1_ref[...] + b1_ref[...], 0.0)

            # 1x1 conv == channel matmul on the MXU (bf16 operands, f32 acc).
            # BN2 scale is pre-folded into w1 -> epilogue is just "+ b2, ReLU".
            a1 = a1.reshape(h * w, cin).astype(jnp.bfloat16)
            y = jnp.dot(a1, w1_ref[...], preferred_element_type=jnp.float32)
            a2 = jnp.maximum(y + b2_ref[...], 0.0).astype(jnp.bfloat16)   # (H*W, K)

            # 3x3 conv (padding=1), lane-dense: ONE matmul against the (K, 9G)
            # tap-major weight, then 9 shifted adds through the zero-halo
            # padded scratch.
            y9 = jnp.dot(a2, w2_ref[...], preferred_element_type=jnp.float32)
            ypad_ref[1:h + 1, 1:w + 1, :] = y9.reshape(h, w, nine_g)

            acc = jnp.zeros((h, w, g), jnp.float32)
            for kh in range(3):
                for kw in range(3):
                    t = kh * 3 + kw
                    acc = acc + ypad_ref[kh:kh + h, kw:kw + w, t * g:(t + 1) * g]

            # New G channels written straight into the resident slab
            # (replaces the per-layer torch.cat / HBM round-trip).
            slab_ref[:, :, cin:cin + g] = acc

        o_ref[0] = slab_ref[...]

    return kernel


# --------------------------- DenseBlock (Pallas) ----------------------------- #

def dense_block_pallas(x_nchw, params):
    n, c0, h, w = x_nchw.shape
    x = jnp.transpose(x_nchw, (0, 2, 3, 1)).astype(jnp.float32)     # NCHW -> NHWC

    num_layers = len(params)
    k = params[0]["w2flat"].shape[0]
    g = params[0]["w2flat"].shape[1] // 9
    ctot = c0 + num_layers * g

    kernel = _make_block_kernel(num_layers, c0, g, k, h, w)

    in_specs = [pl.BlockSpec((1, h, w, c0), lambda i: (i, 0, 0, 0))]
    inputs = [x]
    for p in params:
        cin = p["s1"].shape[1]
        in_specs += [
            pl.BlockSpec((1, cin), lambda i: (0, 0)),        # BN1 scale
            pl.BlockSpec((1, cin), lambda i: (0, 0)),        # BN1 shift
            pl.BlockSpec((cin, k), lambda i: (0, 0)),        # 1x1 weight (bf16)
            pl.BlockSpec((1, k), lambda i: (0, 0)),          # BN2 shift
            pl.BlockSpec((k, 9 * g), lambda i: (0, 0)),      # 3x3 weight (bf16)
        ]
        inputs += [p["s1"], p["b1"], p["w1"], p["b2"], p["w2flat"]]

    # Rough per-core VMEM requirement; clamp well below v7x's 64 MiB per-TC.
    weight_bytes = sum(int(np.prod(p[name].shape)) * p[name].dtype.itemsize
                       for p in params
                       for name in ("s1", "b1", "w1", "b2", "w2flat"))
    need = (4 * h * w * ctot                          # resident slab scratch (f32)
            + 4 * (h + 2) * (w + 2) * 9 * g           # padded conv2-out scratch (f32)
            + 2 * 4 * h * w * (c0 + ctot)             # double-buffered in/out blocks
            + 2 * weight_bytes                        # double-buffered weights
            + 8 * 4 * h * w * max(9 * g, k, ctot))    # live intermediates headroom
    vmem_limit = int(min(max(need, 8 * 1024 * 1024), 48 * 1024 * 1024))

    out = pl.pallas_call(
        kernel,
        out_shape=jax.ShapeDtypeStruct((n, h, w, ctot), jnp.float32),
        grid=(n,),
        in_specs=in_specs,
        out_specs=pl.BlockSpec((1, h, w, ctot), lambda i: (i, 0, 0, 0)),
        scratch_shapes=[
            pltpu.VMEM((h, w, ctot), jnp.float32),            # channel slab
            pltpu.VMEM((h + 2, w + 2, 9 * g), jnp.float32),   # padded conv2 outputs
        ],
        compiler_params=pltpu.CompilerParams(
            dimension_semantics=("parallel",),
            vmem_limit_bytes=vmem_limit),
    )(*inputs)
    return jnp.transpose(out, (0, 3, 1, 2))                   # NHWC -> NCHW


# ------------------------------ parameter setup ------------------------------ #

def init_dense_block_params(key, num_layers, num_input_features, bn_size,
                            growth_rate, eps=1e-5):
    """Deterministic synthetic params (shapes match the PyTorch module).

    BN folded in inference form (running stats -> per-channel scale/shift);
    BN2's scale is folded into the 1x1 conv weight before the bf16 cast
    (stated: rounding differs slightly from an unfused f32 BN2)."""
    params = []
    for i in range(num_layers):
        cin = num_input_features + i * growth_rate
        k = bn_size * growth_rate
        keys = jax.random.split(jax.random.fold_in(key, i), 10)

        g1 = jax.random.uniform(keys[0], (cin,), minval=0.5, maxval=1.5)
        be1 = 0.1 * jax.random.normal(keys[1], (cin,))
        rm1 = 0.1 * jax.random.normal(keys[2], (cin,))
        rv1 = jax.random.uniform(keys[3], (cin,), minval=0.5, maxval=1.5)
        s1 = g1 / jnp.sqrt(rv1 + eps)
        b1 = be1 - rm1 * s1

        # conv1 weight (torch OIHW: (k, cin, 1, 1)) -> (cin, k)
        w1_t = 0.1 * jax.random.normal(keys[4], (k, cin, 1, 1))
        w1 = jnp.transpose(w1_t[:, :, 0, 0], (1, 0))

        g2 = jax.random.uniform(keys[5], (k,), minval=0.5, maxval=1.5)
        be2 = 0.1 * jax.random.normal(keys[6], (k,))
        rm2 = 0.1 * jax.random.normal(keys[7], (k,))
        rv2 = jax.random.uniform(keys[8], (k,), minval=0.5, maxval=1.5)
        s2 = g2 / jnp.sqrt(rv2 + eps)
        b2 = be2 - rm2 * s2

        # conv2 weight (torch OIHW: (G, k, 3, 3)) -> HWIO (3, 3, k, G)
        w2_t = 0.1 * jax.random.normal(keys[9], (growth_rate, k, 3, 3))
        w2_hwio = jnp.transpose(w2_t, (2, 3, 1, 0))

        # Fold BN2 scale into the 1x1 weight; cast MXU operands to bf16.
        w1f = (w1 * s2[None, :]).astype(jnp.bfloat16)
        # Tap-major lane-dense 3x3 weight: (K, 9*G), column block t = kh*3+kw.
        w2flat = jnp.transpose(w2_hwio.reshape(9, k, growth_rate), (1, 0, 2)
                               ).reshape(k, 9 * growth_rate).astype(jnp.bfloat16)

        params.append(dict(
            # Kernel-side params (unpadded; the kernel slices the real Cin).
            s1=s1.reshape(1, cin).astype(jnp.float32),
            b1=b1.reshape(1, cin).astype(jnp.float32),
            w1=w1f,
            b2=b2.reshape(1, k).astype(jnp.float32),
            w2flat=w2flat,
            # Reference-side params (same folded math, lax.conv form).
            ref_s1=s1.astype(jnp.float32), ref_b1=b1.astype(jnp.float32),
            ref_w1_hwio=w1f.reshape(1, 1, cin, k),
            ref_b2=b2.astype(jnp.float32),
            ref_w2_hwio=w2_hwio.astype(jnp.bfloat16),
        ))
    return params


# ----------------------------- pure-JAX reference ---------------------------- #

def dense_block_reference(x_nchw, params):
    """lax.conv reference with the same folded-BN / bf16-operand math."""
    x = jnp.transpose(x_nchw, (0, 2, 3, 1))
    for p in params:
        a1 = jnp.maximum(x * p["ref_s1"] + p["ref_b1"], 0.0)
        y = lax.conv_general_dilated(
            a1.astype(jnp.bfloat16), p["ref_w1_hwio"], (1, 1), "VALID",
            dimension_numbers=("NHWC", "HWIO", "NHWC"),
            preferred_element_type=jnp.float32)
        a2 = jnp.maximum(y + p["ref_b2"], 0.0)
        new = lax.conv_general_dilated(
            a2.astype(jnp.bfloat16), p["ref_w2_hwio"], (1, 1), "SAME",
            dimension_numbers=("NHWC", "HWIO", "NHWC"),
            preferred_element_type=jnp.float32)
        x = jnp.concatenate([x, new], axis=-1)
    return jnp.transpose(x, (0, 3, 1, 2))


# ------------------------------------ main ----------------------------------- #

if __name__ == "__main__":
    num_layers, num_input_features, bn_size, growth_rate = 3, 4, 2, 4
    N, H, W = 2, 16, 16

    key = jax.random.PRNGKey(0)
    k_x, k_p = jax.random.split(key)
    x = jax.random.normal(k_x, (N, num_input_features, H, W), dtype=jnp.float32)

    params = init_dense_block_params(k_p, num_layers, num_input_features,
                                     bn_size, growth_rate)

    out = jax.block_until_ready(jax.jit(dense_block_pallas)(x, params))
    ref = jax.block_until_ready(dense_block_reference(x, params))

    np.testing.assert_allclose(np.asarray(out), np.asarray(ref),
                               rtol=5e-3, atol=5e-3)
    assert out.shape == (N, num_input_features + num_layers * growth_rate, H, W)

    print("KERNEL_OK")
</pallas_src>

<mosaic_0001>
module attributes {stable_mosaic.version = 11 : i64} {
  func.func @kernel(%arg0: i32, %arg1: memref<1x16x16x4xf32, #tpu.memory_space<vmem>>, %arg2: memref<1x4xf32, #tpu.memory_space<vmem>>, %arg3: memref<1x4xf32, #tpu.memory_space<vmem>>, %arg4: memref<4x8xbf16, #tpu.memory_space<vmem>>, %arg5: memref<1x8xf32, #tpu.memory_space<vmem>>, %arg6: memref<8x36xbf16, #tpu.memory_space<vmem>>, %arg7: memref<1x8xf32, #tpu.memory_space<vmem>>, %arg8: memref<1x8xf32, #tpu.memory_space<vmem>>, %arg9: memref<8x8xbf16, #tpu.memory_space<vmem>>, %arg10: memref<1x8xf32, #tpu.memory_space<vmem>>, %arg11: memref<8x36xbf16, #tpu.memory_space<vmem>>, %arg12: memref<1x12xf32, #tpu.memory_space<vmem>>, %arg13: memref<1x12xf32, #tpu.memory_space<vmem>>, %arg14: memref<12x8xbf16, #tpu.memory_space<vmem>>, %arg15: memref<1x8xf32, #tpu.memory_space<vmem>>, %arg16: memref<8x36xbf16, #tpu.memory_space<vmem>>, %arg17: memref<1x16x16x16xf32, #tpu.memory_space<vmem>>, %arg18: memref<16x16x16xf32, #tpu.memory_space<vmem>>, %arg19: memref<18x18x36xf32, #tpu.memory_space<vmem>>) attributes {dimension_semantics = [#tpu.dimension_semantics<parallel>], iteration_bounds = array<i64: 2>, scalar_prefetch = 0 : i64, scratch_operands = 2 : i64, tpu.core_type = #tpu.core_type<tc>, window_params = [{transform_indices = @transform_0, window_bounds = array<i64: 1, 16, 16, 4>}, {pipeline_mode = #tpu.pipeline_mode<synchronous>, transform_indices = @transform_1, window_bounds = array<i64: 1, 4>}, {pipeline_mode = #tpu.pipeline_mode<synchronous>, transform_indices = @transform_2, window_bounds = array<i64: 1, 4>}, {pipeline_mode = #tpu.pipeline_mode<synchronous>, transform_indices = @transform_3, window_bounds = array<i64: 4, 8>}, {pipeline_mode = #tpu.pipeline_mode<synchronous>, transform_indices = @transform_4, window_bounds = array<i64: 1, 8>}, {pipeline_mode = #tpu.pipeline_mode<synchronous>, transform_indices = @transform_5, window_bounds = array<i64: 8, 36>}, {pipeline_mode = #tpu.pipeline_mode<synchronous>, transform_indices = @transform_6, window_bounds = array<i64: 1, 8>}, {pipeline_mode = #tpu.pipeline_mode<synchronous>, transform_indices = @transform_7, window_bounds = array<i64: 1, 8>}, {pipeline_mode = #tpu.pipeline_mode<synchronous>, transform_indices = @transform_8, window_bounds = array<i64: 8, 8>}, {pipeline_mode = #tpu.pipeline_mode<synchronous>, transform_indices = @transform_9, window_bounds = array<i64: 1, 8>}, {pipeline_mode = #tpu.pipeline_mode<synchronous>, transform_indices = @transform_10, window_bounds = array<i64: 8, 36>}, {pipeline_mode = #tpu.pipeline_mode<synchronous>, transform_indices = @transform_11, window_bounds = array<i64: 1, 12>}, {pipeline_mode = #tpu.pipeline_mode<synchronous>, transform_indices = @transform_12, window_bounds = array<i64: 1, 12>}, {pipeline_mode = #tpu.pipeline_mode<synchronous>, transform_indices = @transform_13, window_bounds = array<i64: 12, 8>}, {pipeline_mode = #tpu.pipeline_mode<synchronous>, transform_indices = @transform_14, window_bounds = array<i64: 1, 8>}, {pipeline_mode = #tpu.pipeline_mode<synchronous>, transform_indices = @transform_15, window_bounds = array<i64: 8, 36>}, {transform_indices = @transform_16, window_bounds = array<i64: 1, 16, 16, 16>}]} {
    %cst = arith.constant 0.000000e+00 : f32
    %0 = vector.broadcast %cst : f32 to vector<1x18x36xf32>
    %cst_0 = arith.constant 0.000000e+00 : f32
    %1 = vector.broadcast %cst_0 : f32 to vector<18x1x36xf32>
    %c0 = arith.constant 0 : index
    %c0_1 = arith.constant 0 : index
    %c0_2 = arith.constant 0 : index
    %2 = vector.load %arg19[%c0, %c0_1, %c0_2] : memref<18x18x36xf32, #tpu.memory_space<vmem>>, vector<1x18x36xf32>
    tpu.vector_store %arg19[%c0, %c0_1, %c0_2], %0 {strides = array<i32>} : memref<18x18x36xf32, #tpu.memory_space<vmem>>, vector<1x18x36xf32>,
    %c17 = arith.constant 17 : index
    %c0_3 = arith.constant 0 : index
    %c0_4 = arith.constant 0 : index
    %3 = vector.load %arg19[%c17, %c0_3, %c0_4] : memref<18x18x36xf32, #tpu.memory_space<vmem>>, vector<1x18x36xf32>
    tpu.vector_store %arg19[%c17, %c0_3, %c0_4], %0 {strides = array<i32>} : memref<18x18x36xf32, #tpu.memory_space<vmem>>, vector<1x18x36xf32>,
    %c0_5 = arith.constant 0 : index
    %c0_6 = arith.constant 0 : index
    %c0_7 = arith.constant 0 : index
    %4 = vector.load %arg19[%c0_5, %c0_6, %c0_7] : memref<18x18x36xf32, #tpu.memory_space<vmem>>, vector<18x1x36xf32>
    tpu.vector_store %arg19[%c0_5, %c0_6, %c0_7], %1 {strides = array<i32>} : memref<18x18x36xf32, #tpu.memory_space<vmem>>, vector<18x1x36xf32>,
    %c0_8 = arith.constant 0 : index
    %c17_9 = arith.constant 17 : index
    %c0_10 = arith.constant 0 : index
    %5 = vector.load %arg19[%c0_8, %c17_9, %c0_10] : memref<18x18x36xf32, #tpu.memory_space<vmem>>, vector<18x1x36xf32>
    tpu.vector_store %arg19[%c0_8, %c17_9, %c0_10], %1 {strides = array<i32>} : memref<18x18x36xf32, #tpu.memory_space<vmem>>, vector<18x1x36xf32>,
    %c0_11 = arith.constant 0 : index
    %c0_12 = arith.constant 0 : index
    %c0_13 = arith.constant 0 : index
    %c0_14 = arith.constant 0 : index
    %6 = vector.load %arg1[%c0_11, %c0_12, %c0_13, %c0_14] : memref<1x16x16x4xf32, #tpu.memory_space<vmem>>, vector<1x16x16x4xf32>
    %7 = vector.shape_cast %6 : vector<1x16x16x4xf32> to vector<16x16x4xf32>
    %c0_15 = arith.constant 0 : index
    %c0_16 = arith.constant 0 : index
    %c0_17 = arith.constant 0 : index
    %8 = vector.load %arg18[%c0_15, %c0_16, %c0_17] : memref<16x16x16xf32, #tpu.memory_space<vmem>>, vector<16x16x4xf32>
    tpu.vector_store %arg18[%c0_15, %c0_16, %c0_17], %7 {strides = array<i32>} : memref<16x16x16xf32, #tpu.memory_space<vmem>>, vector<16x16x4xf32>,
    %c0_18 = arith.constant 0 : index
    %c0_19 = arith.constant 0 : index
    %c0_20 = arith.constant 0 : index
    %9 = vector.load %arg18[%c0_18, %c0_19, %c0_20] : memref<16x16x16xf32, #tpu.memory_space<vmem>>, vector<16x16x4xf32>
    %c0_21 = arith.constant 0 : index
    %c0_22 = arith.constant 0 : index
    %10 = vector.load %arg2[%c0_21, %c0_22] : memref<1x4xf32, #tpu.memory_space<vmem>>, vector<1x4xf32>
    %11 = vector.shape_cast %10 : vector<1x4xf32> to vector<1x1x4xf32>
    %12 = vector.broadcast %11 : vector<1x1x4xf32> to vector<16x16x4xf32>
    %13 = arith.mulf %9, %12 : vector<16x16x4xf32>
    %c0_23 = arith.constant 0 : index
    %c0_24 = arith.constant 0 : index
    %14 = vector.load %arg3[%c0_23, %c0_24] : memref<1x4xf32, #tpu.memory_space<vmem>>, vector<1x4xf32>
    %15 = vector.shape_cast %14 : vector<1x4xf32> to vector<1x1x4xf32>
    %16 = vector.broadcast %15 : vector<1x1x4xf32> to vector<16x16x4xf32>
    %17 = arith.addf %13, %16 : vector<16x16x4xf32>
    %cst_25 = arith.constant 0.000000e+00 : f32
    %18 = vector.broadcast %cst_25 : f32 to vector<16x16x4xf32>
    %19 = arith.maximumf %17, %18 : vector<16x16x4xf32>
    %20 = vector.shape_cast %19 : vector<16x16x4xf32> to vector<256x4xf32>
    %21 = arith.truncf %20 : vector<256x4xf32> to vector<256x4xbf16>
    %c0_26 = arith.constant 0 : index
    %c0_27 = arith.constant 0 : index
    %22 = vector.load %arg4[%c0_26, %c0_27] : memref<4x8xbf16, #tpu.memory_space<vmem>>, vector<4x8xbf16>
    %cst_28 = arith.constant dense<0.000000e+00> : vector<256x8xf32>
    %23 = tpu.matmul %21, %22, %cst_28 {dimension_numbers = #tpu.dot_dimension_numbers<[1], [0], [0], [1], [0, 0, 1, 1], [], []>} : vector<256x4xbf16>, vector<4x8xbf16>, vector<256x8xf32> -> vector<256x8xf32>
    %c0_29 = arith.constant 0 : index
    %c0_30 = arith.constant 0 : index
    %24 = vector.load %arg5[%c0_29, %c0_30] : memref<1x8xf32, #tpu.memory_space<vmem>>, vector<1x8xf32>
    %25 = vector.broadcast %24 : vector<1x8xf32> to vector<256x8xf32>
    %26 = arith.addf %23, %25 : vector<256x8xf32>
    %cst_31 = arith.constant 0.000000e+00 : f32
    %27 = vector.broadcast %cst_31 : f32 to vector<256x8xf32>
    %28 = arith.maximumf %26, %27 : vector<256x8xf32>
    %29 = arith.truncf %28 : vector<256x8xf32> to vector<256x8xbf16>
    %c0_32 = arith.constant 0 : index
    %c0_33 = arith.constant 0 : index
    %30 = vector.load %arg6[%c0_32, %c0_33] : memref<8x36xbf16, #tpu.memory_space<vmem>>, vector<8x36xbf16>
    %cst_34 = arith.constant dense<0.000000e+00> : vector<256x36xf32>
    %31 = tpu.matmul %29, %30, %cst_34 {dimension_numbers = #tpu.dot_dimension_numbers<[1], [0], [0], [1], [0, 0, 1, 1], [], []>} : vector<256x8xbf16>, vector<8x36xbf16>, vector<256x36xf32> -> vector<256x36xf32>
    %32 = vector.shape_cast %31 : vector<256x36xf32> to vector<16x16x36xf32>
    %c1 = arith.constant 1 : index
    %c1_35 = arith.constant 1 : index
    %c0_36 = arith.constant 0 : index
    %33 = vector.load %arg19[%c1, %c1_35, %c0_36] : memref<18x18x36xf32, #tpu.memory_space<vmem>>, vector<16x16x36xf32>
    tpu.vector_store %arg19[%c1, %c1_35, %c0_36], %32 {strides = array<i32>} : memref<18x18x36xf32, #tpu.memory_space<vmem>>, vector<16x16x36xf32>,
    %cst_37 = arith.constant 0.000000e+00 : f32
    %34 = vector.broadcast %cst_37 : f32 to vector<16x16x4xf32>
    %c0_38 = arith.constant 0 : index
    %c0_39 = arith.constant 0 : index
    %c0_40 = arith.constant 0 : index
    %35 = vector.load %arg19[%c0_38, %c0_39, %c0_40] : memref<18x18x36xf32, #tpu.memory_space<vmem>>, vector<16x16x4xf32>
    %36 = arith.addf %34, %35 : vector<16x16x4xf32>
    %c0_41 = arith.constant 0 : index
    %c1_42 = arith.constant 1 : index
    %c4 = arith.constant 4 : index
    %37 = vector.load %arg19[%c0_41, %c1_42, %c4] : memref<18x18x36xf32, #tpu.memory_space<vmem>>, vector<16x16x4xf32>
    %38 = arith.addf %36, %37 : vector<16x16x4xf32>
    %c0_43 = arith.constant 0 : index
    %c2 = arith.constant 2 : index
    %c8 = arith.constant 8 : index
    %39 = vector.load %arg19[%c0_43, %c2, %c8] : memref<18x18x36xf32, #tpu.memory_space<vmem>>, vector<16x16x4xf32>
    %40 = arith.addf %38, %39 : vector<16x16x4xf32>
    %c1_44 = arith.constant 1 : index
    %c0_45 = arith.constant 0 : index
    %c12 = arith.constant 12 : index
    %41 = vector.load %arg19[%c1_44, %c0_45, %c12] : memref<18x18x36xf32, #tpu.memory_space<vmem>>, vector<16x16x4xf32>
    %42 = arith.addf %40, %41 : vector<16x16x4xf32>
    %c1_46 = arith.constant 1 : index
    %c1_47 = arith.constant 1 : index
    %c16 = arith.constant 16 : index
    %43 = vector.load %arg19[%c1_46, %c1_47, %c16] : memref<18x18x36xf32, #tpu.memory_space<vmem>>, vector<16x16x4xf32>
    %44 = arith.addf %42, %43 : vector<16x16x4xf32>
    %c1_48 = arith.constant 1 : index
    %c2_49 = arith.constant 2 : index
    %c20 = arith.constant 20 : index
    %45 = vector.load %arg19[%c1_48, %c2_49, %c20] : memref<18x18x36xf32, #tpu.memory_space<vmem>>, vector<16x16x4xf32>
    %46 = arith.addf %44, %45 : vector<16x16x4xf32>
    %c2_50 = arith.constant 2 : index
    %c0_51 = arith.constant 0 : index
    %c24 = arith.constant 24 : index
    %47 = vector.load %arg19[%c2_50, %c0_51, %c24] : memref<18x18x36xf32, #tpu.memory_space<vmem>>, vector<16x16x4xf32>
    %48 = arith.addf %46, %47 : vector<16x16x4xf32>
    %c2_52 = arith.constant 2 : index
    %c1_53 = arith.constant 1 : index
    %c28 = arith.constant 28 : index
    %49 = vector.load %arg19[%c2_52, %c1_53, %c28] : memref<18x18x36xf32, #tpu.memory_space<vmem>>, vector<16x16x4xf32>
    %50 = arith.addf %48, %49 : vector<16x16x4xf32>
    %c2_54 = arith.constant 2 : index
    %c2_55 = arith.constant 2 : index
    %c32 = arith.constant 32 : index
    %51 = vector.load %arg19[%c2_54, %c2_55, %c32] : memref<18x18x36xf32, #tpu.memory_space<vmem>>, vector<16x16x4xf32>
    %52 = arith.addf %50, %51 : vector<16x16x4xf32>
    %c0_56 = arith.constant 0 : index
    %c0_57 = arith.constant 0 : index
    %c4_58 = arith.constant 4 : index
    %53 = vector.load %arg18[%c0_56, %c0_57, %c4_58] : memref<16x16x16xf32, #tpu.memory_space<vmem>>, vector<16x16x4xf32>
    tpu.vector_store %arg18[%c0_56, %c0_57, %c4_58], %52 {strides = array<i32>} : memref<16x16x16xf32, #tpu.memory_space<vmem>>, vector<16x16x4xf32>,
    %c0_59 = arith.constant 0 : index
    %c0_60 = arith.constant 0 : index
    %c0_61 = arith.constant 0 : index
    %54 = vector.load %arg18[%c0_59, %c0_60, %c0_61] : memref<16x16x16xf32, #tpu.memory_space<vmem>>, vector<16x16x8xf32>
    %c0_62 = arith.constant 0 : index
    %c0_63 = arith.constant 0 : index
    %55 = vector.load %arg7[%c0_62, %c0_63] : memref<1x8xf32, #tpu.memory_space<vmem>>, vector<1x8xf32>
    %56 = vector.shape_cast %55 : vector<1x8xf32> to vector<1x1x8xf32>
    %57 = vector.broadcast %56 : vector<1x1x8xf32> to vector<16x16x8xf32>
    %58 = arith.mulf %54, %57 : vector<16x16x8xf32>
    %c0_64 = arith.constant 0 : index
    %c0_65 = arith.constant 0 : index
    %59 = vector.load %arg8[%c0_64, %c0_65] : memref<1x8xf32, #tpu.memory_space<vmem>>, vector<1x8xf32>
    %60 = vector.shape_cast %59 : vector<1x8xf32> to vector<1x1x8xf32>
    %61 = vector.broadcast %60 : vector<1x1x8xf32> to vector<16x16x8xf32>
    %62 = arith.addf %58, %61 : vector<16x16x8xf32>
    %cst_66 = arith.constant 0.000000e+00 : f32
    %63 = vector.broadcast %cst_66 : f32 to vector<16x16x8xf32>
    %64 = arith.maximumf %62, %63 : vector<16x16x8xf32>
    %65 = vector.shape_cast %64 : vector<16x16x8xf32> to vector<256x8xf32>
    %66 = arith.truncf %65 : vector<256x8xf32> to vector<256x8xbf16>
    %c0_67 = arith.constant 0 : index
    %c0_68 = arith.constant 0 : index
    %67 = vector.load %arg9[%c0_67, %c0_68] : memref<8x8xbf16, #tpu.memory_space<vmem>>, vector<8x8xbf16>
    %cst_69 = arith.constant dense<0.000000e+00> : vector<256x8xf32>
    %68 = tpu.matmul %66, %67, %cst_69 {dimension_numbers = #tpu.dot_dimension_numbers<[1], [0], [0], [1], [0, 0, 1, 1], [], []>} : vector<256x8xbf16>, vector<8x8xbf16>, vector<256x8xf32> -> vector<256x8xf32>
    %c0_70 = arith.constant 0 : index
    %c0_71 = arith.constant 0 : index
    %69 = vector.load %arg10[%c0_70, %c0_71] : memref<1x8xf32, #tpu.memory_space<vmem>>, vector<1x8xf32>
    %70 = vector.broadcast %69 : vector<1x8xf32> to vector<256x8xf32>
    %71 = arith.addf %68, %70 : vector<256x8xf32>
    %cst_72 = arith.constant 0.000000e+00 : f32
    %72 = vector.broadcast %cst_72 : f32 to vector<256x8xf32>
    %73 = arith.maximumf %71, %72 : vector<256x8xf32>
    %74 = arith.truncf %73 : vector<256x8xf32> to vector<256x8xbf16>
    %c0_73 = arith.constant 0 : index
    %c0_74 = arith.constant 0 : index
    %75 = vector.load %arg11[%c0_73, %c0_74] : memref<8x36xbf16, #tpu.memory_space<vmem>>, vector<8x36xbf16>
    %cst_75 = arith.constant dense<0.000000e+00> : vector<256x36xf32>
    %76 = tpu.matmul %74, %75, %cst_75 {dimension_numbers = #tpu.dot_dimension_numbers<[1], [0], [0], [1], [0, 0, 1, 1], [], []>} : vector<256x8xbf16>, vector<8x36xbf16>, vector<256x36xf32> -> vector<256x36xf32>
    %77 = vector.shape_cast %76 : vector<256x36xf32> to vector<16x16x36xf32>
    %c1_76 = arith.constant 1 : index
    %c1_77 = arith.constant 1 : index
    %c0_78 = arith.constant 0 : index
    %78 = vector.load %arg19[%c1_76, %c1_77, %c0_78] : memref<18x18x36xf32, #tpu.memory_space<vmem>>, vector<16x16x36xf32>
    tpu.vector_store %arg19[%c1_76, %c1_77, %c0_78], %77 {strides = array<i32>} : memref<18x18x36xf32, #tpu.memory_space<vmem>>, vector<16x16x36xf32>,
    %cst_79 = arith.constant 0.000000e+00 : f32
    %79 = vector.broadcast %cst_79 : f32 to vector<16x16x4xf32>
    %c0_80 = arith.constant 0 : index
    %c0_81 = arith.constant 0 : index
    %c0_82 = arith.constant 0 : index
    %80 = vector.load %arg19[%c0_80, %c0_81, %c0_82] : memref<18x18x36xf32, #tpu.memory_space<vmem>>, vector<16x16x4xf32>
    %81 = arith.addf %79, %80 : vector<16x16x4xf32>
    %c0_83 = arith.constant 0 : index
    %c1_84 = arith.constant 1 : index
    %c4_85 = arith.constant 4 : index
    %82 = vector.load %arg19[%c0_83, %c1_84, %c4_85] : memref<18x18x36xf32, #tpu.memory_space<vmem>>, vector<16x16x4xf32>
    %83 = arith.addf %81, %82 : vector<16x16x4xf32>
    %c0_86 = arith.constant 0 : index
    %c2_87 = arith.constant 2 : index
    %c8_88 = arith.constant 8 : index
    %84 = vector.load %arg19[%c0_86, %c2_87, %c8_88] : memref<18x18x36xf32, #tpu.memory_space<vmem>>, vector<16x16x4xf32>
    %85 = arith.addf %83, %84 : vector<16x16x4xf32>
    %c1_89 = arith.constant 1 : index
    %c0_90 = arith.constant 0 : index
    %c12_91 = arith.constant 12 : index
    %86 = vector.load %arg19[%c1_89, %c0_90, %c12_91] : memref<18x18x36xf32, #tpu.memory_space<vmem>>, vector<16x16x4xf32>
    %87 = arith.addf %85, %86 : vector<16x16x4xf32>
    %c1_92 = arith.constant 1 : index
    %c1_93 = arith.constant 1 : index
    %c16_94 = arith.constant 16 : index
    %88 = vector.load %arg19[%c1_92, %c1_93, %c16_94] : memref<18x18x36xf32, #tpu.memory_space<vmem>>, vector<16x16x4xf32>
    %89 = arith.addf %87, %88 : vector<16x16x4xf32>
    %c1_95 = arith.constant 1 : index
    %c2_96 = arith.constant 2 : index
    %c20_97 = arith.constant 20 : index
    %90 = vector.load %arg19[%c1_95, %c2_96, %c20_97] : memref<18x18x36xf32, #tpu.memory_space<vmem>>, vector<16x16x4xf32>
    %91 = arith.addf %89, %90 : vector<16x16x4xf32>
    %c2_98 = arith.constant 2 : index
    %c0_99 = arith.constant 0 : index
    %c24_100 = arith.constant 24 : index
    %92 = vector.load %arg19[%c2_98, %c0_99, %c24_100] : memref<18x18x36xf32, #tpu.memory_space<vmem>>, vector<16x16x4xf32>
    %93 = arith.addf %91, %92 : vector<16x16x4xf32>
    %c2_101 = arith.constant 2 : index
    %c1_102 = arith.constant 1 : index
    %c28_103 = arith.constant 28 : index
    %94 = vector.load %arg19[%c2_101, %c1_102, %c28_103] : memref<18x18x36xf32, #tpu.memory_space<vmem>>, vector<16x16x4xf32>
    %95 = arith.addf %93, %94 : vector<16x16x4xf32>
    %c2_104 = arith.constant 2 : index
    %c2_105 = arith.constant 2 : index
    %c32_106 = arith.constant 32 : index
    %96 = vector.load %arg19[%c2_104, %c2_105, %c32_106] : memref<18x18x36xf32, #tpu.memory_space<vmem>>, vector<16x16x4xf32>
    %97 = arith.addf %95, %96 : vector<16x16x4xf32>
    %c0_107 = arith.constant 0 : index
    %c0_108 = arith.constant 0 : index
    %c8_109 = arith.constant 8 : index
    %98 = vector.load %arg18[%c0_107, %c0_108, %c8_109] : memref<16x16x16xf32, #tpu.memory_space<vmem>>, vector<16x16x4xf32>
    tpu.vector_store %arg18[%c0_107, %c0_108, %c8_109], %97 {strides = array<i32>} : memref<16x16x16xf32, #tpu.memory_space<vmem>>, vector<16x16x4xf32>,
    %c0_110 = arith.constant 0 : index
    %c0_111 = arith.constant 0 : index
    %c0_112 = arith.constant 0 : index
    %99 = vector.load %arg18[%c0_110, %c0_111, %c0_112] : memref<16x16x16xf32, #tpu.memory_space<vmem>>, vector<16x16x12xf32>
    %c0_113 = arith.constant 0 : index
    %c0_114 = arith.constant 0 : index
    %100 = vector.load %arg12[%c0_113, %c0_114] : memref<1x12xf32, #tpu.memory_space<vmem>>, vector<1x12xf32>
    %101 = vector.shape_cast %100 : vector<1x12xf32> to vector<1x1x12xf32>
    %102 = vector.broadcast %101 : vector<1x1x12xf32> to vector<16x16x12xf32>
    %103 = arith.mulf %99, %102 : vector<16x16x12xf32>
    %c0_115 = arith.constant 0 : index
    %c0_116 = arith.constant 0 : index
    %104 = vector.load %arg13[%c0_115, %c0_116] : memref<1x12xf32, #tpu.memory_space<vmem>>, vector<1x12xf32>
    %105 = vector.shape_cast %104 : vector<1x12xf32> to vector<1x1x12xf32>
    %106 = vector.broadcast %105 : vector<1x1x12xf32> to vector<16x16x12xf32>
    %107 = arith.addf %103, %106 : vector<16x16x12xf32>
    %cst_117 = arith.constant 0.000000e+00 : f32
    %108 = vector.broadcast %cst_117 : f32 to vector<16x16x12xf32>
    %109 = arith.maximumf %107, %108 : vector<16x16x12xf32>
    %110 = vector.shape_cast %109 : vector<16x16x12xf32> to vector<256x12xf32>
    %111 = arith.truncf %110 : vector<256x12xf32> to vector<256x12xbf16>
    %c0_118 = arith.constant 0 : index
    %c0_119 = arith.constant 0 : index
    %112 = vector.load %arg14[%c0_118, %c0_119] : memref<12x8xbf16, #tpu.memory_space<vmem>>, vector<12x8xbf16>
    %cst_120 = arith.constant dense<0.000000e+00> : vector<256x8xf32>
    %113 = tpu.matmul %111, %112, %cst_120 {dimension_numbers = #tpu.dot_dimension_numbers<[1], [0], [0], [1], [0, 0, 1, 1], [], []>} : vector<256x12xbf16>, vector<12x8xbf16>, vector<256x8xf32> -> vector<256x8xf32>
    %c0_121 = arith.constant 0 : index
    %c0_122 = arith.constant 0 : index
    %114 = vector.load %arg15[%c0_121, %c0_122] : memref<1x8xf32, #tpu.memory_space<vmem>>, vector<1x8xf32>
    %115 = vector.broadcast %114 : vector<1x8xf32> to vector<256x8xf32>
    %116 = arith.addf %113, %115 : vector<256x8xf32>
    %cst_123 = arith.constant 0.000000e+00 : f32
    %117 = vector.broadcast %cst_123 : f32 to vector<256x8xf32>
    %118 = arith.maximumf %116, %117 : vector<256x8xf32>
    %119 = arith.truncf %118 : vector<256x8xf32> to vector<256x8xbf16>
    %c0_124 = arith.constant 0 : index
    %c0_125 = arith.constant 0 : index
    %120 = vector.load %arg16[%c0_124, %c0_125] : memref<8x36xbf16, #tpu.memory_space<vmem>>, vector<8x36xbf16>
    %cst_126 = arith.constant dense<0.000000e+00> : vector<256x36xf32>
    %121 = tpu.matmul %119, %120, %cst_126 {dimension_numbers = #tpu.dot_dimension_numbers<[1], [0], [0], [1], [0, 0, 1, 1], [], []>} : vector<256x8xbf16>, vector<8x36xbf16>, vector<256x36xf32> -> vector<256x36xf32>
    %122 = vector.shape_cast %121 : vector<256x36xf32> to vector<16x16x36xf32>
    %c1_127 = arith.constant 1 : index
    %c1_128 = arith.constant 1 : index
    %c0_129 = arith.constant 0 : index
    %123 = vector.load %arg19[%c1_127, %c1_128, %c0_129] : memref<18x18x36xf32, #tpu.memory_space<vmem>>, vector<16x16x36xf32>
    tpu.vector_store %arg19[%c1_127, %c1_128, %c0_129], %122 {strides = array<i32>} : memref<18x18x36xf32, #tpu.memory_space<vmem>>, vector<16x16x36xf32>,
    %cst_130 = arith.constant 0.000000e+00 : f32
    %124 = vector.broadcast %cst_130 : f32 to vector<16x16x4xf32>
    %c0_131 = arith.constant 0 : index
    %c0_132 = arith.constant 0 : index
    %c0_133 = arith.constant 0 : index
    %125 = vector.load %arg19[%c0_131, %c0_132, %c0_133] : memref<18x18x36xf32, #tpu.memory_space<vmem>>, vector<16x16x4xf32>
    %126 = arith.addf %124, %125 : vector<16x16x4xf32>
    %c0_134 = arith.constant 0 : index
    %c1_135 = arith.constant 1 : index
    %c4_136 = arith.constant 4 : index
    %127 = vector.load %arg19[%c0_134, %c1_135, %c4_136] : memref<18x18x36xf32, #tpu.memory_space<vmem>>, vector<16x16x4xf32>
    %128 = arith.addf %126, %127 : vector<16x16x4xf32>
    %c0_137 = arith.constant 0 : index
    %c2_138 = arith.constant 2 : index
    %c8_139 = arith.constant 8 : index
    %129 = vector.load %arg19[%c0_137, %c2_138, %c8_139] : memref<18x18x36xf32, #tpu.memory_space<vmem>>, vector<16x16x4xf32>
    %130 = arith.addf %128, %129 : vector<16x16x4xf32>
    %c1_140 = arith.constant 1 : index
    %c0_141 = arith.constant 0 : index
    %c12_142 = arith.constant 12 : index
    %131 = vector.load %arg19[%c1_140, %c0_141, %c12_142] : memref<18x18x36xf32, #tpu.memory_space<vmem>>, vector<16x16x4xf32>
    %132 = arith.addf %130, %131 : vector<16x16x4xf32>
    %c1_143 = arith.constant 1 : index
    %c1_144 = arith.constant 1 : index
    %c16_145 = arith.constant 16 : index
    %133 = vector.load %arg19[%c1_143, %c1_144, %c16_145] : memref<18x18x36xf32, #tpu.memory_space<vmem>>, vector<16x16x4xf32>
    %134 = arith.addf %132, %133 : vector<16x16x4xf32>
    %c1_146 = arith.constant 1 : index
    %c2_147 = arith.constant 2 : index
    %c20_148 = arith.constant 20 : index
    %135 = vector.load %arg19[%c1_146, %c2_147, %c20_148] : memref<18x18x36xf32, #tpu.memory_space<vmem>>, vector<16x16x4xf32>
    %136 = arith.addf %134, %135 : vector<16x16x4xf32>
    %c2_149 = arith.constant 2 : index
    %c0_150 = arith.constant 0 : index
    %c24_151 = arith.constant 24 : index
    %137 = vector.load %arg19[%c2_149, %c0_150, %c24_151] : memref<18x18x36xf32, #tpu.memory_space<vmem>>, vector<16x16x4xf32>
    %138 = arith.addf %136, %137 : vector<16x16x4xf32>
    %c2_152 = arith.constant 2 : index
    %c1_153 = arith.constant 1 : index
    %c28_154 = arith.constant 28 : index
    %139 = vector.load %arg19[%c2_152, %c1_153, %c28_154] : memref<18x18x36xf32, #tpu.memory_space<vmem>>, vector<16x16x4xf32>
    %140 = arith.addf %138, %139 : vector<16x16x4xf32>
    %c2_155 = arith.constant 2 : index
    %c2_156 = arith.constant 2 : index
    %c32_157 = arith.constant 32 : index
    %141 = vector.load %arg19[%c2_155, %c2_156, %c32_157] : memref<18x18x36xf32, #tpu.memory_space<vmem>>, vector<16x16x4xf32>
    %142 = arith.addf %140, %141 : vector<16x16x4xf32>
    %c0_158 = arith.constant 0 : index
    %c0_159 = arith.constant 0 : index
    %c12_160 = arith.constant 12 : index
    %143 = vector.load %arg18[%c0_158, %c0_159, %c12_160] : memref<16x16x16xf32, #tpu.memory_space<vmem>>, vector<16x16x4xf32>
    tpu.vector_store %arg18[%c0_158, %c0_159, %c12_160], %142 {strides = array<i32>} : memref<16x16x16xf32, #tpu.memory_space<vmem>>, vector<16x16x4xf32>,
    %c0_161 = arith.constant 0 : index
    %c0_162 = arith.constant 0 : index
    %c0_163 = arith.constant 0 : index
    %144 = vector.load %arg18[%c0_161, %c0_162, %c0_163] : memref<16x16x16xf32, #tpu.memory_space<vmem>>, vector<16x16x16xf32>
    %c0_164 = arith.constant 0 : index
    %c0_165 = arith.constant 0 : index
    %c0_166 = arith.constant 0 : index
    %c0_167 = arith.constant 0 : index
    %145 = vector.load %arg17[%c0_164, %c0_165, %c0_166, %c0_167] : memref<1x16x16x16xf32, #tpu.memory_space<vmem>>, vector<1x16x16x16xf32>
    %146 = vector.shape_cast %145 : vector<1x16x16x16xf32> to vector<16x16x16xf32>
    %147 = vector.shape_cast %144 : vector<16x16x16xf32> to vector<1x16x16x16xf32>
    tpu.vector_store %arg17[%c0_164, %c0_165, %c0_166, %c0_167], %147 {strides = array<i32>} : memref<1x16x16x16xf32, #tpu.memory_space<vmem>>, vector<1x16x16x16xf32>,
    return
  }
  func.func @transform_0(%arg0: i32) -> (i32, i32, i32, i32) {
    %c0_i32 = arith.constant 0 : i32
    %c0_i32_0 = arith.constant 0 : i32
    %c0_i32_1 = arith.constant 0 : i32
    %c0_i32_2 = arith.constant 0 : i32
    return %arg0, %c0_i32, %c0_i32_0, %c0_i32_1 : i32, i32, i32, i32
  }
  func.func @transform_1(%arg0: i32) -> (i32, i32) {
    %c0_i32 = arith.constant 0 : i32
    %c0_i32_0 = arith.constant 0 : i32
    %c0_i32_1 = arith.constant 0 : i32
    return %c0_i32, %c0_i32_0 : i32, i32
  }
  func.func @transform_2(%arg0: i32) -> (i32, i32) {
    %c0_i32 = arith.constant 0 : i32
    %c0_i32_0 = arith.constant 0 : i32
    %c0_i32_1 = arith.constant 0 : i32
    return %c0_i32, %c0_i32_0 : i32, i32
  }
  func.func @transform_3(%arg0: i32) -> (i32, i32) {
    %c0_i32 = arith.constant 0 : i32
    %c0_i32_0 = arith.constant 0 : i32
    %c0_i32_1 = arith.constant 0 : i32
    return %c0_i32, %c0_i32_0 : i32, i32
  }
  func.func @transform_4(%arg0: i32) -> (i32, i32) {
    %c0_i32 = arith.constant 0 : i32
    %c0_i32_0 = arith.constant 0 : i32
    %c0_i32_1 = arith.constant 0 : i32
    return %c0_i32, %c0_i32_0 : i32, i32
  }
  func.func @transform_5(%arg0: i32) -> (i32, i32) {
    %c0_i32 = arith.constant 0 : i32
    %c0_i32_0 = arith.constant 0 : i32
    %c0_i32_1 = arith.constant 0 : i32
    return %c0_i32, %c0_i32_0 : i32, i32
  }
  func.func @transform_6(%arg0: i32) -> (i32, i32) {
    %c0_i32 = arith.constant 0 : i32
    %c0_i32_0 = arith.constant 0 : i32
    %c0_i32_1 = arith.constant 0 : i32
    return %c0_i32, %c0_i32_0 : i32, i32
  }
  func.func @transform_7(%arg0: i32) -> (i32, i32) {
    %c0_i32 = arith.constant 0 : i32
    %c0_i32_0 = arith.constant 0 : i32
    %c0_i32_1 = arith.constant 0 : i32
    return %c0_i32, %c0_i32_0 : i32, i32
  }
  func.func @transform_8(%arg0: i32) -> (i32, i32) {
    %c0_i32 = arith.constant 0 : i32
    %c0_i32_0 = arith.constant 0 : i32
    %c0_i32_1 = arith.constant 0 : i32
    return %c0_i32, %c0_i32_0 : i32, i32
  }
  func.func @transform_9(%arg0: i32) -> (i32, i32) {
    %c0_i32 = arith.constant 0 : i32
    %c0_i32_0 = arith.constant 0 : i32
    %c0_i32_1 = arith.constant 0 : i32
    return %c0_i32, %c0_i32_0 : i32, i32
  }
  func.func @transform_10(%arg0: i32) -> (i32, i32) {
    %c0_i32 = arith.constant 0 : i32
    %c0_i32_0 = arith.constant 0 : i32
    %c0_i32_1 = arith.constant 0 : i32
    return %c0_i32, %c0_i32_0 : i32, i32
  }
  func.func @transform_11(%arg0: i32) -> (i32, i32) {
    %c0_i32 = arith.constant 0 : i32
    %c0_i32_0 = arith.constant 0 : i32
    %c0_i32_1 = arith.constant 0 : i32
    return %c0_i32, %c0_i32_0 : i32, i32
  }
  func.func @transform_12(%arg0: i32) -> (i32, i32) {
    %c0_i32 = arith.constant 0 : i32
    %c0_i32_0 = arith.constant 0 : i32
    %c0_i32_1 = arith.constant 0 : i32
    return %c0_i32, %c0_i32_0 : i32, i32
  }
  func.func @transform_13(%arg0: i32) -> (i32, i32) {
    %c0_i32 = arith.constant 0 : i32
    %c0_i32_0 = arith.constant 0 : i32
    %c0_i32_1 = arith.constant 0 : i32
    return %c0_i32, %c0_i32_0 : i32, i32
  }
  func.func @transform_14(%arg0: i32) -> (i32, i32) {
    %c0_i32 = arith.constant 0 : i32
    %c0_i32_0 = arith.constant 0 : i32
    %c0_i32_1 = arith.constant 0 : i32
    return %c0_i32, %c0_i32_0 : i32, i32
  }
  func.func @transform_15(%arg0: i32) -> (i32, i32) {
    %c0_i32 = arith.constant 0 : i32
    %c0_i32_0 = arith.constant 0 : i32
    %c0_i32_1 = arith.constant 0 : i32
    return %c0_i32, %c0_i32_0 : i32, i32
  }
  func.func @transform_16(%arg0: i32) -> (i32, i32, i32, i32) {
    %c0_i32 = arith.constant 0 : i32
    %c0_i32_0 = arith.constant 0 : i32
    %c0_i32_1 = arith.constant 0 : i32
    %c0_i32_2 = arith.constant 0 : i32
    return %arg0, %c0_i32, %c0_i32_0, %c0_i32_1 : i32, i32, i32, i32
  }
}

</mosaic_0001>

<llo_original>
// kernel: dense_block_pallas.1
$region0: #{dense_block_pallas.1}
  #allocation0 [shape = 'u32[]', space=smem, size = 0x4, offset = 0x4, fixed_abs, tag = 'smem constant byte address 0x4 - core index']
  #allocation1 [shape = 'u32[144,128]{1,0:T(1,128)}', space=vmem, size = 0x12000, scoped, tag = 'internal scratch']
  #allocation2 [shape = 'f32[16,16,16]{2,1,0:T(8,128)}', space=vmem, size = 0x20000, scoped, tag = 'scratch operand']
  #allocation3 [shape = 'f32[18,18,36]{2,1,0:T(8,128)}', space=vmem, size = 0x36000, scoped, tag = 'scratch operand']
  %s0 = inlined_call_operand.vmem [shape: f32[2,16,16,4], index: 0, kind: input, shape index: {}]
  %s1 = inlined_call_operand.vmem [shape: f32[1,4], index: 1, kind: input, shape index: {}]
  %s2 = inlined_call_operand.vmem [shape: f32[1,4], index: 2, kind: input, shape index: {}]
  %s3 = inlined_call_operand.vmem [shape: bf16[4,8], index: 3, kind: input, shape index: {}]
  %s4 = inlined_call_operand.vmem [shape: f32[1,8], index: 4, kind: input, shape index: {}]
  %s5 = inlined_call_operand.vmem [shape: bf16[8,36], index: 5, kind: input, shape index: {}]
  %s6 = inlined_call_operand.vmem [shape: f32[1,8], index: 6, kind: input, shape index: {}]
  %s7 = inlined_call_operand.vmem [shape: f32[1,8], index: 7, kind: input, shape index: {}]
  %s8 = inlined_call_operand.vmem [shape: bf16[8,8], index: 8, kind: input, shape index: {}]
  %s9 = inlined_call_operand.vmem [shape: f32[1,8], index: 9, kind: input, shape index: {}]
  %s10 = inlined_call_operand.vmem [shape: bf16[8,36], index: 10, kind: input, shape index: {}]
  %s11 = inlined_call_operand.vmem [shape: f32[1,12], index: 11, kind: input, shape index: {}]
  %s12 = inlined_call_operand.vmem [shape: f32[1,12], index: 12, kind: input, shape index: {}]
  %s13 = inlined_call_operand.vmem [shape: bf16[12,8], index: 13, kind: input, shape index: {}]
  %s14 = inlined_call_operand.vmem [shape: f32[1,8], index: 14, kind: input, shape index: {}]
  %s15 = inlined_call_operand.vmem [shape: bf16[8,36], index: 15, kind: input, shape index: {}]
  %s16 = inlined_call_operand.vmem [shape: f32[2,16,16,16], index: 16, kind: output, shape index: {}]
  %s17 = sld [smem:[#allocation0]]
  $region97: #{dense_block_pallas.1} parent=0
    _
  %s19 = ssub.s32 1, %s17
  %s20 = scalar_select 0, %s19, %s17
  loop: start=0, step=1, limit=4
  $region2: #{dense_block_pallas.1} parent=0 // loop_pre_header
    _
  $region3: #{dense_block_pallas.1} parent=0 // loop_header
    %s22 = sphi 0, %s26
    %p23 = scmp.ge.s32.totalorder %s22, 4
    %s32 = sphi 0, %s34
    %s35 = sphi 0, %s32
    %s36 = sphi 0, %s35
    %s52 = sphi 0, %s36
    %s56 = sphi 0, %s56
    %s58 = sphi 0, %s56
    %s59 = sphi 0, %s58
    %s73 = sphi 0, %s59
    %s77 = sphi 0, %s77
    %s79 = sphi 0, %s77
    %s80 = sphi 0, %s79
    %s94 = sphi 0, %s80
    %s98 = sphi 0, %s98
    %s100 = sphi 0, %s98
    %s101 = sphi 0, %s100
    %s115 = sphi 0, %s101
    %s119 = sphi 0, %s119
    %s121 = sphi 0, %s119
    %s122 = sphi 0, %s121
    %s136 = sphi 0, %s122
    %s140 = sphi 0, %s140
    %s142 = sphi 0, %s140
    %s143 = sphi 0, %s142
    %s157 = sphi 0, %s143
    %s161 = sphi 0, %s161
    %s163 = sphi 0, %s161
    %s164 = sphi 0, %s163
    %s178 = sphi 0, %s164
    %s182 = sphi 0, %s182
    %s184 = sphi 0, %s182
    %s185 = sphi 0, %s184
    %s199 = sphi 0, %s185
    %s203 = sphi 0, %s203
    %s205 = sphi 0, %s203
    %s206 = sphi 0, %s205
    %s220 = sphi 0, %s206
    %s224 = sphi 0, %s224
    %s226 = sphi 0, %s224
    %s227 = sphi 0, %s226
    %s241 = sphi 0, %s227
    %s245 = sphi 0, %s245
    %s247 = sphi 0, %s245
    %s248 = sphi 0, %s247
    %s262 = sphi 0, %s248
    %s266 = sphi 0, %s266
    %s268 = sphi 0, %s266
    %s269 = sphi 0, %s268
    %s283 = sphi 0, %s269
    %s287 = sphi 0, %s287
    %s289 = sphi 0, %s287
    %s290 = sphi 0, %s289
    %s304 = sphi 0, %s290
    %s308 = sphi 0, %s308
    %s310 = sphi 0, %s308
    %s311 = sphi 0, %s310
    %s325 = sphi 0, %s311
    %s329 = sphi 0, %s329
    %s331 = sphi 0, %s329
    %s332 = sphi 0, %s331
    %s346 = sphi 0, %s332
    %s350 = sphi 0, %s350
    %s352 = sphi 0, %s350
    %s353 = sphi 0, %s352
    %s367 = sphi 0, %s353
    %s373 = sphi 0, %s375
    %s376 = sphi 0, %s373
    %s377 = sphi 0, %s376
    %s393 = sphi 0, %s377
  $region4: #{dense_block_pallas.1} parent=0 // loop_header_branch
    %25 = sbr.rel (%p23) target = $region8
  $region5: #{dense_block_pallas.1} parent=0 // loop_body
    %s27 = ssub.s32 %s22, 1
    %s28 = ssub.s32 %s22, 2
    %s29 = sadd.s32 %s22, 1
    %s30 = ssub.s32 %s22, %s29
    %p31 = scmp.eq.s32.totalorder %s30, 0
    %s33 = sadd.s32 %s32, 1
    %s34 = scalar_select %p31, %s32, %s33
    %p37 = pneg %p31
    %p38 = scmp.eq.s32.totalorder %s22, 1
    %p39 = por %p37, %p38
    %p40 = scmp.ne.s32.totalorder %s32, %s35
    %p41 = scmp.eq.s32.totalorder %s22, 0
    %p42 = por %p40, %p41
    %p43 = scmp.ne.s32.totalorder %s32, %s35
    %p44 = scmp.eq.s32.totalorder %s27, 1
    %p45 = por %p43, %p44
    %p46 = scmp.ne.s32.totalorder %s35, %s36
    %p47 = scmp.eq.s32.totalorder %s27, 0
    %p48 = por %p46, %p47
    %p49 = scmp.ne.s32.totalorder %s35, %s36
    %p50 = scmp.eq.s32.totalorder %s28, 1
    %p51 = por %p49, %p50
    %p53 = scmp.ne.s32.totalorder %s36, %s52
    %p54 = scmp.eq.s32.totalorder %s28, 0
    %p55 = por %p53, %p54
    %s57 = sadd.s32 %s56, 1
    %p60 = scmp.eq.s32.totalorder %s22, 1
    %p61 = scmp.ne.s32.totalorder %s56, %s58
    %p62 = scmp.eq.s32.totalorder %s22, 0
    %p63 = por %p61, %p62
    %p64 = scmp.ne.s32.totalorder %s56, %s58
    %p65 = scmp.eq.s32.totalorder %s27, 1
    %p66 = por %p64, %p65
    %p67 = scmp.ne.s32.totalorder %s58, %s59
    %p68 = scmp.eq.s32.totalorder %s27, 0
    %p69 = por %p67, %p68
    %p70 = scmp.ne.s32.totalorder %s58, %s59
    %p71 = scmp.eq.s32.totalorder %s28, 1
    %p72 = por %p70, %p71
    %p74 = scmp.ne.s32.totalorder %s59, %s73
    %p75 = scmp.eq.s32.totalorder %s28, 0
    %p76 = por %p74, %p75
    %s78 = sadd.s32 %s77, 1
    %p81 = scmp.eq.s32.totalorder %s22, 1
    %p82 = scmp.ne.s32.totalorder %s77, %s79
    %p83 = scmp.eq.s32.totalorder %s22, 0
    %p84 = por %p82, %p83
    %p85 = scmp.ne.s32.totalorder %s77, %s79
    %p86 = scmp.eq.s32.totalorder %s27, 1
    %p87 = por %p85, %p86
    %p88 = scmp.ne.s32.totalorder %s79, %s80
    %p89 = scmp.eq.s32.totalorder %s27, 0
    %p90 = por %p88, %p89
    %p91 = scmp.ne.s32.totalorder %s79, %s80
    %p92 = scmp.eq.s32.totalorder %s28, 1
    %p93 = por %p91, %p92
    %p95 = scmp.ne.s32.totalorder %s80, %s94
    %p96 = scmp.eq.s32.totalorder %s28, 0
    %p97 = por %p95, %p96
    %s99 = sadd.s32 %s98, 1
    %p102 = scmp.eq.s32.totalorder %s22, 1
    %p103 = scmp.ne.s32.totalorder %s98, %s100
    %p104 = scmp.eq.s32.totalorder %s22, 0
    %p105 = por %p103, %p104
    %p106 = scmp.ne.s32.totalorder %s98, %s100
    %p107 = scmp.eq.s32.totalorder %s27, 1
    %p108 = por %p106, %p107
    %p109 = scmp.ne.s32.totalorder %s100, %s101
    %p110 = scmp.eq.s32.totalorder %s27, 0
    %p111 = por %p109, %p110
    %p112 = scmp.ne.s32.totalorder %s100, %s101
    %p113 = scmp.eq.s32.totalorder %s28, 1
    %p114 = por %p112, %p113
    %p116 = scmp.ne.s32.totalorder %s101, %s115
    %p117 = scmp.eq.s32.totalorder %s28, 0
    %p118 = por %p116, %p117
    %s120 = sadd.s32 %s119, 1
    %p123 = scmp.eq.s32.totalorder %s22, 1
    %p124 = scmp.ne.s32.totalorder %s119, %s121
    %p125 = scmp.eq.s32.totalorder %s22, 0
    %p126 = por %p124, %p125
    %p127 = scmp.ne.s32.totalorder %s119, %s121
    %p128 = scmp.eq.s32.totalorder %s27, 1
    %p129 = por %p127, %p128
    %p130 = scmp.ne.s32.totalorder %s121, %s122
    %p131 = scmp.eq.s32.totalorder %s27, 0
    %p132 = por %p130, %p131
    %p133 = scmp.ne.s32.totalorder %s121, %s122
    %p134 = scmp.eq.s32.totalorder %s28, 1
    %p135 = por %p133, %p134
    %p137 = scmp.ne.s32.totalorder %s122, %s136
    %p138 = scmp.eq.s32.totalorder %s28, 0
    %p139 = por %p137, %p138
    %s141 = sadd.s32 %s140, 1
    %p144 = scmp.eq.s32.totalorder %s22, 1
    %p145 = scmp.ne.s32.totalorder %s140, %s142
    %p146 = scmp.eq.s32.totalorder %s22, 0
    %p147 = por %p145, %p146
    %p148 = scmp.ne.s32.totalorder %s140, %s142
    %p149 = scmp.eq.s32.totalorder %s27, 1
    %p150 = por %p148, %p149
    %p151 = scmp.ne.s32.totalorder %s142, %s143
    %p152 = scmp.eq.s32.totalorder %s27, 0
    %p153 = por %p151, %p152
    %p154 = scmp.ne.s32.totalorder %s142, %s143
    %p155 = scmp.eq.s32.totalorder %s28, 1
    %p156 = por %p154, %p155
    %p158 = scmp.ne.s32.totalorder %s143, %s157
    %p159 = scmp.eq.s32.totalorder %s28, 0
    %p160 = por %p158, %p159
    %s162 = sadd.s32 %s161, 1
    %p165 = scmp.eq.s32.totalorder %s22, 1
    %p166 = scmp.ne.s32.totalorder %s161, %s163
    %p167 = scmp.eq.s32.totalorder %s22, 0
    %p168 = por %p166, %p167
    %p169 = scmp.ne.s32.totalorder %s161, %s163
    %p170 = scmp.eq.s32.totalorder %s27, 1
    %p171 = por %p169, %p170
    %p172 = scmp.ne.s32.totalorder %s163, %s164
    %p173 = scmp.eq.s32.totalorder %s27, 0
    %p174 = por %p172, %p173
    %p175 = scmp.ne.s32.totalorder %s163, %s164
    %p176 = scmp.eq.s32.totalorder %s28, 1
    %p177 = por %p175, %p176
    %p179 = scmp.ne.s32.totalorder %s164, %s178
    %p180 = scmp.eq.s32.totalorder %s28, 0
    %p181 = por %p179, %p180
    %s183 = sadd.s32 %s182, 1
    %p186 = scmp.eq.s32.totalorder %s22, 1
    %p187 = scmp.ne.s32.totalorder %s182, %s184
    %p188 = scmp.eq.s32.totalorder %s22, 0
    %p189 = por %p187, %p188
    %p190 = scmp.ne.s32.totalorder %s182, %s184
    %p191 = scmp.eq.s32.totalorder %s27, 1
    %p192 = por %p190, %p191
    %p193 = scmp.ne.s32.totalorder %s184, %s185
    %p194 = scmp.eq.s32.totalorder %s27, 0
    %p195 = por %p193, %p194
    %p196 = scmp.ne.s32.totalorder %s184, %s185
    %p197 = scmp.eq.s32.totalorder %s28, 1
    %p198 = por %p196, %p197
    %p200 = scmp.ne.s32.totalorder %s185, %s199
    %p201 = scmp.eq.s32.totalorder %s28, 0
    %p202 = por %p200, %p201
    %s204 = sadd.s32 %s203, 1
    %p207 = scmp.eq.s32.totalorder %s22, 1
    %p208 = scmp.ne.s32.totalorder %s203, %s205
    %p209 = scmp.eq.s32.totalorder %s22, 0
    %p210 = por %p208, %p209
    %p211 = scmp.ne.s32.totalorder %s203, %s205
    %p212 = scmp.eq.s32.totalorder %s27, 1
    %p213 = por %p211, %p212
    %p214 = scmp.ne.s32.totalorder %s205, %s206
    %p215 = scmp.eq.s32.totalorder %s27, 0
    %p216 = por %p214, %p215
    %p217 = scmp.ne.s32.totalorder %s205, %s206
    %p218 = scmp.eq.s32.totalorder %s28, 1
    %p219 = por %p217, %p218
    %p221 = scmp.ne.s32.totalorder %s206, %s220
    %p222 = scmp.eq.s32.totalorder %s28, 0
    %p223 = por %p221, %p222
    %s225 = sadd.s32 %s224, 1
    %p228 = scmp.eq.s32.totalorder %s22, 1
    %p229 = scmp.ne.s32.totalorder %s224, %s226
    %p230 = scmp.eq.s32.totalorder %s22, 0
    %p231 = por %p229, %p230
    %p232 = scmp.ne.s32.totalorder %s224, %s226
    %p233 = scmp.eq.s32.totalorder %s27, 1
    %p234 = por %p232, %p233
    %p235 = scmp.ne.s32.totalorder %s226, %s227
    %p236 = scmp.eq.s32.totalorder %s27, 0
    %p237 = por %p235, %p236
    %p238 = scmp.ne.s32.totalorder %s226, %s227
    %p239 = scmp.eq.s32.totalorder %s28, 1
    %p240 = por %p238, %p239
    %p242 = scmp.ne.s32.totalorder %s227, %s241
    %p243 = scmp.eq.s32.totalorder %s28, 0
    %p244 = por %p242, %p243
    %s246 = sadd.s32 %s245, 1
    %p249 = scmp.eq.s32.totalorder %s22, 1
    %p250 = scmp.ne.s32.totalorder %s245, %s247
    %p251 = scmp.eq.s32.totalorder %s22, 0
    %p252 = por %p250, %p251
    %p253 = scmp.ne.s32.totalorder %s245, %s247
    %p254 = scmp.eq.s32.totalorder %s27, 1
    %p255 = por %p253, %p254
    %p256 = scmp.ne.s32.totalorder %s247, %s248
    %p257 = scmp.eq.s32.totalorder %s27, 0
    %p258 = por %p256, %p257
    %p259 = scmp.ne.s32.totalorder %s247, %s248
    %p260 = scmp.eq.s32.totalorder %s28, 1
    %p261 = por %p259, %p260
    %p263 = scmp.ne.s32.totalorder %s248, %s262
    %p264 = scmp.eq.s32.totalorder %s28, 0
    %p265 = por %p263, %p264
    %s267 = sadd.s32 %s266, 1
    %p270 = scmp.eq.s32.totalorder %s22, 1
    %p271 = scmp.ne.s32.totalorder %s266, %s268
    %p272 = scmp.eq.s32.totalorder %s22, 0
    %p273 = por %p271, %p272
    %p274 = scmp.ne.s32.totalorder %s266, %s268
    %p275 = scmp.eq.s32.totalorder %s27, 1
    %p276 = por %p274, %p275
    %p277 = scmp.ne.s32.totalorder %s268, %s269
    %p278 = scmp.eq.s32.totalorder %s27, 0
    %p279 = por %p277, %p278
    %p280 = scmp.ne.s32.totalorder %s268, %s269
    %p281 = scmp.eq.s32.totalorder %s28, 1
    %p282 = por %p280, %p281
    %p284 = scmp.ne.s32.totalorder %s269, %s283
    %p285 = scmp.eq.s32.totalorder %s28, 0
    %p286 = por %p284, %p285
    %s288 = sadd.s32 %s287, 1
    %p291 = scmp.eq.s32.totalorder %s22, 1
    %p292 = scmp.ne.s32.totalorder %s287, %s289
    %p293 = scmp.eq.s32.totalorder %s22, 0
    %p294 = por %p292, %p293
    %p295 = scmp.ne.s32.totalorder %s287, %s289
    %p296 = scmp.eq.s32.totalorder %s27, 1
    %p297 = por %p295, %p296
    %p298 = scmp.ne.s32.totalorder %s289, %s290
    %p299 = scmp.eq.s32.totalorder %s27, 0
    %p300 = por %p298, %p299
    %p301 = scmp.ne.s32.totalorder %s289, %s290
    %p302 = scmp.eq.s32.totalorder %s28, 1
    %p303 = por %p301, %p302
    %p305 = scmp.ne.s32.totalorder %s290, %s304
    %p306 = scmp.eq.s32.totalorder %s28, 0
    %p307 = por %p305, %p306
    %s309 = sadd.s32 %s308, 1
    %p312 = scmp.eq.s32.totalorder %s22, 1
    %p313 = scmp.ne.s32.totalorder %s308, %s310
    %p314 = scmp.eq.s32.totalorder %s22, 0
    %p315 = por %p313, %p314
    %p316 = scmp.ne.s32.totalorder %s308, %s310
    %p317 = scmp.eq.s32.totalorder %s27, 1
    %p318 = por %p316, %p317
    %p319 = scmp.ne.s32.totalorder %s310, %s311
    %p320 = scmp.eq.s32.totalorder %s27, 0
    %p321 = por %p319, %p320
    %p322 = scmp.ne.s32.totalorder %s310, %s311
    %p323 = scmp.eq.s32.totalorder %s28, 1
    %p324 = por %p322, %p323
    %p326 = scmp.ne.s32.totalorder %s311, %s325
    %p327 = scmp.eq.s32.totalorder %s28, 0
    %p328 = por %p326, %p327
    %s330 = sadd.s32 %s329, 1
    %p333 = scmp.eq.s32.totalorder %s22, 1
    %p334 = scmp.ne.s32.totalorder %s329, %s331
    %p335 = scmp.eq.s32.totalorder %s22, 0
    %p336 = por %p334, %p335
    %p337 = scmp.ne.s32.totalorder %s329, %s331
    %p338 = scmp.eq.s32.totalorder %s27, 1
    %p339 = por %p337, %p338
    %p340 = scmp.ne.s32.totalorder %s331, %s332
    %p341 = scmp.eq.s32.totalorder %s27, 0
    %p342 = por %p340, %p341
    %p343 = scmp.ne.s32.totalorder %s331, %s332
    %p344 = scmp.eq.s32.totalorder %s28, 1
    %p345 = por %p343, %p344
    %p347 = scmp.ne.s32.totalorder %s332, %s346
    %p348 = scmp.eq.s32.totalorder %s28, 0
    %p349 = por %p347, %p348
    %s351 = sadd.s32 %s350, 1
    %p354 = scmp.eq.s32.totalorder %s22, 1
    %p355 = scmp.ne.s32.totalorder %s350, %s352
    %p356 = scmp.eq.s32.totalorder %s22, 0
    %p357 = por %p355, %p356
    %p358 = scmp.ne.s32.totalorder %s350, %s352
    %p359 = scmp.eq.s32.totalorder %s27, 1
    %p360 = por %p358, %p359
    %p361 = scmp.ne.s32.totalorder %s352, %s353
    %p362 = scmp.eq.s32.totalorder %s27, 0
    %p363 = por %p361, %p362
    %p364 = scmp.ne.s32.totalorder %s352, %s353
    %p365 = scmp.eq.s32.totalorder %s28, 1
    %p366 = por %p364, %p365
    %p368 = scmp.ne.s32.totalorder %s353, %s367
    %p369 = scmp.eq.s32.totalorder %s28, 0
    %p370 = por %p368, %p369
    %s371 = ssub.s32 %s22, %s29
    %p372 = scmp.eq.s32.totalorder %s371, 0
    %s374 = sadd.s32 %s373, 1
    %s375 = scalar_select %p372, %s373, %s374
    %p378 = pneg %p372
    %p379 = scmp.eq.s32.totalorder %s22, 1
    %p380 = por %p378, %p379
    %p381 = scmp.ne.s32.totalorder %s373, %s376
    %p382 = scmp.eq.s32.totalorder %s22, 0
    %p383 = por %p381, %p382
    %p384 = scmp.ne.s32.totalorder %s373, %s376
    %p385 = scmp.eq.s32.totalorder %s27, 1
    %p386 = por %p384, %p385
    %p387 = scmp.ne.s32.totalorder %s376, %s377
    %p388 = scmp.eq.s32.totalorder %s27, 0
    %p389 = por %p387, %p388
    %p390 = scmp.ne.s32.totalorder %s376, %s377
    %p391 = scmp.eq.s32.totalorder %s28, 1
    %p392 = por %p390, %p391
    %p394 = scmp.ne.s32.totalorder %s377, %s393
    %p395 = scmp.eq.s32.totalorder %s28, 0
    %p396 = por %p394, %p395
    %p397 = scmp.le.s32.totalorder 1, %s22
    %p398 = scmp.lt.s32.totalorder %s22, 3
    %p399 = pnand %p397, %p398
    %p400 = pneg %p399
    // Predicated region
    $region9: #{dense_block_pallas.1} parent=5 // pred_check
      _
    $region10: #{dense_block_pallas.1} parent=5 // pred_check_branch
      %402 = sbr.rel (%p399) target = $region12
    $region11: #{dense_block_pallas.1} parent=5 // pred_region
      %s403 = ssub.s32 %s22, 1
      // Predicated region
      $region13: #{dense_block_pallas.1} parent=11 // pred_check
        %p404 = pneg %p69
      $region14: #{dense_block_pallas.1} parent=11 // pred_check_branch
        %406 = sbr.rel (%p404) target = $region16
      $region15: #{dense_block_pallas.1} parent=11 // pred_region
        _
      $region16: #{dense_block_pallas.1} parent=11 // pred_fallthru
        _
      // Predicated region
      $region17: #{dense_block_pallas.1} parent=11 // pred_check
        %p407 = pneg %p90
      $region18: #{dense_block_pallas.1} parent=11 // pred_check_branch
        %409 = sbr.rel (%p407) target = $region20
      $region19: #{dense_block_pallas.1} parent=11 // pred_region
        _
      $region20: #{dense_block_pallas.1} parent=11 // pred_fallthru
        _
      // Predicated region
      $region21: #{dense_block_pallas.1} parent=11 // pred_check
        %p410 = pneg %p111
      $region22: #{dense_block_pallas.1} parent=11 // pred_check_branch
        %412 = sbr.rel (%p410) target = $region24
      $region23: #{dense_block_pallas.1} parent=11 // pred_region
        _
      $region24: #{dense_block_pallas.1} parent=11 // pred_fallthru
        _
      // Predicated region
      $region25: #{dense_block_pallas.1} parent=11 // pred_check
        %p413 = pneg %p132
      $region26: #{dense_block_pallas.1} parent=11 // pred_check_branch
        %415 = sbr.rel (%p413) target = $region28
      $region27: #{dense_block_pallas.1} parent=11 // pred_region
        _
      $region28: #{dense_block_pallas.1} parent=11 // pred_fallthru
        _
      // Predicated region
      $region29: #{dense_block_pallas.1} parent=11 // pred_check
        %p416 = pneg %p153
      $region30: #{dense_block_pallas.1} parent=11 // pred_check_branch
        %418 = sbr.rel (%p416) target = $region32
      $region31: #{dense_block_pallas.1} parent=11 // pred_region
        _
      $region32: #{dense_block_pallas.1} parent=11 // pred_fallthru
        _
      // Predicated region
      $region33: #{dense_block_pallas.1} parent=11 // pred_check
        %p419 = pneg %p174
      $region34: #{dense_block_pallas.1} parent=11 // pred_check_branch
        %421 = sbr.rel (%p419) target = $region36
      $region35: #{dense_block_pallas.1} parent=11 // pred_region
        _
      $region36: #{dense_block_pallas.1} parent=11 // pred_fallthru
        _
      // Predicated region
      $region37: #{dense_block_pallas.1} parent=11 // pred_check
        %p422 = pneg %p195
      $region38: #{dense_block_pallas.1} parent=11 // pred_check_branch
        %424 = sbr.rel (%p422) target = $region40
      $region39: #{dense_block_pallas.1} parent=11 // pred_region
        _
      $region40: #{dense_block_pallas.1} parent=11 // pred_fallthru
        _
      // Predicated region
      $region41: #{dense_block_pallas.1} parent=11 // pred_check
        %p425 = pneg %p216
      $region42: #{dense_block_pallas.1} parent=11 // pred_check_branch
        %427 = sbr.rel (%p425) target = $region44
      $region43: #{dense_block_pallas.1} parent=11 // pred_region
        _
      $region44: #{dense_block_pallas.1} parent=11 // pred_fallthru
        _
      // Predicated region
      $region45: #{dense_block_pallas.1} parent=11 // pred_check
        %p428 = pneg %p237
      $region46: #{dense_block_pallas.1} parent=11 // pred_check_branch
        %430 = sbr.rel (%p428) target = $region48
      $region47: #{dense_block_pallas.1} parent=11 // pred_region
        _
      $region48: #{dense_block_pallas.1} parent=11 // pred_fallthru
        _
      // Predicated region
      $region49: #{dense_block_pallas.1} parent=11 // pred_check
        %p431 = pneg %p258
      $region50: #{dense_block_pallas.1} parent=11 // pred_check_branch
        %433 = sbr.rel (%p431) target = $region52
      $region51: #{dense_block_pallas.1} parent=11 // pred_region
        _
      $region52: #{dense_block_pallas.1} parent=11 // pred_fallthru
        _
      // Predicated region
      $region53: #{dense_block_pallas.1} parent=11 // pred_check
        %p434 = pneg %p279
      $region54: #{dense_block_pallas.1} parent=11 // pred_check_branch
        %436 = sbr.rel (%p434) target = $region56
      $region55: #{dense_block_pallas.1} parent=11 // pred_region
        _
      $region56: #{dense_block_pallas.1} parent=11 // pred_fallthru
        _
      // Predicated region
      $region57: #{dense_block_pallas.1} parent=11 // pred_check
        %p437 = pneg %p300
      $region58: #{dense_block_pallas.1} parent=11 // pred_check_branch
        %439 = sbr.rel (%p437) target = $region60
      $region59: #{dense_block_pallas.1} parent=11 // pred_region
        _
      $region60: #{dense_block_pallas.1} parent=11 // pred_fallthru
        _
      // Predicated region
      $region61: #{dense_block_pallas.1} parent=11 // pred_check
        %p440 = pneg %p321
      $region62: #{dense_block_pallas.1} parent=11 // pred_check_branch
        %442 = sbr.rel (%p440) target = $region64
      $region63: #{dense_block_pallas.1} parent=11 // pred_region
        _
      $region64: #{dense_block_pallas.1} parent=11 // pred_fallthru
        _
      // Predicated region
      $region65: #{dense_block_pallas.1} parent=11 // pred_check
        %p443 = pneg %p342
      $region66: #{dense_block_pallas.1} parent=11 // pred_check_branch
        %445 = sbr.rel (%p443) target = $region68
      $region67: #{dense_block_pallas.1} parent=11 // pred_region
        _
      $region68: #{dense_block_pallas.1} parent=11 // pred_fallthru
        _
      // Predicated region
      $region69: #{dense_block_pallas.1} parent=11 // pred_check
        %p446 = pneg %p363
      $region70: #{dense_block_pallas.1} parent=11 // pred_check_branch
        %448 = sbr.rel (%p446) target = $region72
      $region71: #{dense_block_pallas.1} parent=11 // pred_region
        _
      $region72: #{dense_block_pallas.1} parent=11 // pred_fallthru
        _
    $region12: #{dense_block_pallas.1} parent=5 // pred_fallthru
      _
    %p449 = scmp.lt.s32.totalorder %s22, 2
    // Predicated region
    $region73: #{dense_block_pallas.1} parent=5 // pred_check
      %p450 = pneg %p449
    $region74: #{dense_block_pallas.1} parent=5 // pred_check_branch
      %452 = sbr.rel (%p450) target = $region76
    $region75: #{dense_block_pallas.1} parent=5 // pred_region
      // Predicated region
      $region77: #{dense_block_pallas.1} parent=75 // pred_check
        %p453 = pneg %p42
      $region78: #{dense_block_pallas.1} parent=75 // pred_check_branch
        %455 = sbr.rel (%p453) target = $region80
      $region79: #{dense_block_pallas.1} parent=75 // pred_region
        %p456 = scmp.lt.s32.totalorder %s22, 1
        %s457 = scalar_select %p456, %s22, 1
        %s458 = smul.addr %s457, 32
        %s459 = smul.addr %s458, 8
        %s460 = scalar_lea.vmem %s0, %s459
      $region80: #{dense_block_pallas.1} parent=75 // pred_fallthru
        _
    $region76: #{dense_block_pallas.1} parent=5 // pred_fallthru
      _
    %p461 = scmp.le.s32.totalorder 1, %s22
    %p462 = scmp.lt.s32.totalorder %s22, 3
    %p463 = pnand %p461, %p462
    %p464 = pneg %p463
    // Predicated region
    $region81: #{dense_block_pallas.1} parent=5 // pred_check
      _
    $region82: #{dense_block_pallas.1} parent=5 // pred_check_branch
      %466 = sbr.rel (%p463) target = $region84
    $region83: #{dense_block_pallas.1} parent=5 // pred_region
      %s467 = ssub.s32 %s22, 1
      %p468 = scmp.lt.s32.totalorder %s27, 1
      %s469 = scalar_select %p468, %s27, 1
      %s470 = smul.addr %s469, 32
      %s471 = smul.addr %s470, 8
      %s472 = scalar_lea.vmem %s0, %s471
      %p473 = pneg %p48
      %p474 = pneg %p45
      %p475 = pneg %p69
      %p476 = pneg %p66
      %p477 = pneg %p90
      %p478 = pneg %p87
      %p479 = pneg %p111
      %p480 = pneg %p108
      %p481 = pneg %p132
      %p482 = pneg %p129
      %p483 = pneg %p153
      %p484 = pneg %p150
      %p485 = pneg %p174
      %p486 = pneg %p171
      %p487 = pneg %p195
      %p488 = pneg %p192
      %p489 = pneg %p216
      %p490 = pneg %p213
      %p491 = pneg %p237
      %p492 = pneg %p234
      %p493 = pneg %p258
      %p494 = pneg %p255
      %p495 = pneg %p279
      %p496 = pneg %p276
      %p497 = pneg %p300
      %p498 = pneg %p297
      %p499 = pneg %p321
      %p500 = pneg %p318
      %p501 = pneg %p342
      %p502 = pneg %p339
      %p503 = pneg %p363
      %p504 = pneg %p360
      %p505 = pneg %p389
      %p506 = pneg %p386
      %p507 = scmp.lt.s32.totalorder %s27, 1
      %s508 = scalar_select %p507, %s27, 1
      %s509 = smul.addr %s508, 32
      %s510 = smul.addr %s509, 8
      %s511 = scalar_lea.vmem %s16, %s510
      %p512 = scmp.lt.s32.totalorder %s27, 1
      %s513 = scalar_select %p512, %s27, 1
      %s514 = smul.addr %s513, 32
      %s515 = smul.addr %s514, 8
      %s516 = scalar_lea.vmem %s0, %s515
      %p517 = scmp.lt.s32.totalorder %s27, 1
      %s518 = scalar_select %p517, %s27, 1
      %s519 = smul.addr %s518, 32
      %s520 = smul.addr %s519, 8
      %s521 = scalar_lea.vmem %s16, %s520
      %vm523 = vcmask 293888
      %524 = vst.msk [vmem:[#allocation3] sm:$0xff] %vm523, 0.0
      %525 = vst.msk [vmem:[#allocation3 + $0x8] sm:$0xff] %vm523, 0.0
      %vm526 = vcmask 287744
      %527 = vst.msk [vmem:[#allocation3 + $0x10] sm:$0x3] %vm526, 0.0
      %s528 = scalar_lea.vmem [#allocation3], 408
      %529 = vst.msk [vmem:[%s528] sm:$0xff] %vm523, 0.0
      %530 = vst.msk [vmem:[%s528 + $0x8] sm:$0xff] %vm523, 0.0
      %531 = vst.msk [vmem:[%s528 + $0x10] sm:$0x3] %vm526, 0.0
      %vm532 = vcmask 286720
      %533 = vst.msk [vmem:[#allocation3] sm:$0x1] %vm532, 0.0
      %534 = vst.msk [vmem:[#allocation3 + $0x18] sm:$0x1] %vm532, 0.0
      %535 = vst.msk [vmem:[#allocation3 + $0x30] sm:$0x1] %vm532, 0.0
      %536 = vst.msk [vmem:[#allocation3 + $0x48] sm:$0x1] %vm532, 0.0
      %537 = vst.msk [vmem:[#allocation3 + $0x60] sm:$0x1] %vm532, 0.0
      %538 = vst.msk [vmem:[#allocation3 + $0x78] sm:$0x1] %vm532, 0.0
      %539 = vst.msk [vmem:[#allocation3 + $0x90] sm:$0x1] %vm532, 0.0
      %540 = vst.msk [vmem:[#allocation3 + $0xa8] sm:$0x1] %vm532, 0.0
      %541 = vst.msk [vmem:[#allocation3 + $0xc0] sm:$0x1] %vm532, 0.0
      %542 = vst.msk [vmem:[#allocation3 + $0xd8] sm:$0x1] %vm532, 0.0
      %543 = vst.msk [vmem:[#allocation3 + $0xf0] sm:$0x1] %vm532, 0.0
      %544 = vst.msk [vmem:[#allocation3 + $0x108] sm:$0x1] %vm532, 0.0
      %545 = vst.msk [vmem:[#allocation3 + $0x120] sm:$0x1] %vm532, 0.0
      %546 = vst.msk [vmem:[#allocation3 + $0x138] sm:$0x1] %vm532, 0.0
      %547 = vst.msk [vmem:[#allocation3 + $0x150] sm:$0x1] %vm532, 0.0
      %548 = vst.msk [vmem:[#allocation3 + $0x168] sm:$0x1] %vm532, 0.0
      %549 = vst.msk [vmem:[#allocation3 + $0x180] sm:$0x1] %vm532, 0.0
      %550 = vst.msk [vmem:[#allocation3 + $0x198] sm:$0x1] %vm532, 0.0
      %551 = vst.msk [vmem:[#allocation3 + $0x11] sm:$0x1] %vm532, 0.0
      %552 = vst.msk [vmem:[#allocation3 + $0x29] sm:$0x1] %vm532, 0.0
      %553 = vst.msk [vmem:[#allocation3 + $0x41] sm:$0x1] %vm532, 0.0
      %554 = vst.msk [vmem:[#allocation3 + $0x59] sm:$0x1] %vm532, 0.0
      %555 = vst.msk [vmem:[#allocation3 + $0x71] sm:$0x1] %vm532, 0.0
      %556 = vst.msk [vmem:[#allocation3 + $0x89] sm:$0x1] %vm532, 0.0
      %557 = vst.msk [vmem:[#allocation3 + $0xa1] sm:$0x1] %vm532, 0.0
      %558 = vst.msk [vmem:[#allocation3 + $0xb9] sm:$0x1] %vm532, 0.0
      %559 = vst.msk [vmem:[#allocation3 + $0xd1] sm:$0x1] %vm532, 0.0
      %560 = vst.msk [vmem:[#allocation3 + $0xe9] sm:$0x1] %vm532, 0.0
      %561 = vst.msk [vmem:[#allocation3 + $0x101] sm:$0x1] %vm532, 0.0
      %562 = vst.msk [vmem:[#allocation3 + $0x119] sm:$0x1] %vm532, 0.0
      %563 = vst.msk [vmem:[#allocation3 + $0x131] sm:$0x1] %vm532, 0.0
      %564 = vst.msk [vmem:[#allocation3 + $0x149] sm:$0x1] %vm532, 0.0
      %565 = vst.msk [vmem:[#allocation3 + $0x161] sm:$0x1] %vm532, 0.0
      %566 = vst.msk [vmem:[#allocation3 + $0x179] sm:$0x1] %vm532, 0.0
      %567 = vst.msk [vmem:[#allocation3 + $0x191] sm:$0x1] %vm532, 0.0
      %568 = vst.msk [vmem:[#allocation3 + $0x1a9] sm:$0x1] %vm532, 0.0
      %v569 = vld [vmem:[%s516] sm:$0xff]
      %v570 = vld [vmem:[%s516 + $0x8] sm:$0xff]
      %v571 = vld [vmem:[%s516 + $0x10] sm:$0xff]
      %v572 = vld [vmem:[%s516 + $0x18] sm:$0xff]
      %v573 = vld [vmem:[%s516 + $0x20] sm:$0xff]
      %v574 = vld [vmem:[%s516 + $0x28] sm:$0xff]
      %v575 = vld [vmem:[%s516 + $0x30] sm:$0xff]
      %v576 = vld [vmem:[%s516 + $0x38] sm:$0xff]
      %v577 = vld [vmem:[%s516 + $0x40] sm:$0xff]
      %v578 = vld [vmem:[%s516 + $0x48] sm:$0xff]
      %v579 = vld [vmem:[%s516 + $0x50] sm:$0xff]
      %v580 = vld [vmem:[%s516 + $0x58] sm:$0xff]
      %v581 = vld [vmem:[%s516 + $0x60] sm:$0xff]
      %v582 = vld [vmem:[%s516 + $0x68] sm:$0xff]
      %v583 = vld [vmem:[%s516 + $0x70] sm:$0xff]
      %v584 = vld [vmem:[%s516 + $0x78] sm:$0xff]
      %v585 = vld [vmem:[%s516 + $0x80] sm:$0xff]
      %v586 = vld [vmem:[%s516 + $0x88] sm:$0xff]
      %v587 = vld [vmem:[%s516 + $0x90] sm:$0xff]
      %v588 = vld [vmem:[%s516 + $0x98] sm:$0xff]
      %v589 = vld [vmem:[%s516 + $0xa0] sm:$0xff]
      %v590 = vld [vmem:[%s516 + $0xa8] sm:$0xff]
      %v591 = vld [vmem:[%s516 + $0xb0] sm:$0xff]
      %v592 = vld [vmem:[%s516 + $0xb8] sm:$0xff]
      %v593 = vld [vmem:[%s516 + $0xc0] sm:$0xff]
      %v594 = vld [vmem:[%s516 + $0xc8] sm:$0xff]
      %v595 = vld [vmem:[%s516 + $0xd0] sm:$0xff]
      %v596 = vld [vmem:[%s516 + $0xd8] sm:$0xff]
      %v597 = vld [vmem:[%s516 + $0xe0] sm:$0xff]
      %v598 = vld [vmem:[%s516 + $0xe8] sm:$0xff]
      %v599 = vld [vmem:[%s516 + $0xf0] sm:$0xff]
      %v600 = vld [vmem:[%s516 + $0xf8] sm:$0xff]
      %vm601 = vcmask 31744
      %602 = vst.msk [vmem:[#allocation2] sm:$0xff] %vm601, %v569
      %603 = vst.msk [vmem:[#allocation2 + $0x8] sm:$0xff] %vm601, %v570
      %604 = vst.msk [vmem:[#allocation2 + $0x10] sm:$0xff] %vm601, %v571
      %605 = vst.msk [vmem:[#allocation2 + $0x18] sm:$0xff] %vm601, %v572
      %606 = vst.msk [vmem:[#allocation2 + $0x20] sm:$0xff] %vm601, %v573
      %607 = vst.msk [vmem:[#allocation2 + $0x28] sm:$0xff] %vm601, %v574
      %608 = vst.msk [vmem:[#allocation2 + $0x30] sm:$0xff] %vm601, %v575
      %609 = vst.msk [vmem:[#allocation2 + $0x38] sm:$0xff] %vm601, %v576
      %610 = vst.msk [vmem:[#allocation2 + $0x40] sm:$0xff] %vm601, %v577
      %611 = vst.msk [vmem:[#allocation2 + $0x48] sm:$0xff] %vm601, %v578
      %612 = vst.msk [vmem:[#allocation2 + $0x50] sm:$0xff] %vm601, %v579
      %613 = vst.msk [vmem:[#allocation2 + $0x58] sm:$0xff] %vm601, %v580
      %614 = vst.msk [vmem:[#allocation2 + $0x60] sm:$0xff] %vm601, %v581
      %615 = vst.msk [vmem:[#allocation2 + $0x68] sm:$0xff] %vm601, %v582
      %616 = vst.msk [vmem:[#allocation2 + $0x70] sm:$0xff] %vm601, %v583
      %617 = vst.msk [vmem:[#allocation2 + $0x78] sm:$0xff] %vm601, %v584
      %618 = vst.msk [vmem:[#allocation2 + $0x80] sm:$0xff] %vm601, %v585
      %619 = vst.msk [vmem:[#allocation2 + $0x88] sm:$0xff] %vm601, %v586
      %620 = vst.msk [vmem:[#allocation2 + $0x90] sm:$0xff] %vm601, %v587
      %621 = vst.msk [vmem:[#allocation2 + $0x98] sm:$0xff] %vm601, %v588
      %622 = vst.msk [vmem:[#allocation2 + $0xa0] sm:$0xff] %vm601, %v589
      %623 = vst.msk [vmem:[#allocation2 + $0xa8] sm:$0xff] %vm601, %v590
      %624 = vst.msk [vmem:[#allocation2 + $0xb0] sm:$0xff] %vm601, %v591
      %625 = vst.msk [vmem:[#allocation2 + $0xb8] sm:$0xff] %vm601, %v592
      %626 = vst.msk [vmem:[#allocation2 + $0xc0] sm:$0xff] %vm601, %v593
      %627 = vst.msk [vmem:[#allocation2 + $0xc8] sm:$0xff] %vm601, %v594
      %628 = vst.msk [vmem:[#allocation2 + $0xd0] sm:$0xff] %vm601, %v595
      %629 = vst.msk [vmem:[#allocation2 + $0xd8] sm:$0xff] %vm601, %v596
      %630 = vst.msk [vmem:[#allocation2 + $0xe0] sm:$0xff] %vm601, %v597
      %631 = vst.msk [vmem:[#allocation2 + $0xe8] sm:$0xff] %vm601, %v598
      %632 = vst.msk [vmem:[#allocation2 + $0xf0] sm:$0xff] %vm601, %v599
      %633 = vst.msk [vmem:[#allocation2 + $0xf8] sm:$0xff] %vm601, %v600
      %v634 = vld [vmem:[#allocation2] sm:$0xff]
      %v635 = vld [vmem:[#allocation2 + $0x8] sm:$0xff]
      %v636 = vld [vmem:[#allocation2 + $0x10] sm:$0xff]
      %v637 = vld [vmem:[#allocation2 + $0x18] sm:$0xff]
      %v638 = vld [vmem:[#allocation2 + $0x20] sm:$0xff]
      %v639 = vld [vmem:[#allocation2 + $0x28] sm:$0xff]
      %v640 = vld [vmem:[#allocation2 + $0x30] sm:$0xff]
      %v641 = vld [vmem:[#allocation2 + $0x38] sm:$0xff]
      %v642 = vld [vmem:[#allocation2 + $0x40] sm:$0xff]
      %v643 = vld [vmem:[#allocation2 + $0x48] sm:$0xff]
      %v644 = vld [vmem:[#allocation2 + $0x50] sm:$0xff]
      %v645 = vld [vmem:[#allocation2 + $0x58] sm:$0xff]
      %v646 = vld [vmem:[#allocation2 + $0x60] sm:$0xff]
      %v647 = vld [vmem:[#allocation2 + $0x68] sm:$0xff]
      %v648 = vld [vmem:[#allocation2 + $0x70] sm:$0xff]
      %v649 = vld [vmem:[#allocation2 + $0x78] sm:$0xff]
      %v650 = vld [vmem:[#allocation2 + $0x80] sm:$0xff]
      %v651 = vld [vmem:[#allocation2 + $0x88] sm:$0xff]
      %v652 = vld [vmem:[#allocation2 + $0x90] sm:$0xff]
      %v653 = vld [vmem:[#allocation2 + $0x98] sm:$0xff]
      %v654 = vld [vmem:[#allocation2 + $0xa0] sm:$0xff]
      %v655 = vld [vmem:[#allocation2 + $0xa8] sm:$0xff]
      %v656 = vld [vmem:[#allocation2 + $0xb0] sm:$0xff]
      %v657 = vld [vmem:[#allocation2 + $0xb8] sm:$0xff]
      %v658 = vld [vmem:[#allocation2 + $0xc0] sm:$0xff]
      %v659 = vld [vmem:[#allocation2 + $0xc8] sm:$0xff]
      %v660 = vld [vmem:[#allocation2 + $0xd0] sm:$0xff]
      %v661 = vld [vmem:[#allocation2 + $0xd8] sm:$0xff]
      %v662 = vld [vmem:[#allocation2 + $0xe0] sm:$0xff]
      %v663 = vld [vmem:[#allocation2 + $0xe8] sm:$0xff]
      %v664 = vld [vmem:[#allocation2 + $0xf0] sm:$0xff]
      %v665 = vld [vmem:[#allocation2 + $0xf8] sm:$0xff]
      %v666 = vld [vmem:[%s1] sm:$0x1]
      %v668 = vlaneseq
      %v669 = vshrl.u32 %v668, 7
      %v670 = vsub.s32 0, %v669
      %v671 = vrot.slane %v666, %v670
      %v673 = vmul.f32 %v634, %v671
      %v674 = vmul.f32 %v635, %v671
      %v675 = vmul.f32 %v636, %v671
      %v676 = vmul.f32 %v637, %v671
      %v677 = vmul.f32 %v638, %v671
      %v678 = vmul.f32 %v639, %v671
      %v679 = vmul.f32 %v640, %v671
      %v680 = vmul.f32 %v641, %v671
      %v681 = vmul.f32 %v642, %v671
      %v682 = vmul.f32 %v643, %v671
      %v683 = vmul.f32 %v644, %v671
      %v684 = vmul.f32 %v645, %v671
      %v685 = vmul.f32 %v646, %v671
      %v686 = vmul.f32 %v647, %v671
      %v687 = vmul.f32 %v648, %v671
      %v688 = vmul.f32 %v649, %v671
      %v689 = vmul.f32 %v650, %v671
      %v690 = vmul.f32 %v651, %v671
      %v691 = vmul.f32 %v652, %v671
      %v692 = vmul.f32 %v653, %v671
      %v693 = vmul.f32 %v654, %v671
      %v694 = vmul.f32 %v655, %v671
      %v695 = vmul.f32 %v656, %v671
      %v696 = vmul.f32 %v657, %v671
      %v697 = vmul.f32 %v658, %v671
      %v698 = vmul.f32 %v659, %v671
      %v699 = vmul.f32 %v660, %v671
      %v700 = vmul.f32 %v661, %v671
      %v701 = vmul.f32 %v662, %v671
      %v702 = vmul.f32 %v663, %v671
      %v703 = vmul.f32 %v664, %v671
      %v704 = vmul.f32 %v665, %v671
      %v705 = vld [vmem:[%s2] sm:$0x1]
      %v707 = vlaneseq
      %v708 = vshrl.u32 %v707, 7
      %v709 = vsub.s32 0, %v708
      %v710 = vrot.slane %v705, %v709
      %v712 = vadd.f32 %v673, %v710
      %v713 = vadd.f32 %v674, %v710
      %v714 = vadd.f32 %v675, %v710
      %v715 = vadd.f32 %v676, %v710
      %v716 = vadd.f32 %v677, %v710
      %v717 = vadd.f32 %v678, %v710
      %v718 = vadd.f32 %v679, %v710
      %v719 = vadd.f32 %v680, %v710
      %v720 = vadd.f32 %v681, %v710
      %v721 = vadd.f32 %v682, %v710
      %v722 = vadd.f32 %v683, %v710
      %v723 = vadd.f32 %v684, %v710
      %v724 = vadd.f32 %v685, %v710
      %v725 = vadd.f32 %v686, %v710
      %v726 = vadd.f32 %v687, %v710
      %v727 = vadd.f32 %v688, %v710
      %v728 = vadd.f32 %v689, %v710
      %v729 = vadd.f32 %v690, %v710
      %v730 = vadd.f32 %v691, %v710
      %v731 = vadd.f32 %v692, %v710
      %v732 = vadd.f32 %v693, %v710
      %v733 = vadd.f32 %v694, %v710
      %v734 = vadd.f32 %v695, %v710
      %v735 = vadd.f32 %v696, %v710
      %v736 = vadd.f32 %v697, %v710
      %v737 = vadd.f32 %v698, %v710
      %v738 = vadd.f32 %v699, %v710
      %v739 = vadd.f32 %v700, %v710
      %v740 = vadd.f32 %v701, %v710
      %v741 = vadd.f32 %v702, %v710
      %v742 = vadd.f32 %v703, %v710
      %v743 = vadd.f32 %v704, %v710
      %v744 = vmax.f32 %v712, 0.0
      %v745 = vmax.f32 %v713, 0.0
      %v746 = vmax.f32 %v714, 0.0
      %v747 = vmax.f32 %v715, 0.0
      %v748 = vmax.f32 %v716, 0.0
      %v749 = vmax.f32 %v717, 0.0
      %v750 = vmax.f32 %v718, 0.0
      %v751 = vmax.f32 %v719, 0.0
      %v752 = vmax.f32 %v720, 0.0
      %v753 = vmax.f32 %v721, 0.0
      %v754 = vmax.f32 %v722, 0.0
      %v755 = vmax.f32 %v723, 0.0
      %v756 = vmax.f32 %v724, 0.0
      %v757 = vmax.f32 %v725, 0.0
      %v758 = vmax.f32 %v726, 0.0
      %v759 = vmax.f32 %v727, 0.0
      %v760 = vmax.f32 %v728, 0.0
      %v761 = vmax.f32 %v729, 0.0
      %v762 = vmax.f32 %v730, 0.0
      %v763 = vmax.f32 %v731, 0.0
      %v764 = vmax.f32 %v732, 0.0
      %v765 = vmax.f32 %v733, 0.0
      %v766 = vmax.f32 %v734, 0.0
      %v767 = vmax.f32 %v735, 0.0
      %v768 = vmax.f32 %v736, 0.0
      %v769 = vmax.f32 %v737, 0.0
      %v770 = vmax.f32 %v738, 0.0
      %v771 = vmax.f32 %v739, 0.0
      %v772 = vmax.f32 %v740, 0.0
      %v773 = vmax.f32 %v741, 0.0
      %v774 = vmax.f32 %v742, 0.0
      %v775 = vmax.f32 %v743, 0.0
      %v776 = vpack.c.bf16 %v745, %v744
      %v777 = vpack.c.bf16 %v747, %v746
      %v778 = vpack.c.bf16 %v749, %v748
      %v779 = vpack.c.bf16 %v751, %v750
      %v780 = vpack.c.bf16 %v753, %v752
      %v781 = vpack.c.bf16 %v755, %v754
      %v782 = vpack.c.bf16 %v757, %v756
      %v783 = vpack.c.bf16 %v759, %v758
      %v784 = vpack.c.bf16 %v761, %v760
      %v785 = vpack.c.bf16 %v763, %v762
      %v786 = vpack.c.bf16 %v765, %v764
      %v787 = vpack.c.bf16 %v767, %v766
      %v788 = vpack.c.bf16 %v769, %v768
      %v789 = vpack.c.bf16 %v771, %v770
      %v790 = vpack.c.bf16 %v773, %v772
      %v791 = vpack.c.bf16 %v775, %v774
      %v792 = vld [vmem:[%s3] sm:$0x3]
      %v793 = vld [vmem:[%s4] sm:$0x1]
      %v795 = vlaneseq
      %v796 = vshrl.u32 %v795, 7
      %v797 = vsub.s32 0, %v796
      %v798 = vrot.slane %v793, %v797
      %v801 = vsel %vm601, %v776, 0
      %v804 = vsel %vm601, %v777, 0
      %v807 = vsel %vm601, %v778, 0
      %v810 = vsel %vm601, %v779, 0
      %v813 = vsel %vm601, %v780, 0
      %v816 = vsel %vm601, %v781, 0
      %v819 = vsel %vm601, %v782, 0
      %v822 = vsel %vm601, %v783, 0
      %v825 = vsel %vm601, %v784, 0
      %v828 = vsel %vm601, %v785, 0
      %v831 = vsel %vm601, %v786, 0
      %v834 = vsel %vm601, %v787, 0
      %v837 = vsel %vm601, %v788, 0
      %v840 = vsel %vm601, %v789, 0
      %v843 = vsel %vm601, %v790, 0
      %v846 = vsel %vm601, %v791, 0
      %vm848 = vcmask 1041408
      %v850 = vsel %vm848, %v792, 0
      %852 = vmatprep.subr.bf16.mxu0 0
      %853 = vmatpush1.bf16.msra.mxu0 %v850
      %854 = vmatprep.subr.bf16.mxu0 0
      %855 = vmatpush1.bf16.msra.mxu0 0
      %856 = vmatprep.subr.bf16.mxu0 0
      %857 = vmatpush1.bf16.msra.mxu0 0
      %858 = vmatprep.subr.bf16.mxu0 0
      %859 = vmatpush1.bf16.msra.mxu0 0
      %860 = vmatprep.subr.bf16.mxu0 0
      %861 = vmatpush1.bf16.msra.mxu0 0
      %862 = vmatprep.subr.bf16.mxu0 0
      %863 = vmatpush1.bf16.msra.mxu0 0
      %864 = vmatprep.subr.bf16.mxu0 0
      %865 = vmatpush1.bf16.msra.mxu0 0
      %866 = vmatprep.subr.bf16.mxu0 0
      %867 = vmatpush1.bf16.msra.mxu0 0
      %868 = vmatprep.subr.bf16.mxu0 0
      %869 = vmatpush1.bf16.msra.mxu0 0
      %870 = vmatprep.subr.bf16.mxu0 0
      %871 = vmatpush1.bf16.msra.mxu0 0
      %872 = vmatprep.subr.bf16.mxu0 0
      %873 = vmatpush1.bf16.msra.mxu0 0
      %874 = vmatprep.subr.bf16.mxu0 0
      %875 = vmatpush1.bf16.msra.mxu0 0
      %876 = vmatprep.subr.bf16.mxu0 0
      %877 = vmatpush1.bf16.msra.mxu0 0
      %878 = vmatprep.subr.bf16.mxu0 0
      %879 = vmatpush1.bf16.msra.mxu0 0
      %880 = vmatprep.subr.bf16.mxu0 0
      %881 = vmatpush1.bf16.msra.mxu0 0
      %882 = vmatprep.subr.bf16.mxu0 0
      %883 = vmatpush1.bf16.msra.mxu0 0
      %884 = vmatprep.mubr.bf16.mxu0 0
      %885 = vmatmul.mubr.bf16.gmra.mrb[0].mxu0 %v801
      %v886 = vpop.f32.mrb[0].mxu0
      %v887 = vadd.f32 %v798, %v886
      %v888 = vpop.f32.mrb[0].mxu0
      %v889 = vpop.f32.mrb[0].mxu0
      %v890 = vadd.f32 %v798, %v889
      %v891 = vpop.f32.mrb[0].mxu0
      %892 = vmatprep.mubr.bf16.mxu0 0
      %893 = vmatmul.mubr.bf16.gmra.mrb[0].mxu0 %v804
      %v894 = vpop.f32.mrb[0].mxu0
      %v895 = vadd.f32 %v798, %v894
      %v896 = vpop.f32.mrb[0].mxu0
      %v897 = vpop.f32.mrb[0].mxu0
      %v898 = vadd.f32 %v798, %v897
      %v899 = vpop.f32.mrb[0].mxu0
      %900 = vmatprep.mubr.bf16.mxu0 0
      %901 = vmatmul.mubr.bf16.gmra.mrb[0].mxu0 %v807
      %v902 = vpop.f32.mrb[0].mxu0
      %v903 = vadd.f32 %v798, %v902
      %v904 = vpop.f32.mrb[0].mxu0
      %v905 = vpop.f32.mrb[0].mxu0
      %v906 = vadd.f32 %v798, %v905
      %v907 = vpop.f32.mrb[0].mxu0
      %908 = vmatprep.mubr.bf16.mxu0 0
      %909 = vmatmul.mubr.bf16.gmra.mrb[0].mxu0 %v810
      %v910 = vpop.f32.mrb[0].mxu0
      %v911 = vadd.f32 %v798, %v910
      %v912 = vpop.f32.mrb[0].mxu0
      %v913 = vpop.f32.mrb[0].mxu0
      %v914 = vadd.f32 %v798, %v913
      %v915 = vpop.f32.mrb[0].mxu0
      %916 = vmatprep.mubr.bf16.mxu0 0
      %917 = vmatmul.mubr.bf16.gmra.mrb[0].mxu0 %v813
      %v918 = vpop.f32.mrb[0].mxu0
      %v919 = vadd.f32 %v798, %v918
      %v920 = vpop.f32.mrb[0].mxu0
      %v921 = vpop.f32.mrb[0].mxu0
      %v922 = vadd.f32 %v798, %v921
      %v923 = vpop.f32.mrb[0].mxu0
      %924 = vmatprep.mubr.bf16.mxu0 0
      %925 = vmatmul.mubr.bf16.gmra.mrb[0].mxu0 %v816
      %v926 = vpop.f32.mrb[0].mxu0
      %v927 = vadd.f32 %v798, %v926
      %v928 = vpop.f32.mrb[0].mxu0
      %v929 = vpop.f32.mrb[0].mxu0
      %v930 = vadd.f32 %v798, %v929
      %v931 = vpop.f32.mrb[0].mxu0
      %932 = vmatprep.mubr.bf16.mxu0 0
      %933 = vmatmul.mubr.bf16.gmra.mrb[0].mxu0 %v819
      %v934 = vpop.f32.mrb[0].mxu0
      %v935 = vadd.f32 %v798, %v934
      %v936 = vpop.f32.mrb[0].mxu0
      %v937 = vpop.f32.mrb[0].mxu0
      %v938 = vadd.f32 %v798, %v937
      %v939 = vpop.f32.mrb[0].mxu0
      %940 = vmatprep.mubr.bf16.mxu0 0
      %941 = vmatmul.mubr.bf16.gmra.mrb[0].mxu0 %v822
      %v942 = vpop.f32.mrb[0].mxu0
      %v943 = vadd.f32 %v798, %v942
      %v944 = vpop.f32.mrb[0].mxu0
      %v945 = vpop.f32.mrb[0].mxu0
      %v946 = vadd.f32 %v798, %v945
      %v947 = vpop.f32.mrb[0].mxu0
      %948 = vmatprep.mubr.bf16.mxu0 0
      %949 = vmatmul.mubr.bf16.gmra.mrb[0].mxu0 %v825
      %v950 = vpop.f32.mrb[0].mxu0
      %v951 = vadd.f32 %v798, %v950
      %v952 = vpop.f32.mrb[0].mxu0
      %v953 = vpop.f32.mrb[0].mxu0
      %v954 = vadd.f32 %v798, %v953
      %v955 = vpop.f32.mrb[0].mxu0
      %956 = vmatprep.mubr.bf16.mxu0 0
      %957 = vmatmul.mubr.bf16.gmra.mrb[0].mxu0 %v828
      %v958 = vpop.f32.mrb[0].mxu0
      %v959 = vadd.f32 %v798, %v958
      %v960 = vpop.f32.mrb[0].mxu0
      %v961 = vpop.f32.mrb[0].mxu0
      %v962 = vadd.f32 %v798, %v961
      %v963 = vpop.f32.mrb[0].mxu0
      %964 = vmatprep.mubr.bf16.mxu0 0
      %965 = vmatmul.mubr.bf16.gmra.mrb[0].mxu0 %v831
      %v966 = vpop.f32.mrb[0].mxu0
      %v967 = vadd.f32 %v798, %v966
      %v968 = vpop.f32.mrb[0].mxu0
      %v969 = vpop.f32.mrb[0].mxu0
      %v970 = vadd.f32 %v798, %v969
      %v971 = vpop.f32.mrb[0].mxu0
      %972 = vmatprep.mubr.bf16.mxu0 0
      %973 = vmatmul.mubr.bf16.gmra.mrb[0].mxu0 %v834
      %v974 = vpop.f32.mrb[0].mxu0
      %v975 = vadd.f32 %v798, %v974
      %v976 = vpop.f32.mrb[0].mxu0
      %v977 = vpop.f32.mrb[0].mxu0
      %v978 = vadd.f32 %v798, %v977
      %v979 = vpop.f32.mrb[0].mxu0
      %980 = vmatprep.mubr.bf16.mxu0 0
      %981 = vmatmul.mubr.bf16.gmra.mrb[0].mxu0 %v837
      %v982 = vpop.f32.mrb[0].mxu0
      %v983 = vadd.f32 %v798, %v982
      %v984 = vpop.f32.mrb[0].mxu0
      %v985 = vpop.f32.mrb[0].mxu0
      %v986 = vadd.f32 %v798, %v985
      %v987 = vpop.f32.mrb[0].mxu0
      %988 = vmatprep.mubr.bf16.mxu0 0
      %989 = vmatmul.mubr.bf16.gmra.mrb[0].mxu0 %v840
      %v990 = vpop.f32.mrb[0].mxu0
      %v991 = vadd.f32 %v798, %v990
      %v992 = vpop.f32.mrb[0].mxu0
      %v993 = vpop.f32.mrb[0].mxu0
      %v994 = vadd.f32 %v798, %v993
      %v995 = vpop.f32.mrb[0].mxu0
      %996 = vmatprep.mubr.bf16.mxu0 0
      %997 = vmatmul.mubr.bf16.gmra.mrb[0].mxu0 %v843
      %v998 = vpop.f32.mrb[0].mxu0
      %v999 = vadd.f32 %v798, %v998
      %v1000 = vpop.f32.mrb[0].mxu0
      %v1001 = vpop.f32.mrb[0].mxu0
      %v1002 = vadd.f32 %v798, %v1001
      %v1003 = vpop.f32.mrb[0].mxu0
      %1004 = vmatprep.mubr.bf16.mxu0 0
      %1005 = vmatmul.mubr.bf16.gmra.mrb[0].mxu0 %v846
      %v1006 = vpop.f32.mrb[0].mxu0
      %v1007 = vadd.f32 %v798, %v1006
      %v1008 = vpop.f32.mrb[0].mxu0
      %v1009 = vpop.f32.mrb[0].mxu0
      %v1010 = vadd.f32 %v798, %v1009
      %v1011 = vpop.f32.mrb[0].mxu0
      %1012 = vdwg.mxu0
      %v1013 = vmax.f32 %v887, 0.0
      %v1014 = vmax.f32 %v890, 0.0
      %v1015 = vmax.f32 %v895, 0.0
      %v1016 = vmax.f32 %v898, 0.0
      %v1017 = vmax.f32 %v903, 0.0
      %v1018 = vmax.f32 %v906, 0.0
      %v1019 = vmax.f32 %v911, 0.0
      %v1020 = vmax.f32 %v914, 0.0
      %v1021 = vmax.f32 %v919, 0.0
      %v1022 = vmax.f32 %v922, 0.0
      %v1023 = vmax.f32 %v927, 0.0
      %v1024 = vmax.f32 %v930, 0.0
      %v1025 = vmax.f32 %v935, 0.0
      %v1026 = vmax.f32 %v938, 0.0
      %v1027 = vmax.f32 %v943, 0.0
      %v1028 = vmax.f32 %v946, 0.0
      %v1029 = vmax.f32 %v951, 0.0
      %v1030 = vmax.f32 %v954, 0.0
      %v1031 = vmax.f32 %v959, 0.0
      %v1032 = vmax.f32 %v962, 0.0
      %v1033 = vmax.f32 %v967, 0.0
      %v1034 = vmax.f32 %v970, 0.0
      %v1035 = vmax.f32 %v975, 0.0
      %v1036 = vmax.f32 %v978, 0.0
      %v1037 = vmax.f32 %v983, 0.0
      %v1038 = vmax.f32 %v986, 0.0
      %v1039 = vmax.f32 %v991, 0.0
      %v1040 = vmax.f32 %v994, 0.0
      %v1041 = vmax.f32 %v999, 0.0
      %v1042 = vmax.f32 %v1002, 0.0
      %v1043 = vmax.f32 %v1007, 0.0
      %v1044 = vmax.f32 %v1010, 0.0
      %v1045 = vpack.c.bf16 %v1014, %v1013
      %v1046 = vpack.c.bf16 %v1016, %v1015
      %v1047 = vpack.c.bf16 %v1018, %v1017
      %v1048 = vpack.c.bf16 %v1020, %v1019
      %v1049 = vpack.c.bf16 %v1022, %v1021
      %v1050 = vpack.c.bf16 %v1024, %v1023
      %v1051 = vpack.c.bf16 %v1026, %v1025
      %v1052 = vpack.c.bf16 %v1028, %v1027
      %v1053 = vpack.c.bf16 %v1030, %v1029
      %v1054 = vpack.c.bf16 %v1032, %v1031
      %v1055 = vpack.c.bf16 %v1034, %v1033
      %v1056 = vpack.c.bf16 %v1036, %v1035
      %v1057 = vpack.c.bf16 %v1038, %v1037
      %v1058 = vpack.c.bf16 %v1040, %v1039
      %v1059 = vpack.c.bf16 %v1042, %v1041
      %v1060 = vpack.c.bf16 %v1044, %v1043
      %v1061 = vld [vmem:[%s5] sm:$0xf]
      %vm1062 = vcmask 64512
      %v1064 = vsel %vm1062, %v1045, 0
      %v1067 = vsel %vm1062, %v1046, 0
      %v1070 = vsel %vm1062, %v1047, 0
      %v1073 = vsel %vm1062, %v1048, 0
      %v1076 = vsel %vm1062, %v1049, 0
      %v1079 = vsel %vm1062, %v1050, 0
      %v1082 = vsel %vm1062, %v1051, 0
      %v1085 = vsel %vm1062, %v1052, 0
      %v1088 = vsel %vm1062, %v1053, 0
      %v1091 = vsel %vm1062, %v1054, 0
      %v1094 = vsel %vm1062, %v1055, 0
      %v1097 = vsel %vm1062, %v1056, 0
      %v1100 = vsel %vm1062, %v1057, 0
      %v1103 = vsel %vm1062, %v1058, 0
      %v1106 = vsel %vm1062, %v1059, 0
      %v1109 = vsel %vm1062, %v1060, 0
      %vm1111 = vcmask 1043456
      %v1113 = vsel %vm1111, %v1061, 0
      %1115 = vmatprep.subr.bf16.mxu0 0
      %1116 = vmatpush1.bf16.msra.mxu0 %v1113
      %1117 = vmatprep.subr.bf16.mxu0 0
      %1118 = vmatpush1.bf16.msra.mxu0 0
      %1119 = vmatprep.subr.bf16.mxu0 0
      %1120 = vmatpush1.bf16.msra.mxu0 0
      %1121 = vmatprep.subr.bf16.mxu0 0
      %1122 = vmatpush1.bf16.msra.mxu0 0
      %1123 = vmatprep.subr.bf16.mxu0 0
      %1124 = vmatpush1.bf16.msra.mxu0 0
      %1125 = vmatprep.subr.bf16.mxu0 0
      %1126 = vmatpush1.bf16.msra.mxu0 0
      %1127 = vmatprep.subr.bf16.mxu0 0
      %1128 = vmatpush1.bf16.msra.mxu0 0
      %1129 = vmatprep.subr.bf16.mxu0 0
      %1130 = vmatpush1.bf16.msra.mxu0 0
      %1131 = vmatprep.subr.bf16.mxu0 0
      %1132 = vmatpush1.bf16.msra.mxu0 0
      %1133 = vmatprep.subr.bf16.mxu0 0
      %1134 = vmatpush1.bf16.msra.mxu0 0
      %1135 = vmatprep.subr.bf16.mxu0 0
      %1136 = vmatpush1.bf16.msra.mxu0 0
      %1137 = vmatprep.subr.bf16.mxu0 0
      %1138 = vmatpush1.bf16.msra.mxu0 0
      %1139 = vmatprep.subr.bf16.mxu0 0
      %1140 = vmatpush1.bf16.msra.mxu0 0
      %1141 = vmatprep.subr.bf16.mxu0 0
      %1142 = vmatpush1.bf16.msra.mxu0 0
      %1143 = vmatprep.subr.bf16.mxu0 0
      %1144 = vmatpush1.bf16.msra.mxu0 0
      %1145 = vmatprep.subr.bf16.mxu0 0
      %1146 = vmatpush1.bf16.msra.mxu0 0
      %1147 = vmatprep.mubr.bf16.mxu0 0
      %1148 = vmatmul.mubr.bf16.gmra.mrb[0].mxu0 %v1064
      %v1149 = vpop.f32.mrb[0].mxu0
      %v1150 = vadd.f32 0.0, %v1149
      %v1151 = vpop.f32.mrb[0].mxu0
      %v1152 = vpop.f32.mrb[0].mxu0
      %v1153 = vadd.f32 0.0, %v1152
      %v1154 = vpop.f32.mrb[0].mxu0
      %1155 = vmatprep.mubr.bf16.mxu0 0
      %1156 = vmatmul.mubr.bf16.gmra.mrb[0].mxu0 %v1067
      %v1157 = vpop.f32.mrb[0].mxu0
      %v1158 = vadd.f32 0.0, %v1157
      %v1159 = vpop.f32.mrb[0].mxu0
      %v1160 = vpop.f32.mrb[0].mxu0
      %v1161 = vadd.f32 0.0, %v1160
      %v1162 = vpop.f32.mrb[0].mxu0
      %1163 = vmatprep.mubr.bf16.mxu0 0
      %1164 = vmatmul.mubr.bf16.gmra.mrb[0].mxu0 %v1070
      %v1165 = vpop.f32.mrb[0].mxu0
      %v1166 = vadd.f32 0.0, %v1165
      %v1167 = vpop.f32.mrb[0].mxu0
      %v1168 = vpop.f32.mrb[0].mxu0
      %v1169 = vadd.f32 0.0, %v1168
      %v1170 = vpop.f32.mrb[0].mxu0
      %1171 = vmatprep.mubr.bf16.mxu0 0
      %1172 = vmatmul.mubr.bf16.gmra.mrb[0].mxu0 %v1073
      %v1173 = vpop.f32.mrb[0].mxu0
      %v1174 = vadd.f32 0.0, %v1173
      %v1175 = vpop.f32.mrb[0].mxu0
      %v1176 = vpop.f32.mrb[0].mxu0
      %v1177 = vadd.f32 0.0, %v1176
      %v1178 = vpop.f32.mrb[0].mxu0
      %1179 = vmatprep.mubr.bf16.mxu0 0
      %1180 = vmatmul.mubr.bf16.gmra.mrb[0].mxu0 %v1076
      %v1181 = vpop.f32.mrb[0].mxu0
      %v1182 = vadd.f32 0.0, %v1181
      %v1183 = vpop.f32.mrb[0].mxu0
      %v1184 = vpop.f32.mrb[0].mxu0
      %v1185 = vadd.f32 0.0, %v1184
      %v1186 = vpop.f32.mrb[0].mxu0
      %1187 = vmatprep.mubr.bf16.mxu0 0
      %1188 = vmatmul.mubr.bf16.gmra.mrb[0].mxu0 %v1079
      %v1189 = vpop.f32.mrb[0].mxu0
      %v1190 = vadd.f32 0.0, %v1189
      %v1191 = vpop.f32.mrb[0].mxu0
      %v1192 = vpop.f32.mrb[0].mxu0
      %v1193 = vadd.f32 0.0, %v1192
      %v1194 = vpop.f32.mrb[0].mxu0
      %1195 = vmatprep.mubr.bf16.mxu0 0
      %1196 = vmatmul.mubr.bf16.gmra.mrb[0].mxu0 %v1082
      %v1197 = vpop.f32.mrb[0].mxu0
      %v1198 = vadd.f32 0.0, %v1197
      %v1199 = vpop.f32.mrb[0].mxu0
      %v1200 = vpop.f32.mrb[0].mxu0
      %v1201 = vadd.f32 0.0, %v1200
      %v1202 = vpop.f32.mrb[0].mxu0
      %1203 = vmatprep.mubr.bf16.mxu0 0
      %1204 = vmatmul.mubr.bf16.gmra.mrb[0].mxu0 %v1085
      %v1205 = vpop.f32.mrb[0].mxu0
      %v1206 = vadd.f32 0.0, %v1205
      %v1207 = vpop.f32.mrb[0].mxu0
      %v1208 = vpop.f32.mrb[0].mxu0
      %v1209 = vadd.f32 0.0, %v1208
      %v1210 = vpop.f32.mrb[0].mxu0
      %1211 = vmatprep.mubr.bf16.mxu0 0
      %1212 = vmatmul.mubr.bf16.gmra.mrb[0].mxu0 %v1088
      %v1213 = vpop.f32.mrb[0].mxu0
      %v1214 = vadd.f32 0.0, %v1213
      %v1215 = vpop.f32.mrb[0].mxu0
      %v1216 = vpop.f32.mrb[0].mxu0
      %v1217 = vadd.f32 0.0, %v1216
      %v1218 = vpop.f32.mrb[0].mxu0
      %1219 = vmatprep.mubr.bf16.mxu0 0
      %1220 = vmatmul.mubr.bf16.gmra.mrb[0].mxu0 %v1091
      %v1221 = vpop.f32.mrb[0].mxu0
      %v1222 = vadd.f32 0.0, %v1221
      %v1223 = vpop.f32.mrb[0].mxu0
      %v1224 = vpop.f32.mrb[0].mxu0
      %v1225 = vadd.f32 0.0, %v1224
      %v1226 = vpop.f32.mrb[0].mxu0
      %1227 = vmatprep.mubr.bf16.mxu0 0
      %1228 = vmatmul.mubr.bf16.gmra.mrb[0].mxu0 %v1094
      %v1229 = vpop.f32.mrb[0].mxu0
      %v1230 = vadd.f32 0.0, %v1229
      %v1231 = vpop.f32.mrb[0].mxu0
      %v1232 = vpop.f32.mrb[0].mxu0
      %v1233 = vadd.f32 0.0, %v1232
      %v1234 = vpop.f32.mrb[0].mxu0
      %1235 = vmatprep.mubr.bf16.mxu0 0
      %1236 = vmatmul.mubr.bf16.gmra.mrb[0].mxu0 %v1097
      %v1237 = vpop.f32.mrb[0].mxu0
      %v1238 = vadd.f32 0.0, %v1237
      %v1239 = vpop.f32.mrb[0].mxu0
      %v1240 = vpop.f32.mrb[0].mxu0
      %v1241 = vadd.f32 0.0, %v1240
      %v1242 = vpop.f32.mrb[0].mxu0
      %1243 = vmatprep.mubr.bf16.mxu0 0
      %1244 = vmatmul.mubr.bf16.gmra.mrb[0].mxu0 %v1100
      %v1245 = vpop.f32.mrb[0].mxu0
      %v1246 = vadd.f32 0.0, %v1245
      %v1247 = vpop.f32.mrb[0].mxu0
      %v1248 = vpop.f32.mrb[0].mxu0
      %v1249 = vadd.f32 0.0, %v1248
      %v1250 = vpop.f32.mrb[0].mxu0
      %1251 = vmatprep.mubr.bf16.mxu0 0
      %1252 = vmatmul.mubr.bf16.gmra.mrb[0].mxu0 %v1103
      %v1253 = vpop.f32.mrb[0].mxu0
      %v1254 = vadd.f32 0.0, %v1253
      %v1255 = vpop.f32.mrb[0].mxu0
      %v1256 = vpop.f32.mrb[0].mxu0
      %v1257 = vadd.f32 0.0, %v1256
      %v1258 = vpop.f32.mrb[0].mxu0
      %1259 = vmatprep.mubr.bf16.mxu0 0
      %1260 = vmatmul.mubr.bf16.gmra.mrb[0].mxu0 %v1106
      %v1261 = vpop.f32.mrb[0].mxu0
      %v1262 = vadd.f32 0.0, %v1261
      %v1263 = vpop.f32.mrb[0].mxu0
      %v1264 = vpop.f32.mrb[0].mxu0
      %v1265 = vadd.f32 0.0, %v1264
      %v1266 = vpop.f32.mrb[0].mxu0
      %1267 = vmatprep.mubr.bf16.mxu0 0
      %1268 = vmatmul.mubr.bf16.gmra.mrb[0].mxu0 %v1109
      %v1269 = vpop.f32.mrb[0].mxu0
      %v1270 = vadd.f32 0.0, %v1269
      %v1271 = vpop.f32.mrb[0].mxu0
      %v1272 = vpop.f32.mrb[0].mxu0
      %v1273 = vadd.f32 0.0, %v1272
      %v1274 = vpop.f32.mrb[0].mxu0
      %1275 = vdwg.mxu0
      %s1276 = scalar_lea.vmem [#allocation3], 24
      %1277 = vst.msk [vmem:[%s1276 + $0x1] sm:$0xff] %vm523, %v1150
      %1278 = vst.msk [vmem:[%s1276 + $0x9] sm:$0xff] %vm523, %v1153
      %1279 = vst.msk [vmem:[%s1276 + $0x19] sm:$0xff] %vm523, %v1158
      %1280 = vst.msk [vmem:[%s1276 + $0x21] sm:$0xff] %vm523, %v1161
      %1281 = vst.msk [vmem:[%s1276 + $0x31] sm:$0xff] %vm523, %v1166
      %1282 = vst.msk [vmem:[%s1276 + $0x39] sm:$0xff] %vm523, %v1169
      %1283 = vst.msk [vmem:[%s1276 + $0x49] sm:$0xff] %vm523, %v1174
      %1284 = vst.msk [vmem:[%s1276 + $0x51] sm:$0xff] %vm523, %v1177
      %1285 = vst.msk [vmem:[%s1276 + $0x61] sm:$0xff] %vm523, %v1182
      %1286 = vst.msk [vmem:[%s1276 + $0x69] sm:$0xff] %vm523, %v1185
      %1287 = vst.msk [vmem:[%s1276 + $0x79] sm:$0xff] %vm523, %v1190
      %1288 = vst.msk [vmem:[%s1276 + $0x81] sm:$0xff] %vm523, %v1193
      %1289 = vst.msk [vmem:[%s1276 + $0x91] sm:$0xff] %vm523, %v1198
      %1290 = vst.msk [vmem:[%s1276 + $0x99] sm:$0xff] %vm523, %v1201
      %1291 = vst.msk [vmem:[%s1276 + $0xa9] sm:$0xff] %vm523, %v1206
      %1292 = vst.msk [vmem:[%s1276 + $0xb1] sm:$0xff] %vm523, %v1209
      %1293 = vst.msk [vmem:[%s1276 + $0xc1] sm:$0xff] %vm523, %v1214
      %1294 = vst.msk [vmem:[%s1276 + $0xc9] sm:$0xff] %vm523, %v1217
      %1295 = vst.msk [vmem:[%s1276 + $0xd9] sm:$0xff] %vm523, %v1222
      %1296 = vst.msk [vmem:[%s1276 + $0xe1] sm:$0xff] %vm523, %v1225
      %1297 = vst.msk [vmem:[%s1276 + $0xf1] sm:$0xff] %vm523, %v1230
      %1298 = vst.msk [vmem:[%s1276 + $0xf9] sm:$0xff] %vm523, %v1233
      %1299 = vst.msk [vmem:[%s1276 + $0x109] sm:$0xff] %vm523, %v1238
      %1300 = vst.msk [vmem:[%s1276 + $0x111] sm:$0xff] %vm523, %v1241
      %1301 = vst.msk [vmem:[%s1276 + $0x121] sm:$0xff] %vm523, %v1246
      %1302 = vst.msk [vmem:[%s1276 + $0x129] sm:$0xff] %vm523, %v1249
      %1303 = vst.msk [vmem:[%s1276 + $0x139] sm:$0xff] %vm523, %v1254
      %1304 = vst.msk [vmem:[%s1276 + $0x141] sm:$0xff] %vm523, %v1257
      %1305 = vst.msk [vmem:[%s1276 + $0x151] sm:$0xff] %vm523, %v1262
      %1306 = vst.msk [vmem:[%s1276 + $0x159] sm:$0xff] %vm523, %v1265
      %1307 = vst.msk [vmem:[%s1276 + $0x169] sm:$0xff] %vm523, %v1270
      %1308 = vst.msk [vmem:[%s1276 + $0x171] sm:$0xff] %vm523, %v1273
      %v1309 = vld [vmem:[#allocation3] sm:$0xff]
      %v1310 = vld [vmem:[#allocation3 + $0x8] sm:$0xff]
      %v1311 = vld [vmem:[#allocation3 + $0x18] sm:$0xff]
      %v1312 = vld [vmem:[#allocation3 + $0x20] sm:$0xff]
      %v1313 = vld [vmem:[#allocation3 + $0x30] sm:$0xff]
      %v1314 = vld [vmem:[#allocation3 + $0x38] sm:$0xff]
      %v1315 = vld [vmem:[#allocation3 + $0x48] sm:$0xff]
      %v1316 = vld [vmem:[#allocation3 + $0x50] sm:$0xff]
      %v1317 = vld [vmem:[#allocation3 + $0x60] sm:$0xff]
      %v1318 = vld [vmem:[#allocation3 + $0x68] sm:$0xff]
      %v1319 = vld [vmem:[#allocation3 + $0x78] sm:$0xff]
      %v1320 = vld [vmem:[#allocation3 + $0x80] sm:$0xff]
      %v1321 = vld [vmem:[#allocation3 + $0x90] sm:$0xff]
      %v1322 = vld [vmem:[#allocation3 + $0x98] sm:$0xff]
      %v1323 = vld [vmem:[#allocation3 + $0xa8] sm:$0xff]
      %v1324 = vld [vmem:[#allocation3 + $0xb0] sm:$0xff]
      %v1325 = vld [vmem:[#allocation3 + $0xc0] sm:$0xff]
      %v1326 = vld [vmem:[#allocation3 + $0xc8] sm:$0xff]
      %v1327 = vld [vmem:[#allocation3 + $0xd8] sm:$0xff]
      %v1328 = vld [vmem:[#allocation3 + $0xe0] sm:$0xff]
      %v1329 = vld [vmem:[#allocation3 + $0xf0] sm:$0xff]
      %v1330 = vld [vmem:[#allocation3 + $0xf8] sm:$0xff]
      %v1331 = vld [vmem:[#allocation3 + $0x108] sm:$0xff]
      %v1332 = vld [vmem:[#allocation3 + $0x110] sm:$0xff]
      %v1333 = vld [vmem:[#allocation3 + $0x120] sm:$0xff]
      %v1334 = vld [vmem:[#allocation3 + $0x128] sm:$0xff]
      %v1335 = vld [vmem:[#allocation3 + $0x138] sm:$0xff]
      %v1336 = vld [vmem:[#allocation3 + $0x140] sm:$0xff]
      %v1337 = vld [vmem:[#allocation3 + $0x150] sm:$0xff]
      %v1338 = vld [vmem:[#allocation3 + $0x158] sm:$0xff]
      %v1339 = vld [vmem:[#allocation3 + $0x168] sm:$0xff]
      %v1340 = vld [vmem:[#allocation3 + $0x170] sm:$0xff]
      %v1341 = vadd.f32 %v1309, 0.0
      %v1342 = vadd.f32 %v1310, 0.0
      %v1343 = vadd.f32 %v1311, 0.0
      %v1344 = vadd.f32 %v1312, 0.0
      %v1345 = vadd.f32 %v1313, 0.0
      %v1346 = vadd.f32 %v1314, 0.0
      %v1347 = vadd.f32 %v1315, 0.0
      %v1348 = vadd.f32 %v1316, 0.0
      %v1349 = vadd.f32 %v1317, 0.0
      %v1350 = vadd.f32 %v1318, 0.0
      %v1351 = vadd.f32 %v1319, 0.0
      %v1352 = vadd.f32 %v1320, 0.0
      %v1353 = vadd.f32 %v1321, 0.0
      %v1354 = vadd.f32 %v1322, 0.0
      %v1355 = vadd.f32 %v1323, 0.0
      %v1356 = vadd.f32 %v1324, 0.0
      %v1357 = vadd.f32 %v1325, 0.0
      %v1358 = vadd.f32 %v1326, 0.0
      %v1359 = vadd.f32 %v1327, 0.0
      %v1360 = vadd.f32 %v1328, 0.0
      %v1361 = vadd.f32 %v1329, 0.0
      %v1362 = vadd.f32 %v1330, 0.0
      %v1363 = vadd.f32 %v1331, 0.0
      %v1364 = vadd.f32 %v1332, 0.0
      %v1365 = vadd.f32 %v1333, 0.0
      %v1366 = vadd.f32 %v1334, 0.0
      %v1367 = vadd.f32 %v1335, 0.0
      %v1368 = vadd.f32 %v1336, 0.0
      %v1369 = vadd.f32 %v1337, 0.0
      %v1370 = vadd.f32 %v1338, 0.0
      %v1371 = vadd.f32 %v1339, 0.0
      %v1372 = vadd.f32 %v1340, 0.0
      %v1373 = vld [vmem:[#allocation3 + $0x1] sm:$0xff]
      %v1374 = vld [vmem:[#allocation3 + $0x9] sm:$0xff]
      %v1375 = vld [vmem:[#allocation3 + $0x19] sm:$0xff]
      %v1376 = vld [vmem:[#allocation3 + $0x21] sm:$0xff]
      %v1377 = vld [vmem:[#allocation3 + $0x31] sm:$0xff]
      %v1378 = vld [vmem:[#allocation3 + $0x39] sm:$0xff]
      %v1379 = vld [vmem:[#allocation3 + $0x49] sm:$0xff]
      %v1380 = vld [vmem:[#allocation3 + $0x51] sm:$0xff]
      %v1381 = vld [vmem:[#allocation3 + $0x61] sm:$0xff]
      %v1382 = vld [vmem:[#allocation3 + $0x69] sm:$0xff]
      %v1383 = vld [vmem:[#allocation3 + $0x79] sm:$0xff]
      %v1384 = vld [vmem:[#allocation3 + $0x81] sm:$0xff]
      %v1385 = vld [vmem:[#allocation3 + $0x91] sm:$0xff]
      %v1386 = vld [vmem:[#allocation3 + $0x99] sm:$0xff]
      %v1387 = vld [vmem:[#allocation3 + $0xa9] sm:$0xff]
      %v1388 = vld [vmem:[#allocation3 + $0xb1] sm:$0xff]
      %v1389 = vld [vmem:[#allocation3 + $0xc1] sm:$0xff]
      %v1390 = vld [vmem:[#allocation3 + $0xc9] sm:$0xff]
      %v1391 = vld [vmem:[#allocation3 + $0xd9] sm:$0xff]
      %v1392 = vld [vmem:[#allocation3 + $0xe1] sm:$0xff]
      %v1393 = vld [vmem:[#allocation3 + $0xf1] sm:$0xff]
      %v1394 = vld [vmem:[#allocation3 + $0xf9] sm:$0xff]
      %v1395 = vld [vmem:[#allocation3 + $0x109] sm:$0xff]
      %v1396 = vld [vmem:[#allocation3 + $0x111] sm:$0xff]
      %v1397 = vld [vmem:[#allocation3 + $0x121] sm:$0xff]
      %v1398 = vld [vmem:[#allocation3 + $0x129] sm:$0xff]
      %v1399 = vld [vmem:[#allocation3 + $0x139] sm:$0xff]
      %v1400 = vld [vmem:[#allocation3 + $0x141] sm:$0xff]
      %v1401 = vld [vmem:[#allocation3 + $0x151] sm:$0xff]
      %v1402 = vld [vmem:[#allocation3 + $0x159] sm:$0xff]
      %v1403 = vld [vmem:[#allocation3 + $0x169] sm:$0xff]
      %v1404 = vld [vmem:[#allocation3 + $0x171] sm:$0xff]
      %1437 = vrot.lane.b32.xlu0 %v1373, 124
      %v1438 = vpop.permute.xlu0 %1437
      %1439 = vrot.lane.b32.xlu0 %v1374, 124
      %v1440 = vpop.permute.xlu0 %1439
      %1441 = vrot.lane.b32.xlu0 %v1375, 124
      %v1442 = vpop.permute.xlu0 %1441
      %1443 = vrot.lane.b32.xlu0 %v1376, 124
      %v1444 = vpop.permute.xlu0 %1443
      %1445 = vrot.lane.b32.xlu0 %v1377, 124
      %v1446 = vpop.permute.xlu0 %1445
      %1447 = vrot.lane.b32.xlu0 %v1378, 124
      %v1448 = vpop.permute.xlu0 %1447
      %1449 = vrot.lane.b32.xlu0 %v1379, 124
      %v1450 = vpop.permute.xlu0 %1449
      %1451 = vrot.lane.b32.xlu0 %v1380, 124
      %v1452 = vpop.permute.xlu0 %1451
      %1453 = vrot.lane.b32.xlu0 %v1381, 124
      %v1454 = vpop.permute.xlu0 %1453
      %1455 = vrot.lane.b32.xlu0 %v1382, 124
      %v1456 = vpop.permute.xlu0 %1455
      %1457 = vrot.lane.b32.xlu0 %v1383, 124
      %v1458 = vpop.permute.xlu0 %1457
      %1459 = vrot.lane.b32.xlu0 %v1384, 124
      %v1460 = vpop.permute.xlu0 %1459
      %1461 = vrot.lane.b32.xlu0 %v1385, 124
      %v1462 = vpop.permute.xlu0 %1461
      %1463 = vrot.lane.b32.xlu0 %v1386, 124
      %v1464 = vpop.permute.xlu0 %1463
      %1465 = vrot.lane.b32.xlu0 %v1387, 124
      %v1466 = vpop.permute.xlu0 %1465
      %1467 = vrot.lane.b32.xlu0 %v1388, 124
      %v1468 = vpop.permute.xlu0 %1467
      %1469 = vrot.lane.b32.xlu0 %v1389, 124
      %v1470 = vpop.permute.xlu0 %1469
      %1471 = vrot.lane.b32.xlu0 %v1390, 124
      %v1472 = vpop.permute.xlu0 %1471
      %1473 = vrot.lane.b32.xlu0 %v1391, 124
      %v1474 = vpop.permute.xlu0 %1473
      %1475 = vrot.lane.b32.xlu0 %v1392, 124
      %v1476 = vpop.permute.xlu0 %1475
      %1477 = vrot.lane.b32.xlu0 %v1393, 124
      %v1478 = vpop.permute.xlu0 %1477
      %1479 = vrot.lane.b32.xlu0 %v1394, 124
      %v1480 = vpop.permute.xlu0 %1479
      %1481 = vrot.lane.b32.xlu0 %v1395, 124
      %v1482 = vpop.permute.xlu0 %1481
      %1483 = vrot.lane.b32.xlu0 %v1396, 124
      %v1484 = vpop.permute.xlu0 %1483
      %1485 = vrot.lane.b32.xlu0 %v1397, 124
      %v1486 = vpop.permute.xlu0 %1485
      %1487 = vrot.lane.b32.xlu0 %v1398, 124
      %v1488 = vpop.permute.xlu0 %1487
      %1489 = vrot.lane.b32.xlu0 %v1399, 124
      %v1490 = vpop.permute.xlu0 %1489
      %1491 = vrot.lane.b32.xlu0 %v1400, 124
      %v1492 = vpop.permute.xlu0 %1491
      %1493 = vrot.lane.b32.xlu0 %v1401, 124
      %v1494 = vpop.permute.xlu0 %1493
      %1495 = vrot.lane.b32.xlu0 %v1402, 124
      %v1496 = vpop.permute.xlu0 %1495
      %1497 = vrot.lane.b32.xlu0 %v1403, 124
      %v1498 = vpop.permute.xlu0 %1497
      %1499 = vrot.lane.b32.xlu0 %v1404, 124
      %v1500 = vpop.permute.xlu0 %1499
      %v1533 = vadd.f32 %v1341, %v1438
      %v1534 = vadd.f32 %v1342, %v1440
      %v1535 = vadd.f32 %v1343, %v1442
      %v1536 = vadd.f32 %v1344, %v1444
      %v1537 = vadd.f32 %v1345, %v1446
      %v1538 = vadd.f32 %v1346, %v1448
      %v1539 = vadd.f32 %v1347, %v1450
      %v1540 = vadd.f32 %v1348, %v1452
      %v1541 = vadd.f32 %v1349, %v1454
      %v1542 = vadd.f32 %v1350, %v1456
      %v1543 = vadd.f32 %v1351, %v1458
      %v1544 = vadd.f32 %v1352, %v1460
      %v1545 = vadd.f32 %v1353, %v1462
      %v1546 = vadd.f32 %v1354, %v1464
      %v1547 = vadd.f32 %v1355, %v1466
      %v1548 = vadd.f32 %v1356, %v1468
      %v1549 = vadd.f32 %v1357, %v1470
      %v1550 = vadd.f32 %v1358, %v1472
      %v1551 = vadd.f32 %v1359, %v1474
      %v1552 = vadd.f32 %v1360, %v1476
      %v1553 = vadd.f32 %v1361, %v1478
      %v1554 = vadd.f32 %v1362, %v1480
      %v1555 = vadd.f32 %v1363, %v1482
      %v1556 = vadd.f32 %v1364, %v1484
      %v1557 = vadd.f32 %v1365, %v1486
      %v1558 = vadd.f32 %v1366, %v1488
      %v1559 = vadd.f32 %v1367, %v1490
      %v1560 = vadd.f32 %v1368, %v1492
      %v1561 = vadd.f32 %v1369, %v1494
      %v1562 = vadd.f32 %v1370, %v1496
      %v1563 = vadd.f32 %v1371, %v1498
      %v1564 = vadd.f32 %v1372, %v1500
      %v1565 = vld [vmem:[#allocation3 + $0x2] sm:$0xff]
      %v1566 = vld [vmem:[#allocation3 + $0xa] sm:$0xff]
      %v1567 = vld [vmem:[#allocation3 + $0x1a] sm:$0xff]
      %v1568 = vld [vmem:[#allocation3 + $0x22] sm:$0xff]
      %v1569 = vld [vmem:[#allocation3 + $0x32] sm:$0xff]
      %v1570 = vld [vmem:[#allocation3 + $0x3a] sm:$0xff]
      %v1571 = vld [vmem:[#allocation3 + $0x4a] sm:$0xff]
      %v1572 = vld [vmem:[#allocation3 + $0x52] sm:$0xff]
      %v1573 = vld [vmem:[#allocation3 + $0x62] sm:$0xff]
      %v1574 = vld [vmem:[#allocation3 + $0x6a] sm:$0xff]
      %v1575 = vld [vmem:[#allocation3 + $0x7a] sm:$0xff]
      %v1576 = vld [vmem:[#allocation3 + $0x82] sm:$0xff]
      %v1577 = vld [vmem:[#allocation3 + $0x92] sm:$0xff]
      %v1578 = vld [vmem:[#allocation3 + $0x9a] sm:$0xff]
      %v1579 = vld [vmem:[#allocation3 + $0xaa] sm:$0xff]
      %v1580 = vld [vmem:[#allocation3 + $0xb2] sm:$0xff]
      %v1581 = vld [vmem:[#allocation3 + $0xc2] sm:$0xff]
      %v1582 = vld [vmem:[#allocation3 + $0xca] sm:$0xff]
      %v1583 = vld [vmem:[#allocation3 + $0xda] sm:$0xff]
      %v1584 = vld [vmem:[#allocation3 + $0xe2] sm:$0xff]
      %v1585 = vld [vmem:[#allocation3 + $0xf2] sm:$0xff]
      %v1586 = vld [vmem:[#allocation3 + $0xfa] sm:$0xff]
      %v1587 = vld [vmem:[#allocation3 + $0x10a] sm:$0xff]
      %v1588 = vld [vmem:[#allocation3 + $0x112] sm:$0xff]
      %v1589 = vld [vmem:[#allocation3 + $0x122] sm:$0xff]
      %v1590 = vld [vmem:[#allocation3 + $0x12a] sm:$0xff]
      %v1591 = vld [vmem:[#allocation3 + $0x13a] sm:$0xff]
      %v1592 = vld [vmem:[#allocation3 + $0x142] sm:$0xff]
      %v1593 = vld [vmem:[#allocation3 + $0x152] sm:$0xff]
      %v1594 = vld [vmem:[#allocation3 + $0x15a] sm:$0xff]
      %v1595 = vld [vmem:[#allocation3 + $0x16a] sm:$0xff]
      %v1596 = vld [vmem:[#allocation3 + $0x172] sm:$0xff]
      %1629 = vrot.lane.b32.xlu0 %v1565, 120
      %v1630 = vpop.permute.xlu0 %1629
      %1631 = vrot.lane.b32.xlu0 %v1566, 120
      %v1632 = vpop.permute.xlu0 %1631
      %1633 = vrot.lane.b32.xlu0 %v1567, 120
      %v1634 = vpop.permute.xlu0 %1633
      %1635 = vrot.lane.b32.xlu0 %v1568, 120
      %v1636 = vpop.permute.xlu0 %1635
      %1637 = vrot.lane.b32.xlu0 %v1569, 120
      %v1638 = vpop.permute.xlu0 %1637
      %1639 = vrot.lane.b32.xlu0 %v1570, 120
      %v1640 = vpop.permute.xlu0 %1639
      %1641 = vrot.lane.b32.xlu0 %v1571, 120
      %v1642 = vpop.permute.xlu0 %1641
      %1643 = vrot.lane.b32.xlu0 %v1572, 120
      %v1644 = vpop.permute.xlu0 %1643
      %1645 = vrot.lane.b32.xlu0 %v1573, 120
      %v1646 = vpop.permute.xlu0 %1645
      %1647 = vrot.lane.b32.xlu0 %v1574, 120
      %v1648 = vpop.permute.xlu0 %1647
      %1649 = vrot.lane.b32.xlu0 %v1575, 120
      %v1650 = vpop.permute.xlu0 %1649
      %1651 = vrot.lane.b32.xlu0 %v1576, 120
      %v1652 = vpop.permute.xlu0 %1651
      %1653 = vrot.lane.b32.xlu0 %v1577, 120
      %v1654 = vpop.permute.xlu0 %1653
      %1655 = vrot.lane.b32.xlu0 %v1578, 120
      %v1656 = vpop.permute.xlu0 %1655
      %1657 = vrot.lane.b32.xlu0 %v1579, 120
      %v1658 = vpop.permute.xlu0 %1657
      %1659 = vrot.lane.b32.xlu0 %v1580, 120
      %v1660 = vpop.permute.xlu0 %1659
      %1661 = vrot.lane.b32.xlu0 %v1581, 120
      %v1662 = vpop.permute.xlu0 %1661
      %1663 = vrot.lane.b32.xlu0 %v1582, 120
      %v1664 = vpop.permute.xlu0 %1663
      %1665 = vrot.lane.b32.xlu0 %v1583, 120
      %v1666 = vpop.permute.xlu0 %1665
      %1667 = vrot.lane.b32.xlu0 %v1584, 120
      %v1668 = vpop.permute.xlu0 %1667
      %1669 = vrot.lane.b32.xlu0 %v1585, 120
      %v1670 = vpop.permute.xlu0 %1669
      %1671 = vrot.lane.b32.xlu0 %v1586, 120
      %v1672 = vpop.permute.xlu0 %1671
      %1673 = vrot.lane.b32.xlu0 %v1587, 120
      %v1674 = vpop.permute.xlu0 %1673
      %1675 = vrot.lane.b32.xlu0 %v1588, 120
      %v1676 = vpop.permute.xlu0 %1675
      %1677 = vrot.lane.b32.xlu0 %v1589, 120
      %v1678 = vpop.permute.xlu0 %1677
      %1679 = vrot.lane.b32.xlu0 %v1590, 120
      %v1680 = vpop.permute.xlu0 %1679
      %1681 = vrot.lane.b32.xlu0 %v1591, 120
      %v1682 = vpop.permute.xlu0 %1681
      %1683 = vrot.lane.b32.xlu0 %v1592, 120
      %v1684 = vpop.permute.xlu0 %1683
      %1685 = vrot.lane.b32.xlu0 %v1593, 120
      %v1686 = vpop.permute.xlu0 %1685
      %1687 = vrot.lane.b32.xlu0 %v1594, 120
      %v1688 = vpop.permute.xlu0 %1687
      %1689 = vrot.lane.b32.xlu0 %v1595, 120
      %v1690 = vpop.permute.xlu0 %1689
      %1691 = vrot.lane.b32.xlu0 %v1596, 120
      %v1692 = vpop.permute.xlu0 %1691
      %v1725 = vadd.f32 %v1533, %v1630
      %v1726 = vadd.f32 %v1534, %v1632
      %v1727 = vadd.f32 %v1535, %v1634
      %v1728 = vadd.f32 %v1536, %v1636
      %v1729 = vadd.f32 %v1537, %v1638
      %v1730 = vadd.f32 %v1538, %v1640
      %v1731 = vadd.f32 %v1539, %v1642
      %v1732 = vadd.f32 %v1540, %v1644
      %v1733 = vadd.f32 %v1541, %v1646
      %v1734 = vadd.f32 %v1542, %v1648
      %v1735 = vadd.f32 %v1543, %v1650
      %v1736 = vadd.f32 %v1544, %v1652
      %v1737 = vadd.f32 %v1545, %v1654
      %v1738 = vadd.f32 %v1546, %v1656
      %v1739 = vadd.f32 %v1547, %v1658
      %v1740 = vadd.f32 %v1548, %v1660
      %v1741 = vadd.f32 %v1549, %v1662
      %v1742 = vadd.f32 %v1550, %v1664
      %v1743 = vadd.f32 %v1551, %v1666
      %v1744 = vadd.f32 %v1552, %v1668
      %v1745 = vadd.f32 %v1553, %v1670
      %v1746 = vadd.f32 %v1554, %v1672
      %v1747 = vadd.f32 %v1555, %v1674
      %v1748 = vadd.f32 %v1556, %v1676
      %v1749 = vadd.f32 %v1557, %v1678
      %v1750 = vadd.f32 %v1558, %v1680
      %v1751 = vadd.f32 %v1559, %v1682
      %v1752 = vadd.f32 %v1560, %v1684
      %v1753 = vadd.f32 %v1561, %v1686
      %v1754 = vadd.f32 %v1562, %v1688
      %v1755 = vadd.f32 %v1563, %v1690
      %v1756 = vadd.f32 %v1564, %v1692
      %v1757 = vld [vmem:[%s1276] sm:$0xff]
      %v1758 = vld [vmem:[%s1276 + $0x8] sm:$0xff]
      %v1759 = vld [vmem:[%s1276 + $0x18] sm:$0xff]
      %v1760 = vld [vmem:[%s1276 + $0x20] sm:$0xff]
      %v1761 = vld [vmem:[%s1276 + $0x30] sm:$0xff]
      %v1762 = vld [vmem:[%s1276 + $0x38] sm:$0xff]
      %v1763 = vld [vmem:[%s1276 + $0x48] sm:$0xff]
      %v1764 = vld [vmem:[%s1276 + $0x50] sm:$0xff]
      %v1765 = vld [vmem:[%s1276 + $0x60] sm:$0xff]
      %v1766 = vld [vmem:[%s1276 + $0x68] sm:$0xff]
      %v1767 = vld [vmem:[%s1276 + $0x78] sm:$0xff]
      %v1768 = vld [vmem:[%s1276 + $0x80] sm:$0xff]
      %v1769 = vld [vmem:[%s1276 + $0x90] sm:$0xff]
      %v1770 = vld [vmem:[%s1276 + $0x98] sm:$0xff]
      %v1771 = vld [vmem:[%s1276 + $0xa8] sm:$0xff]
      %v1772 = vld [vmem:[%s1276 + $0xb0] sm:$0xff]
      %v1773 = vld [vmem:[%s1276 + $0xc0] sm:$0xff]
      %v1774 = vld [vmem:[%s1276 + $0xc8] sm:$0xff]
      %v1775 = vld [vmem:[%s1276 + $0xd8] sm:$0xff]
      %v1776 = vld [vmem:[%s1276 + $0xe0] sm:$0xff]
      %v1777 = vld [vmem:[%s1276 + $0xf0] sm:$0xff]
      %v1778 = vld [vmem:[%s1276 + $0xf8] sm:$0xff]
      %v1779 = vld [vmem:[%s1276 + $0x108] sm:$0xff]
      %v1780 = vld [vmem:[%s1276 + $0x110] sm:$0xff]
      %v1781 = vld [vmem:[%s1276 + $0x120] sm:$0xff]
      %v1782 = vld [vmem:[%s1276 + $0x128] sm:$0xff]
      %v1783 = vld [vmem:[%s1276 + $0x138] sm:$0xff]
      %v1784 = vld [vmem:[%s1276 + $0x140] sm:$0xff]
      %v1785 = vld [vmem:[%s1276 + $0x150] sm:$0xff]
      %v1786 = vld [vmem:[%s1276 + $0x158] sm:$0xff]
      %v1787 = vld [vmem:[%s1276 + $0x168] sm:$0xff]
      %v1788 = vld [vmem:[%s1276 + $0x170] sm:$0xff]
      %1821 = vrot.lane.b32.xlu0 %v1757, 116
      %v1822 = vpop.permute.xlu0 %1821
      %1823 = vrot.lane.b32.xlu0 %v1758, 116
      %v1824 = vpop.permute.xlu0 %1823
      %1825 = vrot.lane.b32.xlu0 %v1759, 116
      %v1826 = vpop.permute.xlu0 %1825
      %1827 = vrot.lane.b32.xlu0 %v1760, 116
      %v1828 = vpop.permute.xlu0 %1827
      %1829 = vrot.lane.b32.xlu0 %v1761, 116
      %v1830 = vpop.permute.xlu0 %1829
      %1831 = vrot.lane.b32.xlu0 %v1762, 116
      %v1832 = vpop.permute.xlu0 %1831
      %1833 = vrot.lane.b32.xlu0 %v1763, 116
      %v1834 = vpop.permute.xlu0 %1833
      %1835 = vrot.lane.b32.xlu0 %v1764, 116
      %v1836 = vpop.permute.xlu0 %1835
      %1837 = vrot.lane.b32.xlu0 %v1765, 116
      %v1838 = vpop.permute.xlu0 %1837
      %1839 = vrot.lane.b32.xlu0 %v1766, 116
      %v1840 = vpop.permute.xlu0 %1839
      %1841 = vrot.lane.b32.xlu0 %v1767, 116
      %v1842 = vpop.permute.xlu0 %1841
      %1843 = vrot.lane.b32.xlu0 %v1768, 116
      %v1844 = vpop.permute.xlu0 %1843
      %1845 = vrot.lane.b32.xlu0 %v1769, 116
      %v1846 = vpop.permute.xlu0 %1845
      %1847 = vrot.lane.b32.xlu0 %v1770, 116
      %v1848 = vpop.permute.xlu0 %1847
      %1849 = vrot.lane.b32.xlu0 %v1771, 116
      %v1850 = vpop.permute.xlu0 %1849
      %1851 = vrot.lane.b32.xlu0 %v1772, 116
      %v1852 = vpop.permute.xlu0 %1851
      %1853 = vrot.lane.b32.xlu0 %v1773, 116
      %v1854 = vpop.permute.xlu0 %1853
      %1855 = vrot.lane.b32.xlu0 %v1774, 116
      %v1856 = vpop.permute.xlu0 %1855
      %1857 = vrot.lane.b32.xlu0 %v1775, 116
      %v1858 = vpop.permute.xlu0 %1857
      %1859 = vrot.lane.b32.xlu0 %v1776, 116
      %v1860 = vpop.permute.xlu0 %1859
      %1861 = vrot.lane.b32.xlu0 %v1777, 116
      %v1862 = vpop.permute.xlu0 %1861
      %1863 = vrot.lane.b32.xlu0 %v1778, 116
      %v1864 = vpop.permute.xlu0 %1863
      %1865 = vrot.lane.b32.xlu0 %v1779, 116
      %v1866 = vpop.permute.xlu0 %1865
      %1867 = vrot.lane.b32.xlu0 %v1780, 116
      %v1868 = vpop.permute.xlu0 %1867
      %1869 = vrot.lane.b32.xlu0 %v1781, 116
      %v1870 = vpop.permute.xlu0 %1869
      %1871 = vrot.lane.b32.xlu0 %v1782, 116
      %v1872 = vpop.permute.xlu0 %1871
      %1873 = vrot.lane.b32.xlu0 %v1783, 116
      %v1874 = vpop.permute.xlu0 %1873
      %1875 = vrot.lane.b32.xlu0 %v1784, 116
      %v1876 = vpop.permute.xlu0 %1875
      %1877 = vrot.lane.b32.xlu0 %v1785, 116
      %v1878 = vpop.permute.xlu0 %1877
      %1879 = vrot.lane.b32.xlu0 %v1786, 116
      %v1880 = vpop.permute.xlu0 %1879
      %1881 = vrot.lane.b32.xlu0 %v1787, 116
      %v1882 = vpop.permute.xlu0 %1881
      %1883 = vrot.lane.b32.xlu0 %v1788, 116
      %v1884 = vpop.permute.xlu0 %1883
      %v1917 = vadd.f32 %v1725, %v1822
      %v1918 = vadd.f32 %v1726, %v1824
      %v1919 = vadd.f32 %v1727, %v1826
      %v1920 = vadd.f32 %v1728, %v1828
      %v1921 = vadd.f32 %v1729, %v1830
      %v1922 = vadd.f32 %v1730, %v1832
      %v1923 = vadd.f32 %v1731, %v1834
      %v1924 = vadd.f32 %v1732, %v1836
      %v1925 = vadd.f32 %v1733, %v1838
      %v1926 = vadd.f32 %v1734, %v1840
      %v1927 = vadd.f32 %v1735, %v1842
      %v1928 = vadd.f32 %v1736, %v1844
      %v1929 = vadd.f32 %v1737, %v1846
      %v1930 = vadd.f32 %v1738, %v1848
      %v1931 = vadd.f32 %v1739, %v1850
      %v1932 = vadd.f32 %v1740, %v1852
      %v1933 = vadd.f32 %v1741, %v1854
      %v1934 = vadd.f32 %v1742, %v1856
      %v1935 = vadd.f32 %v1743, %v1858
      %v1936 = vadd.f32 %v1744, %v1860
      %v1937 = vadd.f32 %v1745, %v1862
      %v1938 = vadd.f32 %v1746, %v1864
      %v1939 = vadd.f32 %v1747, %v1866
      %v1940 = vadd.f32 %v1748, %v1868
      %v1941 = vadd.f32 %v1749, %v1870
      %v1942 = vadd.f32 %v1750, %v1872
      %v1943 = vadd.f32 %v1751, %v1874
      %v1944 = vadd.f32 %v1752, %v1876
      %v1945 = vadd.f32 %v1753, %v1878
      %v1946 = vadd.f32 %v1754, %v1880
      %v1947 = vadd.f32 %v1755, %v1882
      %v1948 = vadd.f32 %v1756, %v1884
      %v1949 = vld [vmem:[%s1276 + $0x1] sm:$0xff]
      %v1950 = vld [vmem:[%s1276 + $0x9] sm:$0xff]
      %v1951 = vld [vmem:[%s1276 + $0x19] sm:$0xff]
      %v1952 = vld [vmem:[%s1276 + $0x21] sm:$0xff]
      %v1953 = vld [vmem:[%s1276 + $0x31] sm:$0xff]
      %v1954 = vld [vmem:[%s1276 + $0x39] sm:$0xff]
      %v1955 = vld [vmem:[%s1276 + $0x49] sm:$0xff]
      %v1956 = vld [vmem:[%s1276 + $0x51] sm:$0xff]
      %v1957 = vld [vmem:[%s1276 + $0x61] sm:$0xff]
      %v1958 = vld [vmem:[%s1276 + $0x69] sm:$0xff]
      %v1959 = vld [vmem:[%s1276 + $0x79] sm:$0xff]
      %v1960 = vld [vmem:[%s1276 + $0x81] sm:$0xff]
      %v1961 = vld [vmem:[%s1276 + $0x91] sm:$0xff]
      %v1962 = vld [vmem:[%s1276 + $0x99] sm:$0xff]
      %v1963 = vld [vmem:[%s1276 + $0xa9] sm:$0xff]
      %v1964 = vld [vmem:[%s1276 + $0xb1] sm:$0xff]
      %v1965 = vld [vmem:[%s1276 + $0xc1] sm:$0xff]
      %v1966 = vld [vmem:[%s1276 + $0xc9] sm:$0xff]
      %v1967 = vld [vmem:[%s1276 + $0xd9] sm:$0xff]
      %v1968 = vld [vmem:[%s1276 + $0xe1] sm:$0xff]
      %v1969 = vld [vmem:[%s1276 + $0xf1] sm:$0xff]
      %v1970 = vld [vmem:[%s1276 + $0xf9] sm:$0xff]
      %v1971 = vld [vmem:[%s1276 + $0x109] sm:$0xff]
      %v1972 = vld [vmem:[%s1276 + $0x111] sm:$0xff]
      %v1973 = vld [vmem:[%s1276 + $0x121] sm:$0xff]
      %v1974 = vld [vmem:[%s1276 + $0x129] sm:$0xff]
      %v1975 = vld [vmem:[%s1276 + $0x139] sm:$0xff]
      %v1976 = vld [vmem:[%s1276 + $0x141] sm:$0xff]
      %v1977 = vld [vmem:[%s1276 + $0x151] sm:$0xff]
      %v1978 = vld [vmem:[%s1276 + $0x159] sm:$0xff]
      %v1979 = vld [vmem:[%s1276 + $0x169] sm:$0xff]
      %v1980 = vld [vmem:[%s1276 + $0x171] sm:$0xff]
      %2013 = vrot.lane.b32.xlu0 %v1949, 112
      %v2014 = vpop.permute.xlu0 %2013
      %2015 = vrot.lane.b32.xlu0 %v1950, 112
      %v2016 = vpop.permute.xlu0 %2015
      %2017 = vrot.lane.b32.xlu0 %v1951, 112
      %v2018 = vpop.permute.xlu0 %2017
      %2019 = vrot.lane.b32.xlu0 %v1952, 112
      %v2020 = vpop.permute.xlu0 %2019
      %2021 = vrot.lane.b32.xlu0 %v1953, 112
      %v2022 = vpop.permute.xlu0 %2021
      %2023 = vrot.lane.b32.xlu0 %v1954, 112
      %v2024 = vpop.permute.xlu0 %2023
      %2025 = vrot.lane.b32.xlu0 %v1955, 112
      %v2026 = vpop.permute.xlu0 %2025
      %2027 = vrot.lane.b32.xlu0 %v1956, 112
      %v2028 = vpop.permute.xlu0 %2027
      %2029 = vrot.lane.b32.xlu0 %v1957, 112
      %v2030 = vpop.permute.xlu0 %2029
      %2031 = vrot.lane.b32.xlu0 %v1958, 112
      %v2032 = vpop.permute.xlu0 %2031
      %2033 = vrot.lane.b32.xlu0 %v1959, 112
      %v2034 = vpop.permute.xlu0 %2033
      %2035 = vrot.lane.b32.xlu0 %v1960, 112
      %v2036 = vpop.permute.xlu0 %2035
      %2037 = vrot.lane.b32.xlu0 %v1961, 112
      %v2038 = vpop.permute.xlu0 %2037
      %2039 = vrot.lane.b32.xlu0 %v1962, 112
      %v2040 = vpop.permute.xlu0 %2039
      %2041 = vrot.lane.b32.xlu0 %v1963, 112
      %v2042 = vpop.permute.xlu0 %2041
      %2043 = vrot.lane.b32.xlu0 %v1964, 112
      %v2044 = vpop.permute.xlu0 %2043
      %2045 = vrot.lane.b32.xlu0 %v1965, 112
      %v2046 = vpop.permute.xlu0 %2045
      %2047 = vrot.lane.b32.xlu0 %v1966, 112
      %v2048 = vpop.permute.xlu0 %2047
      %2049 = vrot.lane.b32.xlu0 %v1967, 112
      %v2050 = vpop.permute.xlu0 %2049
      %2051 = vrot.lane.b32.xlu0 %v1968, 112
      %v2052 = vpop.permute.xlu0 %2051
      %2053 = vrot.lane.b32.xlu0 %v1969, 112
      %v2054 = vpop.permute.xlu0 %2053
      %2055 = vrot.lane.b32.xlu0 %v1970, 112
      %v2056 = vpop.permute.xlu0 %2055
      %2057 = vrot.lane.b32.xlu0 %v1971, 112
      %v2058 = vpop.permute.xlu0 %2057
      %2059 = vrot.lane.b32.xlu0 %v1972, 112
      %v2060 = vpop.permute.xlu0 %2059
      %2061 = vrot.lane.b32.xlu0 %v1973, 112
      %v2062 = vpop.permute.xlu0 %2061
      %2063 = vrot.lane.b32.xlu0 %v1974, 112
      %v2064 = vpop.permute.xlu0 %2063
      %2065 = vrot.lane.b32.xlu0 %v1975, 112
      %v2066 = vpop.permute.xlu0 %2065
      %2067 = vrot.lane.b32.xlu0 %v1976, 112
      %v2068 = vpop.permute.xlu0 %2067
      %2069 = vrot.lane.b32.xlu0 %v1977, 112
      %v2070 = vpop.permute.xlu0 %2069
      %2071 = vrot.lane.b32.xlu0 %v1978, 112
      %v2072 = vpop.permute.xlu0 %2071
      %2073 = vrot.lane.b32.xlu0 %v1979, 112
      %v2074 = vpop.permute.xlu0 %2073
      %2075 = vrot.lane.b32.xlu0 %v1980, 112
      %v2076 = vpop.permute.xlu0 %2075
      %v2109 = vadd.f32 %v1917, %v2014
      %v2110 = vadd.f32 %v1918, %v2016
      %v2111 = vadd.f32 %v1919, %v2018
      %v2112 = vadd.f32 %v1920, %v2020
      %v2113 = vadd.f32 %v1921, %v2022
      %v2114 = vadd.f32 %v1922, %v2024
      %v2115 = vadd.f32 %v1923, %v2026
      %v2116 = vadd.f32 %v1924, %v2028
      %v2117 = vadd.f32 %v1925, %v2030
      %v2118 = vadd.f32 %v1926, %v2032
      %v2119 = vadd.f32 %v1927, %v2034
      %v2120 = vadd.f32 %v1928, %v2036
      %v2121 = vadd.f32 %v1929, %v2038
      %v2122 = vadd.f32 %v1930, %v2040
      %v2123 = vadd.f32 %v1931, %v2042
      %v2124 = vadd.f32 %v1932, %v2044
      %v2125 = vadd.f32 %v1933, %v2046
      %v2126 = vadd.f32 %v1934, %v2048
      %v2127 = vadd.f32 %v1935, %v2050
      %v2128 = vadd.f32 %v1936, %v2052
      %v2129 = vadd.f32 %v1937, %v2054
      %v2130 = vadd.f32 %v1938, %v2056
      %v2131 = vadd.f32 %v1939, %v2058
      %v2132 = vadd.f32 %v1940, %v2060
      %v2133 = vadd.f32 %v1941, %v2062
      %v2134 = vadd.f32 %v1942, %v2064
      %v2135 = vadd.f32 %v1943, %v2066
      %v2136 = vadd.f32 %v1944, %v2068
      %v2137 = vadd.f32 %v1945, %v2070
      %v2138 = vadd.f32 %v1946, %v2072
      %v2139 = vadd.f32 %v1947, %v2074
      %v2140 = vadd.f32 %v1948, %v2076
      %v2141 = vld [vmem:[%s1276 + $0x2] sm:$0xff]
      %v2142 = vld [vmem:[%s1276 + $0xa] sm:$0xff]
      %v2143 = vld [vmem:[%s1276 + $0x1a] sm:$0xff]
      %v2144 = vld [vmem:[%s1276 + $0x22] sm:$0xff]
      %v2145 = vld [vmem:[%s1276 + $0x32] sm:$0xff]
      %v2146 = vld [vmem:[%s1276 + $0x3a] sm:$0xff]
      %v2147 = vld [vmem:[%s1276 + $0x4a] sm:$0xff]
      %v2148 = vld [vmem:[%s1276 + $0x52] sm:$0xff]
      %v2149 = vld [vmem:[%s1276 + $0x62] sm:$0xff]
      %v2150 = vld [vmem:[%s1276 + $0x6a] sm:$0xff]
      %v2151 = vld [vmem:[%s1276 + $0x7a] sm:$0xff]
      %v2152 = vld [vmem:[%s1276 + $0x82] sm:$0xff]
      %v2153 = vld [vmem:[%s1276 + $0x92] sm:$0xff]
      %v2154 = vld [vmem:[%s1276 + $0x9a] sm:$0xff]
      %v2155 = vld [vmem:[%s1276 + $0xaa] sm:$0xff]
      %v2156 = vld [vmem:[%s1276 + $0xb2] sm:$0xff]
      %v2157 = vld [vmem:[%s1276 + $0xc2] sm:$0xff]
      %v2158 = vld [vmem:[%s1276 + $0xca] sm:$0xff]
      %v2159 = vld [vmem:[%s1276 + $0xda] sm:$0xff]
      %v2160 = vld [vmem:[%s1276 + $0xe2] sm:$0xff]
      %v2161 = vld [vmem:[%s1276 + $0xf2] sm:$0xff]
      %v2162 = vld [vmem:[%s1276 + $0xfa] sm:$0xff]
      %v2163 = vld [vmem:[%s1276 + $0x10a] sm:$0xff]
      %v2164 = vld [vmem:[%s1276 + $0x112] sm:$0xff]
      %v2165 = vld [vmem:[%s1276 + $0x122] sm:$0xff]
      %v2166 = vld [vmem:[%s1276 + $0x12a] sm:$0xff]
      %v2167 = vld [vmem:[%s1276 + $0x13a] sm:$0xff]
      %v2168 = vld [vmem:[%s1276 + $0x142] sm:$0xff]
      %v2169 = vld [vmem:[%s1276 + $0x152] sm:$0xff]
      %v2170 = vld [vmem:[%s1276 + $0x15a] sm:$0xff]
      %v2171 = vld [vmem:[%s1276 + $0x16a] sm:$0xff]
      %v2172 = vld [vmem:[%s1276 + $0x172] sm:$0xff]
      %2205 = vrot.lane.b32.xlu0 %v2141, 108
      %v2206 = vpop.permute.xlu0 %2205
      %2207 = vrot.lane.b32.xlu0 %v2142, 108
      %v2208 = vpop.permute.xlu0 %2207
      %2209 = vrot.lane.b32.xlu0 %v2143, 108
      %v2210 = vpop.permute.xlu0 %2209
      %2211 = vrot.lane.b32.xlu0 %v2144, 108
      %v2212 = vpop.permute.xlu0 %2211
      %2213 = vrot.lane.b32.xlu0 %v2145, 108
      %v2214 = vpop.permute.xlu0 %2213
      %2215 = vrot.lane.b32.xlu0 %v2146, 108
      %v2216 = vpop.permute.xlu0 %2215
      %2217 = vrot.lane.b32.xlu0 %v2147, 108
      %v2218 = vpop.permute.xlu0 %2217
      %2219 = vrot.lane.b32.xlu0 %v2148, 108
      %v2220 = vpop.permute.xlu0 %2219
      %2221 = vrot.lane.b32.xlu0 %v2149, 108
      %v2222 = vpop.permute.xlu0 %2221
      %2223 = vrot.lane.b32.xlu0 %v2150, 108
      %v2224 = vpop.permute.xlu0 %2223
      %2225 = vrot.lane.b32.xlu0 %v2151, 108
      %v2226 = vpop.permute.xlu0 %2225
      %2227 = vrot.lane.b32.xlu0 %v2152, 108
      %v2228 = vpop.permute.xlu0 %2227
      %2229 = vrot.lane.b32.xlu0 %v2153, 108
      %v2230 = vpop.permute.xlu0 %2229
      %2231 = vrot.lane.b32.xlu0 %v2154, 108
      %v2232 = vpop.permute.xlu0 %2231
      %2233 = vrot.lane.b32.xlu0 %v2155, 108
      %v2234 = vpop.permute.xlu0 %2233
      %2235 = vrot.lane.b32.xlu0 %v2156, 108
      %v2236 = vpop.permute.xlu0 %2235
      %2237 = vrot.lane.b32.xlu0 %v2157, 108
      %v2238 = vpop.permute.xlu0 %2237
      %2239 = vrot.lane.b32.xlu0 %v2158, 108
      %v2240 = vpop.permute.xlu0 %2239
      %2241 = vrot.lane.b32.xlu0 %v2159, 108
      %v2242 = vpop.permute.xlu0 %2241
      %2243 = vrot.lane.b32.xlu0 %v2160, 108
      %v2244 = vpop.permute.xlu0 %2243
      %2245 = vrot.lane.b32.xlu0 %v2161, 108
      %v2246 = vpop.permute.xlu0 %2245
      %2247 = vrot.lane.b32.xlu0 %v2162, 108
      %v2248 = vpop.permute.xlu0 %2247
      %2249 = vrot.lane.b32.xlu0 %v2163, 108
      %v2250 = vpop.permute.xlu0 %2249
      %2251 = vrot.lane.b32.xlu0 %v2164, 108
      %v2252 = vpop.permute.xlu0 %2251
      %2253 = vrot.lane.b32.xlu0 %v2165, 108
      %v2254 = vpop.permute.xlu0 %2253
      %2255 = vrot.lane.b32.xlu0 %v2166, 108
      %v2256 = vpop.permute.xlu0 %2255
      %2257 = vrot.lane.b32.xlu0 %v2167, 108
      %v2258 = vpop.permute.xlu0 %2257
      %2259 = vrot.lane.b32.xlu0 %v2168, 108
      %v2260 = vpop.permute.xlu0 %2259
      %2261 = vrot.lane.b32.xlu0 %v2169, 108
      %v2262 = vpop.permute.xlu0 %2261
      %2263 = vrot.lane.b32.xlu0 %v2170, 108
      %v2264 = vpop.permute.xlu0 %2263
      %2265 = vrot.lane.b32.xlu0 %v2171, 108
      %v2266 = vpop.permute.xlu0 %2265
      %2267 = vrot.lane.b32.xlu0 %v2172, 108
      %v2268 = vpop.permute.xlu0 %2267
      %v2301 = vadd.f32 %v2109, %v2206
      %v2302 = vadd.f32 %v2110, %v2208
      %v2303 = vadd.f32 %v2111, %v2210
      %v2304 = vadd.f32 %v2112, %v2212
      %v2305 = vadd.f32 %v2113, %v2214
      %v2306 = vadd.f32 %v2114, %v2216
      %v2307 = vadd.f32 %v2115, %v2218
      %v2308 = vadd.f32 %v2116, %v2220
      %v2309 = vadd.f32 %v2117, %v2222
      %v2310 = vadd.f32 %v2118, %v2224
      %v2311 = vadd.f32 %v2119, %v2226
      %v2312 = vadd.f32 %v2120, %v2228
      %v2313 = vadd.f32 %v2121, %v2230
      %v2314 = vadd.f32 %v2122, %v2232
      %v2315 = vadd.f32 %v2123, %v2234
      %v2316 = vadd.f32 %v2124, %v2236
      %v2317 = vadd.f32 %v2125, %v2238
      %v2318 = vadd.f32 %v2126, %v2240
      %v2319 = vadd.f32 %v2127, %v2242
      %v2320 = vadd.f32 %v2128, %v2244
      %v2321 = vadd.f32 %v2129, %v2246
      %v2322 = vadd.f32 %v2130, %v2248
      %v2323 = vadd.f32 %v2131, %v2250
      %v2324 = vadd.f32 %v2132, %v2252
      %v2325 = vadd.f32 %v2133, %v2254
      %v2326 = vadd.f32 %v2134, %v2256
      %v2327 = vadd.f32 %v2135, %v2258
      %v2328 = vadd.f32 %v2136, %v2260
      %v2329 = vadd.f32 %v2137, %v2262
      %v2330 = vadd.f32 %v2138, %v2264
      %v2331 = vadd.f32 %v2139, %v2266
      %v2332 = vadd.f32 %v2140, %v2268
      %s2333 = scalar_lea.vmem [#allocation3], 48
      %v2334 = vld [vmem:[%s2333] sm:$0xff]
      %v2335 = vld [vmem:[%s2333 + $0x8] sm:$0xff]
      %v2336 = vld [vmem:[%s2333 + $0x18] sm:$0xff]
      %v2337 = vld [vmem:[%s2333 + $0x20] sm:$0xff]
      %v2338 = vld [vmem:[%s2333 + $0x30] sm:$0xff]
      %v2339 = vld [vmem:[%s2333 + $0x38] sm:$0xff]
      %v2340 = vld [vmem:[%s2333 + $0x48] sm:$0xff]
      %v2341 = vld [vmem:[%s2333 + $0x50] sm:$0xff]
      %v2342 = vld [vmem:[%s2333 + $0x60] sm:$0xff]
      %v2343 = vld [vmem:[%s2333 + $0x68] sm:$0xff]
      %v2344 = vld [vmem:[%s2333 + $0x78] sm:$0xff]
      %v2345 = vld [vmem:[%s2333 + $0x80] sm:$0xff]
      %v2346 = vld [vmem:[%s2333 + $0x90] sm:$0xff]
      %v2347 = vld [vmem:[%s2333 + $0x98] sm:$0xff]
      %v2348 = vld [vmem:[%s2333 + $0xa8] sm:$0xff]
      %v2349 = vld [vmem:[%s2333 + $0xb0] sm:$0xff]
      %v2350 = vld [vmem:[%s2333 + $0xc0] sm:$0xff]
      %v2351 = vld [vmem:[%s2333 + $0xc8] sm:$0xff]
      %v2352 = vld [vmem:[%s2333 + $0xd8] sm:$0xff]
      %v2353 = vld [vmem:[%s2333 + $0xe0] sm:$0xff]
      %v2354 = vld [vmem:[%s2333 + $0xf0] sm:$0xff]
      %v2355 = vld [vmem:[%s2333 + $0xf8] sm:$0xff]
      %v2356 = vld [vmem:[%s2333 + $0x108] sm:$0xff]
      %v2357 = vld [vmem:[%s2333 + $0x110] sm:$0xff]
      %v2358 = vld [vmem:[%s2333 + $0x120] sm:$0xff]
      %v2359 = vld [vmem:[%s2333 + $0x128] sm:$0xff]
      %v2360 = vld [vmem:[%s2333 + $0x138] sm:$0xff]
      %v2361 = vld [vmem:[%s2333 + $0x140] sm:$0xff]
      %v2362 = vld [vmem:[%s2333 + $0x150] sm:$0xff]
      %v2363 = vld [vmem:[%s2333 + $0x158] sm:$0xff]
      %v2364 = vld [vmem:[%s2333 + $0x168] sm:$0xff]
      %v2365 = vld [vmem:[%s2333 + $0x170] sm:$0xff]
      %2398 = vrot.lane.b32.xlu0 %v2334, 104
      %v2399 = vpop.permute.xlu0 %2398
      %2400 = vrot.lane.b32.xlu0 %v2335, 104
      %v2401 = vpop.permute.xlu0 %2400
      %2402 = vrot.lane.b32.xlu0 %v2336, 104
      %v2403 = vpop.permute.xlu0 %2402
      %2404 = vrot.lane.b32.xlu0 %v2337, 104
      %v2405 = vpop.permute.xlu0 %2404
      %2406 = vrot.lane.b32.xlu0 %v2338, 104
      %v2407 = vpop.permute.xlu0 %2406
      %2408 = vrot.lane.b32.xlu0 %v2339, 104
      %v2409 = vpop.permute.xlu0 %2408
      %2410 = vrot.lane.b32.xlu0 %v2340, 104
      %v2411 = vpop.permute.xlu0 %2410
      %2412 = vrot.lane.b32.xlu0 %v2341, 104
      %v2413 = vpop.permute.xlu0 %2412
      %2414 = vrot.lane.b32.xlu0 %v2342, 104
      %v2415 = vpop.permute.xlu0 %2414
      %2416 = vrot.lane.b32.xlu0 %v2343, 104
      %v2417 = vpop.permute.xlu0 %2416
      %2418 = vrot.lane.b32.xlu0 %v2344, 104
      %v2419 = vpop.permute.xlu0 %2418
      %2420 = vrot.lane.b32.xlu0 %v2345, 104
      %v2421 = vpop.permute.xlu0 %2420
      %2422 = vrot.lane.b32.xlu0 %v2346, 104
      %v2423 = vpop.permute.xlu0 %2422
      %2424 = vrot.lane.b32.xlu0 %v2347, 104
      %v2425 = vpop.permute.xlu0 %2424
      %2426 = vrot.lane.b32.xlu0 %v2348, 104
      %v2427 = vpop.permute.xlu0 %2426
      %2428 = vrot.lane.b32.xlu0 %v2349, 104
      %v2429 = vpop.permute.xlu0 %2428
      %2430 = vrot.lane.b32.xlu0 %v2350, 104
      %v2431 = vpop.permute.xlu0 %2430
      %2432 = vrot.lane.b32.xlu0 %v2351, 104
      %v2433 = vpop.permute.xlu0 %2432
      %2434 = vrot.lane.b32.xlu0 %v2352, 104
      %v2435 = vpop.permute.xlu0 %2434
      %2436 = vrot.lane.b32.xlu0 %v2353, 104
      %v2437 = vpop.permute.xlu0 %2436
      %2438 = vrot.lane.b32.xlu0 %v2354, 104
      %v2439 = vpop.permute.xlu0 %2438
      %2440 = vrot.lane.b32.xlu0 %v2355, 104
      %v2441 = vpop.permute.xlu0 %2440
      %2442 = vrot.lane.b32.xlu0 %v2356, 104
      %v2443 = vpop.permute.xlu0 %2442
      %2444 = vrot.lane.b32.xlu0 %v2357, 104
      %v2445 = vpop.permute.xlu0 %2444
      %2446 = vrot.lane.b32.xlu0 %v2358, 104
      %v2447 = vpop.permute.xlu0 %2446
      %2448 = vrot.lane.b32.xlu0 %v2359, 104
      %v2449 = vpop.permute.xlu0 %2448
      %2450 = vrot.lane.b32.xlu0 %v2360, 104
      %v2451 = vpop.permute.xlu0 %2450
      %2452 = vrot.lane.b32.xlu0 %v2361, 104
      %v2453 = vpop.permute.xlu0 %2452
      %2454 = vrot.lane.b32.xlu0 %v2362, 104
      %v2455 = vpop.permute.xlu0 %2454
      %2456 = vrot.lane.b32.xlu0 %v2363, 104
      %v2457 = vpop.permute.xlu0 %2456
      %2458 = vrot.lane.b32.xlu0 %v2364, 104
      %v2459 = vpop.permute.xlu0 %2458
      %2460 = vrot.lane.b32.xlu0 %v2365, 104
      %v2461 = vpop.permute.xlu0 %2460
      %v2494 = vadd.f32 %v2301, %v2399
      %v2495 = vadd.f32 %v2302, %v2401
      %v2496 = vadd.f32 %v2303, %v2403
      %v2497 = vadd.f32 %v2304, %v2405
      %v2498 = vadd.f32 %v2305, %v2407
      %v2499 = vadd.f32 %v2306, %v2409
      %v2500 = vadd.f32 %v2307, %v2411
      %v2501 = vadd.f32 %v2308, %v2413
      %v2502 = vadd.f32 %v2309, %v2415
      %v2503 = vadd.f32 %v2310, %v2417
      %v2504 = vadd.f32 %v2311, %v2419
      %v2505 = vadd.f32 %v2312, %v2421
      %v2506 = vadd.f32 %v2313, %v2423
      %v2507 = vadd.f32 %v2314, %v2425
      %v2508 = vadd.f32 %v2315, %v2427
      %v2509 = vadd.f32 %v2316, %v2429
      %v2510 = vadd.f32 %v2317, %v2431
      %v2511 = vadd.f32 %v2318, %v2433
      %v2512 = vadd.f32 %v2319, %v2435
      %v2513 = vadd.f32 %v2320, %v2437
      %v2514 = vadd.f32 %v2321, %v2439
      %v2515 = vadd.f32 %v2322, %v2441
      %v2516 = vadd.f32 %v2323, %v2443
      %v2517 = vadd.f32 %v2324, %v2445
      %v2518 = vadd.f32 %v2325, %v2447
      %v2519 = vadd.f32 %v2326, %v2449
      %v2520 = vadd.f32 %v2327, %v2451
      %v2521 = vadd.f32 %v2328, %v2453
      %v2522 = vadd.f32 %v2329, %v2455
      %v2523 = vadd.f32 %v2330, %v2457
      %v2524 = vadd.f32 %v2331, %v2459
      %v2525 = vadd.f32 %v2332, %v2461
      %v2526 = vld [vmem:[%s2333 + $0x1] sm:$0xff]
      %v2527 = vld [vmem:[%s2333 + $0x9] sm:$0xff]
      %v2528 = vld [vmem:[%s2333 + $0x19] sm:$0xff]
      %v2529 = vld [vmem:[%s2333 + $0x21] sm:$0xff]
      %v2530 = vld [vmem:[%s2333 + $0x31] sm:$0xff]
      %v2531 = vld [vmem:[%s2333 + $0x39] sm:$0xff]
      %v2532 = vld [vmem:[%s2333 + $0x49] sm:$0xff]
      %v2533 = vld [vmem:[%s2333 + $0x51] sm:$0xff]
      %v2534 = vld [vmem:[%s2333 + $0x61] sm:$0xff]
      %v2535 = vld [vmem:[%s2333 + $0x69] sm:$0xff]
      %v2536 = vld [vmem:[%s2333 + $0x79] sm:$0xff]
      %v2537 = vld [vmem:[%s2333 + $0x81] sm:$0xff]
      %v2538 = vld [vmem:[%s2333 + $0x91] sm:$0xff]
      %v2539 = vld [vmem:[%s2333 + $0x99] sm:$0xff]
      %v2540 = vld [vmem:[%s2333 + $0xa9] sm:$0xff]
      %v2541 = vld [vmem:[%s2333 + $0xb1] sm:$0xff]
      %v2542 = vld [vmem:[%s2333 + $0xc1] sm:$0xff]
      %v2543 = vld [vmem:[%s2333 + $0xc9] sm:$0xff]
      %v2544 = vld [vmem:[%s2333 + $0xd9] sm:$0xff]
      %v2545 = vld [vmem:[%s2333 + $0xe1] sm:$0xff]
      %v2546 = vld [vmem:[%s2333 + $0xf1] sm:$0xff]
      %v2547 = vld [vmem:[%s2333 + $0xf9] sm:$0xff]
      %v2548 = vld [vmem:[%s2333 + $0x109] sm:$0xff]
      %v2549 = vld [vmem:[%s2333 + $0x111] sm:$0xff]
      %v2550 = vld [vmem:[%s2333 + $0x121] sm:$0xff]
      %v2551 = vld [vmem:[%s2333 + $0x129] sm:$0xff]
      %v2552 = vld [vmem:[%s2333 + $0x139] sm:$0xff]
      %v2553 = vld [vmem:[%s2333 + $0x141] sm:$0xff]
      %v2554 = vld [vmem:[%s2333 + $0x151] sm:$0xff]
      %v2555 = vld [vmem:[%s2333 + $0x159] sm:$0xff]
      %v2556 = vld [vmem:[%s2333 + $0x169] sm:$0xff]
      %v2557 = vld [vmem:[%s2333 + $0x171] sm:$0xff]
      %2590 = vrot.lane.b32.xlu0 %v2526, 100
      %v2591 = vpop.permute.xlu0 %2590
      %2592 = vrot.lane.b32.xlu0 %v2527, 100
      %v2593 = vpop.permute.xlu0 %2592
      %2594 = vrot.lane.b32.xlu0 %v2528, 100
      %v2595 = vpop.permute.xlu0 %2594
      %2596 = vrot.lane.b32.xlu0 %v2529, 100
      %v2597 = vpop.permute.xlu0 %2596
      %2598 = vrot.lane.b32.xlu0 %v2530, 100
      %v2599 = vpop.permute.xlu0 %2598
      %2600 = vrot.lane.b32.xlu0 %v2531, 100
      %v2601 = vpop.permute.xlu0 %2600
      %2602 = vrot.lane.b32.xlu0 %v2532, 100
      %v2603 = vpop.permute.xlu0 %2602
      %2604 = vrot.lane.b32.xlu0 %v2533, 100
      %v2605 = vpop.permute.xlu0 %2604
      %2606 = vrot.lane.b32.xlu0 %v2534, 100
      %v2607 = vpop.permute.xlu0 %2606
      %2608 = vrot.lane.b32.xlu0 %v2535, 100
      %v2609 = vpop.permute.xlu0 %2608
      %2610 = vrot.lane.b32.xlu0 %v2536, 100
      %v2611 = vpop.permute.xlu0 %2610
      %2612 = vrot.lane.b32.xlu0 %v2537, 100
      %v2613 = vpop.permute.xlu0 %2612
      %2614 = vrot.lane.b32.xlu0 %v2538, 100
      %v2615 = vpop.permute.xlu0 %2614
      %2616 = vrot.lane.b32.xlu0 %v2539, 100
      %v2617 = vpop.permute.xlu0 %2616
      %2618 = vrot.lane.b32.xlu0 %v2540, 100
      %v2619 = vpop.permute.xlu0 %2618
      %2620 = vrot.lane.b32.xlu0 %v2541, 100
      %v2621 = vpop.permute.xlu0 %2620
      %2622 = vrot.lane.b32.xlu0 %v2542, 100
      %v2623 = vpop.permute.xlu0 %2622
      %2624 = vrot.lane.b32.xlu0 %v2543, 100
      %v2625 = vpop.permute.xlu0 %2624
      %2626 = vrot.lane.b32.xlu0 %v2544, 100
      %v2627 = vpop.permute.xlu0 %2626
      %2628 = vrot.lane.b32.xlu0 %v2545, 100
      %v2629 = vpop.permute.xlu0 %2628
      %2630 = vrot.lane.b32.xlu0 %v2546, 100
      %v2631 = vpop.permute.xlu0 %2630
      %2632 = vrot.lane.b32.xlu0 %v2547, 100
      %v2633 = vpop.permute.xlu0 %2632
      %2634 = vrot.lane.b32.xlu0 %v2548, 100
      %v2635 = vpop.permute.xlu0 %2634
      %2636 = vrot.lane.b32.xlu0 %v2549, 100
      %v2637 = vpop.permute.xlu0 %2636
      %2638 = vrot.lane.b32.xlu0 %v2550, 100
      %v2639 = vpop.permute.xlu0 %2638
      %2640 = vrot.lane.b32.xlu0 %v2551, 100
      %v2641 = vpop.permute.xlu0 %2640
      %2642 = vrot.lane.b32.xlu0 %v2552, 100
      %v2643 = vpop.permute.xlu0 %2642
      %2644 = vrot.lane.b32.xlu0 %v2553, 100
      %v2645 = vpop.permute.xlu0 %2644
      %2646 = vrot.lane.b32.xlu0 %v2554, 100
      %v2647 = vpop.permute.xlu0 %2646
      %2648 = vrot.lane.b32.xlu0 %v2555, 100
      %v2649 = vpop.permute.xlu0 %2648
      %2650 = vrot.lane.b32.xlu0 %v2556, 100
      %v2651 = vpop.permute.xlu0 %2650
      %2652 = vrot.lane.b32.xlu0 %v2557, 100
      %v2653 = vpop.permute.xlu0 %2652
      %v2686 = vadd.f32 %v2494, %v2591
      %v2687 = vadd.f32 %v2495, %v2593
      %v2688 = vadd.f32 %v2496, %v2595
      %v2689 = vadd.f32 %v2497, %v2597
      %v2690 = vadd.f32 %v2498, %v2599
      %v2691 = vadd.f32 %v2499, %v2601
      %v2692 = vadd.f32 %v2500, %v2603
      %v2693 = vadd.f32 %v2501, %v2605
      %v2694 = vadd.f32 %v2502, %v2607
      %v2695 = vadd.f32 %v2503, %v2609
      %v2696 = vadd.f32 %v2504, %v2611
      %v2697 = vadd.f32 %v2505, %v2613
      %v2698 = vadd.f32 %v2506, %v2615
      %v2699 = vadd.f32 %v2507, %v2617
      %v2700 = vadd.f32 %v2508, %v2619
      %v2701 = vadd.f32 %v2509, %v2621
      %v2702 = vadd.f32 %v2510, %v2623
      %v2703 = vadd.f32 %v2511, %v2625
      %v2704 = vadd.f32 %v2512, %v2627
      %v2705 = vadd.f32 %v2513, %v2629
      %v2706 = vadd.f32 %v2514, %v2631
      %v2707 = vadd.f32 %v2515, %v2633
      %v2708 = vadd.f32 %v2516, %v2635
      %v2709 = vadd.f32 %v2517, %v2637
      %v2710 = vadd.f32 %v2518, %v2639
      %v2711 = vadd.f32 %v2519, %v2641
      %v2712 = vadd.f32 %v2520, %v2643
      %v2713 = vadd.f32 %v2521, %v2645
      %v2714 = vadd.f32 %v2522, %v2647
      %v2715 = vadd.f32 %v2523, %v2649
      %v2716 = vadd.f32 %v2524, %v2651
      %v2717 = vadd.f32 %v2525, %v2653
      %v2718 = vld [vmem:[%s2333 + $0x2] sm:$0xff]
      %v2719 = vld [vmem:[%s2333 + $0xa] sm:$0xff]
      %v2720 = vld [vmem:[%s2333 + $0x1a] sm:$0xff]
      %v2721 = vld [vmem:[%s2333 + $0x22] sm:$0xff]
      %v2722 = vld [vmem:[%s2333 + $0x32] sm:$0xff]
      %v2723 = vld [vmem:[%s2333 + $0x3a] sm:$0xff]
      %v2724 = vld [vmem:[%s2333 + $0x4a] sm:$0xff]
      %v2725 = vld [vmem:[%s2333 + $0x52] sm:$0xff]
      %v2726 = vld [vmem:[%s2333 + $0x62] sm:$0xff]
      %v2727 = vld [vmem:[%s2333 + $0x6a] sm:$0xff]
      %v2728 = vld [vmem:[%s2333 + $0x7a] sm:$0xff]
      %v2729 = vld [vmem:[%s2333 + $0x82] sm:$0xff]
      %v2730 = vld [vmem:[%s2333 + $0x92] sm:$0xff]
      %v2731 = vld [vmem:[%s2333 + $0x9a] sm:$0xff]
      %v2732 = vld [vmem:[%s2333 + $0xaa] sm:$0xff]
      %v2733 = vld [vmem:[%s2333 + $0xb2] sm:$0xff]
      %v2734 = vld [vmem:[%s2333 + $0xc2] sm:$0xff]
      %v2735 = vld [vmem:[%s2333 + $0xca] sm:$0xff]
      %v2736 = vld [vmem:[%s2333 + $0xda] sm:$0xff]
      %v2737 = vld [vmem:[%s2333 + $0xe2] sm:$0xff]
      %v2738 = vld [vmem:[%s2333 + $0xf2] sm:$0xff]
      %v2739 = vld [vmem:[%s2333 + $0xfa] sm:$0xff]
      %v2740 = vld [vmem:[%s2333 + $0x10a] sm:$0xff]
      %v2741 = vld [vmem:[%s2333 + $0x112] sm:$0xff]
      %v2742 = vld [vmem:[%s2333 + $0x122] sm:$0xff]
      %v2743 = vld [vmem:[%s2333 + $0x12a] sm:$0xff]
      %v2744 = vld [vmem:[%s2333 + $0x13a] sm:$0xff]
      %v2745 = vld [vmem:[%s2333 + $0x142] sm:$0xff]
      %v2746 = vld [vmem:[%s2333 + $0x152] sm:$0xff]
      %v2747 = vld [vmem:[%s2333 + $0x15a] sm:$0xff]
      %v2748 = vld [vmem:[%s2333 + $0x16a] sm:$0xff]
      %v2749 = vld [vmem:[%s2333 + $0x172] sm:$0xff]
      %2782 = vrot.lane.b32.xlu0 %v2718, 96
      %v2783 = vpop.permute.xlu0 %2782
      %2784 = vrot.lane.b32.xlu0 %v2719, 96
      %v2785 = vpop.permute.xlu0 %2784
      %2786 = vrot.lane.b32.xlu0 %v2720, 96
      %v2787 = vpop.permute.xlu0 %2786
      %2788 = vrot.lane.b32.xlu0 %v2721, 96
      %v2789 = vpop.permute.xlu0 %2788
      %2790 = vrot.lane.b32.xlu0 %v2722, 96
      %v2791 = vpop.permute.xlu0 %2790
      %2792 = vrot.lane.b32.xlu0 %v2723, 96
      %v2793 = vpop.permute.xlu0 %2792
      %2794 = vrot.lane.b32.xlu0 %v2724, 96
      %v2795 = vpop.permute.xlu0 %2794
      %2796 = vrot.lane.b32.xlu0 %v2725, 96
      %v2797 = vpop.permute.xlu0 %2796
      %2798 = vrot.lane.b32.xlu0 %v2726, 96
      %v2799 = vpop.permute.xlu0 %2798
      %2800 = vrot.lane.b32.xlu0 %v2727, 96
      %v2801 = vpop.permute.xlu0 %2800
      %2802 = vrot.lane.b32.xlu0 %v2728, 96
      %v2803 = vpop.permute.xlu0 %2802
      %2804 = vrot.lane.b32.xlu0 %v2729, 96
      %v2805 = vpop.permute.xlu0 %2804
      %2806 = vrot.lane.b32.xlu0 %v2730, 96
      %v2807 = vpop.permute.xlu0 %2806
      %2808 = vrot.lane.b32.xlu0 %v2731, 96
      %v2809 = vpop.permute.xlu0 %2808
      %2810 = vrot.lane.b32.xlu0 %v2732, 96
      %v2811 = vpop.permute.xlu0 %2810
      %2812 = vrot.lane.b32.xlu0 %v2733, 96
      %v2813 = vpop.permute.xlu0 %2812
      %2814 = vrot.lane.b32.xlu0 %v2734, 96
      %v2815 = vpop.permute.xlu0 %2814
      %2816 = vrot.lane.b32.xlu0 %v2735, 96
      %v2817 = vpop.permute.xlu0 %2816
      %2818 = vrot.lane.b32.xlu0 %v2736, 96
      %v2819 = vpop.permute.xlu0 %2818
      %2820 = vrot.lane.b32.xlu0 %v2737, 96
      %v2821 = vpop.permute.xlu0 %2820
      %2822 = vrot.lane.b32.xlu0 %v2738, 96
      %v2823 = vpop.permute.xlu0 %2822
      %2824 = vrot.lane.b32.xlu0 %v2739, 96
      %v2825 = vpop.permute.xlu0 %2824
      %2826 = vrot.lane.b32.xlu0 %v2740, 96
      %v2827 = vpop.permute.xlu0 %2826
      %2828 = vrot.lane.b32.xlu0 %v2741, 96
      %v2829 = vpop.permute.xlu0 %2828
      %2830 = vrot.lane.b32.xlu0 %v2742, 96
      %v2831 = vpop.permute.xlu0 %2830
      %2832 = vrot.lane.b32.xlu0 %v2743, 96
      %v2833 = vpop.permute.xlu0 %2832
      %2834 = vrot.lane.b32.xlu0 %v2744, 96
      %v2835 = vpop.permute.xlu0 %2834
      %2836 = vrot.lane.b32.xlu0 %v2745, 96
      %v2837 = vpop.permute.xlu0 %2836
      %2838 = vrot.lane.b32.xlu0 %v2746, 96
      %v2839 = vpop.permute.xlu0 %2838
      %2840 = vrot.lane.b32.xlu0 %v2747, 96
      %v2841 = vpop.permute.xlu0 %2840
      %2842 = vrot.lane.b32.xlu0 %v2748, 96
      %v2843 = vpop.permute.xlu0 %2842
      %2844 = vrot.lane.b32.xlu0 %v2749, 96
      %v2845 = vpop.permute.xlu0 %2844
      %v2878 = vadd.f32 %v2686, %v2783
      %v2879 = vadd.f32 %v2687, %v2785
      %v2880 = vadd.f32 %v2688, %v2787
      %v2881 = vadd.f32 %v2689, %v2789
      %v2882 = vadd.f32 %v2690, %v2791
      %v2883 = vadd.f32 %v2691, %v2793
      %v2884 = vadd.f32 %v2692, %v2795
      %v2885 = vadd.f32 %v2693, %v2797
      %v2886 = vadd.f32 %v2694, %v2799
      %v2887 = vadd.f32 %v2695, %v2801
      %v2888 = vadd.f32 %v2696, %v2803
      %v2889 = vadd.f32 %v2697, %v2805
      %v2890 = vadd.f32 %v2698, %v2807
      %v2891 = vadd.f32 %v2699, %v2809
      %v2892 = vadd.f32 %v2700, %v2811
      %v2893 = vadd.f32 %v2701, %v2813
      %v2894 = vadd.f32 %v2702, %v2815
      %v2895 = vadd.f32 %v2703, %v2817
      %v2896 = vadd.f32 %v2704, %v2819
      %v2897 = vadd.f32 %v2705, %v2821
      %v2898 = vadd.f32 %v2706, %v2823
      %v2899 = vadd.f32 %v2707, %v2825
      %v2900 = vadd.f32 %v2708, %v2827
      %v2901 = vadd.f32 %v2709, %v2829
      %v2902 = vadd.f32 %v2710, %v2831
      %v2903 = vadd.f32 %v2711, %v2833
      %v2904 = vadd.f32 %v2712, %v2835
      %v2905 = vadd.f32 %v2713, %v2837
      %v2906 = vadd.f32 %v2714, %v2839
      %v2907 = vadd.f32 %v2715, %v2841
      %v2908 = vadd.f32 %v2716, %v2843
      %v2909 = vadd.f32 %v2717, %v2845
      %2942 = vrot.lane.b32.xlu0 %v2878, 4
      %v2943 = vpop.permute.xlu0 %2942
      %2944 = vrot.lane.b32.xlu0 %v2879, 4
      %v2945 = vpop.permute.xlu0 %2944
      %2946 = vrot.lane.b32.xlu0 %v2880, 4
      %v2947 = vpop.permute.xlu0 %2946
      %2948 = vrot.lane.b32.xlu0 %v2881, 4
      %v2949 = vpop.permute.xlu0 %2948
      %2950 = vrot.lane.b32.xlu0 %v2882, 4
      %v2951 = vpop.permute.xlu0 %2950
      %2952 = vrot.lane.b32.xlu0 %v2883, 4
      %v2953 = vpop.permute.xlu0 %2952
      %2954 = vrot.lane.b32.xlu0 %v2884, 4
      %v2955 = vpop.permute.xlu0 %2954
      %2956 = vrot.lane.b32.xlu0 %v2885, 4
      %v2957 = vpop.permute.xlu0 %2956
      %2958 = vrot.lane.b32.xlu0 %v2886, 4
      %v2959 = vpop.permute.xlu0 %2958
      %2960 = vrot.lane.b32.xlu0 %v2887, 4
      %v2961 = vpop.permute.xlu0 %2960
      %2962 = vrot.lane.b32.xlu0 %v2888, 4
      %v2963 = vpop.permute.xlu0 %2962
      %2964 = vrot.lane.b32.xlu0 %v2889, 4
      %v2965 = vpop.permute.xlu0 %2964
      %2966 = vrot.lane.b32.xlu0 %v2890, 4
      %v2967 = vpop.permute.xlu0 %2966
      %2968 = vrot.lane.b32.xlu0 %v2891, 4
      %v2969 = vpop.permute.xlu0 %2968
      %2970 = vrot.lane.b32.xlu0 %v2892, 4
      %v2971 = vpop.permute.xlu0 %2970
      %2972 = vrot.lane.b32.xlu0 %v2893, 4
      %v2973 = vpop.permute.xlu0 %2972
      %2974 = vrot.lane.b32.xlu0 %v2894, 4
      %v2975 = vpop.permute.xlu0 %2974
      %2976 = vrot.lane.b32.xlu0 %v2895, 4
      %v2977 = vpop.permute.xlu0 %2976
      %2978 = vrot.lane.b32.xlu0 %v2896, 4
      %v2979 = vpop.permute.xlu0 %2978
      %2980 = vrot.lane.b32.xlu0 %v2897, 4
      %v2981 = vpop.permute.xlu0 %2980
      %2982 = vrot.lane.b32.xlu0 %v2898, 4
      %v2983 = vpop.permute.xlu0 %2982
      %2984 = vrot.lane.b32.xlu0 %v2899, 4
      %v2985 = vpop.permute.xlu0 %2984
      %2986 = vrot.lane.b32.xlu0 %v2900, 4
      %v2987 = vpop.permute.xlu0 %2986
      %2988 = vrot.lane.b32.xlu0 %v2901, 4
      %v2989 = vpop.permute.xlu0 %2988
      %2990 = vrot.lane.b32.xlu0 %v2902, 4
      %v2991 = vpop.permute.xlu0 %2990
      %2992 = vrot.lane.b32.xlu0 %v2903, 4
      %v2993 = vpop.permute.xlu0 %2992
      %2994 = vrot.lane.b32.xlu0 %v2904, 4
      %v2995 = vpop.permute.xlu0 %2994
      %2996 = vrot.lane.b32.xlu0 %v2905, 4
      %v2997 = vpop.permute.xlu0 %2996
      %2998 = vrot.lane.b32.xlu0 %v2906, 4
      %v2999 = vpop.permute.xlu0 %2998
      %3000 = vrot.lane.b32.xlu0 %v2907, 4
      %v3001 = vpop.permute.xlu0 %3000
      %3002 = vrot.lane.b32.xlu0 %v2908, 4
      %v3003 = vpop.permute.xlu0 %3002
      %3004 = vrot.lane.b32.xlu0 %v2909, 4
      %v3005 = vpop.permute.xlu0 %3004
      %vm3038 = vcmask 64544
      %3039 = vst.msk [vmem:[#allocation2] sm:$0xff] %vm3038, %v2943
      %3040 = vst.msk [vmem:[#allocation2 + $0x8] sm:$0xff] %vm3038, %v2945
      %3041 = vst.msk [vmem:[#allocation2 + $0x10] sm:$0xff] %vm3038, %v2947
      %3042 = vst.msk [vmem:[#allocation2 + $0x18] sm:$0xff] %vm3038, %v2949
      %3043 = vst.msk [vmem:[#allocation2 + $0x20] sm:$0xff] %vm3038, %v2951
      %3044 = vst.msk [vmem:[#allocation2 + $0x28] sm:$0xff] %vm3038, %v2953
      %3045 = vst.msk [vmem:[#allocation2 + $0x30] sm:$0xff] %vm3038, %v2955
      %3046 = vst.msk [vmem:[#allocation2 + $0x38] sm:$0xff] %vm3038, %v2957
      %3047 = vst.msk [vmem:[#allocation2 + $0x40] sm:$0xff] %vm3038, %v2959
      %3048 = vst.msk [vmem:[#allocation2 + $0x48] sm:$0xff] %vm3038, %v2961
      %3049 = vst.msk [vmem:[#allocation2 + $0x50] sm:$0xff] %vm3038, %v2963
      %3050 = vst.msk [vmem:[#allocation2 + $0x58] sm:$0xff] %vm3038, %v2965
      %3051 = vst.msk [vmem:[#allocation2 + $0x60] sm:$0xff] %vm3038, %v2967
      %3052 = vst.msk [vmem:[#allocation2 + $0x68] sm:$0xff] %vm3038, %v2969
      %3053 = vst.msk [vmem:[#allocation2 + $0x70] sm:$0xff] %vm3038, %v2971
      %3054 = vst.msk [vmem:[#allocation2 + $0x78] sm:$0xff] %vm3038, %v2973
      %3055 = vst.msk [vmem:[#allocation2 + $0x80] sm:$0xff] %vm3038, %v2975
      %3056 = vst.msk [vmem:[#allocation2 + $0x88] sm:$0xff] %vm3038, %v2977
      %3057 = vst.msk [vmem:[#allocation2 + $0x90] sm:$0xff] %vm3038, %v2979
      %3058 = vst.msk [vmem:[#allocation2 + $0x98] sm:$0xff] %vm3038, %v2981
      %3059 = vst.msk [vmem:[#allocation2 + $0xa0] sm:$0xff] %vm3038, %v2983
      %3060 = vst.msk [vmem:[#allocation2 + $0xa8] sm:$0xff] %vm3038, %v2985
      %3061 = vst.msk [vmem:[#allocation2 + $0xb0] sm:$0xff] %vm3038, %v2987
      %3062 = vst.msk [vmem:[#allocation2 + $0xb8] sm:$0xff] %vm3038, %v2989
      %3063 = vst.msk [vmem:[#allocation2 + $0xc0] sm:$0xff] %vm3038, %v2991
      %3064 = vst.msk [vmem:[#allocation2 + $0xc8] sm:$0xff] %vm3038, %v2993
      %3065 = vst.msk [vmem:[#allocation2 + $0xd0] sm:$0xff] %vm3038, %v2995
      %3066 = vst.msk [vmem:[#allocation2 + $0xd8] sm:$0xff] %vm3038, %v2997
      %3067 = vst.msk [vmem:[#allocation2 + $0xe0] sm:$0xff] %vm3038, %v2999
      %3068 = vst.msk [vmem:[#allocation2 + $0xe8] sm:$0xff] %vm3038, %v3001
      %3069 = vst.msk [vmem:[#allocation2 + $0xf0] sm:$0xff] %vm3038, %v3003
      %3070 = vst.msk [vmem:[#allocation2 + $0xf8] sm:$0xff] %vm3038, %v3005
      %v3071 = vld [vmem:[#allocation2] sm:$0xff]
      %v3072 = vld [vmem:[#allocation2 + $0x8] sm:$0xff]
      %v3073 = vld [vmem:[#allocation2 + $0x10] sm:$0xff]
      %v3074 = vld [vmem:[#allocation2 + $0x18] sm:$0xff]
      %v3075 = vld [vmem:[#allocation2 + $0x20] sm:$0xff]
      %v3076 = vld [vmem:[#allocation2 + $0x28] sm:$0xff]
      %v3077 = vld [vmem:[#allocation2 + $0x30] sm:$0xff]
      %v3078 = vld [vmem:[#allocation2 + $0x38] sm:$0xff]
      %v3079 = vld [vmem:[#allocation2 + $0x40] sm:$0xff]
      %v3080 = vld [vmem:[#allocation2 + $0x48] sm:$0xff]
      %v3081 = vld [vmem:[#allocation2 + $0x50] sm:$0xff]
      %v3082 = vld [vmem:[#allocation2 + $0x58] sm:$0xff]
      %v3083 = vld [vmem:[#allocation2 + $0x60] sm:$0xff]
      %v3084 = vld [vmem:[#allocation2 + $0x68] sm:$0xff]
      %v3085 = vld [vmem:[#allocation2 + $0x70] sm:$0xff]
      %v3086 = vld [vmem:[#allocation2 + $0x78] sm:$0xff]
      %v3087 = vld [vmem:[#allocation2 + $0x80] sm:$0xff]
      %v3088 = vld [vmem:[#allocation2 + $0x88] sm:$0xff]
      %v3089 = vld [vmem:[#allocation2 + $0x90] sm:$0xff]
      %v3090 = vld [vmem:[#allocation2 + $0x98] sm:$0xff]
      %v3091 = vld [vmem:[#allocation2 + $0xa0] sm:$0xff]
      %v3092 = vld [vmem:[#allocation2 + $0xa8] sm:$0xff]
      %v3093 = vld [vmem:[#allocation2 + $0xb0] sm:$0xff]
      %v3094 = vld [vmem:[#allocation2 + $0xb8] sm:$0xff]
      %v3095 = vld [vmem:[#allocation2 + $0xc0] sm:$0xff]
      %v3096 = vld [vmem:[#allocation2 + $0xc8] sm:$0xff]
      %v3097 = vld [vmem:[#allocation2 + $0xd0] sm:$0xff]
      %v3098 = vld [vmem:[#allocation2 + $0xd8] sm:$0xff]
      %v3099 = vld [vmem:[#allocation2 + $0xe0] sm:$0xff]
      %v3100 = vld [vmem:[#allocation2 + $0xe8] sm:$0xff]
      %v3101 = vld [vmem:[#allocation2 + $0xf0] sm:$0xff]
      %v3102 = vld [vmem:[#allocation2 + $0xf8] sm:$0xff]
      %v3103 = vld [vmem:[%s6] sm:$0x1]
      %v3105 = vlaneseq
      %v3106 = vshrl.u32 %v3105, 7
      %v3107 = vsub.s32 0, %v3106
      %v3108 = vrot.slane %v3103, %v3107
      %v3110 = vmul.f32 %v3071, %v3108
      %v3111 = vmul.f32 %v3072, %v3108
      %v3112 = vmul.f32 %v3073, %v3108
      %v3113 = vmul.f32 %v3074, %v3108
      %v3114 = vmul.f32 %v3075, %v3108
      %v3115 = vmul.f32 %v3076, %v3108
      %v3116 = vmul.f32 %v3077, %v3108
      %v3117 = vmul.f32 %v3078, %v3108
      %v3118 = vmul.f32 %v3079, %v3108
      %v3119 = vmul.f32 %v3080, %v3108
      %v3120 = vmul.f32 %v3081, %v3108
      %v3121 = vmul.f32 %v3082, %v3108
      %v3122 = vmul.f32 %v3083, %v3108
      %v3123 = vmul.f32 %v3084, %v3108
      %v3124 = vmul.f32 %v3085, %v3108
      %v3125 = vmul.f32 %v3086, %v3108
      %v3126 = vmul.f32 %v3087, %v3108
      %v3127 = vmul.f32 %v3088, %v3108
      %v3128 = vmul.f32 %v3089, %v3108
      %v3129 = vmul.f32 %v3090, %v3108
      %v3130 = vmul.f32 %v3091, %v3108
      %v3131 = vmul.f32 %v3092, %v3108
      %v3132 = vmul.f32 %v3093, %v3108
      %v3133 = vmul.f32 %v3094, %v3108
      %v3134 = vmul.f32 %v3095, %v3108
      %v3135 = vmul.f32 %v3096, %v3108
      %v3136 = vmul.f32 %v3097, %v3108
      %v3137 = vmul.f32 %v3098, %v3108
      %v3138 = vmul.f32 %v3099, %v3108
      %v3139 = vmul.f32 %v3100, %v3108
      %v3140 = vmul.f32 %v3101, %v3108
      %v3141 = vmul.f32 %v3102, %v3108
      %v3142 = vld [vmem:[%s7] sm:$0x1]
      %v3144 = vlaneseq
      %v3145 = vshrl.u32 %v3144, 7
      %v3146 = vsub.s32 0, %v3145
      %v3147 = vrot.slane %v3142, %v3146
      %v3149 = vadd.f32 %v3110, %v3147
      %v3150 = vadd.f32 %v3111, %v3147
      %v3151 = vadd.f32 %v3112, %v3147
      %v3152 = vadd.f32 %v3113, %v3147
      %v3153 = vadd.f32 %v3114, %v3147
      %v3154 = vadd.f32 %v3115, %v3147
      %v3155 = vadd.f32 %v3116, %v3147
      %v3156 = vadd.f32 %v3117, %v3147
      %v3157 = vadd.f32 %v3118, %v3147
      %v3158 = vadd.f32 %v3119, %v3147
      %v3159 = vadd.f32 %v3120, %v3147
      %v3160 = vadd.f32 %v3121, %v3147
      %v3161 = vadd.f32 %v3122, %v3147
      %v3162 = vadd.f32 %v3123, %v3147
      %v3163 = vadd.f32 %v3124, %v3147
      %v3164 = vadd.f32 %v3125, %v3147
      %v3165 = vadd.f32 %v3126, %v3147
      %v3166 = vadd.f32 %v3127, %v3147
      %v3167 = vadd.f32 %v3128, %v3147
      %v3168 = vadd.f32 %v3129, %v3147
      %v3169 = vadd.f32 %v3130, %v3147
      %v3170 = vadd.f32 %v3131, %v3147
      %v3171 = vadd.f32 %v3132, %v3147
      %v3172 = vadd.f32 %v3133, %v3147
      %v3173 = vadd.f32 %v3134, %v3147
      %v3174 = vadd.f32 %v3135, %v3147
      %v3175 = vadd.f32 %v3136, %v3147
      %v3176 = vadd.f32 %v3137, %v3147
      %v3177 = vadd.f32 %v3138, %v3147
      %v3178 = vadd.f32 %v3139, %v3147
      %v3179 = vadd.f32 %v3140, %v3147
      %v3180 = vadd.f32 %v3141, %v3147
      %v3181 = vmax.f32 %v3149, 0.0
      %v3182 = vmax.f32 %v3150, 0.0
      %v3183 = vmax.f32 %v3151, 0.0
      %v3184 = vmax.f32 %v3152, 0.0
      %v3185 = vmax.f32 %v3153, 0.0
      %v3186 = vmax.f32 %v3154, 0.0
      %v3187 = vmax.f32 %v3155, 0.0
      %v3188 = vmax.f32 %v3156, 0.0
      %v3189 = vmax.f32 %v3157, 0.0
      %v3190 = vmax.f32 %v3158, 0.0
      %v3191 = vmax.f32 %v3159, 0.0
      %v3192 = vmax.f32 %v3160, 0.0
      %v3193 = vmax.f32 %v3161, 0.0
      %v3194 = vmax.f32 %v3162, 0.0
      %v3195 = vmax.f32 %v3163, 0.0
      %v3196 = vmax.f32 %v3164, 0.0
      %v3197 = vmax.f32 %v3165, 0.0
      %v3198 = vmax.f32 %v3166, 0.0
      %v3199 = vmax.f32 %v3167, 0.0
      %v3200 = vmax.f32 %v3168, 0.0
      %v3201 = vmax.f32 %v3169, 0.0
      %v3202 = vmax.f32 %v3170, 0.0
      %v3203 = vmax.f32 %v3171, 0.0
      %v3204 = vmax.f32 %v3172, 0.0
      %v3205 = vmax.f32 %v3173, 0.0
      %v3206 = vmax.f32 %v3174, 0.0
      %v3207 = vmax.f32 %v3175, 0.0
      %v3208 = vmax.f32 %v3176, 0.0
      %v3209 = vmax.f32 %v3177, 0.0
      %v3210 = vmax.f32 %v3178, 0.0
      %v3211 = vmax.f32 %v3179, 0.0
      %v3212 = vmax.f32 %v3180, 0.0
      %v3213 = vpack.c.bf16 %v3182, %v3181
      %v3214 = vpack.c.bf16 %v3184, %v3183
      %v3215 = vpack.c.bf16 %v3186, %v3185
      %v3216 = vpack.c.bf16 %v3188, %v3187
      %v3217 = vpack.c.bf16 %v3190, %v3189
      %v3218 = vpack.c.bf16 %v3192, %v3191
      %v3219 = vpack.c.bf16 %v3194, %v3193
      %v3220 = vpack.c.bf16 %v3196, %v3195
      %v3221 = vpack.c.bf16 %v3198, %v3197
      %v3222 = vpack.c.bf16 %v3200, %v3199
      %v3223 = vpack.c.bf16 %v3202, %v3201
      %v3224 = vpack.c.bf16 %v3204, %v3203
      %v3225 = vpack.c.bf16 %v3206, %v3205
      %v3226 = vpack.c.bf16 %v3208, %v3207
      %v3227 = vpack.c.bf16 %v3210, %v3209
      %v3228 = vpack.c.bf16 %v3212, %v3211
      %v3229 = vld [vmem:[%s8] sm:$0xf]
      %v3230 = vld [vmem:[%s9] sm:$0x1]
      %v3232 = vlaneseq
      %v3233 = vshrl.u32 %v3232, 7
      %v3234 = vsub.s32 0, %v3233
      %v3235 = vrot.slane %v3230, %v3234
      %v3238 = vsel %vm1062, %v3213, 0
      %v3241 = vsel %vm1062, %v3214, 0
      %v3244 = vsel %vm1062, %v3215, 0
      %v3247 = vsel %vm1062, %v3216, 0
      %v3250 = vsel %vm1062, %v3217, 0
      %v3253 = vsel %vm1062, %v3218, 0
      %v3256 = vsel %vm1062, %v3219, 0
      %v3259 = vsel %vm1062, %v3220, 0
      %v3262 = vsel %vm1062, %v3221, 0
      %v3265 = vsel %vm1062, %v3222, 0
      %v3268 = vsel %vm1062, %v3223, 0
      %v3271 = vsel %vm1062, %v3224, 0
      %v3274 = vsel %vm1062, %v3225, 0
      %v3277 = vsel %vm1062, %v3226, 0
      %v3280 = vsel %vm1062, %v3227, 0
      %v3283 = vsel %vm1062, %v3228, 0
      %v3286 = vsel %vm1111, %v3229, 0
      %3288 = vmatprep.subr.bf16.mxu0 0
      %3289 = vmatpush1.bf16.msra.mxu0 %v3286
      %3290 = vmatprep.subr.bf16.mxu0 0
      %3291 = vmatpush1.bf16.msra.mxu0 0
      %3292 = vmatprep.subr.bf16.mxu0 0
      %3293 = vmatpush1.bf16.msra.mxu0 0
      %3294 = vmatprep.subr.bf16.mxu0 0
      %3295 = vmatpush1.bf16.msra.mxu0 0
      %3296 = vmatprep.subr.bf16.mxu0 0
      %3297 = vmatpush1.bf16.msra.mxu0 0
      %3298 = vmatprep.subr.bf16.mxu0 0
      %3299 = vmatpush1.bf16.msra.mxu0 0
      %3300 = vmatprep.subr.bf16.mxu0 0
      %3301 = vmatpush1.bf16.msra.mxu0 0
      %3302 = vmatprep.subr.bf16.mxu0 0
      %3303 = vmatpush1.bf16.msra.mxu0 0
      %3304 = vmatprep.subr.bf16.mxu0 0
      %3305 = vmatpush1.bf16.msra.mxu0 0
      %3306 = vmatprep.subr.bf16.mxu0 0
      %3307 = vmatpush1.bf16.msra.mxu0 0
      %3308 = vmatprep.subr.bf16.mxu0 0
      %3309 = vmatpush1.bf16.msra.mxu0 0
      %3310 = vmatprep.subr.bf16.mxu0 0
      %3311 = vmatpush1.bf16.msra.mxu0 0
      %3312 = vmatprep.subr.bf16.mxu0 0
      %3313 = vmatpush1.bf16.msra.mxu0 0
      %3314 = vmatprep.subr.bf16.mxu0 0
      %3315 = vmatpush1.bf16.msra.mxu0 0
      %3316 = vmatprep.subr.bf16.mxu0 0
      %3317 = vmatpush1.bf16.msra.mxu0 0
      %3318 = vmatprep.subr.bf16.mxu0 0
      %3319 = vmatpush1.bf16.msra.mxu0 0
      %3320 = vmatprep.mubr.bf16.mxu0 0
      %3321 = vmatmul.mubr.bf16.gmra.mrb[0].mxu0 %v3238
      %v3322 = vpop.f32.mrb[0].mxu0
      %v3323 = vadd.f32 %v3235, %v3322
      %v3324 = vpop.f32.mrb[0].mxu0
      %v3325 = vpop.f32.mrb[0].mxu0
      %v3326 = vadd.f32 %v3235, %v3325
      %v3327 = vpop.f32.mrb[0].mxu0
      %3328 = vmatprep.mubr.bf16.mxu0 0
      %3329 = vmatmul.mubr.bf16.gmra.mrb[0].mxu0 %v3241
      %v3330 = vpop.f32.mrb[0].mxu0
      %v3331 = vadd.f32 %v3235, %v3330
      %v3332 = vpop.f32.mrb[0].mxu0
      %v3333 = vpop.f32.mrb[0].mxu0
      %v3334 = vadd.f32 %v3235, %v3333
      %v3335 = vpop.f32.mrb[0].mxu0
      %3336 = vmatprep.mubr.bf16.mxu0 0
      %3337 = vmatmul.mubr.bf16.gmra.mrb[0].mxu0 %v3244
      %v3338 = vpop.f32.mrb[0].mxu0
      %v3339 = vadd.f32 %v3235, %v3338
      %v3340 = vpop.f32.mrb[0].mxu0
      %v3341 = vpop.f32.mrb[0].mxu0
      %v3342 = vadd.f32 %v3235, %v3341
      %v3343 = vpop.f32.mrb[0].mxu0
      %3344 = vmatprep.mubr.bf16.mxu0 0
      %3345 = vmatmul.mubr.bf16.gmra.mrb[0].mxu0 %v3247
      %v3346 = vpop.f32.mrb[0].mxu0
      %v3347 = vadd.f32 %v3235, %v3346
      %v3348 = vpop.f32.mrb[0].mxu0
      %v3349 = vpop.f32.mrb[0].mxu0
      %v3350 = vadd.f32 %v3235, %v3349
      %v3351 = vpop.f32.mrb[0].mxu0
      %3352 = vmatprep.mubr.bf16.mxu0 0
      %3353 = vmatmul.mubr.bf16.gmra.mrb[0].mxu0 %v3250
      %v3354 = vpop.f32.mrb[0].mxu0
      %v3355 = vadd.f32 %v3235, %v3354
      %v3356 = vpop.f32.mrb[0].mxu0
      %v3357 = vpop.f32.mrb[0].mxu0
      %v3358 = vadd.f32 %v3235, %v3357
      %v3359 = vpop.f32.mrb[0].mxu0
      %3360 = vmatprep.mubr.bf16.mxu0 0
      %3361 = vmatmul.mubr.bf16.gmra.mrb[0].mxu0 %v3253
      %v3362 = vpop.f32.mrb[0].mxu0
      %v3363 = vadd.f32 %v3235, %v3362
      %v3364 = vpop.f32.mrb[0].mxu0
      %v3365 = vpop.f32.mrb[0].mxu0
      %v3366 = vadd.f32 %v3235, %v3365
      %v3367 = vpop.f32.mrb[0].mxu0
      %3368 = vmatprep.mubr.bf16.mxu0 0
      %3369 = vmatmul.mubr.bf16.gmra.mrb[0].mxu0 %v3256
      %v3370 = vpop.f32.mrb[0].mxu0
      %v3371 = vadd.f32 %v3235, %v3370
      %v3372 = vpop.f32.mrb[0].mxu0
      %v3373 = vpop.f32.mrb[0].mxu0
      %v3374 = vadd.f32 %v3235, %v3373
      %v3375 = vpop.f32.mrb[0].mxu0
      %3376 = vmatprep.mubr.bf16.mxu0 0
      %3377 = vmatmul.mubr.bf16.gmra.mrb[0].mxu0 %v3259
      %v3378 = vpop.f32.mrb[0].mxu0
      %v3379 = vadd.f32 %v3235, %v3378
      %v3380 = vpop.f32.mrb[0].mxu0
      %v3381 = vpop.f32.mrb[0].mxu0
      %v3382 = vadd.f32 %v3235, %v3381
      %v3383 = vpop.f32.mrb[0].mxu0
      %3384 = vmatprep.mubr.bf16.mxu0 0
      %3385 = vmatmul.mubr.bf16.gmra.mrb[0].mxu0 %v3262
      %v3386 = vpop.f32.mrb[0].mxu0
      %v3387 = vadd.f32 %v3235, %v3386
      %v3388 = vpop.f32.mrb[0].mxu0
      %v3389 = vpop.f32.mrb[0].mxu0
      %v3390 = vadd.f32 %v3235, %v3389
      %v3391 = vpop.f32.mrb[0].mxu0
      %3392 = vmatprep.mubr.bf16.mxu0 0
      %3393 = vmatmul.mubr.bf16.gmra.mrb[0].mxu0 %v3265
      %v3394 = vpop.f32.mrb[0].mxu0
      %v3395 = vadd.f32 %v3235, %v3394
      %v3396 = vpop.f32.mrb[0].mxu0
      %v3397 = vpop.f32.mrb[0].mxu0
      %v3398 = vadd.f32 %v3235, %v3397
      %v3399 = vpop.f32.mrb[0].mxu0
      %3400 = vmatprep.mubr.bf16.mxu0 0
      %3401 = vmatmul.mubr.bf16.gmra.mrb[0].mxu0 %v3268
      %v3402 = vpop.f32.mrb[0].mxu0
      %v3403 = vadd.f32 %v3235, %v3402
      %v3404 = vpop.f32.mrb[0].mxu0
      %v3405 = vpop.f32.mrb[0].mxu0
      %v3406 = vadd.f32 %v3235, %v3405
      %v3407 = vpop.f32.mrb[0].mxu0
      %3408 = vmatprep.mubr.bf16.mxu0 0
      %3409 = vmatmul.mubr.bf16.gmra.mrb[0].mxu0 %v3271
      %v3410 = vpop.f32.mrb[0].mxu0
      %v3411 = vadd.f32 %v3235, %v3410
      %v3412 = vpop.f32.mrb[0].mxu0
      %v3413 = vpop.f32.mrb[0].mxu0
      %v3414 = vadd.f32 %v3235, %v3413
      %v3415 = vpop.f32.mrb[0].mxu0
      %3416 = vmatprep.mubr.bf16.mxu0 0
      %3417 = vmatmul.mubr.bf16.gmra.mrb[0].mxu0 %v3274
      %v3418 = vpop.f32.mrb[0].mxu0
      %v3419 = vadd.f32 %v3235, %v3418
      %v3420 = vpop.f32.mrb[0].mxu0
      %v3421 = vpop.f32.mrb[0].mxu0
      %v3422 = vadd.f32 %v3235, %v3421
      %v3423 = vpop.f32.mrb[0].mxu0
      %3424 = vmatprep.mubr.bf16.mxu0 0
      %3425 = vmatmul.mubr.bf16.gmra.mrb[0].mxu0 %v3277
      %v3426 = vpop.f32.mrb[0].mxu0
      %v3427 = vadd.f32 %v3235, %v3426
      %v3428 = vpop.f32.mrb[0].mxu0
      %v3429 = vpop.f32.mrb[0].mxu0
      %v3430 = vadd.f32 %v3235, %v3429
      %v3431 = vpop.f32.mrb[0].mxu0
      %3432 = vmatprep.mubr.bf16.mxu0 0
      %3433 = vmatmul.mubr.bf16.gmra.mrb[0].mxu0 %v3280
      %v3434 = vpop.f32.mrb[0].mxu0
      %v3435 = vadd.f32 %v3235, %v3434
      %v3436 = vpop.f32.mrb[0].mxu0
      %v3437 = vpop.f32.mrb[0].mxu0
      %v3438 = vadd.f32 %v3235, %v3437
      %v3439 = vpop.f32.mrb[0].mxu0
      %3440 = vmatprep.mubr.bf16.mxu0 0
      %3441 = vmatmul.mubr.bf16.gmra.mrb[0].mxu0 %v3283
      %v3442 = vpop.f32.mrb[0].mxu0
      %v3443 = vadd.f32 %v3235, %v3442
      %v3444 = vpop.f32.mrb[0].mxu0
      %v3445 = vpop.f32.mrb[0].mxu0
      %v3446 = vadd.f32 %v3235, %v3445
      %v3447 = vpop.f32.mrb[0].mxu0
      %3448 = vdwg.mxu0
      %v3449 = vmax.f32 %v3323, 0.0
      %v3450 = vmax.f32 %v3326, 0.0
      %v3451 = vmax.f32 %v3331, 0.0
      %v3452 = vmax.f32 %v3334, 0.0
      %v3453 = vmax.f32 %v3339, 0.0
      %v3454 = vmax.f32 %v3342, 0.0
      %v3455 = vmax.f32 %v3347, 0.0
      %v3456 = vmax.f32 %v3350, 0.0
      %v3457 = vmax.f32 %v3355, 0.0
      %v3458 = vmax.f32 %v3358, 0.0
      %v3459 = vmax.f32 %v3363, 0.0
      %v3460 = vmax.f32 %v3366, 0.0
      %v3461 = vmax.f32 %v3371, 0.0
      %v3462 = vmax.f32 %v3374, 0.0
      %v3463 = vmax.f32 %v3379, 0.0
      %v3464 = vmax.f32 %v3382, 0.0
      %v3465 = vmax.f32 %v3387, 0.0
      %v3466 = vmax.f32 %v3390, 0.0
      %v3467 = vmax.f32 %v3395, 0.0
      %v3468 = vmax.f32 %v3398, 0.0
      %v3469 = vmax.f32 %v3403, 0.0
      %v3470 = vmax.f32 %v3406, 0.0
      %v3471 = vmax.f32 %v3411, 0.0
      %v3472 = vmax.f32 %v3414, 0.0
      %v3473 = vmax.f32 %v3419, 0.0
      %v3474 = vmax.f32 %v3422, 0.0
      %v3475 = vmax.f32 %v3427, 0.0
      %v3476 = vmax.f32 %v3430, 0.0
      %v3477 = vmax.f32 %v3435, 0.0
      %v3478 = vmax.f32 %v3438, 0.0
      %v3479 = vmax.f32 %v3443, 0.0
      %v3480 = vmax.f32 %v3446, 0.0
      %v3481 = vpack.c.bf16 %v3450, %v3449
      %v3482 = vpack.c.bf16 %v3452, %v3451
      %v3483 = vpack.c.bf16 %v3454, %v3453
      %v3484 = vpack.c.bf16 %v3456, %v3455
      %v3485 = vpack.c.bf16 %v3458, %v3457
      %v3486 = vpack.c.bf16 %v3460, %v3459
      %v3487 = vpack.c.bf16 %v3462, %v3461
      %v3488 = vpack.c.bf16 %v3464, %v3463
      %v3489 = vpack.c.bf16 %v3466, %v3465
      %v3490 = vpack.c.bf16 %v3468, %v3467
      %v3491 = vpack.c.bf16 %v3470, %v3469
      %v3492 = vpack.c.bf16 %v3472, %v3471
      %v3493 = vpack.c.bf16 %v3474, %v3473
      %v3494 = vpack.c.bf16 %v3476, %v3475
      %v3495 = vpack.c.bf16 %v3478, %v3477
      %v3496 = vpack.c.bf16 %v3480, %v3479
      %v3497 = vld [vmem:[%s10] sm:$0xf]
      %v3499 = vsel %vm1062, %v3481, 0
      %v3502 = vsel %vm1062, %v3482, 0
      %v3505 = vsel %vm1062, %v3483, 0
      %v3508 = vsel %vm1062, %v3484, 0
      %v3511 = vsel %vm1062, %v3485, 0
      %v3514 = vsel %vm1062, %v3486, 0
      %v3517 = vsel %vm1062, %v3487, 0
      %v3520 = vsel %vm1062, %v3488, 0
      %v3523 = vsel %vm1062, %v3489, 0
      %v3526 = vsel %vm1062, %v3490, 0
      %v3529 = vsel %vm1062, %v3491, 0
      %v3532 = vsel %vm1062, %v3492, 0
      %v3535 = vsel %vm1062, %v3493, 0
      %v3538 = vsel %vm1062, %v3494, 0
      %v3541 = vsel %vm1062, %v3495, 0
      %v3544 = vsel %vm1062, %v3496, 0
      %v3547 = vsel %vm1111, %v3497, 0
      %3549 = vmatprep.subr.bf16.mxu0 0
      %3550 = vmatpush1.bf16.msra.mxu0 %v3547
      %3551 = vmatprep.subr.bf16.mxu0 0
      %3552 = vmatpush1.bf16.msra.mxu0 0
      %3553 = vmatprep.subr.bf16.mxu0 0
      %3554 = vmatpush1.bf16.msra.mxu0 0
      %3555 = vmatprep.subr.bf16.mxu0 0
      %3556 = vmatpush1.bf16.msra.mxu0 0
      %3557 = vmatprep.subr.bf16.mxu0 0
      %3558 = vmatpush1.bf16.msra.mxu0 0
      %3559 = vmatprep.subr.bf16.mxu0 0
      %3560 = vmatpush1.bf16.msra.mxu0 0
      %3561 = vmatprep.subr.bf16.mxu0 0
      %3562 = vmatpush1.bf16.msra.mxu0 0
      %3563 = vmatprep.subr.bf16.mxu0 0
      %3564 = vmatpush1.bf16.msra.mxu0 0
      %3565 = vmatprep.subr.bf16.mxu0 0
      %3566 = vmatpush1.bf16.msra.mxu0 0
      %3567 = vmatprep.subr.bf16.mxu0 0
      %3568 = vmatpush1.bf16.msra.mxu0 0
      %3569 = vmatprep.subr.bf16.mxu0 0
      %3570 = vmatpush1.bf16.msra.mxu0 0
      %3571 = vmatprep.subr.bf16.mxu0 0
      %3572 = vmatpush1.bf16.msra.mxu0 0
      %3573 = vmatprep.subr.bf16.mxu0 0
      %3574 = vmatpush1.bf16.msra.mxu0 0
      %3575 = vmatprep.subr.bf16.mxu0 0
      %3576 = vmatpush1.bf16.msra.mxu0 0
      %3577 = vmatprep.subr.bf16.mxu0 0
      %3578 = vmatpush1.bf16.msra.mxu0 0
      %3579 = vmatprep.subr.bf16.mxu0 0
      %3580 = vmatpush1.bf16.msra.mxu0 0
      %3581 = vmatprep.mubr.bf16.mxu0 0
      %3582 = vmatmul.mubr.bf16.gmra.mrb[0].mxu0 %v3499
      %v3583 = vpop.f32.mrb[0].mxu0
      %v3584 = vadd.f32 0.0, %v3583
      %v3585 = vpop.f32.mrb[0].mxu0
      %v3586 = vpop.f32.mrb[0].mxu0
      %v3587 = vadd.f32 0.0, %v3586
      %v3588 = vpop.f32.mrb[0].mxu0
      %3589 = vmatprep.mubr.bf16.mxu0 0
      %3590 = vmatmul.mubr.bf16.gmra.mrb[0].mxu0 %v3502
      %v3591 = vpop.f32.mrb[0].mxu0
      %v3592 = vadd.f32 0.0, %v3591
      %v3593 = vpop.f32.mrb[0].mxu0
      %v3594 = vpop.f32.mrb[0].mxu0
      %v3595 = vadd.f32 0.0, %v3594
      %v3596 = vpop.f32.mrb[0].mxu0
      %3597 = vmatprep.mubr.bf16.mxu0 0
      %3598 = vmatmul.mubr.bf16.gmra.mrb[0].mxu0 %v3505
      %v3599 = vpop.f32.mrb[0].mxu0
      %v3600 = vadd.f32 0.0, %v3599
      %v3601 = vpop.f32.mrb[0].mxu0
      %v3602 = vpop.f32.mrb[0].mxu0
      %v3603 = vadd.f32 0.0, %v3602
      %v3604 = vpop.f32.mrb[0].mxu0
      %3605 = vmatprep.mubr.bf16.mxu0 0
      %3606 = vmatmul.mubr.bf16.gmra.mrb[0].mxu0 %v3508
      %v3607 = vpop.f32.mrb[0].mxu0
      %v3608 = vadd.f32 0.0, %v3607
      %v3609 = vpop.f32.mrb[0].mxu0
      %v3610 = vpop.f32.mrb[0].mxu0
      %v3611 = vadd.f32 0.0, %v3610
      %v3612 = vpop.f32.mrb[0].mxu0
      %3613 = vmatprep.mubr.bf16.mxu0 0
      %3614 = vmatmul.mubr.bf16.gmra.mrb[0].mxu0 %v3511
      %v3615 = vpop.f32.mrb[0].mxu0
      %v3616 = vadd.f32 0.0, %v3615
      %v3617 = vpop.f32.mrb[0].mxu0
      %v3618 = vpop.f32.mrb[0].mxu0
      %v3619 = vadd.f32 0.0, %v3618
      %v3620 = vpop.f32.mrb[0].mxu0
      %3621 = vmatprep.mubr.bf16.mxu0 0
      %3622 = vmatmul.mubr.bf16.gmra.mrb[0].mxu0 %v3514
      %v3623 = vpop.f32.mrb[0].mxu0
      %v3624 = vadd.f32 0.0, %v3623
      %v3625 = vpop.f32.mrb[0].mxu0
      %v3626 = vpop.f32.mrb[0].mxu0
      %v3627 = vadd.f32 0.0, %v3626
      %v3628 = vpop.f32.mrb[0].mxu0
      %3629 = vmatprep.mubr.bf16.mxu0 0
      %3630 = vmatmul.mubr.bf16.gmra.mrb[0].mxu0 %v3517
      %v3631 = vpop.f32.mrb[0].mxu0
      %v3632 = vadd.f32 0.0, %v3631
      %v3633 = vpop.f32.mrb[0].mxu0
      %v3634 = vpop.f32.mrb[0].mxu0
      %v3635 = vadd.f32 0.0, %v3634
      %v3636 = vpop.f32.mrb[0].mxu0
      %3637 = vmatprep.mubr.bf16.mxu0 0
      %3638 = vmatmul.mubr.bf16.gmra.mrb[0].mxu0 %v3520
      %v3639 = vpop.f32.mrb[0].mxu0
      %v3640 = vadd.f32 0.0, %v3639
      %v3641 = vpop.f32.mrb[0].mxu0
      %v3642 = vpop.f32.mrb[0].mxu0
      %v3643 = vadd.f32 0.0, %v3642
      %v3644 = vpop.f32.mrb[0].mxu0
      %3645 = vmatprep.mubr.bf16.mxu0 0
      %3646 = vmatmul.mubr.bf16.gmra.mrb[0].mxu0 %v3523
      %v3647 = vpop.f32.mrb[0].mxu0
      %v3648 = vadd.f32 0.0, %v3647
      %v3649 = vpop.f32.mrb[0].mxu0
      %v3650 = vpop.f32.mrb[0].mxu0
      %v3651 = vadd.f32 0.0, %v3650
      %v3652 = vpop.f32.mrb[0].mxu0
      %3653 = vmatprep.mubr.bf16.mxu0 0
      %3654 = vmatmul.mubr.bf16.gmra.mrb[0].mxu0 %v3526
      %v3655 = vpop.f32.mrb[0].mxu0
      %v3656 = vadd.f32 0.0, %v3655
      %v3657 = vpop.f32.mrb[0].mxu0
      %v3658 = vpop.f32.mrb[0].mxu0
      %v3659 = vadd.f32 0.0, %v3658
      %v3660 = vpop.f32.mrb[0].mxu0
      %3661 = vmatprep.mubr.bf16.mxu0 0
      %3662 = vmatmul.mubr.bf16.gmra.mrb[0].mxu0 %v3529
      %v3663 = vpop.f32.mrb[0].mxu0
      %v3664 = vadd.f32 0.0, %v3663
      %v3665 = vpop.f32.mrb[0].mxu0
      %v3666 = vpop.f32.mrb[0].mxu0
      %v3667 = vadd.f32 0.0, %v3666
      %v3668 = vpop.f32.mrb[0].mxu0
      %3669 = vmatprep.mubr.bf16.mxu0 0
      %3670 = vmatmul.mubr.bf16.gmra.mrb[0].mxu0 %v3532
      %v3671 = vpop.f32.mrb[0].mxu0
      %v3672 = vadd.f32 0.0, %v3671
      %v3673 = vpop.f32.mrb[0].mxu0
      %v3674 = vpop.f32.mrb[0].mxu0
      %v3675 = vadd.f32 0.0, %v3674
      %v3676 = vpop.f32.mrb[0].mxu0
      %3677 = vmatprep.mubr.bf16.mxu0 0
      %3678 = vmatmul.mubr.bf16.gmra.mrb[0].mxu0 %v3535
      %v3679 = vpop.f32.mrb[0].mxu0
      %v3680 = vadd.f32 0.0, %v3679
      %v3681 = vpop.f32.mrb[0].mxu0
      %v3682 = vpop.f32.mrb[0].mxu0
      %v3683 = vadd.f32 0.0, %v3682
      %v3684 = vpop.f32.mrb[0].mxu0
      %3685 = vmatprep.mubr.bf16.mxu0 0
      %3686 = vmatmul.mubr.bf16.gmra.mrb[0].mxu0 %v3538
      %v3687 = vpop.f32.mrb[0].mxu0
      %v3688 = vadd.f32 0.0, %v3687
      %v3689 = vpop.f32.mrb[0].mxu0
      %v3690 = vpop.f32.mrb[0].mxu0
      %v3691 = vadd.f32 0.0, %v3690
      %v3692 = vpop.f32.mrb[0].mxu0
      %3693 = vmatprep.mubr.bf16.mxu0 0
      %3694 = vmatmul.mubr.bf16.gmra.mrb[0].mxu0 %v3541
      %v3695 = vpop.f32.mrb[0].mxu0
      %v3696 = vadd.f32 0.0, %v3695
      %v3697 = vpop.f32.mrb[0].mxu0
      %v3698 = vpop.f32.mrb[0].mxu0
      %v3699 = vadd.f32 0.0, %v3698
      %v3700 = vpop.f32.mrb[0].mxu0
      %3701 = vmatprep.mubr.bf16.mxu0 0
      %3702 = vmatmul.mubr.bf16.gmra.mrb[0].mxu0 %v3544
      %v3703 = vpop.f32.mrb[0].mxu0
      %v3704 = vadd.f32 0.0, %v3703
      %v3705 = vpop.f32.mrb[0].mxu0
      %v3706 = vpop.f32.mrb[0].mxu0
      %v3707 = vadd.f32 0.0, %v3706
      %v3708 = vpop.f32.mrb[0].mxu0
      %3709 = vdwg.mxu0
      %3710 = vst.msk [vmem:[%s1276 + $0x1] sm:$0xff] %vm523, %v3584
      %3711 = vst.msk [vmem:[%s1276 + $0x9] sm:$0xff] %vm523, %v3587
      %3712 = vst.msk [vmem:[%s1276 + $0x19] sm:$0xff] %vm523, %v3592
      %3713 = vst.msk [vmem:[%s1276 + $0x21] sm:$0xff] %vm523, %v3595
      %3714 = vst.msk [vmem:[%s1276 + $0x31] sm:$0xff] %vm523, %v3600
      %3715 = vst.msk [vmem:[%s1276 + $0x39] sm:$0xff] %vm523, %v3603
      %3716 = vst.msk [vmem:[%s1276 + $0x49] sm:$0xff] %vm523, %v3608
      %3717 = vst.msk [vmem:[%s1276 + $0x51] sm:$0xff] %vm523, %v3611
      %3718 = vst.msk [vmem:[%s1276 + $0x61] sm:$0xff] %vm523, %v3616
      %3719 = vst.msk [vmem:[%s1276 + $0x69] sm:$0xff] %vm523, %v3619
      %3720 = vst.msk [vmem:[%s1276 + $0x79] sm:$0xff] %vm523, %v3624
      %3721 = vst.msk [vmem:[%s1276 + $0x81] sm:$0xff] %vm523, %v3627
      %3722 = vst.msk [vmem:[%s1276 + $0x91] sm:$0xff] %vm523, %v3632
      %3723 = vst.msk [vmem:[%s1276 + $0x99] sm:$0xff] %vm523, %v3635
      %3724 = vst.msk [vmem:[%s1276 + $0xa9] sm:$0xff] %vm523, %v3640
      %3725 = vst.msk [vmem:[%s1276 + $0xb1] sm:$0xff] %vm523, %v3643
      %3726 = vst.msk [vmem:[%s1276 + $0xc1] sm:$0xff] %vm523, %v3648
      %3727 = vst.msk [vmem:[%s1276 + $0xc9] sm:$0xff] %vm523, %v3651
      %3728 = vst.msk [vmem:[%s1276 + $0xd9] sm:$0xff] %vm523, %v3656
      %3729 = vst.msk [vmem:[%s1276 + $0xe1] sm:$0xff] %vm523, %v3659
      %3730 = vst.msk [vmem:[%s1276 + $0xf1] sm:$0xff] %vm523, %v3664
      %3731 = vst.msk [vmem:[%s1276 + $0xf9] sm:$0xff] %vm523, %v3667
      %3732 = vst.msk [vmem:[%s1276 + $0x109] sm:$0xff] %vm523, %v3672
      %3733 = vst.msk [vmem:[%s1276 + $0x111] sm:$0xff] %vm523, %v3675
      %3734 = vst.msk [vmem:[%s1276 + $0x121] sm:$0xff] %vm523, %v3680
      %3735 = vst.msk [vmem:[%s1276 + $0x129] sm:$0xff] %vm523, %v3683
      %3736 = vst.msk [vmem:[%s1276 + $0x139] sm:$0xff] %vm523, %v3688
      %3737 = vst.msk [vmem:[%s1276 + $0x141] sm:$0xff] %vm523, %v3691
      %3738 = vst.msk [vmem:[%s1276 + $0x151] sm:$0xff] %vm523, %v3696
      %3739 = vst.msk [vmem:[%s1276 + $0x159] sm:$0xff] %vm523, %v3699
      %3740 = vst.msk [vmem:[%s1276 + $0x169] sm:$0xff] %vm523, %v3704
      %3741 = vst.msk [vmem:[%s1276 + $0x171] sm:$0xff] %vm523, %v3707
      %v3742 = vld [vmem:[#allocation3] sm:$0xff]
      %v3743 = vld [vmem:[#allocation3 + $0x8] sm:$0xff]
      %v3744 = vld [vmem:[#allocation3 + $0x18] sm:$0xff]
      %v3745 = vld [vmem:[#allocation3 + $0x20] sm:$0xff]
      %v3746 = vld [vmem:[#allocation3 + $0x30] sm:$0xff]
      %v3747 = vld [vmem:[#allocation3 + $0x38] sm:$0xff]
      %v3748 = vld [vmem:[#allocation3 + $0x48] sm:$0xff]
      %v3749 = vld [vmem:[#allocation3 + $0x50] sm:$0xff]
      %v3750 = vld [vmem:[#allocation3 + $0x60] sm:$0xff]
      %v3751 = vld [vmem:[#allocation3 + $0x68] sm:$0xff]
      %v3752 = vld [vmem:[#allocation3 + $0x78] sm:$0xff]
      %v3753 = vld [vmem:[#allocation3 + $0x80] sm:$0xff]
      %v3754 = vld [vmem:[#allocation3 + $0x90] sm:$0xff]
      %v3755 = vld [vmem:[#allocation3 + $0x98] sm:$0xff]
      %v3756 = vld [vmem:[#allocation3 + $0xa8] sm:$0xff]
      %v3757 = vld [vmem:[#allocation3 + $0xb0] sm:$0xff]
      %v3758 = vld [vmem:[#allocation3 + $0xc0] sm:$0xff]
      %v3759 = vld [vmem:[#allocation3 + $0xc8] sm:$0xff]
      %v3760 = vld [vmem:[#allocation3 + $0xd8] sm:$0xff]
      %v3761 = vld [vmem:[#allocation3 + $0xe0] sm:$0xff]
      %v3762 = vld [vmem:[#allocation3 + $0xf0] sm:$0xff]
      %v3763 = vld [vmem:[#allocation3 + $0xf8] sm:$0xff]
      %v3764 = vld [vmem:[#allocation3 + $0x108] sm:$0xff]
      %v3765 = vld [vmem:[#allocation3 + $0x110] sm:$0xff]
      %v3766 = vld [vmem:[#allocation3 + $0x120] sm:$0xff]
      %v3767 = vld [vmem:[#allocation3 + $0x128] sm:$0xff]
      %v3768 = vld [vmem:[#allocation3 + $0x138] sm:$0xff]
      %v3769 = vld [vmem:[#allocation3 + $0x140] sm:$0xff]
      %v3770 = vld [vmem:[#allocation3 + $0x150] sm:$0xff]
      %v3771 = vld [vmem:[#allocation3 + $0x158] sm:$0xff]
      %v3772 = vld [vmem:[#allocation3 + $0x168] sm:$0xff]
      %v3773 = vld [vmem:[#allocation3 + $0x170] sm:$0xff]
      %v3774 = vadd.f32 %v3742, 0.0
      %v3775 = vadd.f32 %v3743, 0.0
      %v3776 = vadd.f32 %v3744, 0.0
      %v3777 = vadd.f32 %v3745, 0.0
      %v3778 = vadd.f32 %v3746, 0.0
      %v3779 = vadd.f32 %v3747, 0.0
      %v3780 = vadd.f32 %v3748, 0.0
      %v3781 = vadd.f32 %v3749, 0.0
      %v3782 = vadd.f32 %v3750, 0.0
      %v3783 = vadd.f32 %v3751, 0.0
      %v3784 = vadd.f32 %v3752, 0.0
      %v3785 = vadd.f32 %v3753, 0.0
      %v3786 = vadd.f32 %v3754, 0.0
      %v3787 = vadd.f32 %v3755, 0.0
      %v3788 = vadd.f32 %v3756, 0.0
      %v3789 = vadd.f32 %v3757, 0.0
      %v3790 = vadd.f32 %v3758, 0.0
      %v3791 = vadd.f32 %v3759, 0.0
      %v3792 = vadd.f32 %v3760, 0.0
      %v3793 = vadd.f32 %v3761, 0.0
      %v3794 = vadd.f32 %v3762, 0.0
      %v3795 = vadd.f32 %v3763, 0.0
      %v3796 = vadd.f32 %v3764, 0.0
      %v3797 = vadd.f32 %v3765, 0.0
      %v3798 = vadd.f32 %v3766, 0.0
      %v3799 = vadd.f32 %v3767, 0.0
      %v3800 = vadd.f32 %v3768, 0.0
      %v3801 = vadd.f32 %v3769, 0.0
      %v3802 = vadd.f32 %v3770, 0.0
      %v3803 = vadd.f32 %v3771, 0.0
      %v3804 = vadd.f32 %v3772, 0.0
      %v3805 = vadd.f32 %v3773, 0.0
      %v3806 = vld [vmem:[#allocation3 + $0x1] sm:$0xff]
      %v3807 = vld [vmem:[#allocation3 + $0x9] sm:$0xff]
      %v3808 = vld [vmem:[#allocation3 + $0x19] sm:$0xff]
      %v3809 = vld [vmem:[#allocation3 + $0x21] sm:$0xff]
      %v3810 = vld [vmem:[#allocation3 + $0x31] sm:$0xff]
      %v3811 = vld [vmem:[#allocation3 + $0x39] sm:$0xff]
      %v3812 = vld [vmem:[#allocation3 + $0x49] sm:$0xff]
      %v3813 = vld [vmem:[#allocation3 + $0x51] sm:$0xff]
      %v3814 = vld [vmem:[#allocation3 + $0x61] sm:$0xff]
      %v3815 = vld [vmem:[#allocation3 + $0x69] sm:$0xff]
      %v3816 = vld [vmem:[#allocation3 + $0x79] sm:$0xff]
      %v3817 = vld [vmem:[#allocation3 + $0x81] sm:$0xff]
      %v3818 = vld [vmem:[#allocation3 + $0x91] sm:$0xff]
      %v3819 = vld [vmem:[#allocation3 + $0x99] sm:$0xff]
      %v3820 = vld [vmem:[#allocation3 + $0xa9] sm:$0xff]
      %v3821 = vld [vmem:[#allocation3 + $0xb1] sm:$0xff]
      %v3822 = vld [vmem:[#allocation3 + $0xc1] sm:$0xff]
      %v3823 = vld [vmem:[#allocation3 + $0xc9] sm:$0xff]
      %v3824 = vld [vmem:[#allocation3 + $0xd9] sm:$0xff]
      %v3825 = vld [vmem:[#allocation3 + $0xe1] sm:$0xff]
      %v3826 = vld [vmem:[#allocation3 + $0xf1] sm:$0xff]
      %v3827 = vld [vmem:[#allocation3 + $0xf9] sm:$0xff]
      %v3828 = vld [vmem:[#allocation3 + $0x109] sm:$0xff]
      %v3829 = vld [vmem:[#allocation3 + $0x111] sm:$0xff]
      %v3830 = vld [vmem:[#allocation3 + $0x121] sm:$0xff]
      %v3831 = vld [vmem:[#allocation3 + $0x129] sm:$0xff]
      %v3832 = vld [vmem:[#allocation3 + $0x139] sm:$0xff]
      %v3833 = vld [vmem:[#allocation3 + $0x141] sm:$0xff]
      %v3834 = vld [vmem:[#allocation3 + $0x151] sm:$0xff]
      %v3835 = vld [vmem:[#allocation3 + $0x159] sm:$0xff]
      %v3836 = vld [vmem:[#allocation3 + $0x169] sm:$0xff]
      %v3837 = vld [vmem:[#allocation3 + $0x171] sm:$0xff]
      %3870 = vrot.lane.b32.xlu0 %v3806, 124
      %v3871 = vpop.permute.xlu0 %3870
      %3872 = vrot.lane.b32.xlu0 %v3807, 124
      %v3873 = vpop.permute.xlu0 %3872
      %3874 = vrot.lane.b32.xlu0 %v3808, 124
      %v3875 = vpop.permute.xlu0 %3874
      %3876 = vrot.lane.b32.xlu0 %v3809, 124
      %v3877 = vpop.permute.xlu0 %3876
      %3878 = vrot.lane.b32.xlu0 %v3810, 124
      %v3879 = vpop.permute.xlu0 %3878
      %3880 = vrot.lane.b32.xlu0 %v3811, 124
      %v3881 = vpop.permute.xlu0 %3880
      %3882 = vrot.lane.b32.xlu0 %v3812, 124
      %v3883 = vpop.permute.xlu0 %3882
      %3884 = vrot.lane.b32.xlu0 %v3813, 124
      %v3885 = vpop.permute.xlu0 %3884
      %3886 = vrot.lane.b32.xlu0 %v3814, 124
      %v3887 = vpop.permute.xlu0 %3886
      %3888 = vrot.lane.b32.xlu0 %v3815, 124
      %v3889 = vpop.permute.xlu0 %3888
      %3890 = vrot.lane.b32.xlu0 %v3816, 124
      %v3891 = vpop.permute.xlu0 %3890
      %3892 = vrot.lane.b32.xlu0 %v3817, 124
      %v3893 = vpop.permute.xlu0 %3892
      %3894 = vrot.lane.b32.xlu0 %v3818, 124
      %v3895 = vpop.permute.xlu0 %3894
      %3896 = vrot.lane.b32.xlu0 %v3819, 124
      %v3897 = vpop.permute.xlu0 %3896
      %3898 = vrot.lane.b32.xlu0 %v3820, 124
      %v3899 = vpop.permute.xlu0 %3898
      %3900 = vrot.lane.b32.xlu0 %v3821, 124
      %v3901 = vpop.permute.xlu0 %3900
      %3902 = vrot.lane.b32.xlu0 %v3822, 124
      %v3903 = vpop.permute.xlu0 %3902
      %3904 = vrot.lane.b32.xlu0 %v3823, 124
      %v3905 = vpop.permute.xlu0 %3904
      %3906 = vrot.lane.b32.xlu0 %v3824, 124
      %v3907 = vpop.permute.xlu0 %3906
      %3908 = vrot.lane.b32.xlu0 %v3825, 124
      %v3909 = vpop.permute.xlu0 %3908
      %3910 = vrot.lane.b32.xlu0 %v3826, 124
      %v3911 = vpop.permute.xlu0 %3910
      %3912 = vrot.lane.b32.xlu0 %v3827, 124
      %v3913 = vpop.permute.xlu0 %3912
      %3914 = vrot.lane.b32.xlu0 %v3828, 124
      %v3915 = vpop.permute.xlu0 %3914
      %3916 = vrot.lane.b32.xlu0 %v3829, 124
      %v3917 = vpop.permute.xlu0 %3916
      %3918 = vrot.lane.b32.xlu0 %v3830, 124
      %v3919 = vpop.permute.xlu0 %3918
      %3920 = vrot.lane.b32.xlu0 %v3831, 124
      %v3921 = vpop.permute.xlu0 %3920
      %3922 = vrot.lane.b32.xlu0 %v3832, 124
      %v3923 = vpop.permute.xlu0 %3922
      %3924 = vrot.lane.b32.xlu0 %v3833, 124
      %v3925 = vpop.permute.xlu0 %3924
      %3926 = vrot.lane.b32.xlu0 %v3834, 124
      %v3927 = vpop.permute.xlu0 %3926
      %3928 = vrot.lane.b32.xlu0 %v3835, 124
      %v3929 = vpop.permute.xlu0 %3928
      %3930 = vrot.lane.b32.xlu0 %v3836, 124
      %v3931 = vpop.permute.xlu0 %3930
      %3932 = vrot.lane.b32.xlu0 %v3837, 124
      %v3933 = vpop.permute.xlu0 %3932
      %v3966 = vadd.f32 %v3774, %v3871
      %v3967 = vadd.f32 %v3775, %v3873
      %v3968 = vadd.f32 %v3776, %v3875
      %v3969 = vadd.f32 %v3777, %v3877
      %v3970 = vadd.f32 %v3778, %v3879
      %v3971 = vadd.f32 %v3779, %v3881
      %v3972 = vadd.f32 %v3780, %v3883
      %v3973 = vadd.f32 %v3781, %v3885
      %v3974 = vadd.f32 %v3782, %v3887
      %v3975 = vadd.f32 %v3783, %v3889
      %v3976 = vadd.f32 %v3784, %v3891
      %v3977 = vadd.f32 %v3785, %v3893
      %v3978 = vadd.f32 %v3786, %v3895
      %v3979 = vadd.f32 %v3787, %v3897
      %v3980 = vadd.f32 %v3788, %v3899
      %v3981 = vadd.f32 %v3789, %v3901
      %v3982 = vadd.f32 %v3790, %v3903
      %v3983 = vadd.f32 %v3791, %v3905
      %v3984 = vadd.f32 %v3792, %v3907
      %v3985 = vadd.f32 %v3793, %v3909
      %v3986 = vadd.f32 %v3794, %v3911
      %v3987 = vadd.f32 %v3795, %v3913
      %v3988 = vadd.f32 %v3796, %v3915
      %v3989 = vadd.f32 %v3797, %v3917
      %v3990 = vadd.f32 %v3798, %v3919
      %v3991 = vadd.f32 %v3799, %v3921
      %v3992 = vadd.f32 %v3800, %v3923
      %v3993 = vadd.f32 %v3801, %v3925
      %v3994 = vadd.f32 %v3802, %v3927
      %v3995 = vadd.f32 %v3803, %v3929
      %v3996 = vadd.f32 %v3804, %v3931
      %v3997 = vadd.f32 %v3805, %v3933
      %v3998 = vld [vmem:[#allocation3 + $0x2] sm:$0xff]
      %v3999 = vld [vmem:[#allocation3 + $0xa] sm:$0xff]
      %v4000 = vld [vmem:[#allocation3 + $0x1a] sm:$0xff]
      %v4001 = vld [vmem:[#allocation3 + $0x22] sm:$0xff]
      %v4002 = vld [vmem:[#allocation3 + $0x32] sm:$0xff]
      %v4003 = vld [vmem:[#allocation3 + $0x3a] sm:$0xff]
      %v4004 = vld [vmem:[#allocation3 + $0x4a] sm:$0xff]
      %v4005 = vld [vmem:[#allocation3 + $0x52] sm:$0xff]
      %v4006 = vld [vmem:[#allocation3 + $0x62] sm:$0xff]
      %v4007 = vld [vmem:[#allocation3 + $0x6a] sm:$0xff]
      %v4008 = vld [vmem:[#allocation3 + $0x7a] sm:$0xff]
      %v4009 = vld [vmem:[#allocation3 + $0x82] sm:$0xff]
      %v4010 = vld [vmem:[#allocation3 + $0x92] sm:$0xff]
      %v4011 = vld [vmem:[#allocation3 + $0x9a] sm:$0xff]
      %v4012 = vld [vmem:[#allocation3 + $0xaa] sm:$0xff]
      %v4013 = vld [vmem:[#allocation3 + $0xb2] sm:$0xff]
      %v4014 = vld [vmem:[#allocation3 + $0xc2] sm:$0xff]
      %v4015 = vld [vmem:[#allocation3 + $0xca] sm:$0xff]
      %v4016 = vld [vmem:[#allocation3 + $0xda] sm:$0xff]
      %v4017 = vld [vmem:[#allocation3 + $0xe2] sm:$0xff]
      %v4018 = vld [vmem:[#allocation3 + $0xf2] sm:$0xff]
      %v4019 = vld [vmem:[#allocation3 + $0xfa] sm:$0xff]
      %v4020 = vld [vmem:[#allocation3 + $0x10a] sm:$0xff]
      %v4021 = vld [vmem:[#allocation3 + $0x112] sm:$0xff]
      %v4022 = vld [vmem:[#allocation3 + $0x122] sm:$0xff]
      %v4023 = vld [vmem:[#allocation3 + $0x12a] sm:$0xff]
      %v4024 = vld [vmem:[#allocation3 + $0x13a] sm:$0xff]
      %v4025 = vld [vmem:[#allocation3 + $0x142] sm:$0xff]
      %v4026 = vld [vmem:[#allocation3 + $0x152] sm:$0xff]
      %v4027 = vld [vmem:[#allocation3 + $0x15a] sm:$0xff]
      %v4028 = vld [vmem:[#allocation3 + $0x16a] sm:$0xff]
      %v4029 = vld [vmem:[#allocation3 + $0x172] sm:$0xff]
      %4062 = vrot.lane.b32.xlu0 %v3998, 120
      %v4063 = vpop.permute.xlu0 %4062
      %4064 = vrot.lane.b32.xlu0 %v3999, 120
      %v4065 = vpop.permute.xlu0 %4064
      %4066 = vrot.lane.b32.xlu0 %v4000, 120
      %v4067 = vpop.permute.xlu0 %4066
      %4068 = vrot.lane.b32.xlu0 %v4001, 120
      %v4069 = vpop.permute.xlu0 %4068
      %4070 = vrot.lane.b32.xlu0 %v4002, 120
      %v4071 = vpop.permute.xlu0 %4070
      %4072 = vrot.lane.b32.xlu0 %v4003, 120
      %v4073 = vpop.permute.xlu0 %4072
      %4074 = vrot.lane.b32.xlu0 %v4004, 120
      %v4075 = vpop.permute.xlu0 %4074
      %4076 = vrot.lane.b32.xlu0 %v4005, 120
      %v4077 = vpop.permute.xlu0 %4076
      %4078 = vrot.lane.b32.xlu0 %v4006, 120
      %v4079 = vpop.permute.xlu0 %4078
      %4080 = vrot.lane.b32.xlu0 %v4007, 120
      %v4081 = vpop.permute.xlu0 %4080
      %4082 = vrot.lane.b32.xlu0 %v4008, 120
      %v4083 = vpop.permute.xlu0 %4082
      %4084 = vrot.lane.b32.xlu0 %v4009, 120
      %v4085 = vpop.permute.xlu0 %4084
      %4086 = vrot.lane.b32.xlu0 %v4010, 120
      %v4087 = vpop.permute.xlu0 %4086
      %4088 = vrot.lane.b32.xlu0 %v4011, 120
      %v4089 = vpop.permute.xlu0 %4088
      %4090 = vrot.lane.b32.xlu0 %v4012, 120
      %v4091 = vpop.permute.xlu0 %4090
      %4092 = vrot.lane.b32.xlu0 %v4013, 120
      %v4093 = vpop.permute.xlu0 %4092
      %4094 = vrot.lane.b32.xlu0 %v4014, 120
      %v4095 = vpop.permute.xlu0 %4094
      %4096 = vrot.lane.b32.xlu0 %v4015, 120
      %v4097 = vpop.permute.xlu0 %4096
      %4098 = vrot.lane.b32.xlu0 %v4016, 120
      %v4099 = vpop.permute.xlu0 %4098
      %4100 = vrot.lane.b32.xlu0 %v4017, 120
      %v4101 = vpop.permute.xlu0 %4100
      %4102 = vrot.lane.b32.xlu0 %v4018, 120
      %v4103 = vpop.permute.xlu0 %4102
      %4104 = vrot.lane.b32.xlu0 %v4019, 120
      %v4105 = vpop.permute.xlu0 %4104
      %4106 = vrot.lane.b32.xlu0 %v4020, 120
      %v4107 = vpop.permute.xlu0 %4106
      %4108 = vrot.lane.b32.xlu0 %v4021, 120
      %v4109 = vpop.permute.xlu0 %4108
      %4110 = vrot.lane.b32.xlu0 %v4022, 120
      %v4111 = vpop.permute.xlu0 %4110
      %4112 = vrot.lane.b32.xlu0 %v4023, 120
      %v4113 = vpop.permute.xlu0 %4112
      %4114 = vrot.lane.b32.xlu0 %v4024, 120
      %v4115 = vpop.permute.xlu0 %4114
      %4116 = vrot.lane.b32.xlu0 %v4025, 120
      %v4117 = vpop.permute.xlu0 %4116
      %4118 = vrot.lane.b32.xlu0 %v4026, 120
      %v4119 = vpop.permute.xlu0 %4118
      %4120 = vrot.lane.b32.xlu0 %v4027, 120
      %v4121 = vpop.permute.xlu0 %4120
      %4122 = vrot.lane.b32.xlu0 %v4028, 120
      %v4123 = vpop.permute.xlu0 %4122
      %4124 = vrot.lane.b32.xlu0 %v4029, 120
      %v4125 = vpop.permute.xlu0 %4124
      %v4158 = vadd.f32 %v3966, %v4063
      %v4159 = vadd.f32 %v3967, %v4065
      %v4160 = vadd.f32 %v3968, %v4067
      %v4161 = vadd.f32 %v3969, %v4069
      %v4162 = vadd.f32 %v3970, %v4071
      %v4163 = vadd.f32 %v3971, %v4073
      %v4164 = vadd.f32 %v3972, %v4075
      %v4165 = vadd.f32 %v3973, %v4077
      %v4166 = vadd.f32 %v3974, %v4079
      %v4167 = vadd.f32 %v3975, %v4081
      %v4168 = vadd.f32 %v3976, %v4083
      %v4169 = vadd.f32 %v3977, %v4085
      %v4170 = vadd.f32 %v3978, %v4087
      %v4171 = vadd.f32 %v3979, %v4089
      %v4172 = vadd.f32 %v3980, %v4091
      %v4173 = vadd.f32 %v3981, %v4093
      %v4174 = vadd.f32 %v3982, %v4095
      %v4175 = vadd.f32 %v3983, %v4097
      %v4176 = vadd.f32 %v3984, %v4099
      %v4177 = vadd.f32 %v3985, %v4101
      %v4178 = vadd.f32 %v3986, %v4103
      %v4179 = vadd.f32 %v3987, %v4105
      %v4180 = vadd.f32 %v3988, %v4107
      %v4181 = vadd.f32 %v3989, %v4109
      %v4182 = vadd.f32 %v3990, %v4111
      %v4183 = vadd.f32 %v3991, %v4113
      %v4184 = vadd.f32 %v3992, %v4115
      %v4185 = vadd.f32 %v3993, %v4117
      %v4186 = vadd.f32 %v3994, %v4119
      %v4187 = vadd.f32 %v3995, %v4121
      %v4188 = vadd.f32 %v3996, %v4123
      %v4189 = vadd.f32 %v3997, %v4125
      %v4190 = vld [vmem:[%s1276] sm:$0xff]
      %v4191 = vld [vmem:[%s1276 + $0x8] sm:$0xff]
      %v4192 = vld [vmem:[%s1276 + $0x18] sm:$0xff]
      %v4193 = vld [vmem:[%s1276 + $0x20] sm:$0xff]
      %v4194 = vld [vmem:[%s1276 + $0x30] sm:$0xff]
      %v4195 = vld [vmem:[%s1276 + $0x38] sm:$0xff]
      %v4196 = vld [vmem:[%s1276 + $0x48] sm:$0xff]
      %v4197 = vld [vmem:[%s1276 + $0x50] sm:$0xff]
      %v4198 = vld [vmem:[%s1276 + $0x60] sm:$0xff]
      %v4199 = vld [vmem:[%s1276 + $0x68] sm:$0xff]
      %v4200 = vld [vmem:[%s1276 + $0x78] sm:$0xff]
      %v4201 = vld [vmem:[%s1276 + $0x80] sm:$0xff]
      %v4202 = vld [vmem:[%s1276 + $0x90] sm:$0xff]
      %v4203 = vld [vmem:[%s1276 + $0x98] sm:$0xff]
      %v4204 = vld [vmem:[%s1276 + $0xa8] sm:$0xff]
      %v4205 = vld [vmem:[%s1276 + $0xb0] sm:$0xff]
      %v4206 = vld [vmem:[%s1276 + $0xc0] sm:$0xff]
      %v4207 = vld [vmem:[%s1276 + $0xc8] sm:$0xff]
      %v4208 = vld [vmem:[%s1276 + $0xd8] sm:$0xff]
      %v4209 = vld [vmem:[%s1276 + $0xe0] sm:$0xff]
      %v4210 = vld [vmem:[%s1276 + $0xf0] sm:$0xff]
      %v4211 = vld [vmem:[%s1276 + $0xf8] sm:$0xff]
      %v4212 = vld [vmem:[%s1276 + $0x108] sm:$0xff]
      %v4213 = vld [vmem:[%s1276 + $0x110] sm:$0xff]
      %v4214 = vld [vmem:[%s1276 + $0x120] sm:$0xff]
      %v4215 = vld [vmem:[%s1276 + $0x128] sm:$0xff]
      %v4216 = vld [vmem:[%s1276 + $0x138] sm:$0xff]
      %v4217 = vld [vmem:[%s1276 + $0x140] sm:$0xff]
      %v4218 = vld [vmem:[%s1276 + $0x150] sm:$0xff]
      %v4219 = vld [vmem:[%s1276 + $0x158] sm:$0xff]
      %v4220 = vld [vmem:[%s1276 + $0x168] sm:$0xff]
      %v4221 = vld [vmem:[%s1276 + $0x170] sm:$0xff]
      %4254 = vrot.lane.b32.xlu0 %v4190, 116
      %v4255 = vpop.permute.xlu0 %4254
      %4256 = vrot.lane.b32.xlu0 %v4191, 116
      %v4257 = vpop.permute.xlu0 %4256
      %4258 = vrot.lane.b32.xlu0 %v4192, 116
      %v4259 = vpop.permute.xlu0 %4258
      %4260 = vrot.lane.b32.xlu0 %v4193, 116
      %v4261 = vpop.permute.xlu0 %4260
      %4262 = vrot.lane.b32.xlu0 %v4194, 116
      %v4263 = vpop.permute.xlu0 %4262
      %4264 = vrot.lane.b32.xlu0 %v4195, 116
      %v4265 = vpop.permute.xlu0 %4264
      %4266 = vrot.lane.b32.xlu0 %v4196, 116
      %v4267 = vpop.permute.xlu0 %4266
      %4268 = vrot.lane.b32.xlu0 %v4197, 116
      %v4269 = vpop.permute.xlu0 %4268
      %4270 = vrot.lane.b32.xlu0 %v4198, 116
      %v4271 = vpop.permute.xlu0 %4270
      %4272 = vrot.lane.b32.xlu0 %v4199, 116
      %v4273 = vpop.permute.xlu0 %4272
      %4274 = vrot.lane.b32.xlu0 %v4200, 116
      %v4275 = vpop.permute.xlu0 %4274
      %4276 = vrot.lane.b32.xlu0 %v4201, 116
      %v4277 = vpop.permute.xlu0 %4276
      %4278 = vrot.lane.b32.xlu0 %v4202, 116
      %v4279 = vpop.permute.xlu0 %4278
      %4280 = vrot.lane.b32.xlu0 %v4203, 116
      %v4281 = vpop.permute.xlu0 %4280
      %4282 = vrot.lane.b32.xlu0 %v4204, 116
      %v4283 = vpop.permute.xlu0 %4282
      %4284 = vrot.lane.b32.xlu0 %v4205, 116
      %v4285 = vpop.permute.xlu0 %4284
      %4286 = vrot.lane.b32.xlu0 %v4206, 116
      %v4287 = vpop.permute.xlu0 %4286
      %4288 = vrot.lane.b32.xlu0 %v4207, 116
      %v4289 = vpop.permute.xlu0 %4288
      %4290 = vrot.lane.b32.xlu0 %v4208, 116
      %v4291 = vpop.permute.xlu0 %4290
      %4292 = vrot.lane.b32.xlu0 %v4209, 116
      %v4293 = vpop.permute.xlu0 %4292
      %4294 = vrot.lane.b32.xlu0 %v4210, 116
      %v4295 = vpop.permute.xlu0 %4294
      %4296 = vrot.lane.b32.xlu0 %v4211, 116
      %v4297 = vpop.permute.xlu0 %4296
      %4298 = vrot.lane.b32.xlu0 %v4212, 116
      %v4299 = vpop.permute.xlu0 %4298
      %4300 = vrot.lane.b32.xlu0 %v4213, 116
      %v4301 = vpop.permute.xlu0 %4300
      %4302 = vrot.lane.b32.xlu0 %v4214, 116
      %v4303 = vpop.permute.xlu0 %4302
      %4304 = vrot.lane.b32.xlu0 %v4215, 116
      %v4305 = vpop.permute.xlu0 %4304
      %4306 = vrot.lane.b32.xlu0 %v4216, 116
      %v4307 = vpop.permute.xlu0 %4306
      %4308 = vrot.lane.b32.xlu0 %v4217, 116
      %v4309 = vpop.permute.xlu0 %4308
      %4310 = vrot.lane.b32.xlu0 %v4218, 116
      %v4311 = vpop.permute.xlu0 %4310
      %4312 = vrot.lane.b32.xlu0 %v4219, 116
      %v4313 = vpop.permute.xlu0 %4312
      %4314 = vrot.lane.b32.xlu0 %v4220, 116
      %v4315 = vpop.permute.xlu0 %4314
      %4316 = vrot.lane.b32.xlu0 %v4221, 116
      %v4317 = vpop.permute.xlu0 %4316
      %v4350 = vadd.f32 %v4158, %v4255
      %v4351 = vadd.f32 %v4159, %v4257
      %v4352 = vadd.f32 %v4160, %v4259
      %v4353 = vadd.f32 %v4161, %v4261
      %v4354 = vadd.f32 %v4162, %v4263
      %v4355 = vadd.f32 %v4163, %v4265
      %v4356 = vadd.f32 %v4164, %v4267
      %v4357 = vadd.f32 %v4165, %v4269
      %v4358 = vadd.f32 %v4166, %v4271
      %v4359 = vadd.f32 %v4167, %v4273
      %v4360 = vadd.f32 %v4168, %v4275
      %v4361 = vadd.f32 %v4169, %v4277
      %v4362 = vadd.f32 %v4170, %v4279
      %v4363 = vadd.f32 %v4171, %v4281
      %v4364 = vadd.f32 %v4172, %v4283
      %v4365 = vadd.f32 %v4173, %v4285
      %v4366 = vadd.f32 %v4174, %v4287
      %v4367 = vadd.f32 %v4175, %v4289
      %v4368 = vadd.f32 %v4176, %v4291
      %v4369 = vadd.f32 %v4177, %v4293
      %v4370 = vadd.f32 %v4178, %v4295
      %v4371 = vadd.f32 %v4179, %v4297
      %v4372 = vadd.f32 %v4180, %v4299
      %v4373 = vadd.f32 %v4181, %v4301
      %v4374 = vadd.f32 %v4182, %v4303
      %v4375 = vadd.f32 %v4183, %v4305
      %v4376 = vadd.f32 %v4184, %v4307
      %v4377 = vadd.f32 %v4185, %v4309
      %v4378 = vadd.f32 %v4186, %v4311
      %v4379 = vadd.f32 %v4187, %v4313
      %v4380 = vadd.f32 %v4188, %v4315
      %v4381 = vadd.f32 %v4189, %v4317
      %v4382 = vld [vmem:[%s1276 + $0x1] sm:$0xff]
      %v4383 = vld [vmem:[%s1276 + $0x9] sm:$0xff]
      %v4384 = vld [vmem:[%s1276 + $0x19] sm:$0xff]
      %v4385 = vld [vmem:[%s1276 + $0x21] sm:$0xff]
      %v4386 = vld [vmem:[%s1276 + $0x31] sm:$0xff]
      %v4387 = vld [vmem:[%s1276 + $0x39] sm:$0xff]
      %v4388 = vld [vmem:[%s1276 + $0x49] sm:$0xff]
      %v4389 = vld [vmem:[%s1276 + $0x51] sm:$0xff]
      %v4390 = vld [vmem:[%s1276 + $0x61] sm:$0xff]
      %v4391 = vld [vmem:[%s1276 + $0x69] sm:$0xff]
      %v4392 = vld [vmem:[%s1276 + $0x79] sm:$0xff]
      %v4393 = vld [vmem:[%s1276 + $0x81] sm:$0xff]
      %v4394 = vld [vmem:[%s1276 + $0x91] sm:$0xff]
      %v4395 = vld [vmem:[%s1276 + $0x99] sm:$0xff]
      %v4396 = vld [vmem:[%s1276 + $0xa9] sm:$0xff]
      %v4397 = vld [vmem:[%s1276 + $0xb1] sm:$0xff]
      %v4398 = vld [vmem:[%s1276 + $0xc1] sm:$0xff]
      %v4399 = vld [vmem:[%s1276 + $0xc9] sm:$0xff]
      %v4400 = vld [vmem:[%s1276 + $0xd9] sm:$0xff]
      %v4401 = vld [vmem:[%s1276 + $0xe1] sm:$0xff]
      %v4402 = vld [vmem:[%s1276 + $0xf1] sm:$0xff]
      %v4403 = vld [vmem:[%s1276 + $0xf9] sm:$0xff]
      %v4404 = vld [vmem:[%s1276 + $0x109] sm:$0xff]
      %v4405 = vld [vmem:[%s1276 + $0x111] sm:$0xff]
      %v4406 = vld [vmem:[%s1276 + $0x121] sm:$0xff]
      %v4407 = vld [vmem:[%s1276 + $0x129] sm:$0xff]
      %v4408 = vld [vmem:[%s1276 + $0x139] sm:$0xff]
      %v4409 = vld [vmem:[%s1276 + $0x141] sm:$0xff]
      %v4410 = vld [vmem:[%s1276 + $0x151] sm:$0xff]
      %v4411 = vld [vmem:[%s1276 + $0x159] sm:$0xff]
      %v4412 = vld [vmem:[%s1276 + $0x169] sm:$0xff]
      %v4413 = vld [vmem:[%s1276 + $0x171] sm:$0xff]
      %4446 = vrot.lane.b32.xlu0 %v4382, 112
      %v4447 = vpop.permute.xlu0 %4446
      %4448 = vrot.lane.b32.xlu0 %v4383, 112
      %v4449 = vpop.permute.xlu0 %4448
      %4450 = vrot.lane.b32.xlu0 %v4384, 112
      %v4451 = vpop.permute.xlu0 %4450
      %4452 = vrot.lane.b32.xlu0 %v4385, 112
      %v4453 = vpop.permute.xlu0 %4452
      %4454 = vrot.lane.b32.xlu0 %v4386, 112
      %v4455 = vpop.permute.xlu0 %4454
      %4456 = vrot.lane.b32.xlu0 %v4387, 112
      %v4457 = vpop.permute.xlu0 %4456
      %4458 = vrot.lane.b32.xlu0 %v4388, 112
      %v4459 = vpop.permute.xlu0 %4458
      %4460 = vrot.lane.b32.xlu0 %v4389, 112
      %v4461 = vpop.permute.xlu0 %4460
      %4462 = vrot.lane.b32.xlu0 %v4390, 112
      %v4463 = vpop.permute.xlu0 %4462
      %4464 = vrot.lane.b32.xlu0 %v4391, 112
      %v4465 = vpop.permute.xlu0 %4464
      %4466 = vrot.lane.b32.xlu0 %v4392, 112
      %v4467 = vpop.permute.xlu0 %4466
      %4468 = vrot.lane.b32.xlu0 %v4393, 112
      %v4469 = vpop.permute.xlu0 %4468
      %4470 = vrot.lane.b32.xlu0 %v4394, 112
      %v4471 = vpop.permute.xlu0 %4470
      %4472 = vrot.lane.b32.xlu0 %v4395, 112
      %v4473 = vpop.permute.xlu0 %4472
      %4474 = vrot.lane.b32.xlu0 %v4396, 112
      %v4475 = vpop.permute.xlu0 %4474
      %4476 = vrot.lane.b32.xlu0 %v4397, 112
      %v4477 = vpop.permute.xlu0 %4476
      %4478 = vrot.lane.b32.xlu0 %v4398, 112
      %v4479 = vpop.permute.xlu0 %4478
      %4480 = vrot.lane.b32.xlu0 %v4399, 112
      %v4481 = vpop.permute.xlu0 %4480
      %4482 = vrot.lane.b32.xlu0 %v4400, 112
      %v4483 = vpop.permute.xlu0 %4482
      %4484 = vrot.lane.b32.xlu0 %v4401, 112
      %v4485 = vpop.permute.xlu0 %4484
      %4486 = vrot.lane.b32.xlu0 %v4402, 112
      %v4487 = vpop.permute.xlu0 %4486
      %4488 = vrot.lane.b32.xlu0 %v4403, 112
      %v4489 = vpop.permute.xlu0 %4488
      %4490 = vrot.lane.b32.xlu0 %v4404, 112
      %v4491 = vpop.permute.xlu0 %4490
      %4492 = vrot.lane.b32.xlu0 %v4405, 112
      %v4493 = vpop.permute.xlu0 %4492
      %4494 = vrot.lane.b32.xlu0 %v4406, 112
      %v4495 = vpop.permute.xlu0 %4494
      %4496 = vrot.lane.b32.xlu0 %v4407, 112
      %v4497 = vpop.permute.xlu0 %4496
      %4498 = vrot.lane.b32.xlu0 %v4408, 112
      %v4499 = vpop.permute.xlu0 %4498
      %4500 = vrot.lane.b32.xlu0 %v4409, 112
      %v4501 = vpop.permute.xlu0 %4500
      %4502 = vrot.lane.b32.xlu0 %v4410, 112
      %v4503 = vpop.permute.xlu0 %4502
      %4504 = vrot.lane.b32.xlu0 %v4411, 112
      %v4505 = vpop.permute.xlu0 %4504
      %4506 = vrot.lane.b32.xlu0 %v4412, 112
      %v4507 = vpop.permute.xlu0 %4506
      %4508 = vrot.lane.b32.xlu0 %v4413, 112
      %v4509 = vpop.permute.xlu0 %4508
      %v4542 = vadd.f32 %v4350, %v4447
      %v4543 = vadd.f32 %v4351, %v4449
      %v4544 = vadd.f32 %v4352, %v4451
      %v4545 = vadd.f32 %v4353, %v4453
      %v4546 = vadd.f32 %v4354, %v4455
      %v4547 = vadd.f32 %v4355, %v4457
      %v4548 = vadd.f32 %v4356, %v4459
      %v4549 = vadd.f32 %v4357, %v4461
      %v4550 = vadd.f32 %v4358, %v4463
      %v4551 = vadd.f32 %v4359, %v4465
      %v4552 = vadd.f32 %v4360, %v4467
      %v4553 = vadd.f32 %v4361, %v4469
      %v4554 = vadd.f32 %v4362, %v4471
      %v4555 = vadd.f32 %v4363, %v4473
      %v4556 = vadd.f32 %v4364, %v4475
      %v4557 = vadd.f32 %v4365, %v4477
      %v4558 = vadd.f32 %v4366, %v4479
      %v4559 = vadd.f32 %v4367, %v4481
      %v4560 = vadd.f32 %v4368, %v4483
      %v4561 = vadd.f32 %v4369, %v4485
      %v4562 = vadd.f32 %v4370, %v4487
      %v4563 = vadd.f32 %v4371, %v4489
      %v4564 = vadd.f32 %v4372, %v4491
      %v4565 = vadd.f32 %v4373, %v4493
      %v4566 = vadd.f32 %v4374, %v4495
      %v4567 = vadd.f32 %v4375, %v4497
      %v4568 = vadd.f32 %v4376, %v4499
      %v4569 = vadd.f32 %v4377, %v4501
      %v4570 = vadd.f32 %v4378, %v4503
      %v4571 = vadd.f32 %v4379, %v4505
      %v4572 = vadd.f32 %v4380, %v4507
      %v4573 = vadd.f32 %v4381, %v4509
      %v4574 = vld [vmem:[%s1276 + $0x2] sm:$0xff]
      %v4575 = vld [vmem:[%s1276 + $0xa] sm:$0xff]
      %v4576 = vld [vmem:[%s1276 + $0x1a] sm:$0xff]
      %v4577 = vld [vmem:[%s1276 + $0x22] sm:$0xff]
      %v4578 = vld [vmem:[%s1276 + $0x32] sm:$0xff]
      %v4579 = vld [vmem:[%s1276 + $0x3a] sm:$0xff]
      %v4580 = vld [vmem:[%s1276 + $0x4a] sm:$0xff]
      %v4581 = vld [vmem:[%s1276 + $0x52] sm:$0xff]
      %v4582 = vld [vmem:[%s1276 + $0x62] sm:$0xff]
      %v4583 = vld [vmem:[%s1276 + $0x6a] sm:$0xff]
      %v4584 = vld [vmem:[%s1276 + $0x7a] sm:$0xff]
      %v4585 = vld [vmem:[%s1276 + $0x82] sm:$0xff]
      %v4586 = vld [vmem:[%s1276 + $0x92] sm:$0xff]
      %v4587 = vld [vmem:[%s1276 + $0x9a] sm:$0xff]
      %v4588 = vld [vmem:[%s1276 + $0xaa] sm:$0xff]
      %v4589 = vld [vmem:[%s1276 + $0xb2] sm:$0xff]
      %v4590 = vld [vmem:[%s1276 + $0xc2] sm:$0xff]
      %v4591 = vld [vmem:[%s1276 + $0xca] sm:$0xff]
      %v4592 = vld [vmem:[%s1276 + $0xda] sm:$0xff]
      %v4593 = vld [vmem:[%s1276 + $0xe2] sm:$0xff]
      %v4594 = vld [vmem:[%s1276 + $0xf2] sm:$0xff]
      %v4595 = vld [vmem:[%s1276 + $0xfa] sm:$0xff]
      %v4596 = vld [vmem:[%s1276 + $0x10a] sm:$0xff]
      %v4597 = vld [vmem:[%s1276 + $0x112] sm:$0xff]
      %v4598 = vld [vmem:[%s1276 + $0x122] sm:$0xff]
      %v4599 = vld [vmem:[%s1276 + $0x12a] sm:$0xff]
      %v4600 = vld [vmem:[%s1276 + $0x13a] sm:$0xff]
      %v4601 = vld [vmem:[%s1276 + $0x142] sm:$0xff]
      %v4602 = vld [vmem:[%s1276 + $0x152] sm:$0xff]
      %v4603 = vld [vmem:[%s1276 + $0x15a] sm:$0xff]
      %v4604 = vld [vmem:[%s1276 + $0x16a] sm:$0xff]
      %v4605 = vld [vmem:[%s1276 + $0x172] sm:$0xff]
      %4638 = vrot.lane.b32.xlu0 %v4574, 108
      %v4639 = vpop.permute.xlu0 %4638
      %4640 = vrot.lane.b32.xlu0 %v4575, 108
      %v4641 = vpop.permute.xlu0 %4640
      %4642 = vrot.lane.b32.xlu0 %v4576, 108
      %v4643 = vpop.permute.xlu0 %4642
      %4644 = vrot.lane.b32.xlu0 %v4577, 108
      %v4645 = vpop.permute.xlu0 %4644
      %4646 = vrot.lane.b32.xlu0 %v4578, 108
      %v4647 = vpop.permute.xlu0 %4646
      %4648 = vrot.lane.b32.xlu0 %v4579, 108
      %v4649 = vpop.permute.xlu0 %4648
      %4650 = vrot.lane.b32.xlu0 %v4580, 108
      %v4651 = vpop.permute.xlu0 %4650
      %4652 = vrot.lane.b32.xlu0 %v4581, 108
      %v4653 = vpop.permute.xlu0 %4652
      %4654 = vrot.lane.b32.xlu0 %v4582, 108
      %v4655 = vpop.permute.xlu0 %4654
      %4656 = vrot.lane.b32.xlu0 %v4583, 108
      %v4657 = vpop.permute.xlu0 %4656
      %4658 = vrot.lane.b32.xlu0 %v4584, 108
      %v4659 = vpop.permute.xlu0 %4658
      %4660 = vrot.lane.b32.xlu0 %v4585, 108
      %v4661 = vpop.permute.xlu0 %4660
      %4662 = vrot.lane.b32.xlu0 %v4586, 108
      %v4663 = vpop.permute.xlu0 %4662
      %4664 = vrot.lane.b32.xlu0 %v4587, 108
      %v4665 = vpop.permute.xlu0 %4664
      %4666 = vrot.lane.b32.xlu0 %v4588, 108
      %v4667 = vpop.permute.xlu0 %4666
      %4668 = vrot.lane.b32.xlu0 %v4589, 108
      %v4669 = vpop.permute.xlu0 %4668
      %4670 = vrot.lane.b32.xlu0 %v4590, 108
      %v4671 = vpop.permute.xlu0 %4670
      %4672 = vrot.lane.b32.xlu0 %v4591, 108
      %v4673 = vpop.permute.xlu0 %4672
      %4674 = vrot.lane.b32.xlu0 %v4592, 108
      %v4675 = vpop.permute.xlu0 %4674
      %4676 = vrot.lane.b32.xlu0 %v4593, 108
      %v4677 = vpop.permute.xlu0 %4676
      %4678 = vrot.lane.b32.xlu0 %v4594, 108
      %v4679 = vpop.permute.xlu0 %4678
      %4680 = vrot.lane.b32.xlu0 %v4595, 108
      %v4681 = vpop.permute.xlu0 %4680
      %4682 = vrot.lane.b32.xlu0 %v4596, 108
      %v4683 = vpop.permute.xlu0 %4682
      %4684 = vrot.lane.b32.xlu0 %v4597, 108
      %v4685 = vpop.permute.xlu0 %4684
      %4686 = vrot.lane.b32.xlu0 %v4598, 108
      %v4687 = vpop.permute.xlu0 %4686
      %4688 = vrot.lane.b32.xlu0 %v4599, 108
      %v4689 = vpop.permute.xlu0 %4688
      %4690 = vrot.lane.b32.xlu0 %v4600, 108
      %v4691 = vpop.permute.xlu0 %4690
      %4692 = vrot.lane.b32.xlu0 %v4601, 108
      %v4693 = vpop.permute.xlu0 %4692
      %4694 = vrot.lane.b32.xlu0 %v4602, 108
      %v4695 = vpop.permute.xlu0 %4694
      %4696 = vrot.lane.b32.xlu0 %v4603, 108
      %v4697 = vpop.permute.xlu0 %4696
      %4698 = vrot.lane.b32.xlu0 %v4604, 108
      %v4699 = vpop.permute.xlu0 %4698
      %4700 = vrot.lane.b32.xlu0 %v4605, 108
      %v4701 = vpop.permute.xlu0 %4700
      %v4734 = vadd.f32 %v4542, %v4639
      %v4735 = vadd.f32 %v4543, %v4641
      %v4736 = vadd.f32 %v4544, %v4643
      %v4737 = vadd.f32 %v4545, %v4645
      %v4738 = vadd.f32 %v4546, %v4647
      %v4739 = vadd.f32 %v4547, %v4649
      %v4740 = vadd.f32 %v4548, %v4651
      %v4741 = vadd.f32 %v4549, %v4653
      %v4742 = vadd.f32 %v4550, %v4655
      %v4743 = vadd.f32 %v4551, %v4657
      %v4744 = vadd.f32 %v4552, %v4659
      %v4745 = vadd.f32 %v4553, %v4661
      %v4746 = vadd.f32 %v4554, %v4663
      %v4747 = vadd.f32 %v4555, %v4665
      %v4748 = vadd.f32 %v4556, %v4667
      %v4749 = vadd.f32 %v4557, %v4669
      %v4750 = vadd.f32 %v4558, %v4671
      %v4751 = vadd.f32 %v4559, %v4673
      %v4752 = vadd.f32 %v4560, %v4675
      %v4753 = vadd.f32 %v4561, %v4677
      %v4754 = vadd.f32 %v4562, %v4679
      %v4755 = vadd.f32 %v4563, %v4681
      %v4756 = vadd.f32 %v4564, %v4683
      %v4757 = vadd.f32 %v4565, %v4685
      %v4758 = vadd.f32 %v4566, %v4687
      %v4759 = vadd.f32 %v4567, %v4689
      %v4760 = vadd.f32 %v4568, %v4691
      %v4761 = vadd.f32 %v4569, %v4693
      %v4762 = vadd.f32 %v4570, %v4695
      %v4763 = vadd.f32 %v4571, %v4697
      %v4764 = vadd.f32 %v4572, %v4699
      %v4765 = vadd.f32 %v4573, %v4701
      %v4766 = vld [vmem:[%s2333] sm:$0xff]
      %v4767 = vld [vmem:[%s2333 + $0x8] sm:$0xff]
      %v4768 = vld [vmem:[%s2333 + $0x18] sm:$0xff]
      %v4769 = vld [vmem:[%s2333 + $0x20] sm:$0xff]
      %v4770 = vld [vmem:[%s2333 + $0x30] sm:$0xff]
      %v4771 = vld [vmem:[%s2333 + $0x38] sm:$0xff]
      %v4772 = vld [vmem:[%s2333 + $0x48] sm:$0xff]
      %v4773 = vld [vmem:[%s2333 + $0x50] sm:$0xff]
      %v4774 = vld [vmem:[%s2333 + $0x60] sm:$0xff]
      %v4775 = vld [vmem:[%s2333 + $0x68] sm:$0xff]
      %v4776 = vld [vmem:[%s2333 + $0x78] sm:$0xff]
      %v4777 = vld [vmem:[%s2333 + $0x80] sm:$0xff]
      %v4778 = vld [vmem:[%s2333 + $0x90] sm:$0xff]
      %v4779 = vld [vmem:[%s2333 + $0x98] sm:$0xff]
      %v4780 = vld [vmem:[%s2333 + $0xa8] sm:$0xff]
      %v4781 = vld [vmem:[%s2333 + $0xb0] sm:$0xff]
      %v4782 = vld [vmem:[%s2333 + $0xc0] sm:$0xff]
      %v4783 = vld [vmem:[%s2333 + $0xc8] sm:$0xff]
      %v4784 = vld [vmem:[%s2333 + $0xd8] sm:$0xff]
      %v4785 = vld [vmem:[%s2333 + $0xe0] sm:$0xff]
      %v4786 = vld [vmem:[%s2333 + $0xf0] sm:$0xff]
      %v4787 = vld [vmem:[%s2333 + $0xf8] sm:$0xff]
      %v4788 = vld [vmem:[%s2333 + $0x108] sm:$0xff]
      %v4789 = vld [vmem:[%s2333 + $0x110] sm:$0xff]
      %v4790 = vld [vmem:[%s2333 + $0x120] sm:$0xff]
      %v4791 = vld [vmem:[%s2333 + $0x128] sm:$0xff]
      %v4792 = vld [vmem:[%s2333 + $0x138] sm:$0xff]
      %v4793 = vld [vmem:[%s2333 + $0x140] sm:$0xff]
      %v4794 = vld [vmem:[%s2333 + $0x150] sm:$0xff]
      %v4795 = vld [vmem:[%s2333 + $0x158] sm:$0xff]
      %v4796 = vld [vmem:[%s2333 + $0x168] sm:$0xff]
      %v4797 = vld [vmem:[%s2333 + $0x170] sm:$0xff]
      %4830 = vrot.lane.b32.xlu0 %v4766, 104
      %v4831 = vpop.permute.xlu0 %4830
      %4832 = vrot.lane.b32.xlu0 %v4767, 104
      %v4833 = vpop.permute.xlu0 %4832
      %4834 = vrot.lane.b32.xlu0 %v4768, 104
      %v4835 = vpop.permute.xlu0 %4834
      %4836 = vrot.lane.b32.xlu0 %v4769, 104
      %v4837 = vpop.permute.xlu0 %4836
      %4838 = vrot.lane.b32.xlu0 %v4770, 104
      %v4839 = vpop.permute.xlu0 %4838
      %4840 = vrot.lane.b32.xlu0 %v4771, 104
      %v4841 = vpop.permute.xlu0 %4840
      %4842 = vrot.lane.b32.xlu0 %v4772, 104
      %v4843 = vpop.permute.xlu0 %4842
      %4844 = vrot.lane.b32.xlu0 %v4773, 104
      %v4845 = vpop.permute.xlu0 %4844
      %4846 = vrot.lane.b32.xlu0 %v4774, 104
      %v4847 = vpop.permute.xlu0 %4846
      %4848 = vrot.lane.b32.xlu0 %v4775, 104
      %v4849 = vpop.permute.xlu0 %4848
      %4850 = vrot.lane.b32.xlu0 %v4776, 104
      %v4851 = vpop.permute.xlu0 %4850
      %4852 = vrot.lane.b32.xlu0 %v4777, 104
      %v4853 = vpop.permute.xlu0 %4852
      %4854 = vrot.lane.b32.xlu0 %v4778, 104
      %v4855 = vpop.permute.xlu0 %4854
      %4856 = vrot.lane.b32.xlu0 %v4779, 104
      %v4857 = vpop.permute.xlu0 %4856
      %4858 = vrot.lane.b32.xlu0 %v4780, 104
      %v4859 = vpop.permute.xlu0 %4858
      %4860 = vrot.lane.b32.xlu0 %v4781, 104
      %v4861 = vpop.permute.xlu0 %4860
      %4862 = vrot.lane.b32.xlu0 %v4782, 104
      %v4863 = vpop.permute.xlu0 %4862
      %4864 = vrot.lane.b32.xlu0 %v4783, 104
      %v4865 = vpop.permute.xlu0 %4864
      %4866 = vrot.lane.b32.xlu0 %v4784, 104
      %v4867 = vpop.permute.xlu0 %4866
      %4868 = vrot.lane.b32.xlu0 %v4785, 104
      %v4869 = vpop.permute.xlu0 %4868
      %4870 = vrot.lane.b32.xlu0 %v4786, 104
      %v4871 = vpop.permute.xlu0 %4870
      %4872 = vrot.lane.b32.xlu0 %v4787, 104
      %v4873 = vpop.permute.xlu0 %4872
      %4874 = vrot.lane.b32.xlu0 %v4788, 104
      %v4875 = vpop.permute.xlu0 %4874
      %4876 = vrot.lane.b32.xlu0 %v4789, 104
      %v4877 = vpop.permute.xlu0 %4876
      %4878 = vrot.lane.b32.xlu0 %v4790, 104
      %v4879 = vpop.permute.xlu0 %4878
      %4880 = vrot.lane.b32.xlu0 %v4791, 104
      %v4881 = vpop.permute.xlu0 %4880
      %4882 = vrot.lane.b32.xlu0 %v4792, 104
      %v4883 = vpop.permute.xlu0 %4882
      %4884 = vrot.lane.b32.xlu0 %v4793, 104
      %v4885 = vpop.permute.xlu0 %4884
      %4886 = vrot.lane.b32.xlu0 %v4794, 104
      %v4887 = vpop.permute.xlu0 %4886
      %4888 = vrot.lane.b32.xlu0 %v4795, 104
      %v4889 = vpop.permute.xlu0 %4888
      %4890 = vrot.lane.b32.xlu0 %v4796, 104
      %v4891 = vpop.permute.xlu0 %4890
      %4892 = vrot.lane.b32.xlu0 %v4797, 104
      %v4893 = vpop.permute.xlu0 %4892
      %v4926 = vadd.f32 %v4734, %v4831
      %v4927 = vadd.f32 %v4735, %v4833
      %v4928 = vadd.f32 %v4736, %v4835
      %v4929 = vadd.f32 %v4737, %v4837
      %v4930 = vadd.f32 %v4738, %v4839
      %v4931 = vadd.f32 %v4739, %v4841
      %v4932 = vadd.f32 %v4740, %v4843
      %v4933 = vadd.f32 %v4741, %v4845
      %v4934 = vadd.f32 %v4742, %v4847
      %v4935 = vadd.f32 %v4743, %v4849
      %v4936 = vadd.f32 %v4744, %v4851
      %v4937 = vadd.f32 %v4745, %v4853
      %v4938 = vadd.f32 %v4746, %v4855
      %v4939 = vadd.f32 %v4747, %v4857
      %v4940 = vadd.f32 %v4748, %v4859
      %v4941 = vadd.f32 %v4749, %v4861
      %v4942 = vadd.f32 %v4750, %v4863
      %v4943 = vadd.f32 %v4751, %v4865
      %v4944 = vadd.f32 %v4752, %v4867
      %v4945 = vadd.f32 %v4753, %v4869
      %v4946 = vadd.f32 %v4754, %v4871
      %v4947 = vadd.f32 %v4755, %v4873
      %v4948 = vadd.f32 %v4756, %v4875
      %v4949 = vadd.f32 %v4757, %v4877
      %v4950 = vadd.f32 %v4758, %v4879
      %v4951 = vadd.f32 %v4759, %v4881
      %v4952 = vadd.f32 %v4760, %v4883
      %v4953 = vadd.f32 %v4761, %v4885
      %v4954 = vadd.f32 %v4762, %v4887
      %v4955 = vadd.f32 %v4763, %v4889
      %v4956 = vadd.f32 %v4764, %v4891
      %v4957 = vadd.f32 %v4765, %v4893
      %v4958 = vld [vmem:[%s2333 + $0x1] sm:$0xff]
      %v4959 = vld [vmem:[%s2333 + $0x9] sm:$0xff]
      %v4960 = vld [vmem:[%s2333 + $0x19] sm:$0xff]
      %v4961 = vld [vmem:[%s2333 + $0x21] sm:$0xff]
      %v4962 = vld [vmem:[%s2333 + $0x31] sm:$0xff]
      %v4963 = vld [vmem:[%s2333 + $0x39] sm:$0xff]
      %v4964 = vld [vmem:[%s2333 + $0x49] sm:$0xff]
      %v4965 = vld [vmem:[%s2333 + $0x51] sm:$0xff]
      %v4966 = vld [vmem:[%s2333 + $0x61] sm:$0xff]
      %v4967 = vld [vmem:[%s2333 + $0x69] sm:$0xff]
      %v4968 = vld [vmem:[%s2333 + $0x79] sm:$0xff]
      %v4969 = vld [vmem:[%s2333 + $0x81] sm:$0xff]
      %v4970 = vld [vmem:[%s2333 + $0x91] sm:$0xff]
      %v4971 = vld [vmem:[%s2333 + $0x99] sm:$0xff]
      %v4972 = vld [vmem:[%s2333 + $0xa9] sm:$0xff]
      %v4973 = vld [vmem:[%s2333 + $0xb1] sm:$0xff]
      %v4974 = vld [vmem:[%s2333 + $0xc1] sm:$0xff]
      %v4975 = vld [vmem:[%s2333 + $0xc9] sm:$0xff]
      %v4976 = vld [vmem:[%s2333 + $0xd9] sm:$0xff]
      %v4977 = vld [vmem:[%s2333 + $0xe1] sm:$0xff]
      %v4978 = vld [vmem:[%s2333 + $0xf1] sm:$0xff]
      %v4979 = vld [vmem:[%s2333 + $0xf9] sm:$0xff]
      %v4980 = vld [vmem:[%s2333 + $0x109] sm:$0xff]
      %v4981 = vld [vmem:[%s2333 + $0x111] sm:$0xff]
      %v4982 = vld [vmem:[%s2333 + $0x121] sm:$0xff]
      %v4983 = vld [vmem:[%s2333 + $0x129] sm:$0xff]
      %v4984 = vld [vmem:[%s2333 + $0x139] sm:$0xff]
      %v4985 = vld [vmem:[%s2333 + $0x141] sm:$0xff]
      %v4986 = vld [vmem:[%s2333 + $0x151] sm:$0xff]
      %v4987 = vld [vmem:[%s2333 + $0x159] sm:$0xff]
      %v4988 = vld [vmem:[%s2333 + $0x169] sm:$0xff]
      %v4989 = vld [vmem:[%s2333 + $0x171] sm:$0xff]
      %5022 = vrot.lane.b32.xlu0 %v4958, 100
      %v5023 = vpop.permute.xlu0 %5022
      %5024 = vrot.lane.b32.xlu0 %v4959, 100
      %v5025 = vpop.permute.xlu0 %5024
      %5026 = vrot.lane.b32.xlu0 %v4960, 100
      %v5027 = vpop.permute.xlu0 %5026
      %5028 = vrot.lane.b32.xlu0 %v4961, 100
      %v5029 = vpop.permute.xlu0 %5028
      %5030 = vrot.lane.b32.xlu0 %v4962, 100
      %v5031 = vpop.permute.xlu0 %5030
      %5032 = vrot.lane.b32.xlu0 %v4963, 100
      %v5033 = vpop.permute.xlu0 %5032
      %5034 = vrot.lane.b32.xlu0 %v4964, 100
      %v5035 = vpop.permute.xlu0 %5034
      %5036 = vrot.lane.b32.xlu0 %v4965, 100
      %v5037 = vpop.permute.xlu0 %5036
      %5038 = vrot.lane.b32.xlu0 %v4966, 100
      %v5039 = vpop.permute.xlu0 %5038
      %5040 = vrot.lane.b32.xlu0 %v4967, 100
      %v5041 = vpop.permute.xlu0 %5040
      %5042 = vrot.lane.b32.xlu0 %v4968, 100
      %v5043 = vpop.permute.xlu0 %5042
      %5044 = vrot.lane.b32.xlu0 %v4969, 100
      %v5045 = vpop.permute.xlu0 %5044
      %5046 = vrot.lane.b32.xlu0 %v4970, 100
      %v5047 = vpop.permute.xlu0 %5046
      %5048 = vrot.lane.b32.xlu0 %v4971, 100
      %v5049 = vpop.permute.xlu0 %5048
      %5050 = vrot.lane.b32.xlu0 %v4972, 100
      %v5051 = vpop.permute.xlu0 %5050
      %5052 = vrot.lane.b32.xlu0 %v4973, 100
      %v5053 = vpop.permute.xlu0 %5052
      %5054 = vrot.lane.b32.xlu0 %v4974, 100
      %v5055 = vpop.permute.xlu0 %5054
      %5056 = vrot.lane.b32.xlu0 %v4975, 100
      %v5057 = vpop.permute.xlu0 %5056
      %5058 = vrot.lane.b32.xlu0 %v4976, 100
      %v5059 = vpop.permute.xlu0 %5058
      %5060 = vrot.lane.b32.xlu0 %v4977, 100
      %v5061 = vpop.permute.xlu0 %5060
      %5062 = vrot.lane.b32.xlu0 %v4978, 100
      %v5063 = vpop.permute.xlu0 %5062
      %5064 = vrot.lane.b32.xlu0 %v4979, 100
      %v5065 = vpop.permute.xlu0 %5064
      %5066 = vrot.lane.b32.xlu0 %v4980, 100
      %v5067 = vpop.permute.xlu0 %5066
      %5068 = vrot.lane.b32.xlu0 %v4981, 100
      %v5069 = vpop.permute.xlu0 %5068
      %5070 = vrot.lane.b32.xlu0 %v4982, 100
      %v5071 = vpop.permute.xlu0 %5070
      %5072 = vrot.lane.b32.xlu0 %v4983, 100
      %v5073 = vpop.permute.xlu0 %5072
      %5074 = vrot.lane.b32.xlu0 %v4984, 100
      %v5075 = vpop.permute.xlu0 %5074
      %5076 = vrot.lane.b32.xlu0 %v4985, 100
      %v5077 = vpop.permute.xlu0 %5076
      %5078 = vrot.lane.b32.xlu0 %v4986, 100
      %v5079 = vpop.permute.xlu0 %5078
      %5080 = vrot.lane.b32.xlu0 %v4987, 100
      %v5081 = vpop.permute.xlu0 %5080
      %5082 = vrot.lane.b32.xlu0 %v4988, 100
      %v5083 = vpop.permute.xlu0 %5082
      %5084 = vrot.lane.b32.xlu0 %v4989, 100
      %v5085 = vpop.permute.xlu0 %5084
      %v5118 = vadd.f32 %v4926, %v5023
      %v5119 = vadd.f32 %v4927, %v5025
      %v5120 = vadd.f32 %v4928, %v5027
      %v5121 = vadd.f32 %v4929, %v5029
      %v5122 = vadd.f32 %v4930, %v5031
      %v5123 = vadd.f32 %v4931, %v5033
      %v5124 = vadd.f32 %v4932, %v5035
      %v5125 = vadd.f32 %v4933, %v5037
      %v5126 = vadd.f32 %v4934, %v5039
      %v5127 = vadd.f32 %v4935, %v5041
      %v5128 = vadd.f32 %v4936, %v5043
      %v5129 = vadd.f32 %v4937, %v5045
      %v5130 = vadd.f32 %v4938, %v5047
      %v5131 = vadd.f32 %v4939, %v5049
      %v5132 = vadd.f32 %v4940, %v5051
      %v5133 = vadd.f32 %v4941, %v5053
      %v5134 = vadd.f32 %v4942, %v5055
      %v5135 = vadd.f32 %v4943, %v5057
      %v5136 = vadd.f32 %v4944, %v5059
      %v5137 = vadd.f32 %v4945, %v5061
      %v5138 = vadd.f32 %v4946, %v5063
      %v5139 = vadd.f32 %v4947, %v5065
      %v5140 = vadd.f32 %v4948, %v5067
      %v5141 = vadd.f32 %v4949, %v5069
      %v5142 = vadd.f32 %v4950, %v5071
      %v5143 = vadd.f32 %v4951, %v5073
      %v5144 = vadd.f32 %v4952, %v5075
      %v5145 = vadd.f32 %v4953, %v5077
      %v5146 = vadd.f32 %v4954, %v5079
      %v5147 = vadd.f32 %v4955, %v5081
      %v5148 = vadd.f32 %v4956, %v5083
      %v5149 = vadd.f32 %v4957, %v5085
      %v5150 = vld [vmem:[%s2333 + $0x2] sm:$0xff]
      %v5151 = vld [vmem:[%s2333 + $0xa] sm:$0xff]
      %v5152 = vld [vmem:[%s2333 + $0x1a] sm:$0xff]
      %v5153 = vld [vmem:[%s2333 + $0x22] sm:$0xff]
      %v5154 = vld [vmem:[%s2333 + $0x32] sm:$0xff]
      %v5155 = vld [vmem:[%s2333 + $0x3a] sm:$0xff]
      %v5156 = vld [vmem:[%s2333 + $0x4a] sm:$0xff]
      %v5157 = vld [vmem:[%s2333 + $0x52] sm:$0xff]
      %v5158 = vld [vmem:[%s2333 + $0x62] sm:$0xff]
      %v5159 = vld [vmem:[%s2333 + $0x6a] sm:$0xff]
      %v5160 = vld [vmem:[%s2333 + $0x7a] sm:$0xff]
      %v5161 = vld [vmem:[%s2333 + $0x82] sm:$0xff]
      %v5162 = vld [vmem:[%s2333 + $0x92] sm:$0xff]
      %v5163 = vld [vmem:[%s2333 + $0x9a] sm:$0xff]
      %v5164 = vld [vmem:[%s2333 + $0xaa] sm:$0xff]
      %v5165 = vld [vmem:[%s2333 + $0xb2] sm:$0xff]
      %v5166 = vld [vmem:[%s2333 + $0xc2] sm:$0xff]
      %v5167 = vld [vmem:[%s2333 + $0xca] sm:$0xff]
      %v5168 = vld [vmem:[%s2333 + $0xda] sm:$0xff]
      %v5169 = vld [vmem:[%s2333 + $0xe2] sm:$0xff]
      %v5170 = vld [vmem:[%s2333 + $0xf2] sm:$0xff]
      %v5171 = vld [vmem:[%s2333 + $0xfa] sm:$0xff]
      %v5172 = vld [vmem:[%s2333 + $0x10a] sm:$0xff]
      %v5173 = vld [vmem:[%s2333 + $0x112] sm:$0xff]
      %v5174 = vld [vmem:[%s2333 + $0x122] sm:$0xff]
      %v5175 = vld [vmem:[%s2333 + $0x12a] sm:$0xff]
      %v5176 = vld [vmem:[%s2333 + $0x13a] sm:$0xff]
      %v5177 = vld [vmem:[%s2333 + $0x142] sm:$0xff]
      %v5178 = vld [vmem:[%s2333 + $0x152] sm:$0xff]
      %v5179 = vld [vmem:[%s2333 + $0x15a] sm:$0xff]
      %v5180 = vld [vmem:[%s2333 + $0x16a] sm:$0xff]
      %v5181 = vld [vmem:[%s2333 + $0x172] sm:$0xff]
      %5214 = vrot.lane.b32.xlu0 %v5150, 96
      %v5215 = vpop.permute.xlu0 %5214
      %5216 = vrot.lane.b32.xlu0 %v5151, 96
      %v5217 = vpop.permute.xlu0 %5216
      %5218 = vrot.lane.b32.xlu0 %v5152, 96
      %v5219 = vpop.permute.xlu0 %5218
      %5220 = vrot.lane.b32.xlu0 %v5153, 96
      %v5221 = vpop.permute.xlu0 %5220
      %5222 = vrot.lane.b32.xlu0 %v5154, 96
      %v5223 = vpop.permute.xlu0 %5222
      %5224 = vrot.lane.b32.xlu0 %v5155, 96
      %v5225 = vpop.permute.xlu0 %5224
      %5226 = vrot.lane.b32.xlu0 %v5156, 96
      %v5227 = vpop.permute.xlu0 %5226
      %5228 = vrot.lane.b32.xlu0 %v5157, 96
      %v5229 = vpop.permute.xlu0 %5228
      %5230 = vrot.lane.b32.xlu0 %v5158, 96
      %v5231 = vpop.permute.xlu0 %5230
      %5232 = vrot.lane.b32.xlu0 %v5159, 96
      %v5233 = vpop.permute.xlu0 %5232
      %5234 = vrot.lane.b32.xlu0 %v5160, 96
      %v5235 = vpop.permute.xlu0 %5234
      %5236 = vrot.lane.b32.xlu0 %v5161, 96
      %v5237 = vpop.permute.xlu0 %5236
      %5238 = vrot.lane.b32.xlu0 %v5162, 96
      %v5239 = vpop.permute.xlu0 %5238
      %5240 = vrot.lane.b32.xlu0 %v5163, 96
      %v5241 = vpop.permute.xlu0 %5240
      %5242 = vrot.lane.b32.xlu0 %v5164, 96
      %v5243 = vpop.permute.xlu0 %5242
      %5244 = vrot.lane.b32.xlu0 %v5165, 96
      %v5245 = vpop.permute.xlu0 %5244
      %5246 = vrot.lane.b32.xlu0 %v5166, 96
      %v5247 = vpop.permute.xlu0 %5246
      %5248 = vrot.lane.b32.xlu0 %v5167, 96
      %v5249 = vpop.permute.xlu0 %5248
      %5250 = vrot.lane.b32.xlu0 %v5168, 96
      %v5251 = vpop.permute.xlu0 %5250
      %5252 = vrot.lane.b32.xlu0 %v5169, 96
      %v5253 = vpop.permute.xlu0 %5252
      %5254 = vrot.lane.b32.xlu0 %v5170, 96
      %v5255 = vpop.permute.xlu0 %5254
      %5256 = vrot.lane.b32.xlu0 %v5171, 96
      %v5257 = vpop.permute.xlu0 %5256
      %5258 = vrot.lane.b32.xlu0 %v5172, 96
      %v5259 = vpop.permute.xlu0 %5258
      %5260 = vrot.lane.b32.xlu0 %v5173, 96
      %v5261 = vpop.permute.xlu0 %5260
      %5262 = vrot.lane.b32.xlu0 %v5174, 96
      %v5263 = vpop.permute.xlu0 %5262
      %5264 = vrot.lane.b32.xlu0 %v5175, 96
      %v5265 = vpop.permute.xlu0 %5264
      %5266 = vrot.lane.b32.xlu0 %v5176, 96
      %v5267 = vpop.permute.xlu0 %5266
      %5268 = vrot.lane.b32.xlu0 %v5177, 96
      %v5269 = vpop.permute.xlu0 %5268
      %5270 = vrot.lane.b32.xlu0 %v5178, 96
      %v5271 = vpop.permute.xlu0 %5270
      %5272 = vrot.lane.b32.xlu0 %v5179, 96
      %v5273 = vpop.permute.xlu0 %5272
      %5274 = vrot.lane.b32.xlu0 %v5180, 96
      %v5275 = vpop.permute.xlu0 %5274
      %5276 = vrot.lane.b32.xlu0 %v5181, 96
      %v5277 = vpop.permute.xlu0 %5276
      %v5310 = vadd.f32 %v5118, %v5215
      %v5311 = vadd.f32 %v5119, %v5217
      %v5312 = vadd.f32 %v5120, %v5219
      %v5313 = vadd.f32 %v5121, %v5221
      %v5314 = vadd.f32 %v5122, %v5223
      %v5315 = vadd.f32 %v5123, %v5225
      %v5316 = vadd.f32 %v5124, %v5227
      %v5317 = vadd.f32 %v5125, %v5229
      %v5318 = vadd.f32 %v5126, %v5231
      %v5319 = vadd.f32 %v5127, %v5233
      %v5320 = vadd.f32 %v5128, %v5235
      %v5321 = vadd.f32 %v5129, %v5237
      %v5322 = vadd.f32 %v5130, %v5239
      %v5323 = vadd.f32 %v5131, %v5241
      %v5324 = vadd.f32 %v5132, %v5243
      %v5325 = vadd.f32 %v5133, %v5245
      %v5326 = vadd.f32 %v5134, %v5247
      %v5327 = vadd.f32 %v5135, %v5249
      %v5328 = vadd.f32 %v5136, %v5251
      %v5329 = vadd.f32 %v5137, %v5253
      %v5330 = vadd.f32 %v5138, %v5255
      %v5331 = vadd.f32 %v5139, %v5257
      %v5332 = vadd.f32 %v5140, %v5259
      %v5333 = vadd.f32 %v5141, %v5261
      %v5334 = vadd.f32 %v5142, %v5263
      %v5335 = vadd.f32 %v5143, %v5265
      %v5336 = vadd.f32 %v5144, %v5267
      %v5337 = vadd.f32 %v5145, %v5269
      %v5338 = vadd.f32 %v5146, %v5271
      %v5339 = vadd.f32 %v5147, %v5273
      %v5340 = vadd.f32 %v5148, %v5275
      %v5341 = vadd.f32 %v5149, %v5277
      %5374 = vrot.lane.b32.xlu0 %v5310, 8
      %v5375 = vpop.permute.xlu0 %5374
      %5376 = vrot.lane.b32.xlu0 %v5311, 8
      %v5377 = vpop.permute.xlu0 %5376
      %5378 = vrot.lane.b32.xlu0 %v5312, 8
      %v5379 = vpop.permute.xlu0 %5378
      %5380 = vrot.lane.b32.xlu0 %v5313, 8
      %v5381 = vpop.permute.xlu0 %5380
      %5382 = vrot.lane.b32.xlu0 %v5314, 8
      %v5383 = vpop.permute.xlu0 %5382
      %5384 = vrot.lane.b32.xlu0 %v5315, 8
      %v5385 = vpop.permute.xlu0 %5384
      %5386 = vrot.lane.b32.xlu0 %v5316, 8
      %v5387 = vpop.permute.xlu0 %5386
      %5388 = vrot.lane.b32.xlu0 %v5317, 8
      %v5389 = vpop.permute.xlu0 %5388
      %5390 = vrot.lane.b32.xlu0 %v5318, 8
      %v5391 = vpop.permute.xlu0 %5390
      %5392 = vrot.lane.b32.xlu0 %v5319, 8
      %v5393 = vpop.permute.xlu0 %5392
      %5394 = vrot.lane.b32.xlu0 %v5320, 8
      %v5395 = vpop.permute.xlu0 %5394
      %5396 = vrot.lane.b32.xlu0 %v5321, 8
      %v5397 = vpop.permute.xlu0 %5396
      %5398 = vrot.lane.b32.xlu0 %v5322, 8
      %v5399 = vpop.permute.xlu0 %5398
      %5400 = vrot.lane.b32.xlu0 %v5323, 8
      %v5401 = vpop.permute.xlu0 %5400
      %5402 = vrot.lane.b32.xlu0 %v5324, 8
      %v5403 = vpop.permute.xlu0 %5402
      %5404 = vrot.lane.b32.xlu0 %v5325, 8
      %v5405 = vpop.permute.xlu0 %5404
      %5406 = vrot.lane.b32.xlu0 %v5326, 8
      %v5407 = vpop.permute.xlu0 %5406
      %5408 = vrot.lane.b32.xlu0 %v5327, 8
      %v5409 = vpop.permute.xlu0 %5408
      %5410 = vrot.lane.b32.xlu0 %v5328, 8
      %v5411 = vpop.permute.xlu0 %5410
      %5412 = vrot.lane.b32.xlu0 %v5329, 8
      %v5413 = vpop.permute.xlu0 %5412
      %5414 = vrot.lane.b32.xlu0 %v5330, 8
      %v5415 = vpop.permute.xlu0 %5414
      %5416 = vrot.lane.b32.xlu0 %v5331, 8
      %v5417 = vpop.permute.xlu0 %5416
      %5418 = vrot.lane.b32.xlu0 %v5332, 8
      %v5419 = vpop.permute.xlu0 %5418
      %5420 = vrot.lane.b32.xlu0 %v5333, 8
      %v5421 = vpop.permute.xlu0 %5420
      %5422 = vrot.lane.b32.xlu0 %v5334, 8
      %v5423 = vpop.permute.xlu0 %5422
      %5424 = vrot.lane.b32.xlu0 %v5335, 8
      %v5425 = vpop.permute.xlu0 %5424
      %5426 = vrot.lane.b32.xlu0 %v5336, 8
      %v5427 = vpop.permute.xlu0 %5426
      %5428 = vrot.lane.b32.xlu0 %v5337, 8
      %v5429 = vpop.permute.xlu0 %5428
      %5430 = vrot.lane.b32.xlu0 %v5338, 8
      %v5431 = vpop.permute.xlu0 %5430
      %5432 = vrot.lane.b32.xlu0 %v5339, 8
      %v5433 = vpop.permute.xlu0 %5432
      %5434 = vrot.lane.b32.xlu0 %v5340, 8
      %v5435 = vpop.permute.xlu0 %5434
      %5436 = vrot.lane.b32.xlu0 %v5341, 8
      %v5437 = vpop.permute.xlu0 %5436
      %vm5470 = vcmask 97344
      %5471 = vst.msk [vmem:[#allocation2] sm:$0xff] %vm5470, %v5375
      %5472 = vst.msk [vmem:[#allocation2 + $0x8] sm:$0xff] %vm5470, %v5377
      %5473 = vst.msk [vmem:[#allocation2 + $0x10] sm:$0xff] %vm5470, %v5379
      %5474 = vst.msk [vmem:[#allocation2 + $0x18] sm:$0xff] %vm5470, %v5381
      %5475 = vst.msk [vmem:[#allocation2 + $0x20] sm:$0xff] %vm5470, %v5383
      %5476 = vst.msk [vmem:[#allocation2 + $0x28] sm:$0xff] %vm5470, %v5385
      %5477 = vst.msk [vmem:[#allocation2 + $0x30] sm:$0xff] %vm5470, %v5387
      %5478 = vst.msk [vmem:[#allocation2 + $0x38] sm:$0xff] %vm5470, %v5389
      %5479 = vst.msk [vmem:[#allocation2 + $0x40] sm:$0xff] %vm5470, %v5391
      %5480 = vst.msk [vmem:[#allocation2 + $0x48] sm:$0xff] %vm5470, %v5393
      %5481 = vst.msk [vmem:[#allocation2 + $0x50] sm:$0xff] %vm5470, %v5395
      %5482 = vst.msk [vmem:[#allocation2 + $0x58] sm:$0xff] %vm5470, %v5397
      %5483 = vst.msk [vmem:[#allocation2 + $0x60] sm:$0xff] %vm5470, %v5399
      %5484 = vst.msk [vmem:[#allocation2 + $0x68] sm:$0xff] %vm5470, %v5401
      %5485 = vst.msk [vmem:[#allocation2 + $0x70] sm:$0xff] %vm5470, %v5403
      %5486 = vst.msk [vmem:[#allocation2 + $0x78] sm:$0xff] %vm5470, %v5405
      %5487 = vst.msk [vmem:[#allocation2 + $0x80] sm:$0xff] %vm5470, %v5407
      %5488 = vst.msk [vmem:[#allocation2 + $0x88] sm:$0xff] %vm5470, %v5409
      %5489 = vst.msk [vmem:[#allocation2 + $0x90] sm:$0xff] %vm5470, %v5411
      %5490 = vst.msk [vmem:[#allocation2 + $0x98] sm:$0xff] %vm5470, %v5413
      %5491 = vst.msk [vmem:[#allocation2 + $0xa0] sm:$0xff] %vm5470, %v5415
      %5492 = vst.msk [vmem:[#allocation2 + $0xa8] sm:$0xff] %vm5470, %v5417
      %5493 = vst.msk [vmem:[#allocation2 + $0xb0] sm:$0xff] %vm5470, %v5419
      %5494 = vst.msk [vmem:[#allocation2 + $0xb8] sm:$0xff] %vm5470, %v5421
      %5495 = vst.msk [vmem:[#allocation2 + $0xc0] sm:$0xff] %vm5470, %v5423
      %5496 = vst.msk [vmem:[#allocation2 + $0xc8] sm:$0xff] %vm5470, %v5425
      %5497 = vst.msk [vmem:[#allocation2 + $0xd0] sm:$0xff] %vm5470, %v5427
      %5498 = vst.msk [vmem:[#allocation2 + $0xd8] sm:$0xff] %vm5470, %v5429
      %5499 = vst.msk [vmem:[#allocation2 + $0xe0] sm:$0xff] %vm5470, %v5431
      %5500 = vst.msk [vmem:[#allocation2 + $0xe8] sm:$0xff] %vm5470, %v5433
      %5501 = vst.msk [vmem:[#allocation2 + $0xf0] sm:$0xff] %vm5470, %v5435
      %5502 = vst.msk [vmem:[#allocation2 + $0xf8] sm:$0xff] %vm5470, %v5437
      %v5503 = vld [vmem:[#allocation2] sm:$0xff]
      %v5504 = vld [vmem:[#allocation2 + $0x8] sm:$0xff]
      %v5505 = vld [vmem:[#allocation2 + $0x10] sm:$0xff]
      %v5506 = vld [vmem:[#allocation2 + $0x18] sm:$0xff]
      %v5507 = vld [vmem:[#allocation2 + $0x20] sm:$0xff]
      %v5508 = vld [vmem:[#allocation2 + $0x28] sm:$0xff]
      %v5509 = vld [vmem:[#allocation2 + $0x30] sm:$0xff]
      %v5510 = vld [vmem:[#allocation2 + $0x38] sm:$0xff]
      %v5511 = vld [vmem:[#allocation2 + $0x40] sm:$0xff]
      %v5512 = vld [vmem:[#allocation2 + $0x48] sm:$0xff]
      %v5513 = vld [vmem:[#allocation2 + $0x50] sm:$0xff]
      %v5514 = vld [vmem:[#allocation2 + $0x58] sm:$0xff]
      %v5515 = vld [vmem:[#allocation2 + $0x60] sm:$0xff]
      %v5516 = vld [vmem:[#allocation2 + $0x68] sm:$0xff]
      %v5517 = vld [vmem:[#allocation2 + $0x70] sm:$0xff]
      %v5518 = vld [vmem:[#allocation2 + $0x78] sm:$0xff]
      %v5519 = vld [vmem:[#allocation2 + $0x80] sm:$0xff]
      %v5520 = vld [vmem:[#allocation2 + $0x88] sm:$0xff]
      %v5521 = vld [vmem:[#allocation2 + $0x90] sm:$0xff]
      %v5522 = vld [vmem:[#allocation2 + $0x98] sm:$0xff]
      %v5523 = vld [vmem:[#allocation2 + $0xa0] sm:$0xff]
      %v5524 = vld [vmem:[#allocation2 + $0xa8] sm:$0xff]
      %v5525 = vld [vmem:[#allocation2 + $0xb0] sm:$0xff]
      %v5526 = vld [vmem:[#allocation2 + $0xb8] sm:$0xff]
      %v5527 = vld [vmem:[#allocation2 + $0xc0] sm:$0xff]
      %v5528 = vld [vmem:[#allocation2 + $0xc8] sm:$0xff]
      %v5529 = vld [vmem:[#allocation2 + $0xd0] sm:$0xff]
      %v5530 = vld [vmem:[#allocation2 + $0xd8] sm:$0xff]
      %v5531 = vld [vmem:[#allocation2 + $0xe0] sm:$0xff]
      %v5532 = vld [vmem:[#allocation2 + $0xe8] sm:$0xff]
      %v5533 = vld [vmem:[#allocation2 + $0xf0] sm:$0xff]
      %v5534 = vld [vmem:[#allocation2 + $0xf8] sm:$0xff]
      %v5535 = vld [vmem:[%s11] sm:$0x1]
      %v5537 = vlaneseq
      %v5538 = vshrl.u32 %v5537, 7
      %v5539 = vsub.s32 0, %v5538
      %v5540 = vrot.slane %v5535, %v5539
      %v5542 = vmul.f32 %v5503, %v5540
      %v5543 = vmul.f32 %v5504, %v5540
      %v5544 = vmul.f32 %v5505, %v5540
      %v5545 = vmul.f32 %v5506, %v5540
      %v5546 = vmul.f32 %v5507, %v5540
      %v5547 = vmul.f32 %v5508, %v5540
      %v5548 = vmul.f32 %v5509, %v5540
      %v5549 = vmul.f32 %v5510, %v5540
      %v5550 = vmul.f32 %v5511, %v5540
      %v5551 = vmul.f32 %v5512, %v5540
      %v5552 = vmul.f32 %v5513, %v5540
      %v5553 = vmul.f32 %v5514, %v5540
      %v5554 = vmul.f32 %v5515, %v5540
      %v5555 = vmul.f32 %v5516, %v5540
      %v5556 = vmul.f32 %v5517, %v5540
      %v5557 = vmul.f32 %v5518, %v5540
      %v5558 = vmul.f32 %v5519, %v5540
      %v5559 = vmul.f32 %v5520, %v5540
      %v5560 = vmul.f32 %v5521, %v5540
      %v5561 = vmul.f32 %v5522, %v5540
      %v5562 = vmul.f32 %v5523, %v5540
      %v5563 = vmul.f32 %v5524, %v5540
      %v5564 = vmul.f32 %v5525, %v5540
      %v5565 = vmul.f32 %v5526, %v5540
      %v5566 = vmul.f32 %v5527, %v5540
      %v5567 = vmul.f32 %v5528, %v5540
      %v5568 = vmul.f32 %v5529, %v5540
      %v5569 = vmul.f32 %v5530, %v5540
      %v5570 = vmul.f32 %v5531, %v5540
      %v5571 = vmul.f32 %v5532, %v5540
      %v5572 = vmul.f32 %v5533, %v5540
      %v5573 = vmul.f32 %v5534, %v5540
      %v5574 = vld [vmem:[%s12] sm:$0x1]
      %v5576 = vlaneseq
      %v5577 = vshrl.u32 %v5576, 7
      %v5578 = vsub.s32 0, %v5577
      %v5579 = vrot.slane %v5574, %v5578
      %v5581 = vadd.f32 %v5542, %v5579
      %v5582 = vadd.f32 %v5543, %v5579
      %v5583 = vadd.f32 %v5544, %v5579
      %v5584 = vadd.f32 %v5545, %v5579
      %v5585 = vadd.f32 %v5546, %v5579
      %v5586 = vadd.f32 %v5547, %v5579
      %v5587 = vadd.f32 %v5548, %v5579
      %v5588 = vadd.f32 %v5549, %v5579
      %v5589 = vadd.f32 %v5550, %v5579
      %v5590 = vadd.f32 %v5551, %v5579
      %v5591 = vadd.f32 %v5552, %v5579
      %v5592 = vadd.f32 %v5553, %v5579
      %v5593 = vadd.f32 %v5554, %v5579
      %v5594 = vadd.f32 %v5555, %v5579
      %v5595 = vadd.f32 %v5556, %v5579
      %v5596 = vadd.f32 %v5557, %v5579
      %v5597 = vadd.f32 %v5558, %v5579
      %v5598 = vadd.f32 %v5559, %v5579
      %v5599 = vadd.f32 %v5560, %v5579
      %v5600 = vadd.f32 %v5561, %v5579
      %v5601 = vadd.f32 %v5562, %v5579
      %v5602 = vadd.f32 %v5563, %v5579
      %v5603 = vadd.f32 %v5564, %v5579
      %v5604 = vadd.f32 %v5565, %v5579
      %v5605 = vadd.f32 %v5566, %v5579
      %v5606 = vadd.f32 %v5567, %v5579
      %v5607 = vadd.f32 %v5568, %v5579
      %v5608 = vadd.f32 %v5569, %v5579
      %v5609 = vadd.f32 %v5570, %v5579
      %v5610 = vadd.f32 %v5571, %v5579
      %v5611 = vadd.f32 %v5572, %v5579
      %v5612 = vadd.f32 %v5573, %v5579
      %v5613 = vmax.f32 %v5581, 0.0
      %v5614 = vmax.f32 %v5582, 0.0
      %v5615 = vmax.f32 %v5583, 0.0
      %v5616 = vmax.f32 %v5584, 0.0
      %v5617 = vmax.f32 %v5585, 0.0
      %v5618 = vmax.f32 %v5586, 0.0
      %v5619 = vmax.f32 %v5587, 0.0
      %v5620 = vmax.f32 %v5588, 0.0
      %v5621 = vmax.f32 %v5589, 0.0
      %v5622 = vmax.f32 %v5590, 0.0
      %v5623 = vmax.f32 %v5591, 0.0
      %v5624 = vmax.f32 %v5592, 0.0
      %v5625 = vmax.f32 %v5593, 0.0
      %v5626 = vmax.f32 %v5594, 0.0
      %v5627 = vmax.f32 %v5595, 0.0
      %v5628 = vmax.f32 %v5596, 0.0
      %v5629 = vmax.f32 %v5597, 0.0
      %v5630 = vmax.f32 %v5598, 0.0
      %v5631 = vmax.f32 %v5599, 0.0
      %v5632 = vmax.f32 %v5600, 0.0
      %v5633 = vmax.f32 %v5601, 0.0
      %v5634 = vmax.f32 %v5602, 0.0
      %v5635 = vmax.f32 %v5603, 0.0
      %v5636 = vmax.f32 %v5604, 0.0
      %v5637 = vmax.f32 %v5605, 0.0
      %v5638 = vmax.f32 %v5606, 0.0
      %v5639 = vmax.f32 %v5607, 0.0
      %v5640 = vmax.f32 %v5608, 0.0
      %v5641 = vmax.f32 %v5609, 0.0
      %v5642 = vmax.f32 %v5610, 0.0
      %v5643 = vmax.f32 %v5611, 0.0
      %v5644 = vmax.f32 %v5612, 0.0
      %v5645 = vpack.c.bf16 %v5614, %v5613
      %v5646 = vpack.c.bf16 %v5616, %v5615
      %v5647 = vpack.c.bf16 %v5618, %v5617
      %v5648 = vpack.c.bf16 %v5620, %v5619
      %v5649 = vpack.c.bf16 %v5622, %v5621
      %v5650 = vpack.c.bf16 %v5624, %v5623
      %v5651 = vpack.c.bf16 %v5626, %v5625
      %v5652 = vpack.c.bf16 %v5628, %v5627
      %v5653 = vpack.c.bf16 %v5630, %v5629
      %v5654 = vpack.c.bf16 %v5632, %v5631
      %v5655 = vpack.c.bf16 %v5634, %v5633
      %v5656 = vpack.c.bf16 %v5636, %v5635
      %v5657 = vpack.c.bf16 %v5638, %v5637
      %v5658 = vpack.c.bf16 %v5640, %v5639
      %v5659 = vpack.c.bf16 %v5642, %v5641
      %v5660 = vpack.c.bf16 %v5644, %v5643
      %v5661 = vld [vmem:[%s13] sm:$0xf]
      %v5662 = vld [vmem:[%s13 + $0x4] sm:$0x3]
      %v5663 = vld [vmem:[%s14] sm:$0x1]
      %v5665 = vlaneseq
      %v5666 = vshrl.u32 %v5665, 7
      %v5667 = vsub.s32 0, %v5666
      %v5668 = vrot.slane %v5663, %v5667
      %v5672 = vunpack.c.l.b16 %v5661
      %v5673 = vunpack.c.l.b16 %v5662
      %v5674 = vpack.c.b16 %v5673, %v5672
      %vm5675 = vcmask 97280
      %v5677 = vsel %vm5675, %v5645, 0
      %v5680 = vsel %vm5675, %v5646, 0
      %v5683 = vsel %vm5675, %v5647, 0
      %v5686 = vsel %vm5675, %v5648, 0
      %v5689 = vsel %vm5675, %v5649, 0
      %v5692 = vsel %vm5675, %v5650, 0
      %v5695 = vsel %vm5675, %v5651, 0
      %v5698 = vsel %vm5675, %v5652, 0
      %v5701 = vsel %vm5675, %v5653, 0
      %v5704 = vsel %vm5675, %v5654, 0
      %v5707 = vsel %vm5675, %v5655, 0
      %v5710 = vsel %vm5675, %v5656, 0
      %v5713 = vsel %vm5675, %v5657, 0
      %v5716 = vsel %vm5675, %v5658, 0
      %v5719 = vsel %vm5675, %v5659, 0
      %v5722 = vsel %vm5675, %v5660, 0
      %vm5724 = vcmask 1045504
      %v5726 = vsel %vm5724, %v5674, 0
      %5728 = vmatprep.subr.bf16.mxu0 0
      %5729 = vmatpush1.bf16.msra.mxu0 %v5726
      %5730 = vmatprep.subr.bf16.mxu0 0
      %5731 = vmatpush1.bf16.msra.mxu0 0
      %5732 = vmatprep.subr.bf16.mxu0 0
      %5733 = vmatpush1.bf16.msra.mxu0 0
      %5734 = vmatprep.subr.bf16.mxu0 0
      %5735 = vmatpush1.bf16.msra.mxu0 0
      %5736 = vmatprep.subr.bf16.mxu0 0
      %5737 = vmatpush1.bf16.msra.mxu0 0
      %5738 = vmatprep.subr.bf16.mxu0 0
      %5739 = vmatpush1.bf16.msra.mxu0 0
      %5740 = vmatprep.subr.bf16.mxu0 0
      %5741 = vmatpush1.bf16.msra.mxu0 0
      %5742 = vmatprep.subr.bf16.mxu0 0
      %5743 = vmatpush1.bf16.msra.mxu0 0
      %5744 = vmatprep.subr.bf16.mxu0 0
      %5745 = vmatpush1.bf16.msra.mxu0 0
      %5746 = vmatprep.subr.bf16.mxu0 0
      %5747 = vmatpush1.bf16.msra.mxu0 0
      %5748 = vmatprep.subr.bf16.mxu0 0
      %5749 = vmatpush1.bf16.msra.mxu0 0
      %5750 = vmatprep.subr.bf16.mxu0 0
      %5751 = vmatpush1.bf16.msra.mxu0 0
      %5752 = vmatprep.subr.bf16.mxu0 0
      %5753 = vmatpush1.bf16.msra.mxu0 0
      %5754 = vmatprep.subr.bf16.mxu0 0
      %5755 = vmatpush1.bf16.msra.mxu0 0
      %5756 = vmatprep.subr.bf16.mxu0 0
      %5757 = vmatpush1.bf16.msra.mxu0 0
      %5758 = vmatprep.subr.bf16.mxu0 0
      %5759 = vmatpush1.bf16.msra.mxu0 0
      %5760 = vmatprep.mubr.bf16.mxu0 0
      %5761 = vmatmul.mubr.bf16.gmra.mrb[0].mxu0 %v5677
      %v5762 = vpop.f32.mrb[0].mxu0
      %v5763 = vadd.f32 %v5668, %v5762
      %v5764 = vpop.f32.mrb[0].mxu0
      %v5765 = vpop.f32.mrb[0].mxu0
      %v5766 = vadd.f32 %v5668, %v5765
      %v5767 = vpop.f32.mrb[0].mxu0
      %5768 = vmatprep.mubr.bf16.mxu0 0
      %5769 = vmatmul.mubr.bf16.gmra.mrb[0].mxu0 %v5680
      %v5770 = vpop.f32.mrb[0].mxu0
      %v5771 = vadd.f32 %v5668, %v5770
      %v5772 = vpop.f32.mrb[0].mxu0
      %v5773 = vpop.f32.mrb[0].mxu0
      %v5774 = vadd.f32 %v5668, %v5773
      %v5775 = vpop.f32.mrb[0].mxu0
      %5776 = vmatprep.mubr.bf16.mxu0 0
      %5777 = vmatmul.mubr.bf16.gmra.mrb[0].mxu0 %v5683
      %v5778 = vpop.f32.mrb[0].mxu0
      %v5779 = vadd.f32 %v5668, %v5778
      %v5780 = vpop.f32.mrb[0].mxu0
      %v5781 = vpop.f32.mrb[0].mxu0
      %v5782 = vadd.f32 %v5668, %v5781
      %v5783 = vpop.f32.mrb[0].mxu0
      %5784 = vmatprep.mubr.bf16.mxu0 0
      %5785 = vmatmul.mubr.bf16.gmra.mrb[0].mxu0 %v5686
      %v5786 = vpop.f32.mrb[0].mxu0
      %v5787 = vadd.f32 %v5668, %v5786
      %v5788 = vpop.f32.mrb[0].mxu0
      %v5789 = vpop.f32.mrb[0].mxu0
      %v5790 = vadd.f32 %v5668, %v5789
      %v5791 = vpop.f32.mrb[0].mxu0
      %5792 = vmatprep.mubr.bf16.mxu0 0
      %5793 = vmatmul.mubr.bf16.gmra.mrb[0].mxu0 %v5689
      %v5794 = vpop.f32.mrb[0].mxu0
      %v5795 = vadd.f32 %v5668, %v5794
      %v5796 = vpop.f32.mrb[0].mxu0
      %v5797 = vpop.f32.mrb[0].mxu0
      %v5798 = vadd.f32 %v5668, %v5797
      %v5799 = vpop.f32.mrb[0].mxu0
      %5800 = vmatprep.mubr.bf16.mxu0 0
      %5801 = vmatmul.mubr.bf16.gmra.mrb[0].mxu0 %v5692
      %v5802 = vpop.f32.mrb[0].mxu0
      %v5803 = vadd.f32 %v5668, %v5802
      %v5804 = vpop.f32.mrb[0].mxu0
      %v5805 = vpop.f32.mrb[0].mxu0
      %v5806 = vadd.f32 %v5668, %v5805
      %v5807 = vpop.f32.mrb[0].mxu0
      %5808 = vmatprep.mubr.bf16.mxu0 0
      %5809 = vmatmul.mubr.bf16.gmra.mrb[0].mxu0 %v5695
      %v5810 = vpop.f32.mrb[0].mxu0
      %v5811 = vadd.f32 %v5668, %v5810
      %v5812 = vpop.f32.mrb[0].mxu0
      %v5813 = vpop.f32.mrb[0].mxu0
      %v5814 = vadd.f32 %v5668, %v5813
      %v5815 = vpop.f32.mrb[0].mxu0
      %5816 = vmatprep.mubr.bf16.mxu0 0
      %5817 = vmatmul.mubr.bf16.gmra.mrb[0].mxu0 %v5698
      %v5818 = vpop.f32.mrb[0].mxu0
      %v5819 = vadd.f32 %v5668, %v5818
      %v5820 = vpop.f32.mrb[0].mxu0
      %v5821 = vpop.f32.mrb[0].mxu0
      %v5822 = vadd.f32 %v5668, %v5821
      %v5823 = vpop.f32.mrb[0].mxu0
      %5824 = vmatprep.mubr.bf16.mxu0 0
      %5825 = vmatmul.mubr.bf16.gmra.mrb[0].mxu0 %v5701
      %v5826 = vpop.f32.mrb[0].mxu0
      %v5827 = vadd.f32 %v5668, %v5826
      %v5828 = vpop.f32.mrb[0].mxu0
      %v5829 = vpop.f32.mrb[0].mxu0
      %v5830 = vadd.f32 %v5668, %v5829
      %v5831 = vpop.f32.mrb[0].mxu0
      %5832 = vmatprep.mubr.bf16.mxu0 0
      %5833 = vmatmul.mubr.bf16.gmra.mrb[0].mxu0 %v5704
      %v5834 = vpop.f32.mrb[0].mxu0
      %v5835 = vadd.f32 %v5668, %v5834
      %v5836 = vpop.f32.mrb[0].mxu0
      %v5837 = vpop.f32.mrb[0].mxu0
      %v5838 = vadd.f32 %v5668, %v5837
      %v5839 = vpop.f32.mrb[0].mxu0
      %5840 = vmatprep.mubr.bf16.mxu0 0
      %5841 = vmatmul.mubr.bf16.gmra.mrb[0].mxu0 %v5707
      %v5842 = vpop.f32.mrb[0].mxu0
      %v5843 = vadd.f32 %v5668, %v5842
      %v5844 = vpop.f32.mrb[0].mxu0
      %v5845 = vpop.f32.mrb[0].mxu0
      %v5846 = vadd.f32 %v5668, %v5845
      %v5847 = vpop.f32.mrb[0].mxu0
      %5848 = vmatprep.mubr.bf16.mxu0 0
      %5849 = vmatmul.mubr.bf16.gmra.mrb[0].mxu0 %v5710
      %v5850 = vpop.f32.mrb[0].mxu0
      %v5851 = vadd.f32 %v5668, %v5850
      %v5852 = vpop.f32.mrb[0].mxu0
      %v5853 = vpop.f32.mrb[0].mxu0
      %v5854 = vadd.f32 %v5668, %v5853
      %v5855 = vpop.f32.mrb[0].mxu0
      %5856 = vmatprep.mubr.bf16.mxu0 0
      %5857 = vmatmul.mubr.bf16.gmra.mrb[0].mxu0 %v5713
      %v5858 = vpop.f32.mrb[0].mxu0
      %v5859 = vadd.f32 %v5668, %v5858
      %v5860 = vpop.f32.mrb[0].mxu0
      %v5861 = vpop.f32.mrb[0].mxu0
      %v5862 = vadd.f32 %v5668, %v5861
      %v5863 = vpop.f32.mrb[0].mxu0
      %5864 = vmatprep.mubr.bf16.mxu0 0
      %5865 = vmatmul.mubr.bf16.gmra.mrb[0].mxu0 %v5716
      %v5866 = vpop.f32.mrb[0].mxu0
      %v5867 = vadd.f32 %v5668, %v5866
      %v5868 = vpop.f32.mrb[0].mxu0
      %v5869 = vpop.f32.mrb[0].mxu0
      %v5870 = vadd.f32 %v5668, %v5869
      %v5871 = vpop.f32.mrb[0].mxu0
      %5872 = vmatprep.mubr.bf16.mxu0 0
      %5873 = vmatmul.mubr.bf16.gmra.mrb[0].mxu0 %v5719
      %v5874 = vpop.f32.mrb[0].mxu0
      %v5875 = vadd.f32 %v5668, %v5874
      %v5876 = vpop.f32.mrb[0].mxu0
      %v5877 = vpop.f32.mrb[0].mxu0
      %v5878 = vadd.f32 %v5668, %v5877
      %v5879 = vpop.f32.mrb[0].mxu0
      %5880 = vmatprep.mubr.bf16.mxu0 0
      %5881 = vmatmul.mubr.bf16.gmra.mrb[0].mxu0 %v5722
      %v5882 = vpop.f32.mrb[0].mxu0
      %v5883 = vadd.f32 %v5668, %v5882
      %v5884 = vpop.f32.mrb[0].mxu0
      %v5885 = vpop.f32.mrb[0].mxu0
      %v5886 = vadd.f32 %v5668, %v5885
      %v5887 = vpop.f32.mrb[0].mxu0
      %5888 = vdwg.mxu0
      %v5889 = vmax.f32 %v5763, 0.0
      %v5890 = vmax.f32 %v5766, 0.0
      %v5891 = vmax.f32 %v5771, 0.0
      %v5892 = vmax.f32 %v5774, 0.0
      %v5893 = vmax.f32 %v5779, 0.0
      %v5894 = vmax.f32 %v5782, 0.0
      %v5895 = vmax.f32 %v5787, 0.0
      %v5896 = vmax.f32 %v5790, 0.0
      %v5897 = vmax.f32 %v5795, 0.0
      %v5898 = vmax.f32 %v5798, 0.0
      %v5899 = vmax.f32 %v5803, 0.0
      %v5900 = vmax.f32 %v5806, 0.0
      %v5901 = vmax.f32 %v5811, 0.0
      %v5902 = vmax.f32 %v5814, 0.0
      %v5903 = vmax.f32 %v5819, 0.0
      %v5904 = vmax.f32 %v5822, 0.0
      %v5905 = vmax.f32 %v5827, 0.0
      %v5906 = vmax.f32 %v5830, 0.0
      %v5907 = vmax.f32 %v5835, 0.0
      %v5908 = vmax.f32 %v5838, 0.0
      %v5909 = vmax.f32 %v5843, 0.0
      %v5910 = vmax.f32 %v5846, 0.0
      %v5911 = vmax.f32 %v5851, 0.0
      %v5912 = vmax.f32 %v5854, 0.0
      %v5913 = vmax.f32 %v5859, 0.0
      %v5914 = vmax.f32 %v5862, 0.0
      %v5915 = vmax.f32 %v5867, 0.0
      %v5916 = vmax.f32 %v5870, 0.0
      %v5917 = vmax.f32 %v5875, 0.0
      %v5918 = vmax.f32 %v5878, 0.0
      %v5919 = vmax.f32 %v5883, 0.0
      %v5920 = vmax.f32 %v5886, 0.0
      %v5921 = vpack.c.bf16 %v5890, %v5889
      %v5922 = vpack.c.bf16 %v5892, %v5891
      %v5923 = vpack.c.bf16 %v5894, %v5893
      %v5924 = vpack.c.bf16 %v5896, %v5895
      %v5925 = vpack.c.bf16 %v5898, %v5897
      %v5926 = vpack.c.bf16 %v5900, %v5899
      %v5927 = vpack.c.bf16 %v5902, %v5901
      %v5928 = vpack.c.bf16 %v5904, %v5903
      %v5929 = vpack.c.bf16 %v5906, %v5905
      %v5930 = vpack.c.bf16 %v5908, %v5907
      %v5931 = vpack.c.bf16 %v5910, %v5909
      %v5932 = vpack.c.bf16 %v5912, %v5911
      %v5933 = vpack.c.bf16 %v5914, %v5913
      %v5934 = vpack.c.bf16 %v5916, %v5915
      %v5935 = vpack.c.bf16 %v5918, %v5917
      %v5936 = vpack.c.bf16 %v5920, %v5919
      %v5937 = vld [vmem:[%s15] sm:$0xf]
      %v5939 = vsel %vm1062, %v5921, 0
      %v5942 = vsel %vm1062, %v5922, 0
      %v5945 = vsel %vm1062, %v5923, 0
      %v5948 = vsel %vm1062, %v5924, 0
      %v5951 = vsel %vm1062, %v5925, 0
      %v5954 = vsel %vm1062, %v5926, 0
      %v5957 = vsel %vm1062, %v5927, 0
      %v5960 = vsel %vm1062, %v5928, 0
      %v5963 = vsel %vm1062, %v5929, 0
      %v5966 = vsel %vm1062, %v5930, 0
      %v5969 = vsel %vm1062, %v5931, 0
      %v5972 = vsel %vm1062, %v5932, 0
      %v5975 = vsel %vm1062, %v5933, 0
      %v5978 = vsel %vm1062, %v5934, 0
      %v5981 = vsel %vm1062, %v5935, 0
      %v5984 = vsel %vm1062, %v5936, 0
      %v5987 = vsel %vm1111, %v5937, 0
      %5989 = vmatprep.subr.bf16.mxu0 0
      %5990 = vmatpush1.bf16.msra.mxu0 %v5987
      %5991 = vmatprep.subr.bf16.mxu0 0
      %5992 = vmatpush1.bf16.msra.mxu0 0
      %5993 = vmatprep.subr.bf16.mxu0 0
      %5994 = vmatpush1.bf16.msra.mxu0 0
      %5995 = vmatprep.subr.bf16.mxu0 0
      %5996 = vmatpush1.bf16.msra.mxu0 0
      %5997 = vmatprep.subr.bf16.mxu0 0
      %5998 = vmatpush1.bf16.msra.mxu0 0
      %5999 = vmatprep.subr.bf16.mxu0 0
      %6000 = vmatpush1.bf16.msra.mxu0 0
      %6001 = vmatprep.subr.bf16.mxu0 0
      %6002 = vmatpush1.bf16.msra.mxu0 0
      %6003 = vmatprep.subr.bf16.mxu0 0
      %6004 = vmatpush1.bf16.msra.mxu0 0
      %6005 = vmatprep.subr.bf16.mxu0 0
      %6006 = vmatpush1.bf16.msra.mxu0 0
      %6007 = vmatprep.subr.bf16.mxu0 0
      %6008 = vmatpush1.bf16.msra.mxu0 0
      %6009 = vmatprep.subr.bf16.mxu0 0
      %6010 = vmatpush1.bf16.msra.mxu0 0
      %6011 = vmatprep.subr.bf16.mxu0 0
      %6012 = vmatpush1.bf16.msra.mxu0 0
      %6013 = vmatprep.subr.bf16.mxu0 0
      %6014 = vmatpush1.bf16.msra.mxu0 0
      %6015 = vmatprep.subr.bf16.mxu0 0
      %6016 = vmatpush1.bf16.msra.mxu0 0
      %6017 = vmatprep.subr.bf16.mxu0 0
      %6018 = vmatpush1.bf16.msra.mxu0 0
      %6019 = vmatprep.subr.bf16.mxu0 0
      %6020 = vmatpush1.bf16.msra.mxu0 0
      %6021 = vmatprep.mubr.bf16.mxu0 0
      %6022 = vmatmul.mubr.bf16.gmra.mrb[0].mxu0 %v5939
      %v6023 = vpop.f32.mrb[0].mxu0
      %v6024 = vadd.f32 0.0, %v6023
      %v6025 = vpop.f32.mrb[0].mxu0
      %v6026 = vpop.f32.mrb[0].mxu0
      %v6027 = vadd.f32 0.0, %v6026
      %v6028 = vpop.f32.mrb[0].mxu0
      %6029 = vmatprep.mubr.bf16.mxu0 0
      %6030 = vmatmul.mubr.bf16.gmra.mrb[0].mxu0 %v5942
      %v6031 = vpop.f32.mrb[0].mxu0
      %v6032 = vadd.f32 0.0, %v6031
      %v6033 = vpop.f32.mrb[0].mxu0
      %v6034 = vpop.f32.mrb[0].mxu0
      %v6035 = vadd.f32 0.0, %v6034
      %v6036 = vpop.f32.mrb[0].mxu0
      %6037 = vmatprep.mubr.bf16.mxu0 0
      %6038 = vmatmul.mubr.bf16.gmra.mrb[0].mxu0 %v5945
      %v6039 = vpop.f32.mrb[0].mxu0
      %v6040 = vadd.f32 0.0, %v6039
      %v6041 = vpop.f32.mrb[0].mxu0
      %v6042 = vpop.f32.mrb[0].mxu0
      %v6043 = vadd.f32 0.0, %v6042
      %v6044 = vpop.f32.mrb[0].mxu0
      %6045 = vmatprep.mubr.bf16.mxu0 0
      %6046 = vmatmul.mubr.bf16.gmra.mrb[0].mxu0 %v5948
      %v6047 = vpop.f32.mrb[0].mxu0
      %v6048 = vadd.f32 0.0, %v6047
      %v6049 = vpop.f32.mrb[0].mxu0
      %v6050 = vpop.f32.mrb[0].mxu0
      %v6051 = vadd.f32 0.0, %v6050
      %v6052 = vpop.f32.mrb[0].mxu0
      %6053 = vmatprep.mubr.bf16.mxu0 0
      %6054 = vmatmul.mubr.bf16.gmra.mrb[0].mxu0 %v5951
      %v6055 = vpop.f32.mrb[0].mxu0
      %v6056 = vadd.f32 0.0, %v6055
      %v6057 = vpop.f32.mrb[0].mxu0
      %v6058 = vpop.f32.mrb[0].mxu0
      %v6059 = vadd.f32 0.0, %v6058
      %v6060 = vpop.f32.mrb[0].mxu0
      %6061 = vmatprep.mubr.bf16.mxu0 0
      %6062 = vmatmul.mubr.bf16.gmra.mrb[0].mxu0 %v5954
      %v6063 = vpop.f32.mrb[0].mxu0
      %v6064 = vadd.f32 0.0, %v6063
      %v6065 = vpop.f32.mrb[0].mxu0
      %v6066 = vpop.f32.mrb[0].mxu0
      %v6067 = vadd.f32 0.0, %v6066
      %v6068 = vpop.f32.mrb[0].mxu0
      %6069 = vmatprep.mubr.bf16.mxu0 0
      %6070 = vmatmul.mubr.bf16.gmra.mrb[0].mxu0 %v5957
      %v6071 = vpop.f32.mrb[0].mxu0
      %v6072 = vadd.f32 0.0, %v6071
      %v6073 = vpop.f32.mrb[0].mxu0
      %v6074 = vpop.f32.mrb[0].mxu0
      %v6075 = vadd.f32 0.0, %v6074
      %v6076 = vpop.f32.mrb[0].mxu0
      %6077 = vmatprep.mubr.bf16.mxu0 0
      %6078 = vmatmul.mubr.bf16.gmra.mrb[0].mxu0 %v5960
      %v6079 = vpop.f32.mrb[0].mxu0
      %v6080 = vadd.f32 0.0, %v6079
      %v6081 = vpop.f32.mrb[0].mxu0
      %v6082 = vpop.f32.mrb[0].mxu0
      %v6083 = vadd.f32 0.0, %v6082
      %v6084 = vpop.f32.mrb[0].mxu0
      %6085 = vmatprep.mubr.bf16.mxu0 0
      %6086 = vmatmul.mubr.bf16.gmra.mrb[0].mxu0 %v5963
      %v6087 = vpop.f32.mrb[0].mxu0
      %v6088 = vadd.f32 0.0, %v6087
      %v6089 = vpop.f32.mrb[0].mxu0
      %v6090 = vpop.f32.mrb[0].mxu0
      %v6091 = vadd.f32 0.0, %v6090
      %v6092 = vpop.f32.mrb[0].mxu0
      %6093 = vmatprep.mubr.bf16.mxu0 0
      %6094 = vmatmul.mubr.bf16.gmra.mrb[0].mxu0 %v5966
      %v6095 = vpop.f32.mrb[0].mxu0
      %v6096 = vadd.f32 0.0, %v6095
      %v6097 = vpop.f32.mrb[0].mxu0
      %v6098 = vpop.f32.mrb[0].mxu0
      %v6099 = vadd.f32 0.0, %v6098
      %v6100 = vpop.f32.mrb[0].mxu0
      %6101 = vmatprep.mubr.bf16.mxu0 0
      %6102 = vmatmul.mubr.bf16.gmra.mrb[0].mxu0 %v5969
      %v6103 = vpop.f32.mrb[0].mxu0
      %v6104 = vadd.f32 0.0, %v6103
      %v6105 = vpop.f32.mrb[0].mxu0
      %v6106 = vpop.f32.mrb[0].mxu0
      %v6107 = vadd.f32 0.0, %v6106
      %v6108 = vpop.f32.mrb[0].mxu0
      %6109 = vmatprep.mubr.bf16.mxu0 0
      %6110 = vmatmul.mubr.bf16.gmra.mrb[0].mxu0 %v5972
      %v6111 = vpop.f32.mrb[0].mxu0
      %v6112 = vadd.f32 0.0, %v6111
      %v6113 = vpop.f32.mrb[0].mxu0
      %v6114 = vpop.f32.mrb[0].mxu0
      %v6115 = vadd.f32 0.0, %v6114
      %v6116 = vpop.f32.mrb[0].mxu0
      %6117 = vmatprep.mubr.bf16.mxu0 0
      %6118 = vmatmul.mubr.bf16.gmra.mrb[0].mxu0 %v5975
      %v6119 = vpop.f32.mrb[0].mxu0
      %v6120 = vadd.f32 0.0, %v6119
      %v6121 = vpop.f32.mrb[0].mxu0
      %v6122 = vpop.f32.mrb[0].mxu0
      %v6123 = vadd.f32 0.0, %v6122
      %v6124 = vpop.f32.mrb[0].mxu0
      %6125 = vmatprep.mubr.bf16.mxu0 0
      %6126 = vmatmul.mubr.bf16.gmra.mrb[0].mxu0 %v5978
      %v6127 = vpop.f32.mrb[0].mxu0
      %v6128 = vadd.f32 0.0, %v6127
      %v6129 = vpop.f32.mrb[0].mxu0
      %v6130 = vpop.f32.mrb[0].mxu0
      %v6131 = vadd.f32 0.0, %v6130
      %v6132 = vpop.f32.mrb[0].mxu0
      %6133 = vmatprep.mubr.bf16.mxu0 0
      %6134 = vmatmul.mubr.bf16.gmra.mrb[0].mxu0 %v5981
      %v6135 = vpop.f32.mrb[0].mxu0
      %v6136 = vadd.f32 0.0, %v6135
      %v6137 = vpop.f32.mrb[0].mxu0
      %v6138 = vpop.f32.mrb[0].mxu0
      %v6139 = vadd.f32 0.0, %v6138
      %v6140 = vpop.f32.mrb[0].mxu0
      %6141 = vmatprep.mubr.bf16.mxu0 0
      %6142 = vmatmul.mubr.bf16.gmra.mrb[0].mxu0 %v5984
      %v6143 = vpop.f32.mrb[0].mxu0
      %v6144 = vadd.f32 0.0, %v6143
      %v6145 = vpop.f32.mrb[0].mxu0
      %v6146 = vpop.f32.mrb[0].mxu0
      %v6147 = vadd.f32 0.0, %v6146
      %v6148 = vpop.f32.mrb[0].mxu0
      %6149 = vdwg.mxu0
      %6150 = vst.msk [vmem:[%s1276 + $0x1] sm:$0xff] %vm523, %v6024
      %6151 = vst.msk [vmem:[%s1276 + $0x9] sm:$0xff] %vm523, %v6027
      %6152 = vst.msk [vmem:[%s1276 + $0x19] sm:$0xff] %vm523, %v6032
      %6153 = vst.msk [vmem:[%s1276 + $0x21] sm:$0xff] %vm523, %v6035
      %6154 = vst.msk [vmem:[%s1276 + $0x31] sm:$0xff] %vm523, %v6040
      %6155 = vst.msk [vmem:[%s1276 + $0x39] sm:$0xff] %vm523, %v6043
      %6156 = vst.msk [vmem:[%s1276 + $0x49] sm:$0xff] %vm523, %v6048
      %6157 = vst.msk [vmem:[%s1276 + $0x51] sm:$0xff] %vm523, %v6051
      %6158 = vst.msk [vmem:[%s1276 + $0x61] sm:$0xff] %vm523, %v6056
      %6159 = vst.msk [vmem:[%s1276 + $0x69] sm:$0xff] %vm523, %v6059
      %6160 = vst.msk [vmem:[%s1276 + $0x79] sm:$0xff] %vm523, %v6064
      %6161 = vst.msk [vmem:[%s1276 + $0x81] sm:$0xff] %vm523, %v6067
      %6162 = vst.msk [vmem:[%s1276 + $0x91] sm:$0xff] %vm523, %v6072
      %6163 = vst.msk [vmem:[%s1276 + $0x99] sm:$0xff] %vm523, %v6075
      %6164 = vst.msk [vmem:[%s1276 + $0xa9] sm:$0xff] %vm523, %v6080
      %6165 = vst.msk [vmem:[%s1276 + $0xb1] sm:$0xff] %vm523, %v6083
      %6166 = vst.msk [vmem:[%s1276 + $0xc1] sm:$0xff] %vm523, %v6088
      %6167 = vst.msk [vmem:[%s1276 + $0xc9] sm:$0xff] %vm523, %v6091
      %6168 = vst.msk [vmem:[%s1276 + $0xd9] sm:$0xff] %vm523, %v6096
      %6169 = vst.msk [vmem:[%s1276 + $0xe1] sm:$0xff] %vm523, %v6099
      %6170 = vst.msk [vmem:[%s1276 + $0xf1] sm:$0xff] %vm523, %v6104
      %6171 = vst.msk [vmem:[%s1276 + $0xf9] sm:$0xff] %vm523, %v6107
      %6172 = vst.msk [vmem:[%s1276 + $0x109] sm:$0xff] %vm523, %v6112
      %6173 = vst.msk [vmem:[%s1276 + $0x111] sm:$0xff] %vm523, %v6115
      %6174 = vst.msk [vmem:[%s1276 + $0x121] sm:$0xff] %vm523, %v6120
      %6175 = vst.msk [vmem:[%s1276 + $0x129] sm:$0xff] %vm523, %v6123
      %6176 = vst.msk [vmem:[%s1276 + $0x139] sm:$0xff] %vm523, %v6128
      %6177 = vst.msk [vmem:[%s1276 + $0x141] sm:$0xff] %vm523, %v6131
      %6178 = vst.msk [vmem:[%s1276 + $0x151] sm:$0xff] %vm523, %v6136
      %6179 = vst.msk [vmem:[%s1276 + $0x159] sm:$0xff] %vm523, %v6139
      %6180 = vst.msk [vmem:[%s1276 + $0x169] sm:$0xff] %vm523, %v6144
      %6181 = vst.msk [vmem:[%s1276 + $0x171] sm:$0xff] %vm523, %v6147
      %v6182 = vld [vmem:[#allocation3] sm:$0xff]
      %v6183 = vld [vmem:[#allocation3 + $0x8] sm:$0xff]
      %v6184 = vld [vmem:[#allocation3 + $0x18] sm:$0xff]
      %v6185 = vld [vmem:[#allocation3 + $0x20] sm:$0xff]
      %v6186 = vld [vmem:[#allocation3 + $0x30] sm:$0xff]
      %v6187 = vld [vmem:[#allocation3 + $0x38] sm:$0xff]
      %v6188 = vld [vmem:[#allocation3 + $0x48] sm:$0xff]
      %v6189 = vld [vmem:[#allocation3 + $0x50] sm:$0xff]
      %v6190 = vld [vmem:[#allocation3 + $0x60] sm:$0xff]
      %v6191 = vld [vmem:[#allocation3 + $0x68] sm:$0xff]
      %v6192 = vld [vmem:[#allocation3 + $0x78] sm:$0xff]
      %v6193 = vld [vmem:[#allocation3 + $0x80] sm:$0xff]
      %v6194 = vld [vmem:[#allocation3 + $0x90] sm:$0xff]
      %v6195 = vld [vmem:[#allocation3 + $0x98] sm:$0xff]
      %v6196 = vld [vmem:[#allocation3 + $0xa8] sm:$0xff]
      %v6197 = vld [vmem:[#allocation3 + $0xb0] sm:$0xff]
      %v6198 = vld [vmem:[#allocation3 + $0xc0] sm:$0xff]
      %v6199 = vld [vmem:[#allocation3 + $0xc8] sm:$0xff]
      %v6200 = vld [vmem:[#allocation3 + $0xd8] sm:$0xff]
      %v6201 = vld [vmem:[#allocation3 + $0xe0] sm:$0xff]
      %v6202 = vld [vmem:[#allocation3 + $0xf0] sm:$0xff]
      %v6203 = vld [vmem:[#allocation3 + $0xf8] sm:$0xff]
      %v6204 = vld [vmem:[#allocation3 + $0x108] sm:$0xff]
      %v6205 = vld [vmem:[#allocation3 + $0x110] sm:$0xff]
      %v6206 = vld [vmem:[#allocation3 + $0x120] sm:$0xff]
      %v6207 = vld [vmem:[#allocation3 + $0x128] sm:$0xff]
      %v6208 = vld [vmem:[#allocation3 + $0x138] sm:$0xff]
      %v6209 = vld [vmem:[#allocation3 + $0x140] sm:$0xff]
      %v6210 = vld [vmem:[#allocation3 + $0x150] sm:$0xff]
      %v6211 = vld [vmem:[#allocation3 + $0x158] sm:$0xff]
      %v6212 = vld [vmem:[#allocation3 + $0x168] sm:$0xff]
      %v6213 = vld [vmem:[#allocation3 + $0x170] sm:$0xff]
      %v6214 = vadd.f32 %v6182, 0.0
      %v6215 = vadd.f32 %v6183, 0.0
      %v6216 = vadd.f32 %v6184, 0.0
      %v6217 = vadd.f32 %v6185, 0.0
      %v6218 = vadd.f32 %v6186, 0.0
      %v6219 = vadd.f32 %v6187, 0.0
      %v6220 = vadd.f32 %v6188, 0.0
      %v6221 = vadd.f32 %v6189, 0.0
      %v6222 = vadd.f32 %v6190, 0.0
      %v6223 = vadd.f32 %v6191, 0.0
      %v6224 = vadd.f32 %v6192, 0.0
      %v6225 = vadd.f32 %v6193, 0.0
      %v6226 = vadd.f32 %v6194, 0.0
      %v6227 = vadd.f32 %v6195, 0.0
      %v6228 = vadd.f32 %v6196, 0.0
      %v6229 = vadd.f32 %v6197, 0.0
      %v6230 = vadd.f32 %v6198, 0.0
      %v6231 = vadd.f32 %v6199, 0.0
      %v6232 = vadd.f32 %v6200, 0.0
      %v6233 = vadd.f32 %v6201, 0.0
      %v6234 = vadd.f32 %v6202, 0.0
      %v6235 = vadd.f32 %v6203, 0.0
      %v6236 = vadd.f32 %v6204, 0.0
      %v6237 = vadd.f32 %v6205, 0.0
      %v6238 = vadd.f32 %v6206, 0.0
      %v6239 = vadd.f32 %v6207, 0.0
      %v6240 = vadd.f32 %v6208, 0.0
      %v6241 = vadd.f32 %v6209, 0.0
      %v6242 = vadd.f32 %v6210, 0.0
      %v6243 = vadd.f32 %v6211, 0.0
      %v6244 = vadd.f32 %v6212, 0.0
      %v6245 = vadd.f32 %v6213, 0.0
      %v6246 = vld [vmem:[#allocation3 + $0x1] sm:$0xff]
      %v6247 = vld [vmem:[#allocation3 + $0x9] sm:$0xff]
      %v6248 = vld [vmem:[#allocation3 + $0x19] sm:$0xff]
      %v6249 = vld [vmem:[#allocation3 + $0x21] sm:$0xff]
      %v6250 = vld [vmem:[#allocation3 + $0x31] sm:$0xff]
      %v6251 = vld [vmem:[#allocation3 + $0x39] sm:$0xff]
      %v6252 = vld [vmem:[#allocation3 + $0x49] sm:$0xff]
      %v6253 = vld [vmem:[#allocation3 + $0x51] sm:$0xff]
      %v6254 = vld [vmem:[#allocation3 + $0x61] sm:$0xff]
      %v6255 = vld [vmem:[#allocation3 + $0x69] sm:$0xff]
      %v6256 = vld [vmem:[#allocation3 + $0x79] sm:$0xff]
      %v6257 = vld [vmem:[#allocation3 + $0x81] sm:$0xff]
      %v6258 = vld [vmem:[#allocation3 + $0x91] sm:$0xff]
      %v6259 = vld [vmem:[#allocation3 + $0x99] sm:$0xff]
      %v6260 = vld [vmem:[#allocation3 + $0xa9] sm:$0xff]
      %v6261 = vld [vmem:[#allocation3 + $0xb1] sm:$0xff]
      %v6262 = vld [vmem:[#allocation3 + $0xc1] sm:$0xff]
      %v6263 = vld [vmem:[#allocation3 + $0xc9] sm:$0xff]
      %v6264 = vld [vmem:[#allocation3 + $0xd9] sm:$0xff]
      %v6265 = vld [vmem:[#allocation3 + $0xe1] sm:$0xff]
      %v6266 = vld [vmem:[#allocation3 + $0xf1] sm:$0xff]
      %v6267 = vld [vmem:[#allocation3 + $0xf9] sm:$0xff]
      %v6268 = vld [vmem:[#allocation3 + $0x109] sm:$0xff]
      %v6269 = vld [vmem:[#allocation3 + $0x111] sm:$0xff]
      %v6270 = vld [vmem:[#allocation3 + $0x121] sm:$0xff]
      %v6271 = vld [vmem:[#allocation3 + $0x129] sm:$0xff]
      %v6272 = vld [vmem:[#allocation3 + $0x139] sm:$0xff]
      %v6273 = vld [vmem:[#allocation3 + $0x141] sm:$0xff]
      %v6274 = vld [vmem:[#allocation3 + $0x151] sm:$0xff]
      %v6275 = vld [vmem:[#allocation3 + $0x159] sm:$0xff]
      %v6276 = vld [vmem:[#allocation3 + $0x169] sm:$0xff]
      %v6277 = vld [vmem:[#allocation3 + $0x171] sm:$0xff]
      %6310 = vrot.lane.b32.xlu0 %v6246, 124
      %v6311 = vpop.permute.xlu0 %6310
      %6312 = vrot.lane.b32.xlu0 %v6247, 124
      %v6313 = vpop.permute.xlu0 %6312
      %6314 = vrot.lane.b32.xlu0 %v6248, 124
      %v6315 = vpop.permute.xlu0 %6314
      %6316 = vrot.lane.b32.xlu0 %v6249, 124
      %v6317 = vpop.permute.xlu0 %6316
      %6318 = vrot.lane.b32.xlu0 %v6250, 124
      %v6319 = vpop.permute.xlu0 %6318
      %6320 = vrot.lane.b32.xlu0 %v6251, 124
      %v6321 = vpop.permute.xlu0 %6320
      %6322 = vrot.lane.b32.xlu0 %v6252, 124
      %v6323 = vpop.permute.xlu0 %6322
      %6324 = vrot.lane.b32.xlu0 %v6253, 124
      %v6325 = vpop.permute.xlu0 %6324
      %6326 = vrot.lane.b32.xlu0 %v6254, 124
      %v6327 = vpop.permute.xlu0 %6326
      %6328 = vrot.lane.b32.xlu0 %v6255, 124
      %v6329 = vpop.permute.xlu0 %6328
      %6330 = vrot.lane.b32.xlu0 %v6256, 124
      %v6331 = vpop.permute.xlu0 %6330
      %6332 = vrot.lane.b32.xlu0 %v6257, 124
      %v6333 = vpop.permute.xlu0 %6332
      %6334 = vrot.lane.b32.xlu0 %v6258, 124
      %v6335 = vpop.permute.xlu0 %6334
      %6336 = vrot.lane.b32.xlu0 %v6259, 124
      %v6337 = vpop.permute.xlu0 %6336
      %6338 = vrot.lane.b32.xlu0 %v6260, 124
      %v6339 = vpop.permute.xlu0 %6338
      %6340 = vrot.lane.b32.xlu0 %v6261, 124
      %v6341 = vpop.permute.xlu0 %6340
      %6342 = vrot.lane.b32.xlu0 %v6262, 124
      %v6343 = vpop.permute.xlu0 %6342
      %6344 = vrot.lane.b32.xlu0 %v6263, 124
      %v6345 = vpop.permute.xlu0 %6344
      %6346 = vrot.lane.b32.xlu0 %v6264, 124
      %v6347 = vpop.permute.xlu0 %6346
      %6348 = vrot.lane.b32.xlu0 %v6265, 124
      %v6349 = vpop.permute.xlu0 %6348
      %6350 = vrot.lane.b32.xlu0 %v6266, 124
      %v6351 = vpop.permute.xlu0 %6350
      %6352 = vrot.lane.b32.xlu0 %v6267, 124
      %v6353 = vpop.permute.xlu0 %6352
      %6354 = vrot.lane.b32.xlu0 %v6268, 124
      %v6355 = vpop.permute.xlu0 %6354
      %6356 = vrot.lane.b32.xlu0 %v6269, 124
      %v6357 = vpop.permute.xlu0 %6356
      %6358 = vrot.lane.b32.xlu0 %v6270, 124
      %v6359 = vpop.permute.xlu0 %6358
      %6360 = vrot.lane.b32.xlu0 %v6271, 124
      %v6361 = vpop.permute.xlu0 %6360
      %6362 = vrot.lane.b32.xlu0 %v6272, 124
      %v6363 = vpop.permute.xlu0 %6362
      %6364 = vrot.lane.b32.xlu0 %v6273, 124
      %v6365 = vpop.permute.xlu0 %6364
      %6366 = vrot.lane.b32.xlu0 %v6274, 124
      %v6367 = vpop.permute.xlu0 %6366
      %6368 = vrot.lane.b32.xlu0 %v6275, 124
      %v6369 = vpop.permute.xlu0 %6368
      %6370 = vrot.lane.b32.xlu0 %v6276, 124
      %v6371 = vpop.permute.xlu0 %6370
      %6372 = vrot.lane.b32.xlu0 %v6277, 124
      %v6373 = vpop.permute.xlu0 %6372
      %v6406 = vadd.f32 %v6214, %v6311
      %v6407 = vadd.f32 %v6215, %v6313
      %v6408 = vadd.f32 %v6216, %v6315
      %v6409 = vadd.f32 %v6217, %v6317
      %v6410 = vadd.f32 %v6218, %v6319
      %v6411 = vadd.f32 %v6219, %v6321
      %v6412 = vadd.f32 %v6220, %v6323
      %v6413 = vadd.f32 %v6221, %v6325
      %v6414 = vadd.f32 %v6222, %v6327
      %v6415 = vadd.f32 %v6223, %v6329
      %v6416 = vadd.f32 %v6224, %v6331
      %v6417 = vadd.f32 %v6225, %v6333
      %v6418 = vadd.f32 %v6226, %v6335
      %v6419 = vadd.f32 %v6227, %v6337
      %v6420 = vadd.f32 %v6228, %v6339
      %v6421 = vadd.f32 %v6229, %v6341
      %v6422 = vadd.f32 %v6230, %v6343
      %v6423 = vadd.f32 %v6231, %v6345
      %v6424 = vadd.f32 %v6232, %v6347
      %v6425 = vadd.f32 %v6233, %v6349
      %v6426 = vadd.f32 %v6234, %v6351
      %v6427 = vadd.f32 %v6235, %v6353
      %v6428 = vadd.f32 %v6236, %v6355
      %v6429 = vadd.f32 %v6237, %v6357
      %v6430 = vadd.f32 %v6238, %v6359
      %v6431 = vadd.f32 %v6239, %v6361
      %v6432 = vadd.f32 %v6240, %v6363
      %v6433 = vadd.f32 %v6241, %v6365
      %v6434 = vadd.f32 %v6242, %v6367
      %v6435 = vadd.f32 %v6243, %v6369
      %v6436 = vadd.f32 %v6244, %v6371
      %v6437 = vadd.f32 %v6245, %v6373
      %v6438 = vld [vmem:[#allocation3 + $0x2] sm:$0xff]
      %v6439 = vld [vmem:[#allocation3 + $0xa] sm:$0xff]
      %v6440 = vld [vmem:[#allocation3 + $0x1a] sm:$0xff]
      %v6441 = vld [vmem:[#allocation3 + $0x22] sm:$0xff]
      %v6442 = vld [vmem:[#allocation3 + $0x32] sm:$0xff]
      %v6443 = vld [vmem:[#allocation3 + $0x3a] sm:$0xff]
      %v6444 = vld [vmem:[#allocation3 + $0x4a] sm:$0xff]
      %v6445 = vld [vmem:[#allocation3 + $0x52] sm:$0xff]
      %v6446 = vld [vmem:[#allocation3 + $0x62] sm:$0xff]
      %v6447 = vld [vmem:[#allocation3 + $0x6a] sm:$0xff]
      %v6448 = vld [vmem:[#allocation3 + $0x7a] sm:$0xff]
      %v6449 = vld [vmem:[#allocation3 + $0x82] sm:$0xff]
      %v6450 = vld [vmem:[#allocation3 + $0x92] sm:$0xff]
      %v6451 = vld [vmem:[#allocation3 + $0x9a] sm:$0xff]
      %v6452 = vld [vmem:[#allocation3 + $0xaa] sm:$0xff]
      %v6453 = vld [vmem:[#allocation3 + $0xb2] sm:$0xff]
      %v6454 = vld [vmem:[#allocation3 + $0xc2] sm:$0xff]
      %v6455 = vld [vmem:[#allocation3 + $0xca] sm:$0xff]
      %v6456 = vld [vmem:[#allocation3 + $0xda] sm:$0xff]
      %v6457 = vld [vmem:[#allocation3 + $0xe2] sm:$0xff]
      %v6458 = vld [vmem:[#allocation3 + $0xf2] sm:$0xff]
      %v6459 = vld [vmem:[#allocation3 + $0xfa] sm:$0xff]
      %v6460 = vld [vmem:[#allocation3 + $0x10a] sm:$0xff]
      %v6461 = vld [vmem:[#allocation3 + $0x112] sm:$0xff]
      %v6462 = vld [vmem:[#allocation3 + $0x122] sm:$0xff]
      %v6463 = vld [vmem:[#allocation3 + $0x12a] sm:$0xff]
      %v6464 = vld [vmem:[#allocation3 + $0x13a] sm:$0xff]
      %v6465 = vld [vmem:[#allocation3 + $0x142] sm:$0xff]
      %v6466 = vld [vmem:[#allocation3 + $0x152] sm:$0xff]
      %v6467 = vld [vmem:[#allocation3 + $0x15a] sm:$0xff]
      %v6468 = vld [vmem:[#allocation3 + $0x16a] sm:$0xff]
      %v6469 = vld [vmem:[#allocation3 + $0x172] sm:$0xff]
      %6502 = vrot.lane.b32.xlu0 %v6438, 120
      %v6503 = vpop.permute.xlu0 %6502
      %6504 = vrot.lane.b32.xlu0 %v6439, 120
      %v6505 = vpop.permute.xlu0 %6504
      %6506 = vrot.lane.b32.xlu0 %v6440, 120
      %v6507 = vpop.permute.xlu0 %6506
      %6508 = vrot.lane.b32.xlu0 %v6441, 120
      %v6509 = vpop.permute.xlu0 %6508
      %6510 = vrot.lane.b32.xlu0 %v6442, 120
      %v6511 = vpop.permute.xlu0 %6510
      %6512 = vrot.lane.b32.xlu0 %v6443, 120
      %v6513 = vpop.permute.xlu0 %6512
      %6514 = vrot.lane.b32.xlu0 %v6444, 120
      %v6515 = vpop.permute.xlu0 %6514
      %6516 = vrot.lane.b32.xlu0 %v6445, 120
      %v6517 = vpop.permute.xlu0 %6516
      %6518 = vrot.lane.b32.xlu0 %v6446, 120
      %v6519 = vpop.permute.xlu0 %6518
      %6520 = vrot.lane.b32.xlu0 %v6447, 120
      %v6521 = vpop.permute.xlu0 %6520
      %6522 = vrot.lane.b32.xlu0 %v6448, 120
      %v6523 = vpop.permute.xlu0 %6522
      %6524 = vrot.lane.b32.xlu0 %v6449, 120
      %v6525 = vpop.permute.xlu0 %6524
      %6526 = vrot.lane.b32.xlu0 %v6450, 120
      %v6527 = vpop.permute.xlu0 %6526
      %6528 = vrot.lane.b32.xlu0 %v6451, 120
      %v6529 = vpop.permute.xlu0 %6528
      %6530 = vrot.lane.b32.xlu0 %v6452, 120
      %v6531 = vpop.permute.xlu0 %6530
      %6532 = vrot.lane.b32.xlu0 %v6453, 120
      %v6533 = vpop.permute.xlu0 %6532
      %6534 = vrot.lane.b32.xlu0 %v6454, 120
      %v6535 = vpop.permute.xlu0 %6534
      %6536 = vrot.lane.b32.xlu0 %v6455, 120
      %v6537 = vpop.permute.xlu0 %6536
      %6538 = vrot.lane.b32.xlu0 %v6456, 120
      %v6539 = vpop.permute.xlu0 %6538
      %6540 = vrot.lane.b32.xlu0 %v6457, 120
      %v6541 = vpop.permute.xlu0 %6540
      %6542 = vrot.lane.b32.xlu0 %v6458, 120
      %v6543 = vpop.permute.xlu0 %6542
      %6544 = vrot.lane.b32.xlu0 %v6459, 120
      %v6545 = vpop.permute.xlu0 %6544
      %6546 = vrot.lane.b32.xlu0 %v6460, 120
      %v6547 = vpop.permute.xlu0 %6546
      %6548 = vrot.lane.b32.xlu0 %v6461, 120
      %v6549 = vpop.permute.xlu0 %6548
      %6550 = vrot.lane.b32.xlu0 %v6462, 120
      %v6551 = vpop.permute.xlu0 %6550
      %6552 = vrot.lane.b32.xlu0 %v6463, 120
      %v6553 = vpop.permute.xlu0 %6552
      %6554 = vrot.lane.b32.xlu0 %v6464, 120
      %v6555 = vpop.permute.xlu0 %6554
      %6556 = vrot.lane.b32.xlu0 %v6465, 120
      %v6557 = vpop.permute.xlu0 %6556
      %6558 = vrot.lane.b32.xlu0 %v6466, 120
      %v6559 = vpop.permute.xlu0 %6558
      %6560 = vrot.lane.b32.xlu0 %v6467, 120
      %v6561 = vpop.permute.xlu0 %6560
      %6562 = vrot.lane.b32.xlu0 %v6468, 120
      %v6563 = vpop.permute.xlu0 %6562
      %6564 = vrot.lane.b32.xlu0 %v6469, 120
      %v6565 = vpop.permute.xlu0 %6564
      %v6598 = vadd.f32 %v6406, %v6503
      %v6599 = vadd.f32 %v6407, %v6505
      %v6600 = vadd.f32 %v6408, %v6507
      %v6601 = vadd.f32 %v6409, %v6509
      %v6602 = vadd.f32 %v6410, %v6511
      %v6603 = vadd.f32 %v6411, %v6513
      %v6604 = vadd.f32 %v6412, %v6515
      %v6605 = vadd.f32 %v6413, %v6517
      %v6606 = vadd.f32 %v6414, %v6519
      %v6607 = vadd.f32 %v6415, %v6521
      %v6608 = vadd.f32 %v6416, %v6523
      %v6609 = vadd.f32 %v6417, %v6525
      %v6610 = vadd.f32 %v6418, %v6527
      %v6611 = vadd.f32 %v6419, %v6529
      %v6612 = vadd.f32 %v6420, %v6531
      %v6613 = vadd.f32 %v6421, %v6533
      %v6614 = vadd.f32 %v6422, %v6535
      %v6615 = vadd.f32 %v6423, %v6537
      %v6616 = vadd.f32 %v6424, %v6539
      %v6617 = vadd.f32 %v6425, %v6541
      %v6618 = vadd.f32 %v6426, %v6543
      %v6619 = vadd.f32 %v6427, %v6545
      %v6620 = vadd.f32 %v6428, %v6547
      %v6621 = vadd.f32 %v6429, %v6549
      %v6622 = vadd.f32 %v6430, %v6551
      %v6623 = vadd.f32 %v6431, %v6553
      %v6624 = vadd.f32 %v6432, %v6555
      %v6625 = vadd.f32 %v6433, %v6557
      %v6626 = vadd.f32 %v6434, %v6559
      %v6627 = vadd.f32 %v6435, %v6561
      %v6628 = vadd.f32 %v6436, %v6563
      %v6629 = vadd.f32 %v6437, %v6565
      %v6630 = vld [vmem:[%s1276] sm:$0xff]
      %v6631 = vld [vmem:[%s1276 + $0x8] sm:$0xff]
      %v6632 = vld [vmem:[%s1276 + $0x18] sm:$0xff]
      %v6633 = vld [vmem:[%s1276 + $0x20] sm:$0xff]
      %v6634 = vld [vmem:[%s1276 + $0x30] sm:$0xff]
      %v6635 = vld [vmem:[%s1276 + $0x38] sm:$0xff]
      %v6636 = vld [vmem:[%s1276 + $0x48] sm:$0xff]
      %v6637 = vld [vmem:[%s1276 + $0x50] sm:$0xff]
      %v6638 = vld [vmem:[%s1276 + $0x60] sm:$0xff]
      %v6639 = vld [vmem:[%s1276 + $0x68] sm:$0xff]
      %v6640 = vld [vmem:[%s1276 + $0x78] sm:$0xff]
      %v6641 = vld [vmem:[%s1276 + $0x80] sm:$0xff]
      %v6642 = vld [vmem:[%s1276 + $0x90] sm:$0xff]
      %v6643 = vld [vmem:[%s1276 + $0x98] sm:$0xff]
      %v6644 = vld [vmem:[%s1276 + $0xa8] sm:$0xff]
      %v6645 = vld [vmem:[%s1276 + $0xb0] sm:$0xff]
      %v6646 = vld [vmem:[%s1276 + $0xc0] sm:$0xff]
      %v6647 = vld [vmem:[%s1276 + $0xc8] sm:$0xff]
      %v6648 = vld [vmem:[%s1276 + $0xd8] sm:$0xff]
      %v6649 = vld [vmem:[%s1276 + $0xe0] sm:$0xff]
      %v6650 = vld [vmem:[%s1276 + $0xf0] sm:$0xff]
      %v6651 = vld [vmem:[%s1276 + $0xf8] sm:$0xff]
      %v6652 = vld [vmem:[%s1276 + $0x108] sm:$0xff]
      %v6653 = vld [vmem:[%s1276 + $0x110] sm:$0xff]
      %v6654 = vld [vmem:[%s1276 + $0x120] sm:$0xff]
      %v6655 = vld [vmem:[%s1276 + $0x128] sm:$0xff]
      %v6656 = vld [vmem:[%s1276 + $0x138] sm:$0xff]
      %v6657 = vld [vmem:[%s1276 + $0x140] sm:$0xff]
      %v6658 = vld [vmem:[%s1276 + $0x150] sm:$0xff]
      %v6659 = vld [vmem:[%s1276 + $0x158] sm:$0xff]
      %v6660 = vld [vmem:[%s1276 + $0x168] sm:$0xff]
      %v6661 = vld [vmem:[%s1276 + $0x170] sm:$0xff]
      %6694 = vrot.lane.b32.xlu0 %v6630, 116
      %v6695 = vpop.permute.xlu0 %6694
      %6696 = vrot.lane.b32.xlu0 %v6631, 116
      %v6697 = vpop.permute.xlu0 %6696
      %6698 = vrot.lane.b32.xlu0 %v6632, 116
      %v6699 = vpop.permute.xlu0 %6698
      %6700 = vrot.lane.b32.xlu0 %v6633, 116
      %v6701 = vpop.permute.xlu0 %6700
      %6702 = vrot.lane.b32.xlu0 %v6634, 116
      %v6703 = vpop.permute.xlu0 %6702
      %6704 = vrot.lane.b32.xlu0 %v6635, 116
      %v6705 = vpop.permute.xlu0 %6704
      %6706 = vrot.lane.b32.xlu0 %v6636, 116
      %v6707 = vpop.permute.xlu0 %6706
      %6708 = vrot.lane.b32.xlu0 %v6637, 116
      %v6709 = vpop.permute.xlu0 %6708
      %6710 = vrot.lane.b32.xlu0 %v6638, 116
      %v6711 = vpop.permute.xlu0 %6710
      %6712 = vrot.lane.b32.xlu0 %v6639, 116
      %v6713 = vpop.permute.xlu0 %6712
      %6714 = vrot.lane.b32.xlu0 %v6640, 116
      %v6715 = vpop.permute.xlu0 %6714
      %6716 = vrot.lane.b32.xlu0 %v6641, 116
      %v6717 = vpop.permute.xlu0 %6716
      %6718 = vrot.lane.b32.xlu0 %v6642, 116
      %v6719 = vpop.permute.xlu0 %6718
      %6720 = vrot.lane.b32.xlu0 %v6643, 116
      %v6721 = vpop.permute.xlu0 %6720
      %6722 = vrot.lane.b32.xlu0 %v6644, 116
      %v6723 = vpop.permute.xlu0 %6722
      %6724 = vrot.lane.b32.xlu0 %v6645, 116
      %v6725 = vpop.permute.xlu0 %6724
      %6726 = vrot.lane.b32.xlu0 %v6646, 116
      %v6727 = vpop.permute.xlu0 %6726
      %6728 = vrot.lane.b32.xlu0 %v6647, 116
      %v6729 = vpop.permute.xlu0 %6728
      %6730 = vrot.lane.b32.xlu0 %v6648, 116
      %v6731 = vpop.permute.xlu0 %6730
      %6732 = vrot.lane.b32.xlu0 %v6649, 116
      %v6733 = vpop.permute.xlu0 %6732
      %6734 = vrot.lane.b32.xlu0 %v6650, 116
      %v6735 = vpop.permute.xlu0 %6734
      %6736 = vrot.lane.b32.xlu0 %v6651, 116
      %v6737 = vpop.permute.xlu0 %6736
      %6738 = vrot.lane.b32.xlu0 %v6652, 116
      %v6739 = vpop.permute.xlu0 %6738
      %6740 = vrot.lane.b32.xlu0 %v6653, 116
      %v6741 = vpop.permute.xlu0 %6740
      %6742 = vrot.lane.b32.xlu0 %v6654, 116
      %v6743 = vpop.permute.xlu0 %6742
      %6744 = vrot.lane.b32.xlu0 %v6655, 116
      %v6745 = vpop.permute.xlu0 %6744
      %6746 = vrot.lane.b32.xlu0 %v6656, 116
      %v6747 = vpop.permute.xlu0 %6746
      %6748 = vrot.lane.b32.xlu0 %v6657, 116
      %v6749 = vpop.permute.xlu0 %6748
      %6750 = vrot.lane.b32.xlu0 %v6658, 116
      %v6751 = vpop.permute.xlu0 %6750
      %6752 = vrot.lane.b32.xlu0 %v6659, 116
      %v6753 = vpop.permute.xlu0 %6752
      %6754 = vrot.lane.b32.xlu0 %v6660, 116
      %v6755 = vpop.permute.xlu0 %6754
      %6756 = vrot.lane.b32.xlu0 %v6661, 116
      %v6757 = vpop.permute.xlu0 %6756
      %v6790 = vadd.f32 %v6598, %v6695
      %v6791 = vadd.f32 %v6599, %v6697
      %v6792 = vadd.f32 %v6600, %v6699
      %v6793 = vadd.f32 %v6601, %v6701
      %v6794 = vadd.f32 %v6602, %v6703
      %v6795 = vadd.f32 %v6603, %v6705
      %v6796 = vadd.f32 %v6604, %v6707
      %v6797 = vadd.f32 %v6605, %v6709
      %v6798 = vadd.f32 %v6606, %v6711
      %v6799 = vadd.f32 %v6607, %v6713
      %v6800 = vadd.f32 %v6608, %v6715
      %v6801 = vadd.f32 %v6609, %v6717
      %v6802 = vadd.f32 %v6610, %v6719
      %v6803 = vadd.f32 %v6611, %v6721
      %v6804 = vadd.f32 %v6612, %v6723
      %v6805 = vadd.f32 %v6613, %v6725
      %v6806 = vadd.f32 %v6614, %v6727
      %v6807 = vadd.f32 %v6615, %v6729
      %v6808 = vadd.f32 %v6616, %v6731
      %v6809 = vadd.f32 %v6617, %v6733
      %v6810 = vadd.f32 %v6618, %v6735
      %v6811 = vadd.f32 %v6619, %v6737
      %v6812 = vadd.f32 %v6620, %v6739
      %v6813 = vadd.f32 %v6621, %v6741
      %v6814 = vadd.f32 %v6622, %v6743
      %v6815 = vadd.f32 %v6623, %v6745
      %v6816 = vadd.f32 %v6624, %v6747
      %v6817 = vadd.f32 %v6625, %v6749
      %v6818 = vadd.f32 %v6626, %v6751
      %v6819 = vadd.f32 %v6627, %v6753
      %v6820 = vadd.f32 %v6628, %v6755
      %v6821 = vadd.f32 %v6629, %v6757
      %v6822 = vld [vmem:[%s1276 + $0x1] sm:$0xff]
      %v6823 = vld [vmem:[%s1276 + $0x9] sm:$0xff]
      %v6824 = vld [vmem:[%s1276 + $0x19] sm:$0xff]
      %v6825 = vld [vmem:[%s1276 + $0x21] sm:$0xff]
      %v6826 = vld [vmem:[%s1276 + $0x31] sm:$0xff]
      %v6827 = vld [vmem:[%s1276 + $0x39] sm:$0xff]
      %v6828 = vld [vmem:[%s1276 + $0x49] sm:$0xff]
      %v6829 = vld [vmem:[%s1276 + $0x51] sm:$0xff]
      %v6830 = vld [vmem:[%s1276 + $0x61] sm:$0xff]
      %v6831 = vld [vmem:[%s1276 + $0x69] sm:$0xff]
      %v6832 = vld [vmem:[%s1276 + $0x79] sm:$0xff]
      %v6833 = vld [vmem:[%s1276 + $0x81] sm:$0xff]
      %v6834 = vld [vmem:[%s1276 + $0x91] sm:$0xff]
      %v6835 = vld [vmem:[%s1276 + $0x99] sm:$0xff]
      %v6836 = vld [vmem:[%s1276 + $0xa9] sm:$0xff]
      %v6837 = vld [vmem:[%s1276 + $0xb1] sm:$0xff]
      %v6838 = vld [vmem:[%s1276 + $0xc1] sm:$0xff]
      %v6839 = vld [vmem:[%s1276 + $0xc9] sm:$0xff]
      %v6840 = vld [vmem:[%s1276 + $0xd9] sm:$0xff]
      %v6841 = vld [vmem:[%s1276 + $0xe1] sm:$0xff]
      %v6842 = vld [vmem:[%s1276 + $0xf1] sm:$0xff]
      %v6843 = vld [vmem:[%s1276 + $0xf9] sm:$0xff]
      %v6844 = vld [vmem:[%s1276 + $0x109] sm:$0xff]
      %v6845 = vld [vmem:[%s1276 + $0x111] sm:$0xff]
      %v6846 = vld [vmem:[%s1276 + $0x121] sm:$0xff]
      %v6847 = vld [vmem:[%s1276 + $0x129] sm:$0xff]
      %v6848 = vld [vmem:[%s1276 + $0x139] sm:$0xff]
      %v6849 = vld [vmem:[%s1276 + $0x141] sm:$0xff]
      %v6850 = vld [vmem:[%s1276 + $0x151] sm:$0xff]
      %v6851 = vld [vmem:[%s1276 + $0x159] sm:$0xff]
      %v6852 = vld [vmem:[%s1276 + $0x169] sm:$0xff]
      %v6853 = vld [vmem:[%s1276 + $0x171] sm:$0xff]
      %6886 = vrot.lane.b32.xlu0 %v6822, 112
      %v6887 = vpop.permute.xlu0 %6886
      %6888 = vrot.lane.b32.xlu0 %v6823, 112
      %v6889 = vpop.permute.xlu0 %6888
      %6890 = vrot.lane.b32.xlu0 %v6824, 112
      %v6891 = vpop.permute.xlu0 %6890
      %6892 = vrot.lane.b32.xlu0 %v6825, 112
      %v6893 = vpop.permute.xlu0 %6892
      %6894 = vrot.lane.b32.xlu0 %v6826, 112
      %v6895 = vpop.permute.xlu0 %6894
      %6896 = vrot.lane.b32.xlu0 %v6827, 112
      %v6897 = vpop.permute.xlu0 %6896
      %6898 = vrot.lane.b32.xlu0 %v6828, 112
      %v6899 = vpop.permute.xlu0 %6898
      %6900 = vrot.lane.b32.xlu0 %v6829, 112
      %v6901 = vpop.permute.xlu0 %6900
      %6902 = vrot.lane.b32.xlu0 %v6830, 112
      %v6903 = vpop.permute.xlu0 %6902
      %6904 = vrot.lane.b32.xlu0 %v6831, 112
      %v6905 = vpop.permute.xlu0 %6904
      %6906 = vrot.lane.b32.xlu0 %v6832, 112
      %v6907 = vpop.permute.xlu0 %6906
      %6908 = vrot.lane.b32.xlu0 %v6833, 112
      %v6909 = vpop.permute.xlu0 %6908
      %6910 = vrot.lane.b32.xlu0 %v6834, 112
      %v6911 = vpop.permute.xlu0 %6910
      %6912 = vrot.lane.b32.xlu0 %v6835, 112
      %v6913 = vpop.permute.xlu0 %6912
      %6914 = vrot.lane.b32.xlu0 %v6836, 112
      %v6915 = vpop.permute.xlu0 %6914
      %6916 = vrot.lane.b32.xlu0 %v6837, 112
      %v6917 = vpop.permute.xlu0 %6916
      %6918 = vrot.lane.b32.xlu0 %v6838, 112
      %v6919 = vpop.permute.xlu0 %6918
      %6920 = vrot.lane.b32.xlu0 %v6839, 112
      %v6921 = vpop.permute.xlu0 %6920
      %6922 = vrot.lane.b32.xlu0 %v6840, 112
      %v6923 = vpop.permute.xlu0 %6922
      %6924 = vrot.lane.b32.xlu0 %v6841, 112
      %v6925 = vpop.permute.xlu0 %6924
      %6926 = vrot.lane.b32.xlu0 %v6842, 112
      %v6927 = vpop.permute.xlu0 %6926
      %6928 = vrot.lane.b32.xlu0 %v6843, 112
      %v6929 = vpop.permute.xlu0 %6928
      %6930 = vrot.lane.b32.xlu0 %v6844, 112
      %v6931 = vpop.permute.xlu0 %6930
      %6932 = vrot.lane.b32.xlu0 %v6845, 112
      %v6933 = vpop.permute.xlu0 %6932
      %6934 = vrot.lane.b32.xlu0 %v6846, 112
      %v6935 = vpop.permute.xlu0 %6934
      %6936 = vrot.lane.b32.xlu0 %v6847, 112
      %v6937 = vpop.permute.xlu0 %6936
      %6938 = vrot.lane.b32.xlu0 %v6848, 112
      %v6939 = vpop.permute.xlu0 %6938
      %6940 = vrot.lane.b32.xlu0 %v6849, 112
      %v6941 = vpop.permute.xlu0 %6940
      %6942 = vrot.lane.b32.xlu0 %v6850, 112
      %v6943 = vpop.permute.xlu0 %6942
      %6944 = vrot.lane.b32.xlu0 %v6851, 112
      %v6945 = vpop.permute.xlu0 %6944
      %6946 = vrot.lane.b32.xlu0 %v6852, 112
      %v6947 = vpop.permute.xlu0 %6946
      %6948 = vrot.lane.b32.xlu0 %v6853, 112
      %v6949 = vpop.permute.xlu0 %6948
      %v6982 = vadd.f32 %v6790, %v6887
      %v6983 = vadd.f32 %v6791, %v6889
      %v6984 = vadd.f32 %v6792, %v6891
      %v6985 = vadd.f32 %v6793, %v6893
      %v6986 = vadd.f32 %v6794, %v6895
      %v6987 = vadd.f32 %v6795, %v6897
      %v6988 = vadd.f32 %v6796, %v6899
      %v6989 = vadd.f32 %v6797, %v6901
      %v6990 = vadd.f32 %v6798, %v6903
      %v6991 = vadd.f32 %v6799, %v6905
      %v6992 = vadd.f32 %v6800, %v6907
      %v6993 = vadd.f32 %v6801, %v6909
      %v6994 = vadd.f32 %v6802, %v6911
      %v6995 = vadd.f32 %v6803, %v6913
      %v6996 = vadd.f32 %v6804, %v6915
      %v6997 = vadd.f32 %v6805, %v6917
      %v6998 = vadd.f32 %v6806, %v6919
      %v6999 = vadd.f32 %v6807, %v6921
      %v7000 = vadd.f32 %v6808, %v6923
      %v7001 = vadd.f32 %v6809, %v6925
      %v7002 = vadd.f32 %v6810, %v6927
      %v7003 = vadd.f32 %v6811, %v6929
      %v7004 = vadd.f32 %v6812, %v6931
      %v7005 = vadd.f32 %v6813, %v6933
      %v7006 = vadd.f32 %v6814, %v6935
      %v7007 = vadd.f32 %v6815, %v6937
      %v7008 = vadd.f32 %v6816, %v6939
      %v7009 = vadd.f32 %v6817, %v6941
      %v7010 = vadd.f32 %v6818, %v6943
      %v7011 = vadd.f32 %v6819, %v6945
      %v7012 = vadd.f32 %v6820, %v6947
      %v7013 = vadd.f32 %v6821, %v6949
      %v7014 = vld [vmem:[%s1276 + $0x2] sm:$0xff]
      %v7015 = vld [vmem:[%s1276 + $0xa] sm:$0xff]
      %v7016 = vld [vmem:[%s1276 + $0x1a] sm:$0xff]
      %v7017 = vld [vmem:[%s1276 + $0x22] sm:$0xff]
      %v7018 = vld [vmem:[%s1276 + $0x32] sm:$0xff]
      %v7019 = vld [vmem:[%s1276 + $0x3a] sm:$0xff]
      %v7020 = vld [vmem:[%s1276 + $0x4a] sm:$0xff]
      %v7021 = vld [vmem:[%s1276 + $0x52] sm:$0xff]
      %v7022 = vld [vmem:[%s1276 + $0x62] sm:$0xff]
      %v7023 = vld [vmem:[%s1276 + $0x6a] sm:$0xff]
      %v7024 = vld [vmem:[%s1276 + $0x7a] sm:$0xff]
      %v7025 = vld [vmem:[%s1276 + $0x82] sm:$0xff]
      %v7026 = vld [vmem:[%s1276 + $0x92] sm:$0xff]
      %v7027 = vld [vmem:[%s1276 + $0x9a] sm:$0xff]
      %v7028 = vld [vmem:[%s1276 + $0xaa] sm:$0xff]
      %v7029 = vld [vmem:[%s1276 + $0xb2] sm:$0xff]
      %v7030 = vld [vmem:[%s1276 + $0xc2] sm:$0xff]
      %v7031 = vld [vmem:[%s1276 + $0xca] sm:$0xff]
      %v7032 = vld [vmem:[%s1276 + $0xda] sm:$0xff]
      %v7033 = vld [vmem:[%s1276 + $0xe2] sm:$0xff]
      %v7034 = vld [vmem:[%s1276 + $0xf2] sm:$0xff]
      %v7035 = vld [vmem:[%s1276 + $0xfa] sm:$0xff]
      %v7036 = vld [vmem:[%s1276 + $0x10a] sm:$0xff]
      %v7037 = vld [vmem:[%s1276 + $0x112] sm:$0xff]
      %v7038 = vld [vmem:[%s1276 + $0x122] sm:$0xff]
      %v7039 = vld [vmem:[%s1276 + $0x12a] sm:$0xff]
      %v7040 = vld [vmem:[%s1276 + $0x13a] sm:$0xff]
      %v7041 = vld [vmem:[%s1276 + $0x142] sm:$0xff]
      %v7042 = vld [vmem:[%s1276 + $0x152] sm:$0xff]
      %v7043 = vld [vmem:[%s1276 + $0x15a] sm:$0xff]
      %v7044 = vld [vmem:[%s1276 + $0x16a] sm:$0xff]
      %v7045 = vld [vmem:[%s1276 + $0x172] sm:$0xff]
      %7078 = vrot.lane.b32.xlu0 %v7014, 108
      %v7079 = vpop.permute.xlu0 %7078
      %7080 = vrot.lane.b32.xlu0 %v7015, 108
      %v7081 = vpop.permute.xlu0 %7080
      %7082 = vrot.lane.b32.xlu0 %v7016, 108
      %v7083 = vpop.permute.xlu0 %7082
      %7084 = vrot.lane.b32.xlu0 %v7017, 108
      %v7085 = vpop.permute.xlu0 %7084
      %7086 = vrot.lane.b32.xlu0 %v7018, 108
      %v7087 = vpop.permute.xlu0 %7086
      %7088 = vrot.lane.b32.xlu0 %v7019, 108
      %v7089 = vpop.permute.xlu0 %7088
      %7090 = vrot.lane.b32.xlu0 %v7020, 108
      %v7091 = vpop.permute.xlu0 %7090
      %7092 = vrot.lane.b32.xlu0 %v7021, 108
      %v7093 = vpop.permute.xlu0 %7092
      %7094 = vrot.lane.b32.xlu0 %v7022, 108
      %v7095 = vpop.permute.xlu0 %7094
      %7096 = vrot.lane.b32.xlu0 %v7023, 108
      %v7097 = vpop.permute.xlu0 %7096
      %7098 = vrot.lane.b32.xlu0 %v7024, 108
      %v7099 = vpop.permute.xlu0 %7098
      %7100 = vrot.lane.b32.xlu0 %v7025, 108
      %v7101 = vpop.permute.xlu0 %7100
      %7102 = vrot.lane.b32.xlu0 %v7026, 108
      %v7103 = vpop.permute.xlu0 %7102
      %7104 = vrot.lane.b32.xlu0 %v7027, 108
      %v7105 = vpop.permute.xlu0 %7104
      %7106 = vrot.lane.b32.xlu0 %v7028, 108
      %v7107 = vpop.permute.xlu0 %7106
      %7108 = vrot.lane.b32.xlu0 %v7029, 108
      %v7109 = vpop.permute.xlu0 %7108
      %7110 = vrot.lane.b32.xlu0 %v7030, 108
      %v7111 = vpop.permute.xlu0 %7110
      %7112 = vrot.lane.b32.xlu0 %v7031, 108
      %v7113 = vpop.permute.xlu0 %7112
      %7114 = vrot.lane.b32.xlu0 %v7032, 108
      %v7115 = vpop.permute.xlu0 %7114
      %7116 = vrot.lane.b32.xlu0 %v7033, 108
      %v7117 = vpop.permute.xlu0 %7116
      %7118 = vrot.lane.b32.xlu0 %v7034, 108
      %v7119 = vpop.permute.xlu0 %7118
      %7120 = vrot.lane.b32.xlu0 %v7035, 108
      %v7121 = vpop.permute.xlu0 %7120
      %7122 = vrot.lane.b32.xlu0 %v7036, 108
      %v7123 = vpop.permute.xlu0 %7122
      %7124 = vrot.lane.b32.xlu0 %v7037, 108
      %v7125 = vpop.permute.xlu0 %7124
      %7126 = vrot.lane.b32.xlu0 %v7038, 108
      %v7127 = vpop.permute.xlu0 %7126
      %7128 = vrot.lane.b32.xlu0 %v7039, 108
      %v7129 = vpop.permute.xlu0 %7128
      %7130 = vrot.lane.b32.xlu0 %v7040, 108
      %v7131 = vpop.permute.xlu0 %7130
      %7132 = vrot.lane.b32.xlu0 %v7041, 108
      %v7133 = vpop.permute.xlu0 %7132
      %7134 = vrot.lane.b32.xlu0 %v7042, 108
      %v7135 = vpop.permute.xlu0 %7134
      %7136 = vrot.lane.b32.xlu0 %v7043, 108
      %v7137 = vpop.permute.xlu0 %7136
      %7138 = vrot.lane.b32.xlu0 %v7044, 108
      %v7139 = vpop.permute.xlu0 %7138
      %7140 = vrot.lane.b32.xlu0 %v7045, 108
      %v7141 = vpop.permute.xlu0 %7140
      %v7174 = vadd.f32 %v6982, %v7079
      %v7175 = vadd.f32 %v6983, %v7081
      %v7176 = vadd.f32 %v6984, %v7083
      %v7177 = vadd.f32 %v6985, %v7085
      %v7178 = vadd.f32 %v6986, %v7087
      %v7179 = vadd.f32 %v6987, %v7089
      %v7180 = vadd.f32 %v6988, %v7091
      %v7181 = vadd.f32 %v6989, %v7093
      %v7182 = vadd.f32 %v6990, %v7095
      %v7183 = vadd.f32 %v6991, %v7097
      %v7184 = vadd.f32 %v6992, %v7099
      %v7185 = vadd.f32 %v6993, %v7101
      %v7186 = vadd.f32 %v6994, %v7103
      %v7187 = vadd.f32 %v6995, %v7105
      %v7188 = vadd.f32 %v6996, %v7107
      %v7189 = vadd.f32 %v6997, %v7109
      %v7190 = vadd.f32 %v6998, %v7111
      %v7191 = vadd.f32 %v6999, %v7113
      %v7192 = vadd.f32 %v7000, %v7115
      %v7193 = vadd.f32 %v7001, %v7117
      %v7194 = vadd.f32 %v7002, %v7119
      %v7195 = vadd.f32 %v7003, %v7121
      %v7196 = vadd.f32 %v7004, %v7123
      %v7197 = vadd.f32 %v7005, %v7125
      %v7198 = vadd.f32 %v7006, %v7127
      %v7199 = vadd.f32 %v7007, %v7129
      %v7200 = vadd.f32 %v7008, %v7131
      %v7201 = vadd.f32 %v7009, %v7133
      %v7202 = vadd.f32 %v7010, %v7135
      %v7203 = vadd.f32 %v7011, %v7137
      %v7204 = vadd.f32 %v7012, %v7139
      %v7205 = vadd.f32 %v7013, %v7141
      %v7206 = vld [vmem:[%s2333] sm:$0xff]
      %v7207 = vld [vmem:[%s2333 + $0x8] sm:$0xff]
      %v7208 = vld [vmem:[%s2333 + $0x18] sm:$0xff]
      %v7209 = vld [vmem:[%s2333 + $0x20] sm:$0xff]
      %v7210 = vld [vmem:[%s2333 + $0x30] sm:$0xff]
      %v7211 = vld [vmem:[%s2333 + $0x38] sm:$0xff]
      %v7212 = vld [vmem:[%s2333 + $0x48] sm:$0xff]
      %v7213 = vld [vmem:[%s2333 + $0x50] sm:$0xff]
      %v7214 = vld [vmem:[%s2333 + $0x60] sm:$0xff]
      %v7215 = vld [vmem:[%s2333 + $0x68] sm:$0xff]
      %v7216 = vld [vmem:[%s2333 + $0x78] sm:$0xff]
      %v7217 = vld [vmem:[%s2333 + $0x80] sm:$0xff]
      %v7218 = vld [vmem:[%s2333 + $0x90] sm:$0xff]
      %v7219 = vld [vmem:[%s2333 + $0x98] sm:$0xff]
      %v7220 = vld [vmem:[%s2333 + $0xa8] sm:$0xff]
      %v7221 = vld [vmem:[%s2333 + $0xb0] sm:$0xff]
      %v7222 = vld [vmem:[%s2333 + $0xc0] sm:$0xff]
      %v7223 = vld [vmem:[%s2333 + $0xc8] sm:$0xff]
      %v7224 = vld [vmem:[%s2333 + $0xd8] sm:$0xff]
      %v7225 = vld [vmem:[%s2333 + $0xe0] sm:$0xff]
      %v7226 = vld [vmem:[%s2333 + $0xf0] sm:$0xff]
      %v7227 = vld [vmem:[%s2333 + $0xf8] sm:$0xff]
      %v7228 = vld [vmem:[%s2333 + $0x108] sm:$0xff]
      %v7229 = vld [vmem:[%s2333 + $0x110] sm:$0xff]
      %v7230 = vld [vmem:[%s2333 + $0x120] sm:$0xff]
      %v7231 = vld [vmem:[%s2333 + $0x128] sm:$0xff]
      %v7232 = vld [vmem:[%s2333 + $0x138] sm:$0xff]
      %v7233 = vld [vmem:[%s2333 + $0x140] sm:$0xff]
      %v7234 = vld [vmem:[%s2333 + $0x150] sm:$0xff]
      %v7235 = vld [vmem:[%s2333 + $0x158] sm:$0xff]
      %v7236 = vld [vmem:[%s2333 + $0x168] sm:$0xff]
      %v7237 = vld [vmem:[%s2333 + $0x170] sm:$0xff]
      %7270 = vrot.lane.b32.xlu0 %v7206, 104
      %v7271 = vpop.permute.xlu0 %7270
      %7272 = vrot.lane.b32.xlu0 %v7207, 104
      %v7273 = vpop.permute.xlu0 %7272
      %7274 = vrot.lane.b32.xlu0 %v7208, 104
      %v7275 = vpop.permute.xlu0 %7274
      %7276 = vrot.lane.b32.xlu0 %v7209, 104
      %v7277 = vpop.permute.xlu0 %7276
      %7278 = vrot.lane.b32.xlu0 %v7210, 104
      %v7279 = vpop.permute.xlu0 %7278
      %7280 = vrot.lane.b32.xlu0 %v7211, 104
      %v7281 = vpop.permute.xlu0 %7280
      %7282 = vrot.lane.b32.xlu0 %v7212, 104
      %v7283 = vpop.permute.xlu0 %7282
      %7284 = vrot.lane.b32.xlu0 %v7213, 104
      %v7285 = vpop.permute.xlu0 %7284
      %7286 = vrot.lane.b32.xlu0 %v7214, 104
      %v7287 = vpop.permute.xlu0 %7286
      %7288 = vrot.lane.b32.xlu0 %v7215, 104
      %v7289 = vpop.permute.xlu0 %7288
      %7290 = vrot.lane.b32.xlu0 %v7216, 104
      %v7291 = vpop.permute.xlu0 %7290
      %7292 = vrot.lane.b32.xlu0 %v7217, 104
      %v7293 = vpop.permute.xlu0 %7292
      %7294 = vrot.lane.b32.xlu0 %v7218, 104
      %v7295 = vpop.permute.xlu0 %7294
      %7296 = vrot.lane.b32.xlu0 %v7219, 104
      %v7297 = vpop.permute.xlu0 %7296
      %7298 = vrot.lane.b32.xlu0 %v7220, 104
      %v7299 = vpop.permute.xlu0 %7298
      %7300 = vrot.lane.b32.xlu0 %v7221, 104
      %v7301 = vpop.permute.xlu0 %7300
      %7302 = vrot.lane.b32.xlu0 %v7222, 104
      %v7303 = vpop.permute.xlu0 %7302
      %7304 = vrot.lane.b32.xlu0 %v7223, 104
      %v7305 = vpop.permute.xlu0 %7304
      %7306 = vrot.lane.b32.xlu0 %v7224, 104
      %v7307 = vpop.permute.xlu0 %7306
      %7308 = vrot.lane.b32.xlu0 %v7225, 104
      %v7309 = vpop.permute.xlu0 %7308
      %7310 = vrot.lane.b32.xlu0 %v7226, 104
      %v7311 = vpop.permute.xlu0 %7310
      %7312 = vrot.lane.b32.xlu0 %v7227, 104
      %v7313 = vpop.permute.xlu0 %7312
      %7314 = vrot.lane.b32.xlu0 %v7228, 104
      %v7315 = vpop.permute.xlu0 %7314
      %7316 = vrot.lane.b32.xlu0 %v7229, 104
      %v7317 = vpop.permute.xlu0 %7316
      %7318 = vrot.lane.b32.xlu0 %v7230, 104
      %v7319 = vpop.permute.xlu0 %7318
      %7320 = vrot.lane.b32.xlu0 %v7231, 104
      %v7321 = vpop.permute.xlu0 %7320
      %7322 = vrot.lane.b32.xlu0 %v7232, 104
      %v7323 = vpop.permute.xlu0 %7322
      %7324 = vrot.lane.b32.xlu0 %v7233, 104
      %v7325 = vpop.permute.xlu0 %7324
      %7326 = vrot.lane.b32.xlu0 %v7234, 104
      %v7327 = vpop.permute.xlu0 %7326
      %7328 = vrot.lane.b32.xlu0 %v7235, 104
      %v7329 = vpop.permute.xlu0 %7328
      %7330 = vrot.lane.b32.xlu0 %v7236, 104
      %v7331 = vpop.permute.xlu0 %7330
      %7332 = vrot.lane.b32.xlu0 %v7237, 104
      %v7333 = vpop.permute.xlu0 %7332
      %v7366 = vadd.f32 %v7174, %v7271
      %v7367 = vadd.f32 %v7175, %v7273
      %v7368 = vadd.f32 %v7176, %v7275
      %v7369 = vadd.f32 %v7177, %v7277
      %v7370 = vadd.f32 %v7178, %v7279
      %v7371 = vadd.f32 %v7179, %v7281
      %v7372 = vadd.f32 %v7180, %v7283
      %v7373 = vadd.f32 %v7181, %v7285
      %v7374 = vadd.f32 %v7182, %v7287
      %v7375 = vadd.f32 %v7183, %v7289
      %v7376 = vadd.f32 %v7184, %v7291
      %v7377 = vadd.f32 %v7185, %v7293
      %v7378 = vadd.f32 %v7186, %v7295
      %v7379 = vadd.f32 %v7187, %v7297
      %v7380 = vadd.f32 %v7188, %v7299
      %v7381 = vadd.f32 %v7189, %v7301
      %v7382 = vadd.f32 %v7190, %v7303
      %v7383 = vadd.f32 %v7191, %v7305
      %v7384 = vadd.f32 %v7192, %v7307
      %v7385 = vadd.f32 %v7193, %v7309
      %v7386 = vadd.f32 %v7194, %v7311
      %v7387 = vadd.f32 %v7195, %v7313
      %v7388 = vadd.f32 %v7196, %v7315
      %v7389 = vadd.f32 %v7197, %v7317
      %v7390 = vadd.f32 %v7198, %v7319
      %v7391 = vadd.f32 %v7199, %v7321
      %v7392 = vadd.f32 %v7200, %v7323
      %v7393 = vadd.f32 %v7201, %v7325
      %v7394 = vadd.f32 %v7202, %v7327
      %v7395 = vadd.f32 %v7203, %v7329
      %v7396 = vadd.f32 %v7204, %v7331
      %v7397 = vadd.f32 %v7205, %v7333
      %v7398 = vld [vmem:[%s2333 + $0x1] sm:$0xff]
      %v7399 = vld [vmem:[%s2333 + $0x9] sm:$0xff]
      %v7400 = vld [vmem:[%s2333 + $0x19] sm:$0xff]
      %v7401 = vld [vmem:[%s2333 + $0x21] sm:$0xff]
      %v7402 = vld [vmem:[%s2333 + $0x31] sm:$0xff]
      %v7403 = vld [vmem:[%s2333 + $0x39] sm:$0xff]
      %v7404 = vld [vmem:[%s2333 + $0x49] sm:$0xff]
      %v7405 = vld [vmem:[%s2333 + $0x51] sm:$0xff]
      %v7406 = vld [vmem:[%s2333 + $0x61] sm:$0xff]
      %v7407 = vld [vmem:[%s2333 + $0x69] sm:$0xff]
      %v7408 = vld [vmem:[%s2333 + $0x79] sm:$0xff]
      %v7409 = vld [vmem:[%s2333 + $0x81] sm:$0xff]
      %v7410 = vld [vmem:[%s2333 + $0x91] sm:$0xff]
      %v7411 = vld [vmem:[%s2333 + $0x99] sm:$0xff]
      %v7412 = vld [vmem:[%s2333 + $0xa9] sm:$0xff]
      %v7413 = vld [vmem:[%s2333 + $0xb1] sm:$0xff]
      %v7414 = vld [vmem:[%s2333 + $0xc1] sm:$0xff]
      %v7415 = vld [vmem:[%s2333 + $0xc9] sm:$0xff]
      %v7416 = vld [vmem:[%s2333 + $0xd9] sm:$0xff]
      %v7417 = vld [vmem:[%s2333 + $0xe1] sm:$0xff]
      %v7418 = vld [vmem:[%s2333 + $0xf1] sm:$0xff]
      %v7419 = vld [vmem:[%s2333 + $0xf9] sm:$0xff]
      %v7420 = vld [vmem:[%s2333 + $0x109] sm:$0xff]
      %v7421 = vld [vmem:[%s2333 + $0x111] sm:$0xff]
      %v7422 = vld [vmem:[%s2333 + $0x121] sm:$0xff]
      %v7423 = vld [vmem:[%s2333 + $0x129] sm:$0xff]
      %v7424 = vld [vmem:[%s2333 + $0x139] sm:$0xff]
      %v7425 = vld [vmem:[%s2333 + $0x141] sm:$0xff]
      %v7426 = vld [vmem:[%s2333 + $0x151] sm:$0xff]
      %v7427 = vld [vmem:[%s2333 + $0x159] sm:$0xff]
      %v7428 = vld [vmem:[%s2333 + $0x169] sm:$0xff]
      %v7429 = vld [vmem:[%s2333 + $0x171] sm:$0xff]
      %7462 = vrot.lane.b32.xlu0 %v7398, 100
      %v7463 = vpop.permute.xlu0 %7462
      %7464 = vrot.lane.b32.xlu0 %v7399, 100
      %v7465 = vpop.permute.xlu0 %7464
      %7466 = vrot.lane.b32.xlu0 %v7400, 100
      %v7467 = vpop.permute.xlu0 %7466
      %7468 = vrot.lane.b32.xlu0 %v7401, 100
      %v7469 = vpop.permute.xlu0 %7468
      %7470 = vrot.lane.b32.xlu0 %v7402, 100
      %v7471 = vpop.permute.xlu0 %7470
      %7472 = vrot.lane.b32.xlu0 %v7403, 100
      %v7473 = vpop.permute.xlu0 %7472
      %7474 = vrot.lane.b32.xlu0 %v7404, 100
      %v7475 = vpop.permute.xlu0 %7474
      %7476 = vrot.lane.b32.xlu0 %v7405, 100
      %v7477 = vpop.permute.xlu0 %7476
      %7478 = vrot.lane.b32.xlu0 %v7406, 100
      %v7479 = vpop.permute.xlu0 %7478
      %7480 = vrot.lane.b32.xlu0 %v7407, 100
      %v7481 = vpop.permute.xlu0 %7480
      %7482 = vrot.lane.b32.xlu0 %v7408, 100
      %v7483 = vpop.permute.xlu0 %7482
      %7484 = vrot.lane.b32.xlu0 %v7409, 100
      %v7485 = vpop.permute.xlu0 %7484
      %7486 = vrot.lane.b32.xlu0 %v7410, 100
      %v7487 = vpop.permute.xlu0 %7486
      %7488 = vrot.lane.b32.xlu0 %v7411, 100
      %v7489 = vpop.permute.xlu0 %7488
      %7490 = vrot.lane.b32.xlu0 %v7412, 100
      %v7491 = vpop.permute.xlu0 %7490
      %7492 = vrot.lane.b32.xlu0 %v7413, 100
      %v7493 = vpop.permute.xlu0 %7492
      %7494 = vrot.lane.b32.xlu0 %v7414, 100
      %v7495 = vpop.permute.xlu0 %7494
      %7496 = vrot.lane.b32.xlu0 %v7415, 100
      %v7497 = vpop.permute.xlu0 %7496
      %7498 = vrot.lane.b32.xlu0 %v7416, 100
      %v7499 = vpop.permute.xlu0 %7498
      %7500 = vrot.lane.b32.xlu0 %v7417, 100
      %v7501 = vpop.permute.xlu0 %7500
      %7502 = vrot.lane.b32.xlu0 %v7418, 100
      %v7503 = vpop.permute.xlu0 %7502
      %7504 = vrot.lane.b32.xlu0 %v7419, 100
      %v7505 = vpop.permute.xlu0 %7504
      %7506 = vrot.lane.b32.xlu0 %v7420, 100
      %v7507 = vpop.permute.xlu0 %7506
      %7508 = vrot.lane.b32.xlu0 %v7421, 100
      %v7509 = vpop.permute.xlu0 %7508
      %7510 = vrot.lane.b32.xlu0 %v7422, 100
      %v7511 = vpop.permute.xlu0 %7510
      %7512 = vrot.lane.b32.xlu0 %v7423, 100
      %v7513 = vpop.permute.xlu0 %7512
      %7514 = vrot.lane.b32.xlu0 %v7424, 100
      %v7515 = vpop.permute.xlu0 %7514
      %7516 = vrot.lane.b32.xlu0 %v7425, 100
      %v7517 = vpop.permute.xlu0 %7516
      %7518 = vrot.lane.b32.xlu0 %v7426, 100
      %v7519 = vpop.permute.xlu0 %7518
      %7520 = vrot.lane.b32.xlu0 %v7427, 100
      %v7521 = vpop.permute.xlu0 %7520
      %7522 = vrot.lane.b32.xlu0 %v7428, 100
      %v7523 = vpop.permute.xlu0 %7522
      %7524 = vrot.lane.b32.xlu0 %v7429, 100
      %v7525 = vpop.permute.xlu0 %7524
      %v7558 = vadd.f32 %v7366, %v7463
      %v7559 = vadd.f32 %v7367, %v7465
      %v7560 = vadd.f32 %v7368, %v7467
      %v7561 = vadd.f32 %v7369, %v7469
      %v7562 = vadd.f32 %v7370, %v7471
      %v7563 = vadd.f32 %v7371, %v7473
      %v7564 = vadd.f32 %v7372, %v7475
      %v7565 = vadd.f32 %v7373, %v7477
      %v7566 = vadd.f32 %v7374, %v7479
      %v7567 = vadd.f32 %v7375, %v7481
      %v7568 = vadd.f32 %v7376, %v7483
      %v7569 = vadd.f32 %v7377, %v7485
      %v7570 = vadd.f32 %v7378, %v7487
      %v7571 = vadd.f32 %v7379, %v7489
      %v7572 = vadd.f32 %v7380, %v7491
      %v7573 = vadd.f32 %v7381, %v7493
      %v7574 = vadd.f32 %v7382, %v7495
      %v7575 = vadd.f32 %v7383, %v7497
      %v7576 = vadd.f32 %v7384, %v7499
      %v7577 = vadd.f32 %v7385, %v7501
      %v7578 = vadd.f32 %v7386, %v7503
      %v7579 = vadd.f32 %v7387, %v7505
      %v7580 = vadd.f32 %v7388, %v7507
      %v7581 = vadd.f32 %v7389, %v7509
      %v7582 = vadd.f32 %v7390, %v7511
      %v7583 = vadd.f32 %v7391, %v7513
      %v7584 = vadd.f32 %v7392, %v7515
      %v7585 = vadd.f32 %v7393, %v7517
      %v7586 = vadd.f32 %v7394, %v7519
      %v7587 = vadd.f32 %v7395, %v7521
      %v7588 = vadd.f32 %v7396, %v7523
      %v7589 = vadd.f32 %v7397, %v7525
      %v7590 = vld [vmem:[%s2333 + $0x2] sm:$0xff]
      %v7591 = vld [vmem:[%s2333 + $0xa] sm:$0xff]
      %v7592 = vld [vmem:[%s2333 + $0x1a] sm:$0xff]
      %v7593 = vld [vmem:[%s2333 + $0x22] sm:$0xff]
      %v7594 = vld [vmem:[%s2333 + $0x32] sm:$0xff]
      %v7595 = vld [vmem:[%s2333 + $0x3a] sm:$0xff]
      %v7596 = vld [vmem:[%s2333 + $0x4a] sm:$0xff]
      %v7597 = vld [vmem:[%s2333 + $0x52] sm:$0xff]
      %v7598 = vld [vmem:[%s2333 + $0x62] sm:$0xff]
      %v7599 = vld [vmem:[%s2333 + $0x6a] sm:$0xff]
      %v7600 = vld [vmem:[%s2333 + $0x7a] sm:$0xff]
      %v7601 = vld [vmem:[%s2333 + $0x82] sm:$0xff]
      %v7602 = vld [vmem:[%s2333 + $0x92] sm:$0xff]
      %v7603 = vld [vmem:[%s2333 + $0x9a] sm:$0xff]
      %v7604 = vld [vmem:[%s2333 + $0xaa] sm:$0xff]
      %v7605 = vld [vmem:[%s2333 + $0xb2] sm:$0xff]
      %v7606 = vld [vmem:[%s2333 + $0xc2] sm:$0xff]
      %v7607 = vld [vmem:[%s2333 + $0xca] sm:$0xff]
      %v7608 = vld [vmem:[%s2333 + $0xda] sm:$0xff]
      %v7609 = vld [vmem:[%s2333 + $0xe2] sm:$0xff]
      %v7610 = vld [vmem:[%s2333 + $0xf2] sm:$0xff]
      %v7611 = vld [vmem:[%s2333 + $0xfa] sm:$0xff]
      %v7612 = vld [vmem:[%s2333 + $0x10a] sm:$0xff]
      %v7613 = vld [vmem:[%s2333 + $0x112] sm:$0xff]
      %v7614 = vld [vmem:[%s2333 + $0x122] sm:$0xff]
      %v7615 = vld [vmem:[%s2333 + $0x12a] sm:$0xff]
      %v7616 = vld [vmem:[%s2333 + $0x13a] sm:$0xff]
      %v7617 = vld [vmem:[%s2333 + $0x142] sm:$0xff]
      %v7618 = vld [vmem:[%s2333 + $0x152] sm:$0xff]
      %v7619 = vld [vmem:[%s2333 + $0x15a] sm:$0xff]
      %v7620 = vld [vmem:[%s2333 + $0x16a] sm:$0xff]
      %v7621 = vld [vmem:[%s2333 + $0x172] sm:$0xff]
      %7654 = vrot.lane.b32.xlu0 %v7590, 96
      %v7655 = vpop.permute.xlu0 %7654
      %7656 = vrot.lane.b32.xlu0 %v7591, 96
      %v7657 = vpop.permute.xlu0 %7656
      %7658 = vrot.lane.b32.xlu0 %v7592, 96
      %v7659 = vpop.permute.xlu0 %7658
      %7660 = vrot.lane.b32.xlu0 %v7593, 96
      %v7661 = vpop.permute.xlu0 %7660
      %7662 = vrot.lane.b32.xlu0 %v7594, 96
      %v7663 = vpop.permute.xlu0 %7662
      %7664 = vrot.lane.b32.xlu0 %v7595, 96
      %v7665 = vpop.permute.xlu0 %7664
      %7666 = vrot.lane.b32.xlu0 %v7596, 96
      %v7667 = vpop.permute.xlu0 %7666
      %7668 = vrot.lane.b32.xlu0 %v7597, 96
      %v7669 = vpop.permute.xlu0 %7668
      %7670 = vrot.lane.b32.xlu0 %v7598, 96
      %v7671 = vpop.permute.xlu0 %7670
      %7672 = vrot.lane.b32.xlu0 %v7599, 96
      %v7673 = vpop.permute.xlu0 %7672
      %7674 = vrot.lane.b32.xlu0 %v7600, 96
      %v7675 = vpop.permute.xlu0 %7674
      %7676 = vrot.lane.b32.xlu0 %v7601, 96
      %v7677 = vpop.permute.xlu0 %7676
      %7678 = vrot.lane.b32.xlu0 %v7602, 96
      %v7679 = vpop.permute.xlu0 %7678
      %7680 = vrot.lane.b32.xlu0 %v7603, 96
      %v7681 = vpop.permute.xlu0 %7680
      %7682 = vrot.lane.b32.xlu0 %v7604, 96
      %v7683 = vpop.permute.xlu0 %7682
      %7684 = vrot.lane.b32.xlu0 %v7605, 96
      %v7685 = vpop.permute.xlu0 %7684
      %7686 = vrot.lane.b32.xlu0 %v7606, 96
      %v7687 = vpop.permute.xlu0 %7686
      %7688 = vrot.lane.b32.xlu0 %v7607, 96
      %v7689 = vpop.permute.xlu0 %7688
      %7690 = vrot.lane.b32.xlu0 %v7608, 96
      %v7691 = vpop.permute.xlu0 %7690
      %7692 = vrot.lane.b32.xlu0 %v7609, 96
      %v7693 = vpop.permute.xlu0 %7692
      %7694 = vrot.lane.b32.xlu0 %v7610, 96
      %v7695 = vpop.permute.xlu0 %7694
      %7696 = vrot.lane.b32.xlu0 %v7611, 96
      %v7697 = vpop.permute.xlu0 %7696
      %7698 = vrot.lane.b32.xlu0 %v7612, 96
      %v7699 = vpop.permute.xlu0 %7698
      %7700 = vrot.lane.b32.xlu0 %v7613, 96
      %v7701 = vpop.permute.xlu0 %7700
      %7702 = vrot.lane.b32.xlu0 %v7614, 96
      %v7703 = vpop.permute.xlu0 %7702
      %7704 = vrot.lane.b32.xlu0 %v7615, 96
      %v7705 = vpop.permute.xlu0 %7704
      %7706 = vrot.lane.b32.xlu0 %v7616, 96
      %v7707 = vpop.permute.xlu0 %7706
      %7708 = vrot.lane.b32.xlu0 %v7617, 96
      %v7709 = vpop.permute.xlu0 %7708
      %7710 = vrot.lane.b32.xlu0 %v7618, 96
      %v7711 = vpop.permute.xlu0 %7710
      %7712 = vrot.lane.b32.xlu0 %v7619, 96
      %v7713 = vpop.permute.xlu0 %7712
      %7714 = vrot.lane.b32.xlu0 %v7620, 96
      %v7715 = vpop.permute.xlu0 %7714
      %7716 = vrot.lane.b32.xlu0 %v7621, 96
      %v7717 = vpop.permute.xlu0 %7716
      %v7750 = vadd.f32 %v7558, %v7655
      %v7751 = vadd.f32 %v7559, %v7657
      %v7752 = vadd.f32 %v7560, %v7659
      %v7753 = vadd.f32 %v7561, %v7661
      %v7754 = vadd.f32 %v7562, %v7663
      %v7755 = vadd.f32 %v7563, %v7665
      %v7756 = vadd.f32 %v7564, %v7667
      %v7757 = vadd.f32 %v7565, %v7669
      %v7758 = vadd.f32 %v7566, %v7671
      %v7759 = vadd.f32 %v7567, %v7673
      %v7760 = vadd.f32 %v7568, %v7675
      %v7761 = vadd.f32 %v7569, %v7677
      %v7762 = vadd.f32 %v7570, %v7679
      %v7763 = vadd.f32 %v7571, %v7681
      %v7764 = vadd.f32 %v7572, %v7683
      %v7765 = vadd.f32 %v7573, %v7685
      %v7766 = vadd.f32 %v7574, %v7687
      %v7767 = vadd.f32 %v7575, %v7689
      %v7768 = vadd.f32 %v7576, %v7691
      %v7769 = vadd.f32 %v7577, %v7693
      %v7770 = vadd.f32 %v7578, %v7695
      %v7771 = vadd.f32 %v7579, %v7697
      %v7772 = vadd.f32 %v7580, %v7699
      %v7773 = vadd.f32 %v7581, %v7701
      %v7774 = vadd.f32 %v7582, %v7703
      %v7775 = vadd.f32 %v7583, %v7705
      %v7776 = vadd.f32 %v7584, %v7707
      %v7777 = vadd.f32 %v7585, %v7709
      %v7778 = vadd.f32 %v7586, %v7711
      %v7779 = vadd.f32 %v7587, %v7713
      %v7780 = vadd.f32 %v7588, %v7715
      %v7781 = vadd.f32 %v7589, %v7717
      %7814 = vrot.lane.b32.xlu0 %v7750, 12
      %v7815 = vpop.permute.xlu0 %7814
      %7816 = vrot.lane.b32.xlu0 %v7751, 12
      %v7817 = vpop.permute.xlu0 %7816
      %7818 = vrot.lane.b32.xlu0 %v7752, 12
      %v7819 = vpop.permute.xlu0 %7818
      %7820 = vrot.lane.b32.xlu0 %v7753, 12
      %v7821 = vpop.permute.xlu0 %7820
      %7822 = vrot.lane.b32.xlu0 %v7754, 12
      %v7823 = vpop.permute.xlu0 %7822
      %7824 = vrot.lane.b32.xlu0 %v7755, 12
      %v7825 = vpop.permute.xlu0 %7824
      %7826 = vrot.lane.b32.xlu0 %v7756, 12
      %v7827 = vpop.permute.xlu0 %7826
      %7828 = vrot.lane.b32.xlu0 %v7757, 12
      %v7829 = vpop.permute.xlu0 %7828
      %7830 = vrot.lane.b32.xlu0 %v7758, 12
      %v7831 = vpop.permute.xlu0 %7830
      %7832 = vrot.lane.b32.xlu0 %v7759, 12
      %v7833 = vpop.permute.xlu0 %7832
      %7834 = vrot.lane.b32.xlu0 %v7760, 12
      %v7835 = vpop.permute.xlu0 %7834
      %7836 = vrot.lane.b32.xlu0 %v7761, 12
      %v7837 = vpop.permute.xlu0 %7836
      %7838 = vrot.lane.b32.xlu0 %v7762, 12
      %v7839 = vpop.permute.xlu0 %7838
      %7840 = vrot.lane.b32.xlu0 %v7763, 12
      %v7841 = vpop.permute.xlu0 %7840
      %7842 = vrot.lane.b32.xlu0 %v7764, 12
      %v7843 = vpop.permute.xlu0 %7842
      %7844 = vrot.lane.b32.xlu0 %v7765, 12
      %v7845 = vpop.permute.xlu0 %7844
      %7846 = vrot.lane.b32.xlu0 %v7766, 12
      %v7847 = vpop.permute.xlu0 %7846
      %7848 = vrot.lane.b32.xlu0 %v7767, 12
      %v7849 = vpop.permute.xlu0 %7848
      %7850 = vrot.lane.b32.xlu0 %v7768, 12
      %v7851 = vpop.permute.xlu0 %7850
      %7852 = vrot.lane.b32.xlu0 %v7769, 12
      %v7853 = vpop.permute.xlu0 %7852
      %7854 = vrot.lane.b32.xlu0 %v7770, 12
      %v7855 = vpop.permute.xlu0 %7854
      %7856 = vrot.lane.b32.xlu0 %v7771, 12
      %v7857 = vpop.permute.xlu0 %7856
      %7858 = vrot.lane.b32.xlu0 %v7772, 12
      %v7859 = vpop.permute.xlu0 %7858
      %7860 = vrot.lane.b32.xlu0 %v7773, 12
      %v7861 = vpop.permute.xlu0 %7860
      %7862 = vrot.lane.b32.xlu0 %v7774, 12
      %v7863 = vpop.permute.xlu0 %7862
      %7864 = vrot.lane.b32.xlu0 %v7775, 12
      %v7865 = vpop.permute.xlu0 %7864
      %7866 = vrot.lane.b32.xlu0 %v7776, 12
      %v7867 = vpop.permute.xlu0 %7866
      %7868 = vrot.lane.b32.xlu0 %v7777, 12
      %v7869 = vpop.permute.xlu0 %7868
      %7870 = vrot.lane.b32.xlu0 %v7778, 12
      %v7871 = vpop.permute.xlu0 %7870
      %7872 = vrot.lane.b32.xlu0 %v7779, 12
      %v7873 = vpop.permute.xlu0 %7872
      %7874 = vrot.lane.b32.xlu0 %v7780, 12
      %v7875 = vpop.permute.xlu0 %7874
      %7876 = vrot.lane.b32.xlu0 %v7781, 12
      %v7877 = vpop.permute.xlu0 %7876
      %vm7910 = vcmask 130144
      %7911 = vst.msk [vmem:[#allocation2] sm:$0xff] %vm7910, %v7815
      %7912 = vst.msk [vmem:[#allocation2 + $0x8] sm:$0xff] %vm7910, %v7817
      %7913 = vst.msk [vmem:[#allocation2 + $0x10] sm:$0xff] %vm7910, %v7819
      %7914 = vst.msk [vmem:[#allocation2 + $0x18] sm:$0xff] %vm7910, %v7821
      %7915 = vst.msk [vmem:[#allocation2 + $0x20] sm:$0xff] %vm7910, %v7823
      %7916 = vst.msk [vmem:[#allocation2 + $0x28] sm:$0xff] %vm7910, %v7825
      %7917 = vst.msk [vmem:[#allocation2 + $0x30] sm:$0xff] %vm7910, %v7827
      %7918 = vst.msk [vmem:[#allocation2 + $0x38] sm:$0xff] %vm7910, %v7829
      %7919 = vst.msk [vmem:[#allocation2 + $0x40] sm:$0xff] %vm7910, %v7831
      %7920 = vst.msk [vmem:[#allocation2 + $0x48] sm:$0xff] %vm7910, %v7833
      %7921 = vst.msk [vmem:[#allocation2 + $0x50] sm:$0xff] %vm7910, %v7835
      %7922 = vst.msk [vmem:[#allocation2 + $0x58] sm:$0xff] %vm7910, %v7837
      %7923 = vst.msk [vmem:[#allocation2 + $0x60] sm:$0xff] %vm7910, %v7839
      %7924 = vst.msk [vmem:[#allocation2 + $0x68] sm:$0xff] %vm7910, %v7841
      %7925 = vst.msk [vmem:[#allocation2 + $0x70] sm:$0xff] %vm7910, %v7843
      %7926 = vst.msk [vmem:[#allocation2 + $0x78] sm:$0xff] %vm7910, %v7845
      %7927 = vst.msk [vmem:[#allocation2 + $0x80] sm:$0xff] %vm7910, %v7847
      %7928 = vst.msk [vmem:[#allocation2 + $0x88] sm:$0xff] %vm7910, %v7849
      %7929 = vst.msk [vmem:[#allocation2 + $0x90] sm:$0xff] %vm7910, %v7851
      %7930 = vst.msk [vmem:[#allocation2 + $0x98] sm:$0xff] %vm7910, %v7853
      %7931 = vst.msk [vmem:[#allocation2 + $0xa0] sm:$0xff] %vm7910, %v7855
      %7932 = vst.msk [vmem:[#allocation2 + $0xa8] sm:$0xff] %vm7910, %v7857
      %7933 = vst.msk [vmem:[#allocation2 + $0xb0] sm:$0xff] %vm7910, %v7859
      %7934 = vst.msk [vmem:[#allocation2 + $0xb8] sm:$0xff] %vm7910, %v7861
      %7935 = vst.msk [vmem:[#allocation2 + $0xc0] sm:$0xff] %vm7910, %v7863
      %7936 = vst.msk [vmem:[#allocation2 + $0xc8] sm:$0xff] %vm7910, %v7865
      %7937 = vst.msk [vmem:[#allocation2 + $0xd0] sm:$0xff] %vm7910, %v7867
      %7938 = vst.msk [vmem:[#allocation2 + $0xd8] sm:$0xff] %vm7910, %v7869
      %7939 = vst.msk [vmem:[#allocation2 + $0xe0] sm:$0xff] %vm7910, %v7871
      %7940 = vst.msk [vmem:[#allocation2 + $0xe8] sm:$0xff] %vm7910, %v7873
      %7941 = vst.msk [vmem:[#allocation2 + $0xf0] sm:$0xff] %vm7910, %v7875
      %7942 = vst.msk [vmem:[#allocation2 + $0xf8] sm:$0xff] %vm7910, %v7877
      %v7943 = vld [vmem:[#allocation2] sm:$0xff]
      %v7944 = vld [vmem:[#allocation2 + $0x8] sm:$0xff]
      %v7945 = vld [vmem:[#allocation2 + $0x10] sm:$0xff]
      %v7946 = vld [vmem:[#allocation2 + $0x18] sm:$0xff]
      %v7947 = vld [vmem:[#allocation2 + $0x20] sm:$0xff]
      %v7948 = vld [vmem:[#allocation2 + $0x28] sm:$0xff]
      %v7949 = vld [vmem:[#allocation2 + $0x30] sm:$0xff]
      %v7950 = vld [vmem:[#allocation2 + $0x38] sm:$0xff]
      %v7951 = vld [vmem:[#allocation2 + $0x40] sm:$0xff]
      %v7952 = vld [vmem:[#allocation2 + $0x48] sm:$0xff]
      %v7953 = vld [vmem:[#allocation2 + $0x50] sm:$0xff]
      %v7954 = vld [vmem:[#allocation2 + $0x58] sm:$0xff]
      %v7955 = vld [vmem:[#allocation2 + $0x60] sm:$0xff]
      %v7956 = vld [vmem:[#allocation2 + $0x68] sm:$0xff]
      %v7957 = vld [vmem:[#allocation2 + $0x70] sm:$0xff]
      %v7958 = vld [vmem:[#allocation2 + $0x78] sm:$0xff]
      %v7959 = vld [vmem:[#allocation2 + $0x80] sm:$0xff]
      %v7960 = vld [vmem:[#allocation2 + $0x88] sm:$0xff]
      %v7961 = vld [vmem:[#allocation2 + $0x90] sm:$0xff]
      %v7962 = vld [vmem:[#allocation2 + $0x98] sm:$0xff]
      %v7963 = vld [vmem:[#allocation2 + $0xa0] sm:$0xff]
      %v7964 = vld [vmem:[#allocation2 + $0xa8] sm:$0xff]
      %v7965 = vld [vmem:[#allocation2 + $0xb0] sm:$0xff]
      %v7966 = vld [vmem:[#allocation2 + $0xb8] sm:$0xff]
      %v7967 = vld [vmem:[#allocation2 + $0xc0] sm:$0xff]
      %v7968 = vld [vmem:[#allocation2 + $0xc8] sm:$0xff]
      %v7969 = vld [vmem:[#allocation2 + $0xd0] sm:$0xff]
      %v7970 = vld [vmem:[#allocation2 + $0xd8] sm:$0xff]
      %v7971 = vld [vmem:[#allocation2 + $0xe0] sm:$0xff]
      %v7972 = vld [vmem:[#allocation2 + $0xe8] sm:$0xff]
      %v7973 = vld [vmem:[#allocation2 + $0xf0] sm:$0xff]
      %v7974 = vld [vmem:[#allocation2 + $0xf8] sm:$0xff]
      %vm7975 = vcmask 130048
      %7976 = vst.msk [vmem:[%s521] sm:$0xff] %vm7975, %v7943
      %7977 = vst.msk [vmem:[%s521 + $0x8] sm:$0xff] %vm7975, %v7944
      %7978 = vst.msk [vmem:[%s521 + $0x10] sm:$0xff] %vm7975, %v7945
      %7979 = vst.msk [vmem:[%s521 + $0x18] sm:$0xff] %vm7975, %v7946
      %7980 = vst.msk [vmem:[%s521 + $0x20] sm:$0xff] %vm7975, %v7947
      %7981 = vst.msk [vmem:[%s521 + $0x28] sm:$0xff] %vm7975, %v7948
      %7982 = vst.msk [vmem:[%s521 + $0x30] sm:$0xff] %vm7975, %v7949
      %7983 = vst.msk [vmem:[%s521 + $0x38] sm:$0xff] %vm7975, %v7950
      %7984 = vst.msk [vmem:[%s521 + $0x40] sm:$0xff] %vm7975, %v7951
      %7985 = vst.msk [vmem:[%s521 + $0x48] sm:$0xff] %vm7975, %v7952
      %7986 = vst.msk [vmem:[%s521 + $0x50] sm:$0xff] %vm7975, %v7953
      %7987 = vst.msk [vmem:[%s521 + $0x58] sm:$0xff] %vm7975, %v7954
      %7988 = vst.msk [vmem:[%s521 + $0x60] sm:$0xff] %vm7975, %v7955
      %7989 = vst.msk [vmem:[%s521 + $0x68] sm:$0xff] %vm7975, %v7956
      %7990 = vst.msk [vmem:[%s521 + $0x70] sm:$0xff] %vm7975, %v7957
      %7991 = vst.msk [vmem:[%s521 + $0x78] sm:$0xff] %vm7975, %v7958
      %7992 = vst.msk [vmem:[%s521 + $0x80] sm:$0xff] %vm7975, %v7959
      %7993 = vst.msk [vmem:[%s521 + $0x88] sm:$0xff] %vm7975, %v7960
      %7994 = vst.msk [vmem:[%s521 + $0x90] sm:$0xff] %vm7975, %v7961
      %7995 = vst.msk [vmem:[%s521 + $0x98] sm:$0xff] %vm7975, %v7962
      %7996 = vst.msk [vmem:[%s521 + $0xa0] sm:$0xff] %vm7975, %v7963
      %7997 = vst.msk [vmem:[%s521 + $0xa8] sm:$0xff] %vm7975, %v7964
      %7998 = vst.msk [vmem:[%s521 + $0xb0] sm:$0xff] %vm7975, %v7965
      %7999 = vst.msk [vmem:[%s521 + $0xb8] sm:$0xff] %vm7975, %v7966
      %8000 = vst.msk [vmem:[%s521 + $0xc0] sm:$0xff] %vm7975, %v7967
      %8001 = vst.msk [vmem:[%s521 + $0xc8] sm:$0xff] %vm7975, %v7968
      %8002 = vst.msk [vmem:[%s521 + $0xd0] sm:$0xff] %vm7975, %v7969
      %8003 = vst.msk [vmem:[%s521 + $0xd8] sm:$0xff] %vm7975, %v7970
      %8004 = vst.msk [vmem:[%s521 + $0xe0] sm:$0xff] %vm7975, %v7971
      %8005 = vst.msk [vmem:[%s521 + $0xe8] sm:$0xff] %vm7975, %v7972
      %8006 = vst.msk [vmem:[%s521 + $0xf0] sm:$0xff] %vm7975, %v7973
      %8007 = vst.msk [vmem:[%s521 + $0xf8] sm:$0xff] %vm7975, %v7974
      %p8008 = scmp.lt.s32.totalorder %s27, 1
      %s8009 = scalar_select %p8008, %s27, 1
      %s8010 = smul.addr %s8009, 32
      %s8011 = smul.addr %s8010, 8
      %s8012 = scalar_lea.vmem %s16, %s8011
      // Predicated region
      $region85: #{dense_block_pallas.1} parent=83 // pred_check
        %p8013 = pneg %p386
      $region86: #{dense_block_pallas.1} parent=83 // pred_check_branch
        %8015 = sbr.rel (%p8013) target = $region88
      $region87: #{dense_block_pallas.1} parent=83 // pred_region
        _
      $region88: #{dense_block_pallas.1} parent=83 // pred_fallthru
        _
    $region84: #{dense_block_pallas.1} parent=5 // pred_fallthru
      _
    %p8016 = scmp.le.s32.totalorder 2, %s22
    // Predicated region
    $region89: #{dense_block_pallas.1} parent=5 // pred_check
      %p8017 = pneg %p8016
    $region90: #{dense_block_pallas.1} parent=5 // pred_check_branch
      %8019 = sbr.rel (%p8017) target = $region92
    $region91: #{dense_block_pallas.1} parent=5 // pred_region
      %s8020 = ssub.s32 %s22, 2
      // Predicated region
      $region93: #{dense_block_pallas.1} parent=91 // pred_check
        %p8021 = pneg %p392
      $region94: #{dense_block_pallas.1} parent=91 // pred_check_branch
        %8023 = sbr.rel (%p8021) target = $region96
      $region95: #{dense_block_pallas.1} parent=91 // pred_region
        %p8024 = scmp.lt.s32.totalorder %s28, 1
        %s8025 = scalar_select %p8024, %s28, 1
        %s8026 = smul.addr %s8025, 32
        %s8027 = smul.addr %s8026, 8
        %s8028 = scalar_lea.vmem %s16, %s8027
      $region96: #{dense_block_pallas.1} parent=91 // pred_fallthru
        _
    $region92: #{dense_block_pallas.1} parent=5 // pred_fallthru
      _
  $region6: #{dense_block_pallas.1} parent=0 // loop_footer
    %s26 = sadd.s32 1, %s22
  $region7: #{dense_block_pallas.1} parent=0 // loop_footer_branch
    %21 = sbr.rel target = $region3
  $region8: #{dense_block_pallas.1} parent=0 // loop_exit
    _

</llo_original>
